<compile_context>
chip_gen: v7x
topology: tpu7x:2x2x1
jax: 0.10.0
libtpu: 0.0.40
codegen_flags: <defaults>
</compile_context>

<pallas_src>
import functools

import jax
import jax.numpy as jnp
from jax.experimental import pallas as pl
from jax.experimental.pallas import tpu as pltpu

# Layer sizes (from the nn.Module __init__).
ENC_DIMS = [784, 128, 64, 12, 3]
DEC_DIMS = [3, 12, 64, 128, 784]

D_IN = 784
D_PAD = 896        # 7 * 128: lane-dense padding of the 784 feature dim
CODE = 3
CODE_PAD = 128     # lane-dense padding of the 3-wide code layer

# Padded per-layer (in, out) dims actually run on the MXU.
PADDED_LAYER_DIMS = [
    (D_PAD, 128), (128, 64), (64, 12), (12, CODE_PAD),       # encoder
    (CODE_PAD, 12), (12, 64), (64, 128), (128, D_PAD),        # decoder
]


def _linear(h, w_ref, b_ref):
    """bf16 MXU matmul with f32 accumulation, f32 bias add."""
    return (
        jnp.dot(h.astype(jnp.bfloat16), w_ref[...],
                preferred_element_type=jnp.float32)
        + b_ref[...]
    )


def autoencoder_kernel(
    x_ref,
    # encoder params (bf16 weights, f32 biases)
    w1, b1, w2, b2, w3, b3, w4, b4,
    # decoder params
    w5, b5, w6, b6, w7, b7, w8, b8,
    # outputs
    enc_ref, dec_ref,
):
    h = x_ref[...]                                   # bf16 [block_b, 896]

    # Encoder: Linear+ReLU x3, then Linear (no activation on the code layer).
    h = jnp.maximum(_linear(h, w1, b1), 0.0)         # f32 [block_b, 128]
    h = jnp.maximum(_linear(h, w2, b2), 0.0)         # f32 [block_b, 64]
    h = jnp.maximum(_linear(h, w3, b3), 0.0)         # f32 [block_b, 12]
    e = _linear(h, w4, b4)                           # f32 [block_b, 128]; cols 3: are exactly 0
    enc_ref[...] = e.astype(enc_ref.dtype)

    # Decoder: Linear+ReLU x3, then Linear + Sigmoid.
    h = jnp.maximum(_linear(e, w5, b5), 0.0)
    h = jnp.maximum(_linear(h, w6, b6), 0.0)
    h = jnp.maximum(_linear(h, w7, b7), 0.0)
    d = jax.nn.sigmoid(_linear(h, w8, b8))           # f32 [block_b, 896]
    dec_ref[...] = d.astype(dec_ref.dtype)


def _prepare_params(params):
    """Zero-pad the non-128-multiple edge dims and cast weights to bf16.

    Padding is exact: padded x columns hit zero w1 rows; padded w4 columns and
    b4 entries make enc cols 3: exactly zero, which hit zero w5 rows; padded
    w8 columns / b8 entries only affect dec columns that the wrapper slices off.
    """
    (w1, b1, w2, b2, w3, b3, w4, b4,
     w5, b5, w6, b6, w7, b7, w8, b8) = params

    w1p = jnp.zeros((D_PAD, 128), jnp.float32).at[:D_IN, :].set(w1)
    w4p = jnp.zeros((12, CODE_PAD), jnp.float32).at[:, :CODE].set(w4)
    b4p = jnp.zeros((1, CODE_PAD), jnp.float32).at[:, :CODE].set(b4)
    w5p = jnp.zeros((CODE_PAD, 12), jnp.float32).at[:CODE, :].set(w5)
    w8p = jnp.zeros((128, D_PAD), jnp.float32).at[:, :D_IN].set(w8)
    b8p = jnp.zeros((1, D_PAD), jnp.float32).at[:, :D_IN].set(b8)

    ws = [w1p, w2, w3, w4p, w5p, w6, w7, w8p]
    bs = [b1, b2, b3, b4p, b5, b6, b7, b8p]

    out = []
    for w, b in zip(ws, bs):
        out += [w.astype(jnp.bfloat16), b.astype(jnp.float32)]
    return out


@functools.partial(jax.jit, static_argnames=("block_b",))
def autoencoder_forward(x, params, *, block_b=256):
    """params: flat list [w1, b1, ..., w8, b8] with w_i: [in, out], b_i: [1, out]."""
    B, D = x.shape
    assert D == D_IN

    kparams = _prepare_params(params)

    # Pad the batch so any B works (padded rows are streamed once, then dropped).
    n_blocks = -(-B // block_b)
    b_pad = n_blocks * block_b
    xp = jnp.zeros((b_pad, D_PAD), jnp.bfloat16)
    xp = xp.at[:B, :D].set(x.astype(jnp.bfloat16))

    grid = (n_blocks,)

    # x / enc / dec are tiled along batch; every weight/bias block is the full
    # (padded) array and stays resident in VMEM across grid steps.
    param_specs = [pl.BlockSpec(p.shape, lambda i: (0, 0)) for p in kparams]
    in_specs = [pl.BlockSpec((block_b, D_PAD), lambda i: (i, 0))] + param_specs
    out_specs = [
        pl.BlockSpec((block_b, CODE_PAD), lambda i: (i, 0)),
        pl.BlockSpec((block_b, D_PAD), lambda i: (i, 0)),
    ]

    flops = 2 * b_pad * sum(di * do for di, do in PADDED_LAYER_DIMS)
    bytes_accessed = (
        xp.size * 2                          # bf16 input stream
        + b_pad * CODE_PAD * 4               # enc (f32)
        + b_pad * D_PAD * 4                  # dec (f32)
        + sum(int(p.size) * p.dtype.itemsize for p in kparams)
    )
    cost = pl.CostEstimate(
        flops=flops,
        transcendentals=b_pad * D_PAD,       # sigmoid on the decoder output
        bytes_accessed=bytes_accessed,
    )

    enc_p, dec_p = pl.pallas_call(
        autoencoder_kernel,
        out_shape=(
            jax.ShapeDtypeStruct((b_pad, CODE_PAD), jnp.float32),
            jax.ShapeDtypeStruct((b_pad, D_PAD), jnp.float32),
        ),
        grid_spec=pltpu.PrefetchScalarGridSpec(
            num_scalar_prefetch=0,
            grid=grid,
            in_specs=in_specs,
            out_specs=out_specs,
        ),
        compiler_params=pltpu.CompilerParams(
            dimension_semantics=("parallel",),
            vmem_limit_bytes=48 * 1024 * 1024,
        ),
        cost_estimate=cost,
    )(xp, *kparams)

    return enc_p[:B, :CODE], dec_p[:B, :D_IN]


def init_params(key):
    """Deterministic synthetic params (PyTorch-Linear-like uniform init)."""
    dims = list(zip(ENC_DIMS[:-1], ENC_DIMS[1:])) + list(
        zip(DEC_DIMS[:-1], DEC_DIMS[1:])
    )
    params = []
    for (fan_in, fan_out) in dims:
        key, kw, kb = jax.random.split(key, 3)
        bound = 1.0 / jnp.sqrt(fan_in)
        # Stored as [in, out] (transpose of torch's [out, in]) for h @ W.
        w = jax.random.uniform(kw, (fan_in, fan_out), jnp.float32, -bound, bound)
        b = jax.random.uniform(kb, (1, fan_out), jnp.float32, -bound, bound)
        params += [w, b]
    return params


def reference_forward(x, params, matmul_dtype=jnp.float32):
    """Plain-JAX reference. matmul_dtype=bfloat16 mimics the kernel's MXU cast."""
    h = x.astype(jnp.float32)
    e = None
    for li in range(8):
        w, b = params[2 * li], params[2 * li + 1]
        h = jnp.dot(h.astype(matmul_dtype), w.astype(matmul_dtype),
                    preferred_element_type=jnp.float32) + b
        if li == 3:
            e = h                      # code layer: no activation
        elif li != 7:
            h = jnp.maximum(h, 0.0)
    d = jax.nn.sigmoid(h)
    return e, d


if __name__ == "__main__":
    key = jax.random.PRNGKey(0)
    kx, kp = jax.random.split(key)

    B = 300  # deliberately not a multiple of block_b to exercise batch padding
    x = jax.random.uniform(kx, (B, D_IN), jnp.float32)  # "flattened MNIST"
    params = init_params(kp)

    enc, dec = autoencoder_forward(x, params)
    jax.block_until_ready((enc, dec))

    assert enc.shape == (B, CODE) and dec.shape == (B, D_IN)

    # Tight check vs. a reference that uses the same bf16 operands / f32 acc.
    enc_bf, dec_bf = reference_forward(x, params, matmul_dtype=jnp.bfloat16)
    assert jnp.allclose(enc, enc_bf, atol=2e-3, rtol=2e-3)
    assert jnp.allclose(dec, dec_bf, atol=2e-3, rtol=2e-3)

    # Loose check vs. the original full-f32 module semantics.
    enc_f32, dec_f32 = reference_forward(x, params, matmul_dtype=jnp.float32)
    assert jnp.allclose(enc, enc_f32, atol=5e-2, rtol=5e-2)
    assert jnp.allclose(dec, dec_f32, atol=5e-2, rtol=5e-2)

    print("KERNEL_OK")
</pallas_src>

<mosaic_0001>
module attributes {stable_mosaic.version = 11 : i64} {
  func.func @autoencoder_kernel(%arg0: i32, %arg1: memref<256x896xbf16, #tpu.memory_space<vmem>>, %arg2: memref<896x128xbf16, #tpu.memory_space<vmem>>, %arg3: memref<1x128xf32, #tpu.memory_space<vmem>>, %arg4: memref<128x64xbf16, #tpu.memory_space<vmem>>, %arg5: memref<1x64xf32, #tpu.memory_space<vmem>>, %arg6: memref<64x12xbf16, #tpu.memory_space<vmem>>, %arg7: memref<1x12xf32, #tpu.memory_space<vmem>>, %arg8: memref<12x128xbf16, #tpu.memory_space<vmem>>, %arg9: memref<1x128xf32, #tpu.memory_space<vmem>>, %arg10: memref<128x12xbf16, #tpu.memory_space<vmem>>, %arg11: memref<1x12xf32, #tpu.memory_space<vmem>>, %arg12: memref<12x64xbf16, #tpu.memory_space<vmem>>, %arg13: memref<1x64xf32, #tpu.memory_space<vmem>>, %arg14: memref<64x128xbf16, #tpu.memory_space<vmem>>, %arg15: memref<1x128xf32, #tpu.memory_space<vmem>>, %arg16: memref<128x896xbf16, #tpu.memory_space<vmem>>, %arg17: memref<1x896xf32, #tpu.memory_space<vmem>>, %arg18: memref<256x128xf32, #tpu.memory_space<vmem>>, %arg19: memref<256x896xf32, #tpu.memory_space<vmem>>) attributes {dimension_semantics = [#tpu.dimension_semantics<parallel>], iteration_bounds = array<i64: 2>, scalar_prefetch = 0 : i64, scratch_operands = 0 : i64, tpu.core_type = #tpu.core_type<tc>, window_params = [{transform_indices = @transform_0, window_bounds = array<i64: 256, 896>}, {pipeline_mode = #tpu.pipeline_mode<synchronous>, transform_indices = @transform_1, window_bounds = array<i64: 896, 128>}, {pipeline_mode = #tpu.pipeline_mode<synchronous>, transform_indices = @transform_2, window_bounds = array<i64: 1, 128>}, {pipeline_mode = #tpu.pipeline_mode<synchronous>, transform_indices = @transform_3, window_bounds = array<i64: 128, 64>}, {pipeline_mode = #tpu.pipeline_mode<synchronous>, transform_indices = @transform_4, window_bounds = array<i64: 1, 64>}, {pipeline_mode = #tpu.pipeline_mode<synchronous>, transform_indices = @transform_5, window_bounds = array<i64: 64, 12>}, {pipeline_mode = #tpu.pipeline_mode<synchronous>, transform_indices = @transform_6, window_bounds = array<i64: 1, 12>}, {pipeline_mode = #tpu.pipeline_mode<synchronous>, transform_indices = @transform_7, window_bounds = array<i64: 12, 128>}, {pipeline_mode = #tpu.pipeline_mode<synchronous>, transform_indices = @transform_8, window_bounds = array<i64: 1, 128>}, {pipeline_mode = #tpu.pipeline_mode<synchronous>, transform_indices = @transform_9, window_bounds = array<i64: 128, 12>}, {pipeline_mode = #tpu.pipeline_mode<synchronous>, transform_indices = @transform_10, window_bounds = array<i64: 1, 12>}, {pipeline_mode = #tpu.pipeline_mode<synchronous>, transform_indices = @transform_11, window_bounds = array<i64: 12, 64>}, {pipeline_mode = #tpu.pipeline_mode<synchronous>, transform_indices = @transform_12, window_bounds = array<i64: 1, 64>}, {pipeline_mode = #tpu.pipeline_mode<synchronous>, transform_indices = @transform_13, window_bounds = array<i64: 64, 128>}, {pipeline_mode = #tpu.pipeline_mode<synchronous>, transform_indices = @transform_14, window_bounds = array<i64: 1, 128>}, {pipeline_mode = #tpu.pipeline_mode<synchronous>, transform_indices = @transform_15, window_bounds = array<i64: 128, 896>}, {pipeline_mode = #tpu.pipeline_mode<synchronous>, transform_indices = @transform_16, window_bounds = array<i64: 1, 896>}, {transform_indices = @transform_17, window_bounds = array<i64: 256, 128>}, {transform_indices = @transform_18, window_bounds = array<i64: 256, 896>}]} {
    %c0 = arith.constant 0 : index
    %c0_0 = arith.constant 0 : index
    %0 = vector.load %arg1[%c0, %c0_0] : memref<256x896xbf16, #tpu.memory_space<vmem>>, vector<256x896xbf16>
    %c0_1 = arith.constant 0 : index
    %c0_2 = arith.constant 0 : index
    %1 = vector.load %arg2[%c0_1, %c0_2] : memref<896x128xbf16, #tpu.memory_space<vmem>>, vector<896x128xbf16>
    %cst = arith.constant dense<0.000000e+00> : vector<256x128xf32>
    %2 = tpu.matmul %0, %1, %cst {dimension_numbers = #tpu.dot_dimension_numbers<[1], [0], [0], [1], [0, 0, 1, 1], [], []>} : vector<256x896xbf16>, vector<896x128xbf16>, vector<256x128xf32> -> vector<256x128xf32>
    %c0_3 = arith.constant 0 : index
    %c0_4 = arith.constant 0 : index
    %3 = vector.load %arg3[%c0_3, %c0_4] : memref<1x128xf32, #tpu.memory_space<vmem>>, vector<1x128xf32>
    %4 = vector.broadcast %3 : vector<1x128xf32> to vector<256x128xf32>
    %5 = arith.addf %2, %4 : vector<256x128xf32>
    %cst_5 = arith.constant 0.000000e+00 : f32
    %6 = vector.broadcast %cst_5 : f32 to vector<256x128xf32>
    %7 = arith.maximumf %5, %6 : vector<256x128xf32>
    %8 = arith.truncf %7 : vector<256x128xf32> to vector<256x128xbf16>
    %c0_6 = arith.constant 0 : index
    %c0_7 = arith.constant 0 : index
    %9 = vector.load %arg4[%c0_6, %c0_7] : memref<128x64xbf16, #tpu.memory_space<vmem>>, vector<128x64xbf16>
    %cst_8 = arith.constant dense<0.000000e+00> : vector<256x64xf32>
    %10 = tpu.matmul %8, %9, %cst_8 {dimension_numbers = #tpu.dot_dimension_numbers<[1], [0], [0], [1], [0, 0, 1, 1], [], []>} : vector<256x128xbf16>, vector<128x64xbf16>, vector<256x64xf32> -> vector<256x64xf32>
    %c0_9 = arith.constant 0 : index
    %c0_10 = arith.constant 0 : index
    %11 = vector.load %arg5[%c0_9, %c0_10] : memref<1x64xf32, #tpu.memory_space<vmem>>, vector<1x64xf32>
    %12 = vector.broadcast %11 : vector<1x64xf32> to vector<256x64xf32>
    %13 = arith.addf %10, %12 : vector<256x64xf32>
    %cst_11 = arith.constant 0.000000e+00 : f32
    %14 = vector.broadcast %cst_11 : f32 to vector<256x64xf32>
    %15 = arith.maximumf %13, %14 : vector<256x64xf32>
    %16 = arith.truncf %15 : vector<256x64xf32> to vector<256x64xbf16>
    %c0_12 = arith.constant 0 : index
    %c0_13 = arith.constant 0 : index
    %17 = vector.load %arg6[%c0_12, %c0_13] : memref<64x12xbf16, #tpu.memory_space<vmem>>, vector<64x12xbf16>
    %cst_14 = arith.constant dense<0.000000e+00> : vector<256x12xf32>
    %18 = tpu.matmul %16, %17, %cst_14 {dimension_numbers = #tpu.dot_dimension_numbers<[1], [0], [0], [1], [0, 0, 1, 1], [], []>} : vector<256x64xbf16>, vector<64x12xbf16>, vector<256x12xf32> -> vector<256x12xf32>
    %c0_15 = arith.constant 0 : index
    %c0_16 = arith.constant 0 : index
    %19 = vector.load %arg7[%c0_15, %c0_16] : memref<1x12xf32, #tpu.memory_space<vmem>>, vector<1x12xf32>
    %20 = vector.broadcast %19 : vector<1x12xf32> to vector<256x12xf32>
    %21 = arith.addf %18, %20 : vector<256x12xf32>
    %cst_17 = arith.constant 0.000000e+00 : f32
    %22 = vector.broadcast %cst_17 : f32 to vector<256x12xf32>
    %23 = arith.maximumf %21, %22 : vector<256x12xf32>
    %24 = arith.truncf %23 : vector<256x12xf32> to vector<256x12xbf16>
    %c0_18 = arith.constant 0 : index
    %c0_19 = arith.constant 0 : index
    %25 = vector.load %arg8[%c0_18, %c0_19] : memref<12x128xbf16, #tpu.memory_space<vmem>>, vector<12x128xbf16>
    %cst_20 = arith.constant dense<0.000000e+00> : vector<256x128xf32>
    %26 = tpu.matmul %24, %25, %cst_20 {dimension_numbers = #tpu.dot_dimension_numbers<[1], [0], [0], [1], [0, 0, 1, 1], [], []>} : vector<256x12xbf16>, vector<12x128xbf16>, vector<256x128xf32> -> vector<256x128xf32>
    %c0_21 = arith.constant 0 : index
    %c0_22 = arith.constant 0 : index
    %27 = vector.load %arg9[%c0_21, %c0_22] : memref<1x128xf32, #tpu.memory_space<vmem>>, vector<1x128xf32>
    %28 = vector.broadcast %27 : vector<1x128xf32> to vector<256x128xf32>
    %29 = arith.addf %26, %28 : vector<256x128xf32>
    %c0_23 = arith.constant 0 : index
    %c0_24 = arith.constant 0 : index
    %30 = vector.load %arg18[%c0_23, %c0_24] : memref<256x128xf32, #tpu.memory_space<vmem>>, vector<256x128xf32>
    tpu.vector_store %arg18[%c0_23, %c0_24], %29 {strides = array<i32>} : memref<256x128xf32, #tpu.memory_space<vmem>>, vector<256x128xf32>,
    %31 = arith.truncf %29 : vector<256x128xf32> to vector<256x128xbf16>
    %c0_25 = arith.constant 0 : index
    %c0_26 = arith.constant 0 : index
    %32 = vector.load %arg10[%c0_25, %c0_26] : memref<128x12xbf16, #tpu.memory_space<vmem>>, vector<128x12xbf16>
    %cst_27 = arith.constant dense<0.000000e+00> : vector<256x12xf32>
    %33 = tpu.matmul %31, %32, %cst_27 {dimension_numbers = #tpu.dot_dimension_numbers<[1], [0], [0], [1], [0, 0, 1, 1], [], []>} : vector<256x128xbf16>, vector<128x12xbf16>, vector<256x12xf32> -> vector<256x12xf32>
    %c0_28 = arith.constant 0 : index
    %c0_29 = arith.constant 0 : index
    %34 = vector.load %arg11[%c0_28, %c0_29] : memref<1x12xf32, #tpu.memory_space<vmem>>, vector<1x12xf32>
    %35 = vector.broadcast %34 : vector<1x12xf32> to vector<256x12xf32>
    %36 = arith.addf %33, %35 : vector<256x12xf32>
    %cst_30 = arith.constant 0.000000e+00 : f32
    %37 = vector.broadcast %cst_30 : f32 to vector<256x12xf32>
    %38 = arith.maximumf %36, %37 : vector<256x12xf32>
    %39 = arith.truncf %38 : vector<256x12xf32> to vector<256x12xbf16>
    %c0_31 = arith.constant 0 : index
    %c0_32 = arith.constant 0 : index
    %40 = vector.load %arg12[%c0_31, %c0_32] : memref<12x64xbf16, #tpu.memory_space<vmem>>, vector<12x64xbf16>
    %cst_33 = arith.constant dense<0.000000e+00> : vector<256x64xf32>
    %41 = tpu.matmul %39, %40, %cst_33 {dimension_numbers = #tpu.dot_dimension_numbers<[1], [0], [0], [1], [0, 0, 1, 1], [], []>} : vector<256x12xbf16>, vector<12x64xbf16>, vector<256x64xf32> -> vector<256x64xf32>
    %c0_34 = arith.constant 0 : index
    %c0_35 = arith.constant 0 : index
    %42 = vector.load %arg13[%c0_34, %c0_35] : memref<1x64xf32, #tpu.memory_space<vmem>>, vector<1x64xf32>
    %43 = vector.broadcast %42 : vector<1x64xf32> to vector<256x64xf32>
    %44 = arith.addf %41, %43 : vector<256x64xf32>
    %cst_36 = arith.constant 0.000000e+00 : f32
    %45 = vector.broadcast %cst_36 : f32 to vector<256x64xf32>
    %46 = arith.maximumf %44, %45 : vector<256x64xf32>
    %47 = arith.truncf %46 : vector<256x64xf32> to vector<256x64xbf16>
    %c0_37 = arith.constant 0 : index
    %c0_38 = arith.constant 0 : index
    %48 = vector.load %arg14[%c0_37, %c0_38] : memref<64x128xbf16, #tpu.memory_space<vmem>>, vector<64x128xbf16>
    %cst_39 = arith.constant dense<0.000000e+00> : vector<256x128xf32>
    %49 = tpu.matmul %47, %48, %cst_39 {dimension_numbers = #tpu.dot_dimension_numbers<[1], [0], [0], [1], [0, 0, 1, 1], [], []>} : vector<256x64xbf16>, vector<64x128xbf16>, vector<256x128xf32> -> vector<256x128xf32>
    %c0_40 = arith.constant 0 : index
    %c0_41 = arith.constant 0 : index
    %50 = vector.load %arg15[%c0_40, %c0_41] : memref<1x128xf32, #tpu.memory_space<vmem>>, vector<1x128xf32>
    %51 = vector.broadcast %50 : vector<1x128xf32> to vector<256x128xf32>
    %52 = arith.addf %49, %51 : vector<256x128xf32>
    %cst_42 = arith.constant 0.000000e+00 : f32
    %53 = vector.broadcast %cst_42 : f32 to vector<256x128xf32>
    %54 = arith.maximumf %52, %53 : vector<256x128xf32>
    %55 = arith.truncf %54 : vector<256x128xf32> to vector<256x128xbf16>
    %c0_43 = arith.constant 0 : index
    %c0_44 = arith.constant 0 : index
    %56 = vector.load %arg16[%c0_43, %c0_44] : memref<128x896xbf16, #tpu.memory_space<vmem>>, vector<128x896xbf16>
    %cst_45 = arith.constant dense<0.000000e+00> : vector<256x896xf32>
    %57 = tpu.matmul %55, %56, %cst_45 {dimension_numbers = #tpu.dot_dimension_numbers<[1], [0], [0], [1], [0, 0, 1, 1], [], []>} : vector<256x128xbf16>, vector<128x896xbf16>, vector<256x896xf32> -> vector<256x896xf32>
    %c0_46 = arith.constant 0 : index
    %c0_47 = arith.constant 0 : index
    %58 = vector.load %arg17[%c0_46, %c0_47] : memref<1x896xf32, #tpu.memory_space<vmem>>, vector<1x896xf32>
    %59 = vector.broadcast %58 : vector<1x896xf32> to vector<256x896xf32>
    %60 = arith.addf %57, %59 : vector<256x896xf32>
    %61 = arith.negf %60 : vector<256x896xf32>
    %62 = math.exp %61 : vector<256x896xf32>
    %cst_48 = arith.constant 1.000000e+00 : f32
    %63 = vector.broadcast %cst_48 : f32 to vector<256x896xf32>
    %64 = arith.addf %63, %62 : vector<256x896xf32>
    %65 = arith.divf %63, %64 : vector<256x896xf32>
    %c0_49 = arith.constant 0 : index
    %c0_50 = arith.constant 0 : index
    %66 = vector.load %arg19[%c0_49, %c0_50] : memref<256x896xf32, #tpu.memory_space<vmem>>, vector<256x896xf32>
    tpu.vector_store %arg19[%c0_49, %c0_50], %65 {strides = array<i32>} : memref<256x896xf32, #tpu.memory_space<vmem>>, vector<256x896xf32>,
    return
  }
  func.func @transform_0(%arg0: i32) -> (i32, i32) {
    %c0_i32 = arith.constant 0 : i32
    %c0_i32_0 = arith.constant 0 : i32
    return %arg0, %c0_i32 : i32, i32
  }
  func.func @transform_1(%arg0: i32) -> (i32, i32) {
    %c0_i32 = arith.constant 0 : i32
    %c0_i32_0 = arith.constant 0 : i32
    %c0_i32_1 = arith.constant 0 : i32
    return %c0_i32, %c0_i32_0 : i32, i32
  }
  func.func @transform_2(%arg0: i32) -> (i32, i32) {
    %c0_i32 = arith.constant 0 : i32
    %c0_i32_0 = arith.constant 0 : i32
    %c0_i32_1 = arith.constant 0 : i32
    return %c0_i32, %c0_i32_0 : i32, i32
  }
  func.func @transform_3(%arg0: i32) -> (i32, i32) {
    %c0_i32 = arith.constant 0 : i32
    %c0_i32_0 = arith.constant 0 : i32
    %c0_i32_1 = arith.constant 0 : i32
    return %c0_i32, %c0_i32_0 : i32, i32
  }
  func.func @transform_4(%arg0: i32) -> (i32, i32) {
    %c0_i32 = arith.constant 0 : i32
    %c0_i32_0 = arith.constant 0 : i32
    %c0_i32_1 = arith.constant 0 : i32
    return %c0_i32, %c0_i32_0 : i32, i32
  }
  func.func @transform_5(%arg0: i32) -> (i32, i32) {
    %c0_i32 = arith.constant 0 : i32
    %c0_i32_0 = arith.constant 0 : i32
    %c0_i32_1 = arith.constant 0 : i32
    return %c0_i32, %c0_i32_0 : i32, i32
  }
  func.func @transform_6(%arg0: i32) -> (i32, i32) {
    %c0_i32 = arith.constant 0 : i32
    %c0_i32_0 = arith.constant 0 : i32
    %c0_i32_1 = arith.constant 0 : i32
    return %c0_i32, %c0_i32_0 : i32, i32
  }
  func.func @transform_7(%arg0: i32) -> (i32, i32) {
    %c0_i32 = arith.constant 0 : i32
    %c0_i32_0 = arith.constant 0 : i32
    %c0_i32_1 = arith.constant 0 : i32
    return %c0_i32, %c0_i32_0 : i32, i32
  }
  func.func @transform_8(%arg0: i32) -> (i32, i32) {
    %c0_i32 = arith.constant 0 : i32
    %c0_i32_0 = arith.constant 0 : i32
    %c0_i32_1 = arith.constant 0 : i32
    return %c0_i32, %c0_i32_0 : i32, i32
  }
  func.func @transform_9(%arg0: i32) -> (i32, i32) {
    %c0_i32 = arith.constant 0 : i32
    %c0_i32_0 = arith.constant 0 : i32
    %c0_i32_1 = arith.constant 0 : i32
    return %c0_i32, %c0_i32_0 : i32, i32
  }
  func.func @transform_10(%arg0: i32) -> (i32, i32) {
    %c0_i32 = arith.constant 0 : i32
    %c0_i32_0 = arith.constant 0 : i32
    %c0_i32_1 = arith.constant 0 : i32
    return %c0_i32, %c0_i32_0 : i32, i32
  }
  func.func @transform_11(%arg0: i32) -> (i32, i32) {
    %c0_i32 = arith.constant 0 : i32
    %c0_i32_0 = arith.constant 0 : i32
    %c0_i32_1 = arith.constant 0 : i32
    return %c0_i32, %c0_i32_0 : i32, i32
  }
  func.func @transform_12(%arg0: i32) -> (i32, i32) {
    %c0_i32 = arith.constant 0 : i32
    %c0_i32_0 = arith.constant 0 : i32
    %c0_i32_1 = arith.constant 0 : i32
    return %c0_i32, %c0_i32_0 : i32, i32
  }
  func.func @transform_13(%arg0: i32) -> (i32, i32) {
    %c0_i32 = arith.constant 0 : i32
    %c0_i32_0 = arith.constant 0 : i32
    %c0_i32_1 = arith.constant 0 : i32
    return %c0_i32, %c0_i32_0 : i32, i32
  }
  func.func @transform_14(%arg0: i32) -> (i32, i32) {
    %c0_i32 = arith.constant 0 : i32
    %c0_i32_0 = arith.constant 0 : i32
    %c0_i32_1 = arith.constant 0 : i32
    return %c0_i32, %c0_i32_0 : i32, i32
  }
  func.func @transform_15(%arg0: i32) -> (i32, i32) {
    %c0_i32 = arith.constant 0 : i32
    %c0_i32_0 = arith.constant 0 : i32
    %c0_i32_1 = arith.constant 0 : i32
    return %c0_i32, %c0_i32_0 : i32, i32
  }
  func.func @transform_16(%arg0: i32) -> (i32, i32) {
    %c0_i32 = arith.constant 0 : i32
    %c0_i32_0 = arith.constant 0 : i32
    %c0_i32_1 = arith.constant 0 : i32
    return %c0_i32, %c0_i32_0 : i32, i32
  }
  func.func @transform_17(%arg0: i32) -> (i32, i32) {
    %c0_i32 = arith.constant 0 : i32
    %c0_i32_0 = arith.constant 0 : i32
    return %arg0, %c0_i32 : i32, i32
  }
  func.func @transform_18(%arg0: i32) -> (i32, i32) {
    %c0_i32 = arith.constant 0 : i32
    %c0_i32_0 = arith.constant 0 : i32
    return %arg0, %c0_i32 : i32, i32
  }
}

</mosaic_0001>

<llo_original>
// kernel: autoencoder_forward.1
$region0: #{autoencoder_forward.1}
  #allocation0 [shape = 'u32[]', space=smem, size = 0x4, offset = 0x4, fixed_abs, tag = 'smem constant byte address 0x4 - core index']
  #allocation1 [shape = 'u32[144,128]{1,0:T(1,128)}', space=vmem, size = 0x12000, scoped, tag = 'internal scratch']
  %s0 = inlined_call_operand.vmem [shape: bf16[512,896], index: 0, kind: input, shape index: {}]
  %s1 = inlined_call_operand.vmem [shape: bf16[896,128], index: 1, kind: input, shape index: {}]
  %s2 = inlined_call_operand.vmem [shape: f32[1,128], index: 2, kind: input, shape index: {}]
  %s3 = inlined_call_operand.vmem [shape: bf16[128,64], index: 3, kind: input, shape index: {}]
  %s4 = inlined_call_operand.vmem [shape: f32[1,64], index: 4, kind: input, shape index: {}]
  %s5 = inlined_call_operand.vmem [shape: bf16[64,12], index: 5, kind: input, shape index: {}]
  %s6 = inlined_call_operand.vmem [shape: f32[1,12], index: 6, kind: input, shape index: {}]
  %s7 = inlined_call_operand.vmem [shape: bf16[12,128], index: 7, kind: input, shape index: {}]
  %s8 = inlined_call_operand.vmem [shape: f32[1,128], index: 8, kind: input, shape index: {}]
  %s9 = inlined_call_operand.vmem [shape: bf16[128,12], index: 9, kind: input, shape index: {}]
  %s10 = inlined_call_operand.vmem [shape: f32[1,12], index: 10, kind: input, shape index: {}]
  %s11 = inlined_call_operand.vmem [shape: bf16[12,64], index: 11, kind: input, shape index: {}]
  %s12 = inlined_call_operand.vmem [shape: f32[1,64], index: 12, kind: input, shape index: {}]
  %s13 = inlined_call_operand.vmem [shape: bf16[64,128], index: 13, kind: input, shape index: {}]
  %s14 = inlined_call_operand.vmem [shape: f32[1,128], index: 14, kind: input, shape index: {}]
  %s15 = inlined_call_operand.vmem [shape: bf16[128,896], index: 15, kind: input, shape index: {}]
  %s16 = inlined_call_operand.vmem [shape: f32[1,896], index: 16, kind: input, shape index: {}]
  %s17 = inlined_call_operand.vmem [shape: f32[512,128], index: 17, kind: output, shape index: {0}]
  %s18 = inlined_call_operand.vmem [shape: f32[512,896], index: 18, kind: output, shape index: {1}]
  %19 = xla_tuple %s17, %s18
  %s20 = sld [smem:[#allocation0]]
  $region109: #{autoencoder_forward.1} parent=0
    _
  %s22 = ssub.s32 1, %s20
  %s23 = scalar_select 0, %s22, %s20
  loop: start=0, step=1, limit=4
  $region2: #{autoencoder_forward.1} parent=0 // loop_pre_header
    _
  $region3: #{autoencoder_forward.1} parent=0 // loop_header
    %s25 = sphi 0, %s29
    %p26 = scmp.ge.s32.totalorder %s25, 4
    %s35 = sphi 0, %s37
    %s38 = sphi 0, %s35
    %s39 = sphi 0, %s38
    %s55 = sphi 0, %s39
    %s59 = sphi 0, %s59
    %s61 = sphi 0, %s59
    %s62 = sphi 0, %s61
    %s76 = sphi 0, %s62
    %s80 = sphi 0, %s80
    %s82 = sphi 0, %s80
    %s83 = sphi 0, %s82
    %s97 = sphi 0, %s83
    %s101 = sphi 0, %s101
    %s103 = sphi 0, %s101
    %s104 = sphi 0, %s103
    %s118 = sphi 0, %s104
    %s122 = sphi 0, %s122
    %s124 = sphi 0, %s122
    %s125 = sphi 0, %s124
    %s139 = sphi 0, %s125
    %s143 = sphi 0, %s143
    %s145 = sphi 0, %s143
    %s146 = sphi 0, %s145
    %s160 = sphi 0, %s146
    %s164 = sphi 0, %s164
    %s166 = sphi 0, %s164
    %s167 = sphi 0, %s166
    %s181 = sphi 0, %s167
    %s185 = sphi 0, %s185
    %s187 = sphi 0, %s185
    %s188 = sphi 0, %s187
    %s202 = sphi 0, %s188
    %s206 = sphi 0, %s206
    %s208 = sphi 0, %s206
    %s209 = sphi 0, %s208
    %s223 = sphi 0, %s209
    %s227 = sphi 0, %s227
    %s229 = sphi 0, %s227
    %s230 = sphi 0, %s229
    %s244 = sphi 0, %s230
    %s248 = sphi 0, %s248
    %s250 = sphi 0, %s248
    %s251 = sphi 0, %s250
    %s265 = sphi 0, %s251
    %s269 = sphi 0, %s269
    %s271 = sphi 0, %s269
    %s272 = sphi 0, %s271
    %s286 = sphi 0, %s272
    %s290 = sphi 0, %s290
    %s292 = sphi 0, %s290
    %s293 = sphi 0, %s292
    %s307 = sphi 0, %s293
    %s311 = sphi 0, %s311
    %s313 = sphi 0, %s311
    %s314 = sphi 0, %s313
    %s328 = sphi 0, %s314
    %s332 = sphi 0, %s332
    %s334 = sphi 0, %s332
    %s335 = sphi 0, %s334
    %s349 = sphi 0, %s335
    %s353 = sphi 0, %s353
    %s355 = sphi 0, %s353
    %s356 = sphi 0, %s355
    %s370 = sphi 0, %s356
    %s374 = sphi 0, %s374
    %s376 = sphi 0, %s374
    %s377 = sphi 0, %s376
    %s391 = sphi 0, %s377
    %s397 = sphi 0, %s399
    %s400 = sphi 0, %s397
    %s401 = sphi 0, %s400
    %s417 = sphi 0, %s401
    %s423 = sphi 0, %s425
    %s426 = sphi 0, %s423
    %s427 = sphi 0, %s426
    %s443 = sphi 0, %s427
  $region4: #{autoencoder_forward.1} parent=0 // loop_header_branch
    %28 = sbr.rel (%p26) target = $region8
  $region5: #{autoencoder_forward.1} parent=0 // loop_body
    %s30 = ssub.s32 %s25, 1
    %s31 = ssub.s32 %s25, 2
    %s32 = sadd.s32 %s25, 1
    %s33 = ssub.s32 %s25, %s32
    %p34 = scmp.eq.s32.totalorder %s33, 0
    %s36 = sadd.s32 %s35, 1
    %s37 = scalar_select %p34, %s35, %s36
    %p40 = pneg %p34
    %p41 = scmp.eq.s32.totalorder %s25, 1
    %p42 = por %p40, %p41
    %p43 = scmp.ne.s32.totalorder %s35, %s38
    %p44 = scmp.eq.s32.totalorder %s25, 0
    %p45 = por %p43, %p44
    %p46 = scmp.ne.s32.totalorder %s35, %s38
    %p47 = scmp.eq.s32.totalorder %s30, 1
    %p48 = por %p46, %p47
    %p49 = scmp.ne.s32.totalorder %s38, %s39
    %p50 = scmp.eq.s32.totalorder %s30, 0
    %p51 = por %p49, %p50
    %p52 = scmp.ne.s32.totalorder %s38, %s39
    %p53 = scmp.eq.s32.totalorder %s31, 1
    %p54 = por %p52, %p53
    %p56 = scmp.ne.s32.totalorder %s39, %s55
    %p57 = scmp.eq.s32.totalorder %s31, 0
    %p58 = por %p56, %p57
    %s60 = sadd.s32 %s59, 1
    %p63 = scmp.eq.s32.totalorder %s25, 1
    %p64 = scmp.ne.s32.totalorder %s59, %s61
    %p65 = scmp.eq.s32.totalorder %s25, 0
    %p66 = por %p64, %p65
    %p67 = scmp.ne.s32.totalorder %s59, %s61
    %p68 = scmp.eq.s32.totalorder %s30, 1
    %p69 = por %p67, %p68
    %p70 = scmp.ne.s32.totalorder %s61, %s62
    %p71 = scmp.eq.s32.totalorder %s30, 0
    %p72 = por %p70, %p71
    %p73 = scmp.ne.s32.totalorder %s61, %s62
    %p74 = scmp.eq.s32.totalorder %s31, 1
    %p75 = por %p73, %p74
    %p77 = scmp.ne.s32.totalorder %s62, %s76
    %p78 = scmp.eq.s32.totalorder %s31, 0
    %p79 = por %p77, %p78
    %s81 = sadd.s32 %s80, 1
    %p84 = scmp.eq.s32.totalorder %s25, 1
    %p85 = scmp.ne.s32.totalorder %s80, %s82
    %p86 = scmp.eq.s32.totalorder %s25, 0
    %p87 = por %p85, %p86
    %p88 = scmp.ne.s32.totalorder %s80, %s82
    %p89 = scmp.eq.s32.totalorder %s30, 1
    %p90 = por %p88, %p89
    %p91 = scmp.ne.s32.totalorder %s82, %s83
    %p92 = scmp.eq.s32.totalorder %s30, 0
    %p93 = por %p91, %p92
    %p94 = scmp.ne.s32.totalorder %s82, %s83
    %p95 = scmp.eq.s32.totalorder %s31, 1
    %p96 = por %p94, %p95
    %p98 = scmp.ne.s32.totalorder %s83, %s97
    %p99 = scmp.eq.s32.totalorder %s31, 0
    %p100 = por %p98, %p99
    %s102 = sadd.s32 %s101, 1
    %p105 = scmp.eq.s32.totalorder %s25, 1
    %p106 = scmp.ne.s32.totalorder %s101, %s103
    %p107 = scmp.eq.s32.totalorder %s25, 0
    %p108 = por %p106, %p107
    %p109 = scmp.ne.s32.totalorder %s101, %s103
    %p110 = scmp.eq.s32.totalorder %s30, 1
    %p111 = por %p109, %p110
    %p112 = scmp.ne.s32.totalorder %s103, %s104
    %p113 = scmp.eq.s32.totalorder %s30, 0
    %p114 = por %p112, %p113
    %p115 = scmp.ne.s32.totalorder %s103, %s104
    %p116 = scmp.eq.s32.totalorder %s31, 1
    %p117 = por %p115, %p116
    %p119 = scmp.ne.s32.totalorder %s104, %s118
    %p120 = scmp.eq.s32.totalorder %s31, 0
    %p121 = por %p119, %p120
    %s123 = sadd.s32 %s122, 1
    %p126 = scmp.eq.s32.totalorder %s25, 1
    %p127 = scmp.ne.s32.totalorder %s122, %s124
    %p128 = scmp.eq.s32.totalorder %s25, 0
    %p129 = por %p127, %p128
    %p130 = scmp.ne.s32.totalorder %s122, %s124
    %p131 = scmp.eq.s32.totalorder %s30, 1
    %p132 = por %p130, %p131
    %p133 = scmp.ne.s32.totalorder %s124, %s125
    %p134 = scmp.eq.s32.totalorder %s30, 0
    %p135 = por %p133, %p134
    %p136 = scmp.ne.s32.totalorder %s124, %s125
    %p137 = scmp.eq.s32.totalorder %s31, 1
    %p138 = por %p136, %p137
    %p140 = scmp.ne.s32.totalorder %s125, %s139
    %p141 = scmp.eq.s32.totalorder %s31, 0
    %p142 = por %p140, %p141
    %s144 = sadd.s32 %s143, 1
    %p147 = scmp.eq.s32.totalorder %s25, 1
    %p148 = scmp.ne.s32.totalorder %s143, %s145
    %p149 = scmp.eq.s32.totalorder %s25, 0
    %p150 = por %p148, %p149
    %p151 = scmp.ne.s32.totalorder %s143, %s145
    %p152 = scmp.eq.s32.totalorder %s30, 1
    %p153 = por %p151, %p152
    %p154 = scmp.ne.s32.totalorder %s145, %s146
    %p155 = scmp.eq.s32.totalorder %s30, 0
    %p156 = por %p154, %p155
    %p157 = scmp.ne.s32.totalorder %s145, %s146
    %p158 = scmp.eq.s32.totalorder %s31, 1
    %p159 = por %p157, %p158
    %p161 = scmp.ne.s32.totalorder %s146, %s160
    %p162 = scmp.eq.s32.totalorder %s31, 0
    %p163 = por %p161, %p162
    %s165 = sadd.s32 %s164, 1
    %p168 = scmp.eq.s32.totalorder %s25, 1
    %p169 = scmp.ne.s32.totalorder %s164, %s166
    %p170 = scmp.eq.s32.totalorder %s25, 0
    %p171 = por %p169, %p170
    %p172 = scmp.ne.s32.totalorder %s164, %s166
    %p173 = scmp.eq.s32.totalorder %s30, 1
    %p174 = por %p172, %p173
    %p175 = scmp.ne.s32.totalorder %s166, %s167
    %p176 = scmp.eq.s32.totalorder %s30, 0
    %p177 = por %p175, %p176
    %p178 = scmp.ne.s32.totalorder %s166, %s167
    %p179 = scmp.eq.s32.totalorder %s31, 1
    %p180 = por %p178, %p179
    %p182 = scmp.ne.s32.totalorder %s167, %s181
    %p183 = scmp.eq.s32.totalorder %s31, 0
    %p184 = por %p182, %p183
    %s186 = sadd.s32 %s185, 1
    %p189 = scmp.eq.s32.totalorder %s25, 1
    %p190 = scmp.ne.s32.totalorder %s185, %s187
    %p191 = scmp.eq.s32.totalorder %s25, 0
    %p192 = por %p190, %p191
    %p193 = scmp.ne.s32.totalorder %s185, %s187
    %p194 = scmp.eq.s32.totalorder %s30, 1
    %p195 = por %p193, %p194
    %p196 = scmp.ne.s32.totalorder %s187, %s188
    %p197 = scmp.eq.s32.totalorder %s30, 0
    %p198 = por %p196, %p197
    %p199 = scmp.ne.s32.totalorder %s187, %s188
    %p200 = scmp.eq.s32.totalorder %s31, 1
    %p201 = por %p199, %p200
    %p203 = scmp.ne.s32.totalorder %s188, %s202
    %p204 = scmp.eq.s32.totalorder %s31, 0
    %p205 = por %p203, %p204
    %s207 = sadd.s32 %s206, 1
    %p210 = scmp.eq.s32.totalorder %s25, 1
    %p211 = scmp.ne.s32.totalorder %s206, %s208
    %p212 = scmp.eq.s32.totalorder %s25, 0
    %p213 = por %p211, %p212
    %p214 = scmp.ne.s32.totalorder %s206, %s208
    %p215 = scmp.eq.s32.totalorder %s30, 1
    %p216 = por %p214, %p215
    %p217 = scmp.ne.s32.totalorder %s208, %s209
    %p218 = scmp.eq.s32.totalorder %s30, 0
    %p219 = por %p217, %p218
    %p220 = scmp.ne.s32.totalorder %s208, %s209
    %p221 = scmp.eq.s32.totalorder %s31, 1
    %p222 = por %p220, %p221
    %p224 = scmp.ne.s32.totalorder %s209, %s223
    %p225 = scmp.eq.s32.totalorder %s31, 0
    %p226 = por %p224, %p225
    %s228 = sadd.s32 %s227, 1
    %p231 = scmp.eq.s32.totalorder %s25, 1
    %p232 = scmp.ne.s32.totalorder %s227, %s229
    %p233 = scmp.eq.s32.totalorder %s25, 0
    %p234 = por %p232, %p233
    %p235 = scmp.ne.s32.totalorder %s227, %s229
    %p236 = scmp.eq.s32.totalorder %s30, 1
    %p237 = por %p235, %p236
    %p238 = scmp.ne.s32.totalorder %s229, %s230
    %p239 = scmp.eq.s32.totalorder %s30, 0
    %p240 = por %p238, %p239
    %p241 = scmp.ne.s32.totalorder %s229, %s230
    %p242 = scmp.eq.s32.totalorder %s31, 1
    %p243 = por %p241, %p242
    %p245 = scmp.ne.s32.totalorder %s230, %s244
    %p246 = scmp.eq.s32.totalorder %s31, 0
    %p247 = por %p245, %p246
    %s249 = sadd.s32 %s248, 1
    %p252 = scmp.eq.s32.totalorder %s25, 1
    %p253 = scmp.ne.s32.totalorder %s248, %s250
    %p254 = scmp.eq.s32.totalorder %s25, 0
    %p255 = por %p253, %p254
    %p256 = scmp.ne.s32.totalorder %s248, %s250
    %p257 = scmp.eq.s32.totalorder %s30, 1
    %p258 = por %p256, %p257
    %p259 = scmp.ne.s32.totalorder %s250, %s251
    %p260 = scmp.eq.s32.totalorder %s30, 0
    %p261 = por %p259, %p260
    %p262 = scmp.ne.s32.totalorder %s250, %s251
    %p263 = scmp.eq.s32.totalorder %s31, 1
    %p264 = por %p262, %p263
    %p266 = scmp.ne.s32.totalorder %s251, %s265
    %p267 = scmp.eq.s32.totalorder %s31, 0
    %p268 = por %p266, %p267
    %s270 = sadd.s32 %s269, 1
    %p273 = scmp.eq.s32.totalorder %s25, 1
    %p274 = scmp.ne.s32.totalorder %s269, %s271
    %p275 = scmp.eq.s32.totalorder %s25, 0
    %p276 = por %p274, %p275
    %p277 = scmp.ne.s32.totalorder %s269, %s271
    %p278 = scmp.eq.s32.totalorder %s30, 1
    %p279 = por %p277, %p278
    %p280 = scmp.ne.s32.totalorder %s271, %s272
    %p281 = scmp.eq.s32.totalorder %s30, 0
    %p282 = por %p280, %p281
    %p283 = scmp.ne.s32.totalorder %s271, %s272
    %p284 = scmp.eq.s32.totalorder %s31, 1
    %p285 = por %p283, %p284
    %p287 = scmp.ne.s32.totalorder %s272, %s286
    %p288 = scmp.eq.s32.totalorder %s31, 0
    %p289 = por %p287, %p288
    %s291 = sadd.s32 %s290, 1
    %p294 = scmp.eq.s32.totalorder %s25, 1
    %p295 = scmp.ne.s32.totalorder %s290, %s292
    %p296 = scmp.eq.s32.totalorder %s25, 0
    %p297 = por %p295, %p296
    %p298 = scmp.ne.s32.totalorder %s290, %s292
    %p299 = scmp.eq.s32.totalorder %s30, 1
    %p300 = por %p298, %p299
    %p301 = scmp.ne.s32.totalorder %s292, %s293
    %p302 = scmp.eq.s32.totalorder %s30, 0
    %p303 = por %p301, %p302
    %p304 = scmp.ne.s32.totalorder %s292, %s293
    %p305 = scmp.eq.s32.totalorder %s31, 1
    %p306 = por %p304, %p305
    %p308 = scmp.ne.s32.totalorder %s293, %s307
    %p309 = scmp.eq.s32.totalorder %s31, 0
    %p310 = por %p308, %p309
    %s312 = sadd.s32 %s311, 1
    %p315 = scmp.eq.s32.totalorder %s25, 1
    %p316 = scmp.ne.s32.totalorder %s311, %s313
    %p317 = scmp.eq.s32.totalorder %s25, 0
    %p318 = por %p316, %p317
    %p319 = scmp.ne.s32.totalorder %s311, %s313
    %p320 = scmp.eq.s32.totalorder %s30, 1
    %p321 = por %p319, %p320
    %p322 = scmp.ne.s32.totalorder %s313, %s314
    %p323 = scmp.eq.s32.totalorder %s30, 0
    %p324 = por %p322, %p323
    %p325 = scmp.ne.s32.totalorder %s313, %s314
    %p326 = scmp.eq.s32.totalorder %s31, 1
    %p327 = por %p325, %p326
    %p329 = scmp.ne.s32.totalorder %s314, %s328
    %p330 = scmp.eq.s32.totalorder %s31, 0
    %p331 = por %p329, %p330
    %s333 = sadd.s32 %s332, 1
    %p336 = scmp.eq.s32.totalorder %s25, 1
    %p337 = scmp.ne.s32.totalorder %s332, %s334
    %p338 = scmp.eq.s32.totalorder %s25, 0
    %p339 = por %p337, %p338
    %p340 = scmp.ne.s32.totalorder %s332, %s334
    %p341 = scmp.eq.s32.totalorder %s30, 1
    %p342 = por %p340, %p341
    %p343 = scmp.ne.s32.totalorder %s334, %s335
    %p344 = scmp.eq.s32.totalorder %s30, 0
    %p345 = por %p343, %p344
    %p346 = scmp.ne.s32.totalorder %s334, %s335
    %p347 = scmp.eq.s32.totalorder %s31, 1
    %p348 = por %p346, %p347
    %p350 = scmp.ne.s32.totalorder %s335, %s349
    %p351 = scmp.eq.s32.totalorder %s31, 0
    %p352 = por %p350, %p351
    %s354 = sadd.s32 %s353, 1
    %p357 = scmp.eq.s32.totalorder %s25, 1
    %p358 = scmp.ne.s32.totalorder %s353, %s355
    %p359 = scmp.eq.s32.totalorder %s25, 0
    %p360 = por %p358, %p359
    %p361 = scmp.ne.s32.totalorder %s353, %s355
    %p362 = scmp.eq.s32.totalorder %s30, 1
    %p363 = por %p361, %p362
    %p364 = scmp.ne.s32.totalorder %s355, %s356
    %p365 = scmp.eq.s32.totalorder %s30, 0
    %p366 = por %p364, %p365
    %p367 = scmp.ne.s32.totalorder %s355, %s356
    %p368 = scmp.eq.s32.totalorder %s31, 1
    %p369 = por %p367, %p368
    %p371 = scmp.ne.s32.totalorder %s356, %s370
    %p372 = scmp.eq.s32.totalorder %s31, 0
    %p373 = por %p371, %p372
    %s375 = sadd.s32 %s374, 1
    %p378 = scmp.eq.s32.totalorder %s25, 1
    %p379 = scmp.ne.s32.totalorder %s374, %s376
    %p380 = scmp.eq.s32.totalorder %s25, 0
    %p381 = por %p379, %p380
    %p382 = scmp.ne.s32.totalorder %s374, %s376
    %p383 = scmp.eq.s32.totalorder %s30, 1
    %p384 = por %p382, %p383
    %p385 = scmp.ne.s32.totalorder %s376, %s377
    %p386 = scmp.eq.s32.totalorder %s30, 0
    %p387 = por %p385, %p386
    %p388 = scmp.ne.s32.totalorder %s376, %s377
    %p389 = scmp.eq.s32.totalorder %s31, 1
    %p390 = por %p388, %p389
    %p392 = scmp.ne.s32.totalorder %s377, %s391
    %p393 = scmp.eq.s32.totalorder %s31, 0
    %p394 = por %p392, %p393
    %s395 = ssub.s32 %s25, %s32
    %p396 = scmp.eq.s32.totalorder %s395, 0
    %s398 = sadd.s32 %s397, 1
    %s399 = scalar_select %p396, %s397, %s398
    %p402 = pneg %p396
    %p403 = scmp.eq.s32.totalorder %s25, 1
    %p404 = por %p402, %p403
    %p405 = scmp.ne.s32.totalorder %s397, %s400
    %p406 = scmp.eq.s32.totalorder %s25, 0
    %p407 = por %p405, %p406
    %p408 = scmp.ne.s32.totalorder %s397, %s400
    %p409 = scmp.eq.s32.totalorder %s30, 1
    %p410 = por %p408, %p409
    %p411 = scmp.ne.s32.totalorder %s400, %s401
    %p412 = scmp.eq.s32.totalorder %s30, 0
    %p413 = por %p411, %p412
    %p414 = scmp.ne.s32.totalorder %s400, %s401
    %p415 = scmp.eq.s32.totalorder %s31, 1
    %p416 = por %p414, %p415
    %p418 = scmp.ne.s32.totalorder %s401, %s417
    %p419 = scmp.eq.s32.totalorder %s31, 0
    %p420 = por %p418, %p419
    %s421 = ssub.s32 %s25, %s32
    %p422 = scmp.eq.s32.totalorder %s421, 0
    %s424 = sadd.s32 %s423, 1
    %s425 = scalar_select %p422, %s423, %s424
    %p428 = pneg %p422
    %p429 = scmp.eq.s32.totalorder %s25, 1
    %p430 = por %p428, %p429
    %p431 = scmp.ne.s32.totalorder %s423, %s426
    %p432 = scmp.eq.s32.totalorder %s25, 0
    %p433 = por %p431, %p432
    %p434 = scmp.ne.s32.totalorder %s423, %s426
    %p435 = scmp.eq.s32.totalorder %s30, 1
    %p436 = por %p434, %p435
    %p437 = scmp.ne.s32.totalorder %s426, %s427
    %p438 = scmp.eq.s32.totalorder %s30, 0
    %p439 = por %p437, %p438
    %p440 = scmp.ne.s32.totalorder %s426, %s427
    %p441 = scmp.eq.s32.totalorder %s31, 1
    %p442 = por %p440, %p441
    %p444 = scmp.ne.s32.totalorder %s427, %s443
    %p445 = scmp.eq.s32.totalorder %s31, 0
    %p446 = por %p444, %p445
    %p447 = scmp.le.s32.totalorder 1, %s25
    %p448 = scmp.lt.s32.totalorder %s25, 3
    %p449 = pnand %p447, %p448
    %p450 = pneg %p449
    // Predicated region
    $region9: #{autoencoder_forward.1} parent=5 // pred_check
      _
    $region10: #{autoencoder_forward.1} parent=5 // pred_check_branch
      %452 = sbr.rel (%p449) target = $region12
    $region11: #{autoencoder_forward.1} parent=5 // pred_region
      %s453 = ssub.s32 %s25, 1
      // Predicated region
      $region13: #{autoencoder_forward.1} parent=11 // pred_check
        %p454 = pneg %p72
      $region14: #{autoencoder_forward.1} parent=11 // pred_check_branch
        %456 = sbr.rel (%p454) target = $region16
      $region15: #{autoencoder_forward.1} parent=11 // pred_region
        _
      $region16: #{autoencoder_forward.1} parent=11 // pred_fallthru
        _
      // Predicated region
      $region17: #{autoencoder_forward.1} parent=11 // pred_check
        %p457 = pneg %p93
      $region18: #{autoencoder_forward.1} parent=11 // pred_check_branch
        %459 = sbr.rel (%p457) target = $region20
      $region19: #{autoencoder_forward.1} parent=11 // pred_region
        _
      $region20: #{autoencoder_forward.1} parent=11 // pred_fallthru
        _
      // Predicated region
      $region21: #{autoencoder_forward.1} parent=11 // pred_check
        %p460 = pneg %p114
      $region22: #{autoencoder_forward.1} parent=11 // pred_check_branch
        %462 = sbr.rel (%p460) target = $region24
      $region23: #{autoencoder_forward.1} parent=11 // pred_region
        _
      $region24: #{autoencoder_forward.1} parent=11 // pred_fallthru
        _
      // Predicated region
      $region25: #{autoencoder_forward.1} parent=11 // pred_check
        %p463 = pneg %p135
      $region26: #{autoencoder_forward.1} parent=11 // pred_check_branch
        %465 = sbr.rel (%p463) target = $region28
      $region27: #{autoencoder_forward.1} parent=11 // pred_region
        _
      $region28: #{autoencoder_forward.1} parent=11 // pred_fallthru
        _
      // Predicated region
      $region29: #{autoencoder_forward.1} parent=11 // pred_check
        %p466 = pneg %p156
      $region30: #{autoencoder_forward.1} parent=11 // pred_check_branch
        %468 = sbr.rel (%p466) target = $region32
      $region31: #{autoencoder_forward.1} parent=11 // pred_region
        _
      $region32: #{autoencoder_forward.1} parent=11 // pred_fallthru
        _
      // Predicated region
      $region33: #{autoencoder_forward.1} parent=11 // pred_check
        %p469 = pneg %p177
      $region34: #{autoencoder_forward.1} parent=11 // pred_check_branch
        %471 = sbr.rel (%p469) target = $region36
      $region35: #{autoencoder_forward.1} parent=11 // pred_region
        _
      $region36: #{autoencoder_forward.1} parent=11 // pred_fallthru
        _
      // Predicated region
      $region37: #{autoencoder_forward.1} parent=11 // pred_check
        %p472 = pneg %p198
      $region38: #{autoencoder_forward.1} parent=11 // pred_check_branch
        %474 = sbr.rel (%p472) target = $region40
      $region39: #{autoencoder_forward.1} parent=11 // pred_region
        _
      $region40: #{autoencoder_forward.1} parent=11 // pred_fallthru
        _
      // Predicated region
      $region41: #{autoencoder_forward.1} parent=11 // pred_check
        %p475 = pneg %p219
      $region42: #{autoencoder_forward.1} parent=11 // pred_check_branch
        %477 = sbr.rel (%p475) target = $region44
      $region43: #{autoencoder_forward.1} parent=11 // pred_region
        _
      $region44: #{autoencoder_forward.1} parent=11 // pred_fallthru
        _
      // Predicated region
      $region45: #{autoencoder_forward.1} parent=11 // pred_check
        %p478 = pneg %p240
      $region46: #{autoencoder_forward.1} parent=11 // pred_check_branch
        %480 = sbr.rel (%p478) target = $region48
      $region47: #{autoencoder_forward.1} parent=11 // pred_region
        _
      $region48: #{autoencoder_forward.1} parent=11 // pred_fallthru
        _
      // Predicated region
      $region49: #{autoencoder_forward.1} parent=11 // pred_check
        %p481 = pneg %p261
      $region50: #{autoencoder_forward.1} parent=11 // pred_check_branch
        %483 = sbr.rel (%p481) target = $region52
      $region51: #{autoencoder_forward.1} parent=11 // pred_region
        _
      $region52: #{autoencoder_forward.1} parent=11 // pred_fallthru
        _
      // Predicated region
      $region53: #{autoencoder_forward.1} parent=11 // pred_check
        %p484 = pneg %p282
      $region54: #{autoencoder_forward.1} parent=11 // pred_check_branch
        %486 = sbr.rel (%p484) target = $region56
      $region55: #{autoencoder_forward.1} parent=11 // pred_region
        _
      $region56: #{autoencoder_forward.1} parent=11 // pred_fallthru
        _
      // Predicated region
      $region57: #{autoencoder_forward.1} parent=11 // pred_check
        %p487 = pneg %p303
      $region58: #{autoencoder_forward.1} parent=11 // pred_check_branch
        %489 = sbr.rel (%p487) target = $region60
      $region59: #{autoencoder_forward.1} parent=11 // pred_region
        _
      $region60: #{autoencoder_forward.1} parent=11 // pred_fallthru
        _
      // Predicated region
      $region61: #{autoencoder_forward.1} parent=11 // pred_check
        %p490 = pneg %p324
      $region62: #{autoencoder_forward.1} parent=11 // pred_check_branch
        %492 = sbr.rel (%p490) target = $region64
      $region63: #{autoencoder_forward.1} parent=11 // pred_region
        _
      $region64: #{autoencoder_forward.1} parent=11 // pred_fallthru
        _
      // Predicated region
      $region65: #{autoencoder_forward.1} parent=11 // pred_check
        %p493 = pneg %p345
      $region66: #{autoencoder_forward.1} parent=11 // pred_check_branch
        %495 = sbr.rel (%p493) target = $region68
      $region67: #{autoencoder_forward.1} parent=11 // pred_region
        _
      $region68: #{autoencoder_forward.1} parent=11 // pred_fallthru
        _
      // Predicated region
      $region69: #{autoencoder_forward.1} parent=11 // pred_check
        %p496 = pneg %p366
      $region70: #{autoencoder_forward.1} parent=11 // pred_check_branch
        %498 = sbr.rel (%p496) target = $region72
      $region71: #{autoencoder_forward.1} parent=11 // pred_region
        _
      $region72: #{autoencoder_forward.1} parent=11 // pred_fallthru
        _
      // Predicated region
      $region73: #{autoencoder_forward.1} parent=11 // pred_check
        %p499 = pneg %p387
      $region74: #{autoencoder_forward.1} parent=11 // pred_check_branch
        %501 = sbr.rel (%p499) target = $region76
      $region75: #{autoencoder_forward.1} parent=11 // pred_region
        _
      $region76: #{autoencoder_forward.1} parent=11 // pred_fallthru
        _
    $region12: #{autoencoder_forward.1} parent=5 // pred_fallthru
      _
    %p502 = scmp.lt.s32.totalorder %s25, 2
    // Predicated region
    $region77: #{autoencoder_forward.1} parent=5 // pred_check
      %p503 = pneg %p502
    $region78: #{autoencoder_forward.1} parent=5 // pred_check_branch
      %505 = sbr.rel (%p503) target = $region80
    $region79: #{autoencoder_forward.1} parent=5 // pred_region
      // Predicated region
      $region81: #{autoencoder_forward.1} parent=79 // pred_check
        %p506 = pneg %p45
      $region82: #{autoencoder_forward.1} parent=79 // pred_check_branch
        %508 = sbr.rel (%p506) target = $region84
      $region83: #{autoencoder_forward.1} parent=79 // pred_region
        %s509 = smul.u32 32, %s25
        %p510 = scmp.lt.s32.totalorder %s509, 63
        %s511 = scalar_select %p510, %s509, 63
        %s512 = smul.addr %s511, 7
        %s513 = smul.addr %s512, 4
        %s514 = scalar_lea.vmem %s0, %s513
        %s515 = smul.u32 32, %s25
      $region84: #{autoencoder_forward.1} parent=79 // pred_fallthru
        _
    $region80: #{autoencoder_forward.1} parent=5 // pred_fallthru
      _
    %p516 = scmp.le.s32.totalorder 1, %s25
    %p517 = scmp.lt.s32.totalorder %s25, 3
    %p518 = pnand %p516, %p517
    %p519 = pneg %p518
    // Predicated region
    $region85: #{autoencoder_forward.1} parent=5 // pred_check
      _
    $region86: #{autoencoder_forward.1} parent=5 // pred_check_branch
      %521 = sbr.rel (%p518) target = $region88
    $region87: #{autoencoder_forward.1} parent=5 // pred_region
      %s522 = ssub.s32 %s25, 1
      %s523 = smul.u32 32, %s30
      %p524 = scmp.lt.s32.totalorder %s523, 63
      %s525 = scalar_select %p524, %s523, 63
      %s526 = smul.addr %s525, 7
      %s527 = smul.addr %s526, 4
      %s528 = scalar_lea.vmem %s0, %s527
      %p529 = pneg %p51
      %p530 = pneg %p48
      %p531 = pneg %p72
      %p532 = pneg %p69
      %p533 = pneg %p93
      %p534 = pneg %p90
      %p535 = pneg %p114
      %p536 = pneg %p111
      %p537 = pneg %p135
      %p538 = pneg %p132
      %p539 = pneg %p156
      %p540 = pneg %p153
      %p541 = pneg %p177
      %p542 = pneg %p174
      %p543 = pneg %p198
      %p544 = pneg %p195
      %p545 = pneg %p219
      %p546 = pneg %p216
      %p547 = pneg %p240
      %p548 = pneg %p237
      %p549 = pneg %p261
      %p550 = pneg %p258
      %p551 = pneg %p282
      %p552 = pneg %p279
      %p553 = pneg %p303
      %p554 = pneg %p300
      %p555 = pneg %p324
      %p556 = pneg %p321
      %p557 = pneg %p345
      %p558 = pneg %p342
      %p559 = pneg %p366
      %p560 = pneg %p363
      %p561 = pneg %p387
      %p562 = pneg %p384
      %p563 = pneg %p413
      %p564 = pneg %p410
      %s565 = smul.u32 32, %s30
      %p566 = scmp.lt.s32.totalorder %s565, 63
      %s567 = scalar_select %p566, %s565, 63
      %s568 = smul.addr %s567, 8
      %s569 = scalar_lea.vmem %s17, %s568
      %p570 = pneg %p439
      %p571 = pneg %p436
      %s572 = smul.u32 32, %s30
      %p573 = scmp.lt.s32.totalorder %s572, 63
      %s574 = scalar_select %p573, %s572, 63
      %s575 = smul.addr %s574, 7
      %s576 = smul.addr %s575, 8
      %s577 = scalar_lea.vmem %s18, %s576
      %s578 = smul.u32 32, %s30
      %p579 = scmp.lt.s32.totalorder %s578, 63
      %s580 = scalar_select %p579, %s578, 63
      %s581 = smul.addr %s580, 7
      %s582 = smul.addr %s581, 4
      %s583 = scalar_lea.vmem %s0, %s582
      %s584 = smul.u32 32, %s30
      %s585 = smul.u32 32, %s30
      %p586 = scmp.lt.s32.totalorder %s585, 63
      %s587 = scalar_select %p586, %s585, 63
      %s588 = smul.addr %s587, 8
      %s589 = scalar_lea.vmem %s17, %s588
      %s590 = smul.u32 32, %s30
      %s591 = smul.u32 32, %s30
      %p592 = scmp.lt.s32.totalorder %s591, 63
      %s593 = scalar_select %p592, %s591, 63
      %s594 = smul.addr %s593, 7
      %s595 = smul.addr %s594, 8
      %s596 = scalar_lea.vmem %s18, %s595
      %s597 = smul.u32 32, %s30
      %v599 = vld [vmem:[%s583] sm:$0xff]
      %v600 = vld [vmem:[%s583 + $0x8] sm:$0xff]
      %v601 = vld [vmem:[%s583 + $0x10] sm:$0xff]
      %v602 = vld [vmem:[%s583 + $0x18] sm:$0xf]
      %v603 = vld [vmem:[%s583 + $0x1c] sm:$0xff]
      %v604 = vld [vmem:[%s583 + $0x24] sm:$0xff]
      %v605 = vld [vmem:[%s583 + $0x2c] sm:$0xff]
      %v606 = vld [vmem:[%s583 + $0x34] sm:$0xf]
      %v607 = vld [vmem:[%s583 + $0x38] sm:$0xff]
      %v608 = vld [vmem:[%s583 + $0x40] sm:$0xff]
      %v609 = vld [vmem:[%s583 + $0x48] sm:$0xff]
      %v610 = vld [vmem:[%s583 + $0x50] sm:$0xf]
      %v611 = vld [vmem:[%s583 + $0x54] sm:$0xff]
      %v612 = vld [vmem:[%s583 + $0x5c] sm:$0xff]
      %v613 = vld [vmem:[%s583 + $0x64] sm:$0xff]
      %v614 = vld [vmem:[%s583 + $0x6c] sm:$0xf]
      %v615 = vld [vmem:[%s583 + $0x70] sm:$0xff]
      %v616 = vld [vmem:[%s583 + $0x78] sm:$0xff]
      %v617 = vld [vmem:[%s583 + $0x80] sm:$0xff]
      %v618 = vld [vmem:[%s583 + $0x88] sm:$0xf]
      %v619 = vld [vmem:[%s583 + $0x8c] sm:$0xff]
      %v620 = vld [vmem:[%s583 + $0x94] sm:$0xff]
      %v621 = vld [vmem:[%s583 + $0x9c] sm:$0xff]
      %v622 = vld [vmem:[%s583 + $0xa4] sm:$0xf]
      %v623 = vld [vmem:[%s583 + $0xa8] sm:$0xff]
      %v624 = vld [vmem:[%s583 + $0xb0] sm:$0xff]
      %v625 = vld [vmem:[%s583 + $0xb8] sm:$0xff]
      %v626 = vld [vmem:[%s583 + $0xc0] sm:$0xf]
      %v627 = vld [vmem:[%s583 + $0xc4] sm:$0xff]
      %v628 = vld [vmem:[%s583 + $0xcc] sm:$0xff]
      %v629 = vld [vmem:[%s583 + $0xd4] sm:$0xff]
      %v630 = vld [vmem:[%s583 + $0xdc] sm:$0xf]
      %v631 = vld [vmem:[%s583 + $0xe0] sm:$0xff]
      %v632 = vld [vmem:[%s583 + $0xe8] sm:$0xff]
      %v633 = vld [vmem:[%s583 + $0xf0] sm:$0xff]
      %v634 = vld [vmem:[%s583 + $0xf8] sm:$0xf]
      %v635 = vld [vmem:[%s583 + $0xfc] sm:$0xff]
      %v636 = vld [vmem:[%s583 + $0x104] sm:$0xff]
      %v637 = vld [vmem:[%s583 + $0x10c] sm:$0xff]
      %v638 = vld [vmem:[%s583 + $0x114] sm:$0xf]
      %v639 = vld [vmem:[%s583 + $0x118] sm:$0xff]
      %v640 = vld [vmem:[%s583 + $0x120] sm:$0xff]
      %v641 = vld [vmem:[%s583 + $0x128] sm:$0xff]
      %v642 = vld [vmem:[%s583 + $0x130] sm:$0xf]
      %v643 = vld [vmem:[%s583 + $0x134] sm:$0xff]
      %v644 = vld [vmem:[%s583 + $0x13c] sm:$0xff]
      %v645 = vld [vmem:[%s583 + $0x144] sm:$0xff]
      %v646 = vld [vmem:[%s583 + $0x14c] sm:$0xf]
      %v647 = vld [vmem:[%s583 + $0x150] sm:$0xff]
      %v648 = vld [vmem:[%s583 + $0x158] sm:$0xff]
      %v649 = vld [vmem:[%s583 + $0x160] sm:$0xff]
      %v650 = vld [vmem:[%s583 + $0x168] sm:$0xf]
      %v651 = vld [vmem:[%s583 + $0x16c] sm:$0xff]
      %v652 = vld [vmem:[%s583 + $0x174] sm:$0xff]
      %v653 = vld [vmem:[%s583 + $0x17c] sm:$0xff]
      %v654 = vld [vmem:[%s583 + $0x184] sm:$0xf]
      %v655 = vld [vmem:[%s583 + $0x188] sm:$0xff]
      %v656 = vld [vmem:[%s583 + $0x190] sm:$0xff]
      %v657 = vld [vmem:[%s583 + $0x198] sm:$0xff]
      %v658 = vld [vmem:[%s583 + $0x1a0] sm:$0xf]
      %v659 = vld [vmem:[%s583 + $0x1a4] sm:$0xff]
      %v660 = vld [vmem:[%s583 + $0x1ac] sm:$0xff]
      %v661 = vld [vmem:[%s583 + $0x1b4] sm:$0xff]
      %v662 = vld [vmem:[%s583 + $0x1bc] sm:$0xf]
      %v663 = vld [vmem:[%s583 + $0x1c0] sm:$0xff]
      %v664 = vld [vmem:[%s583 + $0x1c8] sm:$0xff]
      %v665 = vld [vmem:[%s583 + $0x1d0] sm:$0xff]
      %v666 = vld [vmem:[%s583 + $0x1d8] sm:$0xf]
      %v667 = vld [vmem:[%s583 + $0x1dc] sm:$0xff]
      %v668 = vld [vmem:[%s583 + $0x1e4] sm:$0xff]
      %v669 = vld [vmem:[%s583 + $0x1ec] sm:$0xff]
      %v670 = vld [vmem:[%s583 + $0x1f4] sm:$0xf]
      %v671 = vld [vmem:[%s583 + $0x1f8] sm:$0xff]
      %v672 = vld [vmem:[%s583 + $0x200] sm:$0xff]
      %v673 = vld [vmem:[%s583 + $0x208] sm:$0xff]
      %v674 = vld [vmem:[%s583 + $0x210] sm:$0xf]
      %v675 = vld [vmem:[%s583 + $0x214] sm:$0xff]
      %v676 = vld [vmem:[%s583 + $0x21c] sm:$0xff]
      %v677 = vld [vmem:[%s583 + $0x224] sm:$0xff]
      %v678 = vld [vmem:[%s583 + $0x22c] sm:$0xf]
      %v679 = vld [vmem:[%s583 + $0x230] sm:$0xff]
      %v680 = vld [vmem:[%s583 + $0x238] sm:$0xff]
      %v681 = vld [vmem:[%s583 + $0x240] sm:$0xff]
      %v682 = vld [vmem:[%s583 + $0x248] sm:$0xf]
      %v683 = vld [vmem:[%s583 + $0x24c] sm:$0xff]
      %v684 = vld [vmem:[%s583 + $0x254] sm:$0xff]
      %v685 = vld [vmem:[%s583 + $0x25c] sm:$0xff]
      %v686 = vld [vmem:[%s583 + $0x264] sm:$0xf]
      %v687 = vld [vmem:[%s583 + $0x268] sm:$0xff]
      %v688 = vld [vmem:[%s583 + $0x270] sm:$0xff]
      %v689 = vld [vmem:[%s583 + $0x278] sm:$0xff]
      %v690 = vld [vmem:[%s583 + $0x280] sm:$0xf]
      %v691 = vld [vmem:[%s583 + $0x284] sm:$0xff]
      %v692 = vld [vmem:[%s583 + $0x28c] sm:$0xff]
      %v693 = vld [vmem:[%s583 + $0x294] sm:$0xff]
      %v694 = vld [vmem:[%s583 + $0x29c] sm:$0xf]
      %v695 = vld [vmem:[%s583 + $0x2a0] sm:$0xff]
      %v696 = vld [vmem:[%s583 + $0x2a8] sm:$0xff]
      %v697 = vld [vmem:[%s583 + $0x2b0] sm:$0xff]
      %v698 = vld [vmem:[%s583 + $0x2b8] sm:$0xf]
      %v699 = vld [vmem:[%s583 + $0x2bc] sm:$0xff]
      %v700 = vld [vmem:[%s583 + $0x2c4] sm:$0xff]
      %v701 = vld [vmem:[%s583 + $0x2cc] sm:$0xff]
      %v702 = vld [vmem:[%s583 + $0x2d4] sm:$0xf]
      %v703 = vld [vmem:[%s583 + $0x2d8] sm:$0xff]
      %v704 = vld [vmem:[%s583 + $0x2e0] sm:$0xff]
      %v705 = vld [vmem:[%s583 + $0x2e8] sm:$0xff]
      %v706 = vld [vmem:[%s583 + $0x2f0] sm:$0xf]
      %v707 = vld [vmem:[%s583 + $0x2f4] sm:$0xff]
      %v708 = vld [vmem:[%s583 + $0x2fc] sm:$0xff]
      %v709 = vld [vmem:[%s583 + $0x304] sm:$0xff]
      %v710 = vld [vmem:[%s583 + $0x30c] sm:$0xf]
      %v711 = vld [vmem:[%s583 + $0x310] sm:$0xff]
      %v712 = vld [vmem:[%s583 + $0x318] sm:$0xff]
      %v713 = vld [vmem:[%s583 + $0x320] sm:$0xff]
      %v714 = vld [vmem:[%s583 + $0x328] sm:$0xf]
      %v715 = vld [vmem:[%s583 + $0x32c] sm:$0xff]
      %v716 = vld [vmem:[%s583 + $0x334] sm:$0xff]
      %v717 = vld [vmem:[%s583 + $0x33c] sm:$0xff]
      %v718 = vld [vmem:[%s583 + $0x344] sm:$0xf]
      %v719 = vld [vmem:[%s583 + $0x348] sm:$0xff]
      %v720 = vld [vmem:[%s583 + $0x350] sm:$0xff]
      %v721 = vld [vmem:[%s583 + $0x358] sm:$0xff]
      %v722 = vld [vmem:[%s583 + $0x360] sm:$0xf]
      %v723 = vld [vmem:[%s583 + $0x364] sm:$0xff]
      %v724 = vld [vmem:[%s583 + $0x36c] sm:$0xff]
      %v725 = vld [vmem:[%s583 + $0x374] sm:$0xff]
      %v726 = vld [vmem:[%s583 + $0x37c] sm:$0xf]
      %v727 = vld [vmem:[%s1] sm:$0xf]
      %v728 = vld [vmem:[%s1 + $0x4] sm:$0xf]
      %v729 = vld [vmem:[%s1 + $0x8] sm:$0xf]
      %v730 = vld [vmem:[%s1 + $0xc] sm:$0xf]
      %v731 = vld [vmem:[%s1 + $0x10] sm:$0xf]
      %v732 = vld [vmem:[%s1 + $0x14] sm:$0xf]
      %v733 = vld [vmem:[%s1 + $0x18] sm:$0xf]
      %v734 = vld [vmem:[%s1 + $0x1c] sm:$0xf]
      %v735 = vld [vmem:[%s1 + $0x20] sm:$0xf]
      %v736 = vld [vmem:[%s1 + $0x24] sm:$0xf]
      %v737 = vld [vmem:[%s1 + $0x28] sm:$0xf]
      %v738 = vld [vmem:[%s1 + $0x2c] sm:$0xf]
      %v739 = vld [vmem:[%s1 + $0x30] sm:$0xf]
      %v740 = vld [vmem:[%s1 + $0x34] sm:$0xf]
      %v741 = vld [vmem:[%s1 + $0x38] sm:$0xf]
      %v742 = vld [vmem:[%s1 + $0x3c] sm:$0xf]
      %v743 = vld [vmem:[%s1 + $0x40] sm:$0xf]
      %v744 = vld [vmem:[%s1 + $0x44] sm:$0xf]
      %v745 = vld [vmem:[%s1 + $0x48] sm:$0xf]
      %v746 = vld [vmem:[%s1 + $0x4c] sm:$0xf]
      %v747 = vld [vmem:[%s1 + $0x50] sm:$0xf]
      %v748 = vld [vmem:[%s1 + $0x54] sm:$0xf]
      %v749 = vld [vmem:[%s1 + $0x58] sm:$0xf]
      %v750 = vld [vmem:[%s1 + $0x5c] sm:$0xf]
      %v751 = vld [vmem:[%s1 + $0x60] sm:$0xf]
      %v752 = vld [vmem:[%s1 + $0x64] sm:$0xf]
      %v753 = vld [vmem:[%s1 + $0x68] sm:$0xf]
      %v754 = vld [vmem:[%s1 + $0x6c] sm:$0xf]
      %v755 = vld [vmem:[%s1 + $0x70] sm:$0xf]
      %v756 = vld [vmem:[%s1 + $0x74] sm:$0xf]
      %v757 = vld [vmem:[%s1 + $0x78] sm:$0xf]
      %v758 = vld [vmem:[%s1 + $0x7c] sm:$0xf]
      %v759 = vld [vmem:[%s1 + $0x80] sm:$0xf]
      %v760 = vld [vmem:[%s1 + $0x84] sm:$0xf]
      %v761 = vld [vmem:[%s1 + $0x88] sm:$0xf]
      %v762 = vld [vmem:[%s1 + $0x8c] sm:$0xf]
      %v763 = vld [vmem:[%s1 + $0x90] sm:$0xf]
      %v764 = vld [vmem:[%s1 + $0x94] sm:$0xf]
      %v765 = vld [vmem:[%s1 + $0x98] sm:$0xf]
      %v766 = vld [vmem:[%s1 + $0x9c] sm:$0xf]
      %v767 = vld [vmem:[%s1 + $0xa0] sm:$0xf]
      %v768 = vld [vmem:[%s1 + $0xa4] sm:$0xf]
      %v769 = vld [vmem:[%s1 + $0xa8] sm:$0xf]
      %v770 = vld [vmem:[%s1 + $0xac] sm:$0xf]
      %v771 = vld [vmem:[%s1 + $0xb0] sm:$0xf]
      %v772 = vld [vmem:[%s1 + $0xb4] sm:$0xf]
      %v773 = vld [vmem:[%s1 + $0xb8] sm:$0xf]
      %v774 = vld [vmem:[%s1 + $0xbc] sm:$0xf]
      %v775 = vld [vmem:[%s1 + $0xc0] sm:$0xf]
      %v776 = vld [vmem:[%s1 + $0xc4] sm:$0xf]
      %v777 = vld [vmem:[%s1 + $0xc8] sm:$0xf]
      %v778 = vld [vmem:[%s1 + $0xcc] sm:$0xf]
      %v779 = vld [vmem:[%s1 + $0xd0] sm:$0xf]
      %v780 = vld [vmem:[%s1 + $0xd4] sm:$0xf]
      %v781 = vld [vmem:[%s1 + $0xd8] sm:$0xf]
      %v782 = vld [vmem:[%s1 + $0xdc] sm:$0xf]
      %v783 = vld [vmem:[%s1 + $0xe0] sm:$0xf]
      %v784 = vld [vmem:[%s1 + $0xe4] sm:$0xf]
      %v785 = vld [vmem:[%s1 + $0xe8] sm:$0xf]
      %v786 = vld [vmem:[%s1 + $0xec] sm:$0xf]
      %v787 = vld [vmem:[%s1 + $0xf0] sm:$0xf]
      %v788 = vld [vmem:[%s1 + $0xf4] sm:$0xf]
      %v789 = vld [vmem:[%s1 + $0xf8] sm:$0xf]
      %v790 = vld [vmem:[%s1 + $0xfc] sm:$0xf]
      %v791 = vld [vmem:[%s1 + $0x100] sm:$0xf]
      %v792 = vld [vmem:[%s1 + $0x104] sm:$0xf]
      %v793 = vld [vmem:[%s1 + $0x108] sm:$0xf]
      %v794 = vld [vmem:[%s1 + $0x10c] sm:$0xf]
      %v795 = vld [vmem:[%s1 + $0x110] sm:$0xf]
      %v796 = vld [vmem:[%s1 + $0x114] sm:$0xf]
      %v797 = vld [vmem:[%s1 + $0x118] sm:$0xf]
      %v798 = vld [vmem:[%s1 + $0x11c] sm:$0xf]
      %v799 = vld [vmem:[%s1 + $0x120] sm:$0xf]
      %v800 = vld [vmem:[%s1 + $0x124] sm:$0xf]
      %v801 = vld [vmem:[%s1 + $0x128] sm:$0xf]
      %v802 = vld [vmem:[%s1 + $0x12c] sm:$0xf]
      %v803 = vld [vmem:[%s1 + $0x130] sm:$0xf]
      %v804 = vld [vmem:[%s1 + $0x134] sm:$0xf]
      %v805 = vld [vmem:[%s1 + $0x138] sm:$0xf]
      %v806 = vld [vmem:[%s1 + $0x13c] sm:$0xf]
      %v807 = vld [vmem:[%s1 + $0x140] sm:$0xf]
      %v808 = vld [vmem:[%s1 + $0x144] sm:$0xf]
      %v809 = vld [vmem:[%s1 + $0x148] sm:$0xf]
      %v810 = vld [vmem:[%s1 + $0x14c] sm:$0xf]
      %v811 = vld [vmem:[%s1 + $0x150] sm:$0xf]
      %v812 = vld [vmem:[%s1 + $0x154] sm:$0xf]
      %v813 = vld [vmem:[%s1 + $0x158] sm:$0xf]
      %v814 = vld [vmem:[%s1 + $0x15c] sm:$0xf]
      %v815 = vld [vmem:[%s1 + $0x160] sm:$0xf]
      %v816 = vld [vmem:[%s1 + $0x164] sm:$0xf]
      %v817 = vld [vmem:[%s1 + $0x168] sm:$0xf]
      %v818 = vld [vmem:[%s1 + $0x16c] sm:$0xf]
      %v819 = vld [vmem:[%s1 + $0x170] sm:$0xf]
      %v820 = vld [vmem:[%s1 + $0x174] sm:$0xf]
      %v821 = vld [vmem:[%s1 + $0x178] sm:$0xf]
      %v822 = vld [vmem:[%s1 + $0x17c] sm:$0xf]
      %v823 = vld [vmem:[%s1 + $0x180] sm:$0xf]
      %v824 = vld [vmem:[%s1 + $0x184] sm:$0xf]
      %v825 = vld [vmem:[%s1 + $0x188] sm:$0xf]
      %v826 = vld [vmem:[%s1 + $0x18c] sm:$0xf]
      %v827 = vld [vmem:[%s1 + $0x190] sm:$0xf]
      %v828 = vld [vmem:[%s1 + $0x194] sm:$0xf]
      %v829 = vld [vmem:[%s1 + $0x198] sm:$0xf]
      %v830 = vld [vmem:[%s1 + $0x19c] sm:$0xf]
      %v831 = vld [vmem:[%s1 + $0x1a0] sm:$0xf]
      %v832 = vld [vmem:[%s1 + $0x1a4] sm:$0xf]
      %v833 = vld [vmem:[%s1 + $0x1a8] sm:$0xf]
      %v834 = vld [vmem:[%s1 + $0x1ac] sm:$0xf]
      %v835 = vld [vmem:[%s1 + $0x1b0] sm:$0xf]
      %v836 = vld [vmem:[%s1 + $0x1b4] sm:$0xf]
      %v837 = vld [vmem:[%s1 + $0x1b8] sm:$0xf]
      %v838 = vld [vmem:[%s1 + $0x1bc] sm:$0xf]
      %v839 = vld [vmem:[%s2] sm:$0x1]
      %v841 = vlaneseq
      %v842 = vshrl.u32 %v841, 7
      %v843 = vsub.s32 0, %v842
      %v844 = vrot.slane %v839, %v843
      %v974 = vunpack.c.l.b16 %v599
      %v975 = vunpack.c.h.b16 %v599
      %v976 = vunpack.c.l.b16 %v600
      %v977 = vunpack.c.h.b16 %v600
      %v978 = vunpack.c.l.b16 %v601
      %v979 = vunpack.c.h.b16 %v601
      %v980 = vunpack.c.l.b16 %v602
      %v981 = vunpack.c.l.b16 %v603
      %v982 = vunpack.c.h.b16 %v603
      %v983 = vunpack.c.l.b16 %v604
      %v984 = vunpack.c.h.b16 %v604
      %v985 = vunpack.c.l.b16 %v605
      %v986 = vunpack.c.h.b16 %v605
      %v987 = vunpack.c.l.b16 %v606
      %v988 = vunpack.c.l.b16 %v607
      %v989 = vunpack.c.h.b16 %v607
      %v990 = vunpack.c.l.b16 %v608
      %v991 = vunpack.c.h.b16 %v608
      %v992 = vunpack.c.l.b16 %v609
      %v993 = vunpack.c.h.b16 %v609
      %v994 = vunpack.c.l.b16 %v610
      %v995 = vunpack.c.l.b16 %v611
      %v996 = vunpack.c.h.b16 %v611
      %v997 = vunpack.c.l.b16 %v612
      %v998 = vunpack.c.h.b16 %v612
      %v999 = vunpack.c.l.b16 %v613
      %v1000 = vunpack.c.h.b16 %v613
      %v1001 = vunpack.c.l.b16 %v614
      %v1002 = vunpack.c.l.b16 %v615
      %v1003 = vunpack.c.h.b16 %v615
      %v1004 = vunpack.c.l.b16 %v616
      %v1005 = vunpack.c.h.b16 %v616
      %v1006 = vunpack.c.l.b16 %v617
      %v1007 = vunpack.c.h.b16 %v617
      %v1008 = vunpack.c.l.b16 %v618
      %v1009 = vunpack.c.l.b16 %v619
      %v1010 = vunpack.c.h.b16 %v619
      %v1011 = vunpack.c.l.b16 %v620
      %v1012 = vunpack.c.h.b16 %v620
      %v1013 = vunpack.c.l.b16 %v621
      %v1014 = vunpack.c.h.b16 %v621
      %v1015 = vunpack.c.l.b16 %v622
      %v1016 = vunpack.c.l.b16 %v623
      %v1017 = vunpack.c.h.b16 %v623
      %v1018 = vunpack.c.l.b16 %v624
      %v1019 = vunpack.c.h.b16 %v624
      %v1020 = vunpack.c.l.b16 %v625
      %v1021 = vunpack.c.h.b16 %v625
      %v1022 = vunpack.c.l.b16 %v626
      %v1023 = vunpack.c.l.b16 %v627
      %v1024 = vunpack.c.h.b16 %v627
      %v1025 = vunpack.c.l.b16 %v628
      %v1026 = vunpack.c.h.b16 %v628
      %v1027 = vunpack.c.l.b16 %v629
      %v1028 = vunpack.c.h.b16 %v629
      %v1029 = vunpack.c.l.b16 %v630
      %v1030 = vunpack.c.l.b16 %v631
      %v1031 = vunpack.c.h.b16 %v631
      %v1032 = vunpack.c.l.b16 %v632
      %v1033 = vunpack.c.h.b16 %v632
      %v1034 = vunpack.c.l.b16 %v633
      %v1035 = vunpack.c.h.b16 %v633
      %v1036 = vunpack.c.l.b16 %v634
      %v1037 = vunpack.c.l.b16 %v635
      %v1038 = vunpack.c.h.b16 %v635
      %v1039 = vunpack.c.l.b16 %v636
      %v1040 = vunpack.c.h.b16 %v636
      %v1041 = vunpack.c.l.b16 %v637
      %v1042 = vunpack.c.h.b16 %v637
      %v1043 = vunpack.c.l.b16 %v638
      %v1044 = vunpack.c.l.b16 %v639
      %v1045 = vunpack.c.h.b16 %v639
      %v1046 = vunpack.c.l.b16 %v640
      %v1047 = vunpack.c.h.b16 %v640
      %v1048 = vunpack.c.l.b16 %v641
      %v1049 = vunpack.c.h.b16 %v641
      %v1050 = vunpack.c.l.b16 %v642
      %v1051 = vunpack.c.l.b16 %v643
      %v1052 = vunpack.c.h.b16 %v643
      %v1053 = vunpack.c.l.b16 %v644
      %v1054 = vunpack.c.h.b16 %v644
      %v1055 = vunpack.c.l.b16 %v645
      %v1056 = vunpack.c.h.b16 %v645
      %v1057 = vunpack.c.l.b16 %v646
      %v1058 = vunpack.c.l.b16 %v647
      %v1059 = vunpack.c.h.b16 %v647
      %v1060 = vunpack.c.l.b16 %v648
      %v1061 = vunpack.c.h.b16 %v648
      %v1062 = vunpack.c.l.b16 %v649
      %v1063 = vunpack.c.h.b16 %v649
      %v1064 = vunpack.c.l.b16 %v650
      %v1065 = vunpack.c.l.b16 %v651
      %v1066 = vunpack.c.h.b16 %v651
      %v1067 = vunpack.c.l.b16 %v652
      %v1068 = vunpack.c.h.b16 %v652
      %v1069 = vunpack.c.l.b16 %v653
      %v1070 = vunpack.c.h.b16 %v653
      %v1071 = vunpack.c.l.b16 %v654
      %v1072 = vunpack.c.l.b16 %v655
      %v1073 = vunpack.c.h.b16 %v655
      %v1074 = vunpack.c.l.b16 %v656
      %v1075 = vunpack.c.h.b16 %v656
      %v1076 = vunpack.c.l.b16 %v657
      %v1077 = vunpack.c.h.b16 %v657
      %v1078 = vunpack.c.l.b16 %v658
      %v1079 = vunpack.c.l.b16 %v659
      %v1080 = vunpack.c.h.b16 %v659
      %v1081 = vunpack.c.l.b16 %v660
      %v1082 = vunpack.c.h.b16 %v660
      %v1083 = vunpack.c.l.b16 %v661
      %v1084 = vunpack.c.h.b16 %v661
      %v1085 = vunpack.c.l.b16 %v662
      %v1086 = vunpack.c.l.b16 %v663
      %v1087 = vunpack.c.h.b16 %v663
      %v1088 = vunpack.c.l.b16 %v664
      %v1089 = vunpack.c.h.b16 %v664
      %v1090 = vunpack.c.l.b16 %v665
      %v1091 = vunpack.c.h.b16 %v665
      %v1092 = vunpack.c.l.b16 %v666
      %v1093 = vunpack.c.l.b16 %v667
      %v1094 = vunpack.c.h.b16 %v667
      %v1095 = vunpack.c.l.b16 %v668
      %v1096 = vunpack.c.h.b16 %v668
      %v1097 = vunpack.c.l.b16 %v669
      %v1098 = vunpack.c.h.b16 %v669
      %v1099 = vunpack.c.l.b16 %v670
      %v1100 = vunpack.c.l.b16 %v671
      %v1101 = vunpack.c.h.b16 %v671
      %v1102 = vunpack.c.l.b16 %v672
      %v1103 = vunpack.c.h.b16 %v672
      %v1104 = vunpack.c.l.b16 %v673
      %v1105 = vunpack.c.h.b16 %v673
      %v1106 = vunpack.c.l.b16 %v674
      %v1107 = vunpack.c.l.b16 %v675
      %v1108 = vunpack.c.h.b16 %v675
      %v1109 = vunpack.c.l.b16 %v676
      %v1110 = vunpack.c.h.b16 %v676
      %v1111 = vunpack.c.l.b16 %v677
      %v1112 = vunpack.c.h.b16 %v677
      %v1113 = vunpack.c.l.b16 %v678
      %v1114 = vunpack.c.l.b16 %v679
      %v1115 = vunpack.c.h.b16 %v679
      %v1116 = vunpack.c.l.b16 %v680
      %v1117 = vunpack.c.h.b16 %v680
      %v1118 = vunpack.c.l.b16 %v681
      %v1119 = vunpack.c.h.b16 %v681
      %v1120 = vunpack.c.l.b16 %v682
      %v1121 = vunpack.c.l.b16 %v683
      %v1122 = vunpack.c.h.b16 %v683
      %v1123 = vunpack.c.l.b16 %v684
      %v1124 = vunpack.c.h.b16 %v684
      %v1125 = vunpack.c.l.b16 %v685
      %v1126 = vunpack.c.h.b16 %v685
      %v1127 = vunpack.c.l.b16 %v686
      %v1128 = vunpack.c.l.b16 %v687
      %v1129 = vunpack.c.h.b16 %v687
      %v1130 = vunpack.c.l.b16 %v688
      %v1131 = vunpack.c.h.b16 %v688
      %v1132 = vunpack.c.l.b16 %v689
      %v1133 = vunpack.c.h.b16 %v689
      %v1134 = vunpack.c.l.b16 %v690
      %v1135 = vunpack.c.l.b16 %v691
      %v1136 = vunpack.c.h.b16 %v691
      %v1137 = vunpack.c.l.b16 %v692
      %v1138 = vunpack.c.h.b16 %v692
      %v1139 = vunpack.c.l.b16 %v693
      %v1140 = vunpack.c.h.b16 %v693
      %v1141 = vunpack.c.l.b16 %v694
      %v1142 = vunpack.c.l.b16 %v695
      %v1143 = vunpack.c.h.b16 %v695
      %v1144 = vunpack.c.l.b16 %v696
      %v1145 = vunpack.c.h.b16 %v696
      %v1146 = vunpack.c.l.b16 %v697
      %v1147 = vunpack.c.h.b16 %v697
      %v1148 = vunpack.c.l.b16 %v698
      %v1149 = vunpack.c.l.b16 %v699
      %v1150 = vunpack.c.h.b16 %v699
      %v1151 = vunpack.c.l.b16 %v700
      %v1152 = vunpack.c.h.b16 %v700
      %v1153 = vunpack.c.l.b16 %v701
      %v1154 = vunpack.c.h.b16 %v701
      %v1155 = vunpack.c.l.b16 %v702
      %v1156 = vunpack.c.l.b16 %v703
      %v1157 = vunpack.c.h.b16 %v703
      %v1158 = vunpack.c.l.b16 %v704
      %v1159 = vunpack.c.h.b16 %v704
      %v1160 = vunpack.c.l.b16 %v705
      %v1161 = vunpack.c.h.b16 %v705
      %v1162 = vunpack.c.l.b16 %v706
      %v1163 = vunpack.c.l.b16 %v707
      %v1164 = vunpack.c.h.b16 %v707
      %v1165 = vunpack.c.l.b16 %v708
      %v1166 = vunpack.c.h.b16 %v708
      %v1167 = vunpack.c.l.b16 %v709
      %v1168 = vunpack.c.h.b16 %v709
      %v1169 = vunpack.c.l.b16 %v710
      %v1170 = vunpack.c.l.b16 %v711
      %v1171 = vunpack.c.h.b16 %v711
      %v1172 = vunpack.c.l.b16 %v712
      %v1173 = vunpack.c.h.b16 %v712
      %v1174 = vunpack.c.l.b16 %v713
      %v1175 = vunpack.c.h.b16 %v713
      %v1176 = vunpack.c.l.b16 %v714
      %v1177 = vunpack.c.l.b16 %v715
      %v1178 = vunpack.c.h.b16 %v715
      %v1179 = vunpack.c.l.b16 %v716
      %v1180 = vunpack.c.h.b16 %v716
      %v1181 = vunpack.c.l.b16 %v717
      %v1182 = vunpack.c.h.b16 %v717
      %v1183 = vunpack.c.l.b16 %v718
      %v1184 = vunpack.c.l.b16 %v719
      %v1185 = vunpack.c.h.b16 %v719
      %v1186 = vunpack.c.l.b16 %v720
      %v1187 = vunpack.c.h.b16 %v720
      %v1188 = vunpack.c.l.b16 %v721
      %v1189 = vunpack.c.h.b16 %v721
      %v1190 = vunpack.c.l.b16 %v722
      %v1191 = vunpack.c.l.b16 %v723
      %v1192 = vunpack.c.h.b16 %v723
      %v1193 = vunpack.c.l.b16 %v724
      %v1194 = vunpack.c.h.b16 %v724
      %v1195 = vunpack.c.l.b16 %v725
      %v1196 = vunpack.c.h.b16 %v725
      %v1197 = vunpack.c.l.b16 %v726
      %v1198 = vpack.c.b16 %v981, %v974
      %v1199 = vpack.c.b16 %v982, %v975
      %v1200 = vpack.c.b16 %v983, %v976
      %v1201 = vpack.c.b16 %v984, %v977
      %v1202 = vpack.c.b16 %v985, %v978
      %v1203 = vpack.c.b16 %v986, %v979
      %v1204 = vpack.c.b16 %v987, %v980
      %v1205 = vpack.c.b16 %v995, %v988
      %v1206 = vpack.c.b16 %v996, %v989
      %v1207 = vpack.c.b16 %v997, %v990
      %v1208 = vpack.c.b16 %v998, %v991
      %v1209 = vpack.c.b16 %v999, %v992
      %v1210 = vpack.c.b16 %v1000, %v993
      %v1211 = vpack.c.b16 %v1001, %v994
      %v1212 = vpack.c.b16 %v1009, %v1002
      %v1213 = vpack.c.b16 %v1010, %v1003
      %v1214 = vpack.c.b16 %v1011, %v1004
      %v1215 = vpack.c.b16 %v1012, %v1005
      %v1216 = vpack.c.b16 %v1013, %v1006
      %v1217 = vpack.c.b16 %v1014, %v1007
      %v1218 = vpack.c.b16 %v1015, %v1008
      %v1219 = vpack.c.b16 %v1023, %v1016
      %v1220 = vpack.c.b16 %v1024, %v1017
      %v1221 = vpack.c.b16 %v1025, %v1018
      %v1222 = vpack.c.b16 %v1026, %v1019
      %v1223 = vpack.c.b16 %v1027, %v1020
      %v1224 = vpack.c.b16 %v1028, %v1021
      %v1225 = vpack.c.b16 %v1029, %v1022
      %v1226 = vpack.c.b16 %v1037, %v1030
      %v1227 = vpack.c.b16 %v1038, %v1031
      %v1228 = vpack.c.b16 %v1039, %v1032
      %v1229 = vpack.c.b16 %v1040, %v1033
      %v1230 = vpack.c.b16 %v1041, %v1034
      %v1231 = vpack.c.b16 %v1042, %v1035
      %v1232 = vpack.c.b16 %v1043, %v1036
      %v1233 = vpack.c.b16 %v1051, %v1044
      %v1234 = vpack.c.b16 %v1052, %v1045
      %v1235 = vpack.c.b16 %v1053, %v1046
      %v1236 = vpack.c.b16 %v1054, %v1047
      %v1237 = vpack.c.b16 %v1055, %v1048
      %v1238 = vpack.c.b16 %v1056, %v1049
      %v1239 = vpack.c.b16 %v1057, %v1050
      %v1240 = vpack.c.b16 %v1065, %v1058
      %v1241 = vpack.c.b16 %v1066, %v1059
      %v1242 = vpack.c.b16 %v1067, %v1060
      %v1243 = vpack.c.b16 %v1068, %v1061
      %v1244 = vpack.c.b16 %v1069, %v1062
      %v1245 = vpack.c.b16 %v1070, %v1063
      %v1246 = vpack.c.b16 %v1071, %v1064
      %v1247 = vpack.c.b16 %v1079, %v1072
      %v1248 = vpack.c.b16 %v1080, %v1073
      %v1249 = vpack.c.b16 %v1081, %v1074
      %v1250 = vpack.c.b16 %v1082, %v1075
      %v1251 = vpack.c.b16 %v1083, %v1076
      %v1252 = vpack.c.b16 %v1084, %v1077
      %v1253 = vpack.c.b16 %v1085, %v1078
      %v1254 = vpack.c.b16 %v1093, %v1086
      %v1255 = vpack.c.b16 %v1094, %v1087
      %v1256 = vpack.c.b16 %v1095, %v1088
      %v1257 = vpack.c.b16 %v1096, %v1089
      %v1258 = vpack.c.b16 %v1097, %v1090
      %v1259 = vpack.c.b16 %v1098, %v1091
      %v1260 = vpack.c.b16 %v1099, %v1092
      %v1261 = vpack.c.b16 %v1107, %v1100
      %v1262 = vpack.c.b16 %v1108, %v1101
      %v1263 = vpack.c.b16 %v1109, %v1102
      %v1264 = vpack.c.b16 %v1110, %v1103
      %v1265 = vpack.c.b16 %v1111, %v1104
      %v1266 = vpack.c.b16 %v1112, %v1105
      %v1267 = vpack.c.b16 %v1113, %v1106
      %v1268 = vpack.c.b16 %v1121, %v1114
      %v1269 = vpack.c.b16 %v1122, %v1115
      %v1270 = vpack.c.b16 %v1123, %v1116
      %v1271 = vpack.c.b16 %v1124, %v1117
      %v1272 = vpack.c.b16 %v1125, %v1118
      %v1273 = vpack.c.b16 %v1126, %v1119
      %v1274 = vpack.c.b16 %v1127, %v1120
      %v1275 = vpack.c.b16 %v1135, %v1128
      %v1276 = vpack.c.b16 %v1136, %v1129
      %v1277 = vpack.c.b16 %v1137, %v1130
      %v1278 = vpack.c.b16 %v1138, %v1131
      %v1279 = vpack.c.b16 %v1139, %v1132
      %v1280 = vpack.c.b16 %v1140, %v1133
      %v1281 = vpack.c.b16 %v1141, %v1134
      %v1282 = vpack.c.b16 %v1149, %v1142
      %v1283 = vpack.c.b16 %v1150, %v1143
      %v1284 = vpack.c.b16 %v1151, %v1144
      %v1285 = vpack.c.b16 %v1152, %v1145
      %v1286 = vpack.c.b16 %v1153, %v1146
      %v1287 = vpack.c.b16 %v1154, %v1147
      %v1288 = vpack.c.b16 %v1155, %v1148
      %v1289 = vpack.c.b16 %v1163, %v1156
      %v1290 = vpack.c.b16 %v1164, %v1157
      %v1291 = vpack.c.b16 %v1165, %v1158
      %v1292 = vpack.c.b16 %v1166, %v1159
      %v1293 = vpack.c.b16 %v1167, %v1160
      %v1294 = vpack.c.b16 %v1168, %v1161
      %v1295 = vpack.c.b16 %v1169, %v1162
      %v1296 = vpack.c.b16 %v1177, %v1170
      %v1297 = vpack.c.b16 %v1178, %v1171
      %v1298 = vpack.c.b16 %v1179, %v1172
      %v1299 = vpack.c.b16 %v1180, %v1173
      %v1300 = vpack.c.b16 %v1181, %v1174
      %v1301 = vpack.c.b16 %v1182, %v1175
      %v1302 = vpack.c.b16 %v1183, %v1176
      %v1303 = vpack.c.b16 %v1191, %v1184
      %v1304 = vpack.c.b16 %v1192, %v1185
      %v1305 = vpack.c.b16 %v1193, %v1186
      %v1306 = vpack.c.b16 %v1194, %v1187
      %v1307 = vpack.c.b16 %v1195, %v1188
      %v1308 = vpack.c.b16 %v1196, %v1189
      %v1309 = vpack.c.b16 %v1197, %v1190
      %v1534 = vunpack.c.l.b16 %v727
      %v1535 = vunpack.c.l.b16 %v728
      %v1536 = vunpack.c.l.b16 %v729
      %v1537 = vunpack.c.l.b16 %v730
      %v1538 = vunpack.c.l.b16 %v731
      %v1539 = vunpack.c.l.b16 %v732
      %v1540 = vunpack.c.l.b16 %v733
      %v1541 = vunpack.c.l.b16 %v734
      %v1542 = vunpack.c.l.b16 %v735
      %v1543 = vunpack.c.l.b16 %v736
      %v1544 = vunpack.c.l.b16 %v737
      %v1545 = vunpack.c.l.b16 %v738
      %v1546 = vunpack.c.l.b16 %v739
      %v1547 = vunpack.c.l.b16 %v740
      %v1548 = vunpack.c.l.b16 %v741
      %v1549 = vunpack.c.l.b16 %v742
      %v1550 = vunpack.c.l.b16 %v743
      %v1551 = vunpack.c.l.b16 %v744
      %v1552 = vunpack.c.l.b16 %v745
      %v1553 = vunpack.c.l.b16 %v746
      %v1554 = vunpack.c.l.b16 %v747
      %v1555 = vunpack.c.l.b16 %v748
      %v1556 = vunpack.c.l.b16 %v749
      %v1557 = vunpack.c.l.b16 %v750
      %v1558 = vunpack.c.l.b16 %v751
      %v1559 = vunpack.c.l.b16 %v752
      %v1560 = vunpack.c.l.b16 %v753
      %v1561 = vunpack.c.l.b16 %v754
      %v1562 = vunpack.c.l.b16 %v755
      %v1563 = vunpack.c.l.b16 %v756
      %v1564 = vunpack.c.l.b16 %v757
      %v1565 = vunpack.c.l.b16 %v758
      %v1566 = vunpack.c.l.b16 %v759
      %v1567 = vunpack.c.l.b16 %v760
      %v1568 = vunpack.c.l.b16 %v761
      %v1569 = vunpack.c.l.b16 %v762
      %v1570 = vunpack.c.l.b16 %v763
      %v1571 = vunpack.c.l.b16 %v764
      %v1572 = vunpack.c.l.b16 %v765
      %v1573 = vunpack.c.l.b16 %v766
      %v1574 = vunpack.c.l.b16 %v767
      %v1575 = vunpack.c.l.b16 %v768
      %v1576 = vunpack.c.l.b16 %v769
      %v1577 = vunpack.c.l.b16 %v770
      %v1578 = vunpack.c.l.b16 %v771
      %v1579 = vunpack.c.l.b16 %v772
      %v1580 = vunpack.c.l.b16 %v773
      %v1581 = vunpack.c.l.b16 %v774
      %v1582 = vunpack.c.l.b16 %v775
      %v1583 = vunpack.c.l.b16 %v776
      %v1584 = vunpack.c.l.b16 %v777
      %v1585 = vunpack.c.l.b16 %v778
      %v1586 = vunpack.c.l.b16 %v779
      %v1587 = vunpack.c.l.b16 %v780
      %v1588 = vunpack.c.l.b16 %v781
      %v1589 = vunpack.c.l.b16 %v782
      %v1590 = vunpack.c.l.b16 %v783
      %v1591 = vunpack.c.l.b16 %v784
      %v1592 = vunpack.c.l.b16 %v785
      %v1593 = vunpack.c.l.b16 %v786
      %v1594 = vunpack.c.l.b16 %v787
      %v1595 = vunpack.c.l.b16 %v788
      %v1596 = vunpack.c.l.b16 %v789
      %v1597 = vunpack.c.l.b16 %v790
      %v1598 = vunpack.c.l.b16 %v791
      %v1599 = vunpack.c.l.b16 %v792
      %v1600 = vunpack.c.l.b16 %v793
      %v1601 = vunpack.c.l.b16 %v794
      %v1602 = vunpack.c.l.b16 %v795
      %v1603 = vunpack.c.l.b16 %v796
      %v1604 = vunpack.c.l.b16 %v797
      %v1605 = vunpack.c.l.b16 %v798
      %v1606 = vunpack.c.l.b16 %v799
      %v1607 = vunpack.c.l.b16 %v800
      %v1608 = vunpack.c.l.b16 %v801
      %v1609 = vunpack.c.l.b16 %v802
      %v1610 = vunpack.c.l.b16 %v803
      %v1611 = vunpack.c.l.b16 %v804
      %v1612 = vunpack.c.l.b16 %v805
      %v1613 = vunpack.c.l.b16 %v806
      %v1614 = vunpack.c.l.b16 %v807
      %v1615 = vunpack.c.l.b16 %v808
      %v1616 = vunpack.c.l.b16 %v809
      %v1617 = vunpack.c.l.b16 %v810
      %v1618 = vunpack.c.l.b16 %v811
      %v1619 = vunpack.c.l.b16 %v812
      %v1620 = vunpack.c.l.b16 %v813
      %v1621 = vunpack.c.l.b16 %v814
      %v1622 = vunpack.c.l.b16 %v815
      %v1623 = vunpack.c.l.b16 %v816
      %v1624 = vunpack.c.l.b16 %v817
      %v1625 = vunpack.c.l.b16 %v818
      %v1626 = vunpack.c.l.b16 %v819
      %v1627 = vunpack.c.l.b16 %v820
      %v1628 = vunpack.c.l.b16 %v821
      %v1629 = vunpack.c.l.b16 %v822
      %v1630 = vunpack.c.l.b16 %v823
      %v1631 = vunpack.c.l.b16 %v824
      %v1632 = vunpack.c.l.b16 %v825
      %v1633 = vunpack.c.l.b16 %v826
      %v1634 = vunpack.c.l.b16 %v827
      %v1635 = vunpack.c.l.b16 %v828
      %v1636 = vunpack.c.l.b16 %v829
      %v1637 = vunpack.c.l.b16 %v830
      %v1638 = vunpack.c.l.b16 %v831
      %v1639 = vunpack.c.l.b16 %v832
      %v1640 = vunpack.c.l.b16 %v833
      %v1641 = vunpack.c.l.b16 %v834
      %v1642 = vunpack.c.l.b16 %v835
      %v1643 = vunpack.c.l.b16 %v836
      %v1644 = vunpack.c.l.b16 %v837
      %v1645 = vunpack.c.l.b16 %v838
      %v1646 = vpack.c.b16 %v1535, %v1534
      %v1647 = vpack.c.b16 %v1537, %v1536
      %v1648 = vpack.c.b16 %v1539, %v1538
      %v1649 = vpack.c.b16 %v1541, %v1540
      %v1650 = vpack.c.b16 %v1543, %v1542
      %v1651 = vpack.c.b16 %v1545, %v1544
      %v1652 = vpack.c.b16 %v1547, %v1546
      %v1653 = vpack.c.b16 %v1549, %v1548
      %v1654 = vpack.c.b16 %v1551, %v1550
      %v1655 = vpack.c.b16 %v1553, %v1552
      %v1656 = vpack.c.b16 %v1555, %v1554
      %v1657 = vpack.c.b16 %v1557, %v1556
      %v1658 = vpack.c.b16 %v1559, %v1558
      %v1659 = vpack.c.b16 %v1561, %v1560
      %v1660 = vpack.c.b16 %v1563, %v1562
      %v1661 = vpack.c.b16 %v1565, %v1564
      %v1662 = vpack.c.b16 %v1567, %v1566
      %v1663 = vpack.c.b16 %v1569, %v1568
      %v1664 = vpack.c.b16 %v1571, %v1570
      %v1665 = vpack.c.b16 %v1573, %v1572
      %v1666 = vpack.c.b16 %v1575, %v1574
      %v1667 = vpack.c.b16 %v1577, %v1576
      %v1668 = vpack.c.b16 %v1579, %v1578
      %v1669 = vpack.c.b16 %v1581, %v1580
      %v1670 = vpack.c.b16 %v1583, %v1582
      %v1671 = vpack.c.b16 %v1585, %v1584
      %v1672 = vpack.c.b16 %v1587, %v1586
      %v1673 = vpack.c.b16 %v1589, %v1588
      %v1674 = vpack.c.b16 %v1591, %v1590
      %v1675 = vpack.c.b16 %v1593, %v1592
      %v1676 = vpack.c.b16 %v1595, %v1594
      %v1677 = vpack.c.b16 %v1597, %v1596
      %v1678 = vpack.c.b16 %v1599, %v1598
      %v1679 = vpack.c.b16 %v1601, %v1600
      %v1680 = vpack.c.b16 %v1603, %v1602
      %v1681 = vpack.c.b16 %v1605, %v1604
      %v1682 = vpack.c.b16 %v1607, %v1606
      %v1683 = vpack.c.b16 %v1609, %v1608
      %v1684 = vpack.c.b16 %v1611, %v1610
      %v1685 = vpack.c.b16 %v1613, %v1612
      %v1686 = vpack.c.b16 %v1615, %v1614
      %v1687 = vpack.c.b16 %v1617, %v1616
      %v1688 = vpack.c.b16 %v1619, %v1618
      %v1689 = vpack.c.b16 %v1621, %v1620
      %v1690 = vpack.c.b16 %v1623, %v1622
      %v1691 = vpack.c.b16 %v1625, %v1624
      %v1692 = vpack.c.b16 %v1627, %v1626
      %v1693 = vpack.c.b16 %v1629, %v1628
      %v1694 = vpack.c.b16 %v1631, %v1630
      %v1695 = vpack.c.b16 %v1633, %v1632
      %v1696 = vpack.c.b16 %v1635, %v1634
      %v1697 = vpack.c.b16 %v1637, %v1636
      %v1698 = vpack.c.b16 %v1639, %v1638
      %v1699 = vpack.c.b16 %v1641, %v1640
      %v1700 = vpack.c.b16 %v1643, %v1642
      %v1701 = vpack.c.b16 %v1645, %v1644
      %1758 = vmatprep.subr.bf16.mxu0 0
      %1759 = vmatpush1.bf16.msra.mxu0 %v1646
      %1760 = vmatprep.subr.bf16.mxu0 0
      %1761 = vmatpush1.bf16.msra.mxu0 %v1647
      %1762 = vmatprep.subr.bf16.mxu0 0
      %1763 = vmatpush1.bf16.msra.mxu0 %v1648
      %1764 = vmatprep.subr.bf16.mxu0 0
      %1765 = vmatpush1.bf16.msra.mxu0 %v1649
      %1766 = vmatprep.subr.bf16.mxu0 0
      %1767 = vmatpush1.bf16.msra.mxu0 %v1650
      %1768 = vmatprep.subr.bf16.mxu0 0
      %1769 = vmatpush1.bf16.msra.mxu0 %v1651
      %1770 = vmatprep.subr.bf16.mxu0 0
      %1771 = vmatpush1.bf16.msra.mxu0 %v1652
      %1772 = vmatprep.subr.bf16.mxu0 0
      %1773 = vmatpush1.bf16.msra.mxu0 %v1653
      %1774 = vmatprep.subr.bf16.mxu0 0
      %1775 = vmatpush1.bf16.msra.mxu0 %v1654
      %1776 = vmatprep.subr.bf16.mxu0 0
      %1777 = vmatpush1.bf16.msra.mxu0 %v1655
      %1778 = vmatprep.subr.bf16.mxu0 0
      %1779 = vmatpush1.bf16.msra.mxu0 %v1656
      %1780 = vmatprep.subr.bf16.mxu0 0
      %1781 = vmatpush1.bf16.msra.mxu0 %v1657
      %1782 = vmatprep.subr.bf16.mxu0 0
      %1783 = vmatpush1.bf16.msra.mxu0 %v1658
      %1784 = vmatprep.subr.bf16.mxu0 0
      %1785 = vmatpush1.bf16.msra.mxu0 %v1659
      %1786 = vmatprep.subr.bf16.mxu0 0
      %1787 = vmatpush1.bf16.msra.mxu0 %v1660
      %1788 = vmatprep.subr.bf16.mxu0 0
      %1789 = vmatpush1.bf16.msra.mxu0 %v1661
      %1790 = vmatprep.mubr.bf16.mxu0 %v1199
      %1791 = vmatmul.mubr.bf16.gmra.mrb[0].mxu0 %v1198
      %v1792 = vpop.f32.mrb[0].mxu0
      %v1793 = vadd.f32 %v844, %v1792
      %v1794 = vpop.f32.mrb[0].mxu0
      %v1795 = vpop.f32.mrb[0].mxu0
      %v1796 = vadd.f32 %v844, %v1795
      %v1797 = vpop.f32.mrb[0].mxu0
      %1798 = vmatprep.mubr.bf16.mxu0 %v1206
      %1799 = vmatmul.mubr.bf16.gmra.mrb[0].mxu0 %v1205
      %v1800 = vpop.f32.mrb[0].mxu0
      %v1801 = vadd.f32 %v844, %v1800
      %v1802 = vpop.f32.mrb[0].mxu0
      %v1803 = vpop.f32.mrb[0].mxu0
      %v1804 = vadd.f32 %v844, %v1803
      %v1805 = vpop.f32.mrb[0].mxu0
      %1806 = vmatprep.mubr.bf16.mxu0 %v1213
      %1807 = vmatmul.mubr.bf16.gmra.mrb[0].mxu0 %v1212
      %v1808 = vpop.f32.mrb[0].mxu0
      %v1809 = vadd.f32 %v844, %v1808
      %v1810 = vpop.f32.mrb[0].mxu0
      %v1811 = vpop.f32.mrb[0].mxu0
      %v1812 = vadd.f32 %v844, %v1811
      %v1813 = vpop.f32.mrb[0].mxu0
      %1814 = vmatprep.mubr.bf16.mxu0 %v1220
      %1815 = vmatmul.mubr.bf16.gmra.mrb[0].mxu0 %v1219
      %v1816 = vpop.f32.mrb[0].mxu0
      %v1817 = vadd.f32 %v844, %v1816
      %v1818 = vpop.f32.mrb[0].mxu0
      %v1819 = vpop.f32.mrb[0].mxu0
      %v1820 = vadd.f32 %v844, %v1819
      %v1821 = vpop.f32.mrb[0].mxu0
      %1822 = vmatprep.mubr.bf16.mxu0 %v1227
      %1823 = vmatmul.mubr.bf16.gmra.mrb[0].mxu0 %v1226
      %v1824 = vpop.f32.mrb[0].mxu0
      %v1825 = vadd.f32 %v844, %v1824
      %v1826 = vpop.f32.mrb[0].mxu0
      %v1827 = vpop.f32.mrb[0].mxu0
      %v1828 = vadd.f32 %v844, %v1827
      %v1829 = vpop.f32.mrb[0].mxu0
      %1830 = vmatprep.mubr.bf16.mxu0 %v1234
      %1831 = vmatmul.mubr.bf16.gmra.mrb[0].mxu0 %v1233
      %v1832 = vpop.f32.mrb[0].mxu0
      %v1833 = vadd.f32 %v844, %v1832
      %v1834 = vpop.f32.mrb[0].mxu0
      %v1835 = vpop.f32.mrb[0].mxu0
      %v1836 = vadd.f32 %v844, %v1835
      %v1837 = vpop.f32.mrb[0].mxu0
      %1838 = vmatprep.mubr.bf16.mxu0 %v1241
      %1839 = vmatmul.mubr.bf16.gmra.mrb[0].mxu0 %v1240
      %v1840 = vpop.f32.mrb[0].mxu0
      %v1841 = vadd.f32 %v844, %v1840
      %v1842 = vpop.f32.mrb[0].mxu0
      %v1843 = vpop.f32.mrb[0].mxu0
      %v1844 = vadd.f32 %v844, %v1843
      %v1845 = vpop.f32.mrb[0].mxu0
      %1846 = vmatprep.mubr.bf16.mxu0 %v1248
      %1847 = vmatmul.mubr.bf16.gmra.mrb[0].mxu0 %v1247
      %v1848 = vpop.f32.mrb[0].mxu0
      %v1849 = vadd.f32 %v844, %v1848
      %v1850 = vpop.f32.mrb[0].mxu0
      %v1851 = vpop.f32.mrb[0].mxu0
      %v1852 = vadd.f32 %v844, %v1851
      %v1853 = vpop.f32.mrb[0].mxu0
      %1854 = vmatprep.mubr.bf16.mxu0 %v1255
      %1855 = vmatmul.mubr.bf16.gmra.mrb[0].mxu0 %v1254
      %v1856 = vpop.f32.mrb[0].mxu0
      %v1857 = vadd.f32 %v844, %v1856
      %v1858 = vpop.f32.mrb[0].mxu0
      %v1859 = vpop.f32.mrb[0].mxu0
      %v1860 = vadd.f32 %v844, %v1859
      %v1861 = vpop.f32.mrb[0].mxu0
      %1862 = vmatprep.mubr.bf16.mxu0 %v1262
      %1863 = vmatmul.mubr.bf16.gmra.mrb[0].mxu0 %v1261
      %v1864 = vpop.f32.mrb[0].mxu0
      %v1865 = vadd.f32 %v844, %v1864
      %v1866 = vpop.f32.mrb[0].mxu0
      %v1867 = vpop.f32.mrb[0].mxu0
      %v1868 = vadd.f32 %v844, %v1867
      %v1869 = vpop.f32.mrb[0].mxu0
      %1870 = vmatprep.mubr.bf16.mxu0 %v1269
      %1871 = vmatmul.mubr.bf16.gmra.mrb[0].mxu0 %v1268
      %v1872 = vpop.f32.mrb[0].mxu0
      %v1873 = vadd.f32 %v844, %v1872
      %v1874 = vpop.f32.mrb[0].mxu0
      %v1875 = vpop.f32.mrb[0].mxu0
      %v1876 = vadd.f32 %v844, %v1875
      %v1877 = vpop.f32.mrb[0].mxu0
      %1878 = vmatprep.mubr.bf16.mxu0 %v1276
      %1879 = vmatmul.mubr.bf16.gmra.mrb[0].mxu0 %v1275
      %v1880 = vpop.f32.mrb[0].mxu0
      %v1881 = vadd.f32 %v844, %v1880
      %v1882 = vpop.f32.mrb[0].mxu0
      %v1883 = vpop.f32.mrb[0].mxu0
      %v1884 = vadd.f32 %v844, %v1883
      %v1885 = vpop.f32.mrb[0].mxu0
      %1886 = vmatprep.mubr.bf16.mxu0 %v1283
      %1887 = vmatmul.mubr.bf16.gmra.mrb[0].mxu0 %v1282
      %v1888 = vpop.f32.mrb[0].mxu0
      %v1889 = vadd.f32 %v844, %v1888
      %v1890 = vpop.f32.mrb[0].mxu0
      %v1891 = vpop.f32.mrb[0].mxu0
      %v1892 = vadd.f32 %v844, %v1891
      %v1893 = vpop.f32.mrb[0].mxu0
      %1894 = vmatprep.mubr.bf16.mxu0 %v1290
      %1895 = vmatmul.mubr.bf16.gmra.mrb[0].mxu0 %v1289
      %v1896 = vpop.f32.mrb[0].mxu0
      %v1897 = vadd.f32 %v844, %v1896
      %v1898 = vpop.f32.mrb[0].mxu0
      %v1899 = vpop.f32.mrb[0].mxu0
      %v1900 = vadd.f32 %v844, %v1899
      %v1901 = vpop.f32.mrb[0].mxu0
      %1902 = vmatprep.mubr.bf16.mxu0 %v1297
      %1903 = vmatmul.mubr.bf16.gmra.mrb[0].mxu0 %v1296
      %v1904 = vpop.f32.mrb[0].mxu0
      %v1905 = vadd.f32 %v844, %v1904
      %v1906 = vpop.f32.mrb[0].mxu0
      %v1907 = vpop.f32.mrb[0].mxu0
      %v1908 = vadd.f32 %v844, %v1907
      %v1909 = vpop.f32.mrb[0].mxu0
      %1910 = vmatprep.mubr.bf16.mxu0 %v1304
      %1911 = vmatmul.mubr.bf16.gmra.mrb[0].mxu0 %v1303
      %v1912 = vpop.f32.mrb[0].mxu0
      %v1913 = vadd.f32 %v844, %v1912
      %v1914 = vpop.f32.mrb[0].mxu0
      %v1915 = vpop.f32.mrb[0].mxu0
      %v1916 = vadd.f32 %v844, %v1915
      %v1917 = vpop.f32.mrb[0].mxu0
      %1918 = vdwg.mxu0
      %1919 = vmatprep.subr.bf16.mxu0 0
      %1920 = vmatpush1.bf16.msra.mxu0 %v1662
      %1921 = vmatprep.subr.bf16.mxu0 0
      %1922 = vmatpush1.bf16.msra.mxu0 %v1663
      %1923 = vmatprep.subr.bf16.mxu0 0
      %1924 = vmatpush1.bf16.msra.mxu0 %v1664
      %1925 = vmatprep.subr.bf16.mxu0 0
      %1926 = vmatpush1.bf16.msra.mxu0 %v1665
      %1927 = vmatprep.subr.bf16.mxu0 0
      %1928 = vmatpush1.bf16.msra.mxu0 %v1666
      %1929 = vmatprep.subr.bf16.mxu0 0
      %1930 = vmatpush1.bf16.msra.mxu0 %v1667
      %1931 = vmatprep.subr.bf16.mxu0 0
      %1932 = vmatpush1.bf16.msra.mxu0 %v1668
      %1933 = vmatprep.subr.bf16.mxu0 0
      %1934 = vmatpush1.bf16.msra.mxu0 %v1669
      %1935 = vmatprep.subr.bf16.mxu0 0
      %1936 = vmatpush1.bf16.msra.mxu0 %v1670
      %1937 = vmatprep.subr.bf16.mxu0 0
      %1938 = vmatpush1.bf16.msra.mxu0 %v1671
      %1939 = vmatprep.subr.bf16.mxu0 0
      %1940 = vmatpush1.bf16.msra.mxu0 %v1672
      %1941 = vmatprep.subr.bf16.mxu0 0
      %1942 = vmatpush1.bf16.msra.mxu0 %v1673
      %1943 = vmatprep.subr.bf16.mxu0 0
      %1944 = vmatpush1.bf16.msra.mxu0 %v1674
      %1945 = vmatprep.subr.bf16.mxu0 0
      %1946 = vmatpush1.bf16.msra.mxu0 %v1675
      %1947 = vmatprep.subr.bf16.mxu0 0
      %1948 = vmatpush1.bf16.msra.mxu0 %v1676
      %1949 = vmatprep.subr.bf16.mxu0 0
      %1950 = vmatpush1.bf16.msra.mxu0 %v1677
      %1951 = vmatprep.mubr.bf16.mxu0 %v1201
      %1952 = vmatmul.mubr.bf16.gmra.mrb[0].mxu0 %v1200
      %v1953 = vpop.f32.mrb[0].mxu0
      %v1954 = vadd.f32 %v1793, %v1953
      %v1955 = vpop.f32.mrb[0].mxu0
      %v1956 = vpop.f32.mrb[0].mxu0
      %v1957 = vadd.f32 %v1796, %v1956
      %v1958 = vpop.f32.mrb[0].mxu0
      %1959 = vmatprep.mubr.bf16.mxu0 %v1208
      %1960 = vmatmul.mubr.bf16.gmra.mrb[0].mxu0 %v1207
      %v1961 = vpop.f32.mrb[0].mxu0
      %v1962 = vadd.f32 %v1801, %v1961
      %v1963 = vpop.f32.mrb[0].mxu0
      %v1964 = vpop.f32.mrb[0].mxu0
      %v1965 = vadd.f32 %v1804, %v1964
      %v1966 = vpop.f32.mrb[0].mxu0
      %1967 = vmatprep.mubr.bf16.mxu0 %v1215
      %1968 = vmatmul.mubr.bf16.gmra.mrb[0].mxu0 %v1214
      %v1969 = vpop.f32.mrb[0].mxu0
      %v1970 = vadd.f32 %v1809, %v1969
      %v1971 = vpop.f32.mrb[0].mxu0
      %v1972 = vpop.f32.mrb[0].mxu0
      %v1973 = vadd.f32 %v1812, %v1972
      %v1974 = vpop.f32.mrb[0].mxu0
      %1975 = vmatprep.mubr.bf16.mxu0 %v1222
      %1976 = vmatmul.mubr.bf16.gmra.mrb[0].mxu0 %v1221
      %v1977 = vpop.f32.mrb[0].mxu0
      %v1978 = vadd.f32 %v1817, %v1977
      %v1979 = vpop.f32.mrb[0].mxu0
      %v1980 = vpop.f32.mrb[0].mxu0
      %v1981 = vadd.f32 %v1820, %v1980
      %v1982 = vpop.f32.mrb[0].mxu0
      %1983 = vmatprep.mubr.bf16.mxu0 %v1229
      %1984 = vmatmul.mubr.bf16.gmra.mrb[0].mxu0 %v1228
      %v1985 = vpop.f32.mrb[0].mxu0
      %v1986 = vadd.f32 %v1825, %v1985
      %v1987 = vpop.f32.mrb[0].mxu0
      %v1988 = vpop.f32.mrb[0].mxu0
      %v1989 = vadd.f32 %v1828, %v1988
      %v1990 = vpop.f32.mrb[0].mxu0
      %1991 = vmatprep.mubr.bf16.mxu0 %v1236
      %1992 = vmatmul.mubr.bf16.gmra.mrb[0].mxu0 %v1235
      %v1993 = vpop.f32.mrb[0].mxu0
      %v1994 = vadd.f32 %v1833, %v1993
      %v1995 = vpop.f32.mrb[0].mxu0
      %v1996 = vpop.f32.mrb[0].mxu0
      %v1997 = vadd.f32 %v1836, %v1996
      %v1998 = vpop.f32.mrb[0].mxu0
      %1999 = vmatprep.mubr.bf16.mxu0 %v1243
      %2000 = vmatmul.mubr.bf16.gmra.mrb[0].mxu0 %v1242
      %v2001 = vpop.f32.mrb[0].mxu0
      %v2002 = vadd.f32 %v1841, %v2001
      %v2003 = vpop.f32.mrb[0].mxu0
      %v2004 = vpop.f32.mrb[0].mxu0
      %v2005 = vadd.f32 %v1844, %v2004
      %v2006 = vpop.f32.mrb[0].mxu0
      %2007 = vmatprep.mubr.bf16.mxu0 %v1250
      %2008 = vmatmul.mubr.bf16.gmra.mrb[0].mxu0 %v1249
      %v2009 = vpop.f32.mrb[0].mxu0
      %v2010 = vadd.f32 %v1849, %v2009
      %v2011 = vpop.f32.mrb[0].mxu0
      %v2012 = vpop.f32.mrb[0].mxu0
      %v2013 = vadd.f32 %v1852, %v2012
      %v2014 = vpop.f32.mrb[0].mxu0
      %2015 = vmatprep.mubr.bf16.mxu0 %v1257
      %2016 = vmatmul.mubr.bf16.gmra.mrb[0].mxu0 %v1256
      %v2017 = vpop.f32.mrb[0].mxu0
      %v2018 = vadd.f32 %v1857, %v2017
      %v2019 = vpop.f32.mrb[0].mxu0
      %v2020 = vpop.f32.mrb[0].mxu0
      %v2021 = vadd.f32 %v1860, %v2020
      %v2022 = vpop.f32.mrb[0].mxu0
      %2023 = vmatprep.mubr.bf16.mxu0 %v1264
      %2024 = vmatmul.mubr.bf16.gmra.mrb[0].mxu0 %v1263
      %v2025 = vpop.f32.mrb[0].mxu0
      %v2026 = vadd.f32 %v1865, %v2025
      %v2027 = vpop.f32.mrb[0].mxu0
      %v2028 = vpop.f32.mrb[0].mxu0
      %v2029 = vadd.f32 %v1868, %v2028
      %v2030 = vpop.f32.mrb[0].mxu0
      %2031 = vmatprep.mubr.bf16.mxu0 %v1271
      %2032 = vmatmul.mubr.bf16.gmra.mrb[0].mxu0 %v1270
      %v2033 = vpop.f32.mrb[0].mxu0
      %v2034 = vadd.f32 %v1873, %v2033
      %v2035 = vpop.f32.mrb[0].mxu0
      %v2036 = vpop.f32.mrb[0].mxu0
      %v2037 = vadd.f32 %v1876, %v2036
      %v2038 = vpop.f32.mrb[0].mxu0
      %2039 = vmatprep.mubr.bf16.mxu0 %v1278
      %2040 = vmatmul.mubr.bf16.gmra.mrb[0].mxu0 %v1277
      %v2041 = vpop.f32.mrb[0].mxu0
      %v2042 = vadd.f32 %v1881, %v2041
      %v2043 = vpop.f32.mrb[0].mxu0
      %v2044 = vpop.f32.mrb[0].mxu0
      %v2045 = vadd.f32 %v1884, %v2044
      %v2046 = vpop.f32.mrb[0].mxu0
      %2047 = vmatprep.mubr.bf16.mxu0 %v1285
      %2048 = vmatmul.mubr.bf16.gmra.mrb[0].mxu0 %v1284
      %v2049 = vpop.f32.mrb[0].mxu0
      %v2050 = vadd.f32 %v1889, %v2049
      %v2051 = vpop.f32.mrb[0].mxu0
      %v2052 = vpop.f32.mrb[0].mxu0
      %v2053 = vadd.f32 %v1892, %v2052
      %v2054 = vpop.f32.mrb[0].mxu0
      %2055 = vmatprep.mubr.bf16.mxu0 %v1292
      %2056 = vmatmul.mubr.bf16.gmra.mrb[0].mxu0 %v1291
      %v2057 = vpop.f32.mrb[0].mxu0
      %v2058 = vadd.f32 %v1897, %v2057
      %v2059 = vpop.f32.mrb[0].mxu0
      %v2060 = vpop.f32.mrb[0].mxu0
      %v2061 = vadd.f32 %v1900, %v2060
      %v2062 = vpop.f32.mrb[0].mxu0
      %2063 = vmatprep.mubr.bf16.mxu0 %v1299
      %2064 = vmatmul.mubr.bf16.gmra.mrb[0].mxu0 %v1298
      %v2065 = vpop.f32.mrb[0].mxu0
      %v2066 = vadd.f32 %v1905, %v2065
      %v2067 = vpop.f32.mrb[0].mxu0
      %v2068 = vpop.f32.mrb[0].mxu0
      %v2069 = vadd.f32 %v1908, %v2068
      %v2070 = vpop.f32.mrb[0].mxu0
      %2071 = vmatprep.mubr.bf16.mxu0 %v1306
      %2072 = vmatmul.mubr.bf16.gmra.mrb[0].mxu0 %v1305
      %v2073 = vpop.f32.mrb[0].mxu0
      %v2074 = vadd.f32 %v1913, %v2073
      %v2075 = vpop.f32.mrb[0].mxu0
      %v2076 = vpop.f32.mrb[0].mxu0
      %v2077 = vadd.f32 %v1916, %v2076
      %v2078 = vpop.f32.mrb[0].mxu0
      %2079 = vdwg.mxu0
      %2080 = vmatprep.subr.bf16.mxu0 0
      %2081 = vmatpush1.bf16.msra.mxu0 %v1678
      %2082 = vmatprep.subr.bf16.mxu0 0
      %2083 = vmatpush1.bf16.msra.mxu0 %v1679
      %2084 = vmatprep.subr.bf16.mxu0 0
      %2085 = vmatpush1.bf16.msra.mxu0 %v1680
      %2086 = vmatprep.subr.bf16.mxu0 0
      %2087 = vmatpush1.bf16.msra.mxu0 %v1681
      %2088 = vmatprep.subr.bf16.mxu0 0
      %2089 = vmatpush1.bf16.msra.mxu0 %v1682
      %2090 = vmatprep.subr.bf16.mxu0 0
      %2091 = vmatpush1.bf16.msra.mxu0 %v1683
      %2092 = vmatprep.subr.bf16.mxu0 0
      %2093 = vmatpush1.bf16.msra.mxu0 %v1684
      %2094 = vmatprep.subr.bf16.mxu0 0
      %2095 = vmatpush1.bf16.msra.mxu0 %v1685
      %2096 = vmatprep.subr.bf16.mxu0 0
      %2097 = vmatpush1.bf16.msra.mxu0 %v1686
      %2098 = vmatprep.subr.bf16.mxu0 0
      %2099 = vmatpush1.bf16.msra.mxu0 %v1687
      %2100 = vmatprep.subr.bf16.mxu0 0
      %2101 = vmatpush1.bf16.msra.mxu0 %v1688
      %2102 = vmatprep.subr.bf16.mxu0 0
      %2103 = vmatpush1.bf16.msra.mxu0 %v1689
      %2104 = vmatprep.subr.bf16.mxu0 0
      %2105 = vmatpush1.bf16.msra.mxu0 %v1690
      %2106 = vmatprep.subr.bf16.mxu0 0
      %2107 = vmatpush1.bf16.msra.mxu0 %v1691
      %2108 = vmatprep.subr.bf16.mxu0 0
      %2109 = vmatpush1.bf16.msra.mxu0 %v1692
      %2110 = vmatprep.subr.bf16.mxu0 0
      %2111 = vmatpush1.bf16.msra.mxu0 %v1693
      %2112 = vmatprep.mubr.bf16.mxu0 %v1203
      %2113 = vmatmul.mubr.bf16.gmra.mrb[0].mxu0 %v1202
      %v2114 = vpop.f32.mrb[0].mxu0
      %v2115 = vadd.f32 %v1954, %v2114
      %v2116 = vpop.f32.mrb[0].mxu0
      %v2117 = vpop.f32.mrb[0].mxu0
      %v2118 = vadd.f32 %v1957, %v2117
      %v2119 = vpop.f32.mrb[0].mxu0
      %2120 = vmatprep.mubr.bf16.mxu0 %v1210
      %2121 = vmatmul.mubr.bf16.gmra.mrb[0].mxu0 %v1209
      %v2122 = vpop.f32.mrb[0].mxu0
      %v2123 = vadd.f32 %v1962, %v2122
      %v2124 = vpop.f32.mrb[0].mxu0
      %v2125 = vpop.f32.mrb[0].mxu0
      %v2126 = vadd.f32 %v1965, %v2125
      %v2127 = vpop.f32.mrb[0].mxu0
      %2128 = vmatprep.mubr.bf16.mxu0 %v1217
      %2129 = vmatmul.mubr.bf16.gmra.mrb[0].mxu0 %v1216
      %v2130 = vpop.f32.mrb[0].mxu0
      %v2131 = vadd.f32 %v1970, %v2130
      %v2132 = vpop.f32.mrb[0].mxu0
      %v2133 = vpop.f32.mrb[0].mxu0
      %v2134 = vadd.f32 %v1973, %v2133
      %v2135 = vpop.f32.mrb[0].mxu0
      %2136 = vmatprep.mubr.bf16.mxu0 %v1224
      %2137 = vmatmul.mubr.bf16.gmra.mrb[0].mxu0 %v1223
      %v2138 = vpop.f32.mrb[0].mxu0
      %v2139 = vadd.f32 %v1978, %v2138
      %v2140 = vpop.f32.mrb[0].mxu0
      %v2141 = vpop.f32.mrb[0].mxu0
      %v2142 = vadd.f32 %v1981, %v2141
      %v2143 = vpop.f32.mrb[0].mxu0
      %2144 = vmatprep.mubr.bf16.mxu0 %v1231
      %2145 = vmatmul.mubr.bf16.gmra.mrb[0].mxu0 %v1230
      %v2146 = vpop.f32.mrb[0].mxu0
      %v2147 = vadd.f32 %v1986, %v2146
      %v2148 = vpop.f32.mrb[0].mxu0
      %v2149 = vpop.f32.mrb[0].mxu0
      %v2150 = vadd.f32 %v1989, %v2149
      %v2151 = vpop.f32.mrb[0].mxu0
      %2152 = vmatprep.mubr.bf16.mxu0 %v1238
      %2153 = vmatmul.mubr.bf16.gmra.mrb[0].mxu0 %v1237
      %v2154 = vpop.f32.mrb[0].mxu0
      %v2155 = vadd.f32 %v1994, %v2154
      %v2156 = vpop.f32.mrb[0].mxu0
      %v2157 = vpop.f32.mrb[0].mxu0
      %v2158 = vadd.f32 %v1997, %v2157
      %v2159 = vpop.f32.mrb[0].mxu0
      %2160 = vmatprep.mubr.bf16.mxu0 %v1245
      %2161 = vmatmul.mubr.bf16.gmra.mrb[0].mxu0 %v1244
      %v2162 = vpop.f32.mrb[0].mxu0
      %v2163 = vadd.f32 %v2002, %v2162
      %v2164 = vpop.f32.mrb[0].mxu0
      %v2165 = vpop.f32.mrb[0].mxu0
      %v2166 = vadd.f32 %v2005, %v2165
      %v2167 = vpop.f32.mrb[0].mxu0
      %2168 = vmatprep.mubr.bf16.mxu0 %v1252
      %2169 = vmatmul.mubr.bf16.gmra.mrb[0].mxu0 %v1251
      %v2170 = vpop.f32.mrb[0].mxu0
      %v2171 = vadd.f32 %v2010, %v2170
      %v2172 = vpop.f32.mrb[0].mxu0
      %v2173 = vpop.f32.mrb[0].mxu0
      %v2174 = vadd.f32 %v2013, %v2173
      %v2175 = vpop.f32.mrb[0].mxu0
      %2176 = vmatprep.mubr.bf16.mxu0 %v1259
      %2177 = vmatmul.mubr.bf16.gmra.mrb[0].mxu0 %v1258
      %v2178 = vpop.f32.mrb[0].mxu0
      %v2179 = vadd.f32 %v2018, %v2178
      %v2180 = vpop.f32.mrb[0].mxu0
      %v2181 = vpop.f32.mrb[0].mxu0
      %v2182 = vadd.f32 %v2021, %v2181
      %v2183 = vpop.f32.mrb[0].mxu0
      %2184 = vmatprep.mubr.bf16.mxu0 %v1266
      %2185 = vmatmul.mubr.bf16.gmra.mrb[0].mxu0 %v1265
      %v2186 = vpop.f32.mrb[0].mxu0
      %v2187 = vadd.f32 %v2026, %v2186
      %v2188 = vpop.f32.mrb[0].mxu0
      %v2189 = vpop.f32.mrb[0].mxu0
      %v2190 = vadd.f32 %v2029, %v2189
      %v2191 = vpop.f32.mrb[0].mxu0
      %2192 = vmatprep.mubr.bf16.mxu0 %v1273
      %2193 = vmatmul.mubr.bf16.gmra.mrb[0].mxu0 %v1272
      %v2194 = vpop.f32.mrb[0].mxu0
      %v2195 = vadd.f32 %v2034, %v2194
      %v2196 = vpop.f32.mrb[0].mxu0
      %v2197 = vpop.f32.mrb[0].mxu0
      %v2198 = vadd.f32 %v2037, %v2197
      %v2199 = vpop.f32.mrb[0].mxu0
      %2200 = vmatprep.mubr.bf16.mxu0 %v1280
      %2201 = vmatmul.mubr.bf16.gmra.mrb[0].mxu0 %v1279
      %v2202 = vpop.f32.mrb[0].mxu0
      %v2203 = vadd.f32 %v2042, %v2202
      %v2204 = vpop.f32.mrb[0].mxu0
      %v2205 = vpop.f32.mrb[0].mxu0
      %v2206 = vadd.f32 %v2045, %v2205
      %v2207 = vpop.f32.mrb[0].mxu0
      %2208 = vmatprep.mubr.bf16.mxu0 %v1287
      %2209 = vmatmul.mubr.bf16.gmra.mrb[0].mxu0 %v1286
      %v2210 = vpop.f32.mrb[0].mxu0
      %v2211 = vadd.f32 %v2050, %v2210
      %v2212 = vpop.f32.mrb[0].mxu0
      %v2213 = vpop.f32.mrb[0].mxu0
      %v2214 = vadd.f32 %v2053, %v2213
      %v2215 = vpop.f32.mrb[0].mxu0
      %2216 = vmatprep.mubr.bf16.mxu0 %v1294
      %2217 = vmatmul.mubr.bf16.gmra.mrb[0].mxu0 %v1293
      %v2218 = vpop.f32.mrb[0].mxu0
      %v2219 = vadd.f32 %v2058, %v2218
      %v2220 = vpop.f32.mrb[0].mxu0
      %v2221 = vpop.f32.mrb[0].mxu0
      %v2222 = vadd.f32 %v2061, %v2221
      %v2223 = vpop.f32.mrb[0].mxu0
      %2224 = vmatprep.mubr.bf16.mxu0 %v1301
      %2225 = vmatmul.mubr.bf16.gmra.mrb[0].mxu0 %v1300
      %v2226 = vpop.f32.mrb[0].mxu0
      %v2227 = vadd.f32 %v2066, %v2226
      %v2228 = vpop.f32.mrb[0].mxu0
      %v2229 = vpop.f32.mrb[0].mxu0
      %v2230 = vadd.f32 %v2069, %v2229
      %v2231 = vpop.f32.mrb[0].mxu0
      %2232 = vmatprep.mubr.bf16.mxu0 %v1308
      %2233 = vmatmul.mubr.bf16.gmra.mrb[0].mxu0 %v1307
      %v2234 = vpop.f32.mrb[0].mxu0
      %v2235 = vadd.f32 %v2074, %v2234
      %v2236 = vpop.f32.mrb[0].mxu0
      %v2237 = vpop.f32.mrb[0].mxu0
      %v2238 = vadd.f32 %v2077, %v2237
      %v2239 = vpop.f32.mrb[0].mxu0
      %2240 = vdwg.mxu0
      %2241 = vmatprep.subr.bf16.mxu0 0
      %2242 = vmatpush1.bf16.msra.mxu0 %v1694
      %2243 = vmatprep.subr.bf16.mxu0 0
      %2244 = vmatpush1.bf16.msra.mxu0 %v1695
      %2245 = vmatprep.subr.bf16.mxu0 0
      %2246 = vmatpush1.bf16.msra.mxu0 %v1696
      %2247 = vmatprep.subr.bf16.mxu0 0
      %2248 = vmatpush1.bf16.msra.mxu0 %v1697
      %2249 = vmatprep.subr.bf16.mxu0 0
      %2250 = vmatpush1.bf16.msra.mxu0 %v1698
      %2251 = vmatprep.subr.bf16.mxu0 0
      %2252 = vmatpush1.bf16.msra.mxu0 %v1699
      %2253 = vmatprep.subr.bf16.mxu0 0
      %2254 = vmatpush1.bf16.msra.mxu0 %v1700
      %2255 = vmatprep.subr.bf16.mxu0 0
      %2256 = vmatpush1.bf16.msra.mxu0 %v1701
      %2257 = vmatprep.subr.bf16.mxu0 0
      %2258 = vmatpush1.bf16.msra.mxu0 0
      %2259 = vmatprep.subr.bf16.mxu0 0
      %2260 = vmatpush1.bf16.msra.mxu0 0
      %2261 = vmatprep.subr.bf16.mxu0 0
      %2262 = vmatpush1.bf16.msra.mxu0 0
      %2263 = vmatprep.subr.bf16.mxu0 0
      %2264 = vmatpush1.bf16.msra.mxu0 0
      %2265 = vmatprep.subr.bf16.mxu0 0
      %2266 = vmatpush1.bf16.msra.mxu0 0
      %2267 = vmatprep.subr.bf16.mxu0 0
      %2268 = vmatpush1.bf16.msra.mxu0 0
      %2269 = vmatprep.subr.bf16.mxu0 0
      %2270 = vmatpush1.bf16.msra.mxu0 0
      %2271 = vmatprep.subr.bf16.mxu0 0
      %2272 = vmatpush1.bf16.msra.mxu0 0
      %2273 = vmatprep.mubr.bf16.mxu0 0
      %2274 = vmatmul.mubr.bf16.gmra.mrb[0].mxu0 %v1204
      %v2275 = vpop.f32.mrb[0].mxu0
      %v2276 = vadd.f32 %v2115, %v2275
      %v2277 = vpop.f32.mrb[0].mxu0
      %v2278 = vpop.f32.mrb[0].mxu0
      %v2279 = vadd.f32 %v2118, %v2278
      %v2280 = vpop.f32.mrb[0].mxu0
      %2281 = vmatprep.mubr.bf16.mxu0 0
      %2282 = vmatmul.mubr.bf16.gmra.mrb[0].mxu0 %v1211
      %v2283 = vpop.f32.mrb[0].mxu0
      %v2284 = vadd.f32 %v2123, %v2283
      %v2285 = vpop.f32.mrb[0].mxu0
      %v2286 = vpop.f32.mrb[0].mxu0
      %v2287 = vadd.f32 %v2126, %v2286
      %v2288 = vpop.f32.mrb[0].mxu0
      %2289 = vmatprep.mubr.bf16.mxu0 0
      %2290 = vmatmul.mubr.bf16.gmra.mrb[0].mxu0 %v1218
      %v2291 = vpop.f32.mrb[0].mxu0
      %v2292 = vadd.f32 %v2131, %v2291
      %v2293 = vpop.f32.mrb[0].mxu0
      %v2294 = vpop.f32.mrb[0].mxu0
      %v2295 = vadd.f32 %v2134, %v2294
      %v2296 = vpop.f32.mrb[0].mxu0
      %2297 = vmatprep.mubr.bf16.mxu0 0
      %2298 = vmatmul.mubr.bf16.gmra.mrb[0].mxu0 %v1225
      %v2299 = vpop.f32.mrb[0].mxu0
      %v2300 = vadd.f32 %v2139, %v2299
      %v2301 = vpop.f32.mrb[0].mxu0
      %v2302 = vpop.f32.mrb[0].mxu0
      %v2303 = vadd.f32 %v2142, %v2302
      %v2304 = vpop.f32.mrb[0].mxu0
      %2305 = vmatprep.mubr.bf16.mxu0 0
      %2306 = vmatmul.mubr.bf16.gmra.mrb[0].mxu0 %v1232
      %v2307 = vpop.f32.mrb[0].mxu0
      %v2308 = vadd.f32 %v2147, %v2307
      %v2309 = vpop.f32.mrb[0].mxu0
      %v2310 = vpop.f32.mrb[0].mxu0
      %v2311 = vadd.f32 %v2150, %v2310
      %v2312 = vpop.f32.mrb[0].mxu0
      %2313 = vmatprep.mubr.bf16.mxu0 0
      %2314 = vmatmul.mubr.bf16.gmra.mrb[0].mxu0 %v1239
      %v2315 = vpop.f32.mrb[0].mxu0
      %v2316 = vadd.f32 %v2155, %v2315
      %v2317 = vpop.f32.mrb[0].mxu0
      %v2318 = vpop.f32.mrb[0].mxu0
      %v2319 = vadd.f32 %v2158, %v2318
      %v2320 = vpop.f32.mrb[0].mxu0
      %2321 = vmatprep.mubr.bf16.mxu0 0
      %2322 = vmatmul.mubr.bf16.gmra.mrb[0].mxu0 %v1246
      %v2323 = vpop.f32.mrb[0].mxu0
      %v2324 = vadd.f32 %v2163, %v2323
      %v2325 = vpop.f32.mrb[0].mxu0
      %v2326 = vpop.f32.mrb[0].mxu0
      %v2327 = vadd.f32 %v2166, %v2326
      %v2328 = vpop.f32.mrb[0].mxu0
      %2329 = vmatprep.mubr.bf16.mxu0 0
      %2330 = vmatmul.mubr.bf16.gmra.mrb[0].mxu0 %v1253
      %v2331 = vpop.f32.mrb[0].mxu0
      %v2332 = vadd.f32 %v2171, %v2331
      %v2333 = vpop.f32.mrb[0].mxu0
      %v2334 = vpop.f32.mrb[0].mxu0
      %v2335 = vadd.f32 %v2174, %v2334
      %v2336 = vpop.f32.mrb[0].mxu0
      %2337 = vmatprep.mubr.bf16.mxu0 0
      %2338 = vmatmul.mubr.bf16.gmra.mrb[0].mxu0 %v1260
      %v2339 = vpop.f32.mrb[0].mxu0
      %v2340 = vadd.f32 %v2179, %v2339
      %v2341 = vpop.f32.mrb[0].mxu0
      %v2342 = vpop.f32.mrb[0].mxu0
      %v2343 = vadd.f32 %v2182, %v2342
      %v2344 = vpop.f32.mrb[0].mxu0
      %2345 = vmatprep.mubr.bf16.mxu0 0
      %2346 = vmatmul.mubr.bf16.gmra.mrb[0].mxu0 %v1267
      %v2347 = vpop.f32.mrb[0].mxu0
      %v2348 = vadd.f32 %v2187, %v2347
      %v2349 = vpop.f32.mrb[0].mxu0
      %v2350 = vpop.f32.mrb[0].mxu0
      %v2351 = vadd.f32 %v2190, %v2350
      %v2352 = vpop.f32.mrb[0].mxu0
      %2353 = vmatprep.mubr.bf16.mxu0 0
      %2354 = vmatmul.mubr.bf16.gmra.mrb[0].mxu0 %v1274
      %v2355 = vpop.f32.mrb[0].mxu0
      %v2356 = vadd.f32 %v2195, %v2355
      %v2357 = vpop.f32.mrb[0].mxu0
      %v2358 = vpop.f32.mrb[0].mxu0
      %v2359 = vadd.f32 %v2198, %v2358
      %v2360 = vpop.f32.mrb[0].mxu0
      %2361 = vmatprep.mubr.bf16.mxu0 0
      %2362 = vmatmul.mubr.bf16.gmra.mrb[0].mxu0 %v1281
      %v2363 = vpop.f32.mrb[0].mxu0
      %v2364 = vadd.f32 %v2203, %v2363
      %v2365 = vpop.f32.mrb[0].mxu0
      %v2366 = vpop.f32.mrb[0].mxu0
      %v2367 = vadd.f32 %v2206, %v2366
      %v2368 = vpop.f32.mrb[0].mxu0
      %2369 = vmatprep.mubr.bf16.mxu0 0
      %2370 = vmatmul.mubr.bf16.gmra.mrb[0].mxu0 %v1288
      %v2371 = vpop.f32.mrb[0].mxu0
      %v2372 = vadd.f32 %v2211, %v2371
      %v2373 = vpop.f32.mrb[0].mxu0
      %v2374 = vpop.f32.mrb[0].mxu0
      %v2375 = vadd.f32 %v2214, %v2374
      %v2376 = vpop.f32.mrb[0].mxu0
      %2377 = vmatprep.mubr.bf16.mxu0 0
      %2378 = vmatmul.mubr.bf16.gmra.mrb[0].mxu0 %v1295
      %v2379 = vpop.f32.mrb[0].mxu0
      %v2380 = vadd.f32 %v2219, %v2379
      %v2381 = vpop.f32.mrb[0].mxu0
      %v2382 = vpop.f32.mrb[0].mxu0
      %v2383 = vadd.f32 %v2222, %v2382
      %v2384 = vpop.f32.mrb[0].mxu0
      %2385 = vmatprep.mubr.bf16.mxu0 0
      %2386 = vmatmul.mubr.bf16.gmra.mrb[0].mxu0 %v1302
      %v2387 = vpop.f32.mrb[0].mxu0
      %v2388 = vadd.f32 %v2227, %v2387
      %v2389 = vpop.f32.mrb[0].mxu0
      %v2390 = vpop.f32.mrb[0].mxu0
      %v2391 = vadd.f32 %v2230, %v2390
      %v2392 = vpop.f32.mrb[0].mxu0
      %2393 = vmatprep.mubr.bf16.mxu0 0
      %2394 = vmatmul.mubr.bf16.gmra.mrb[0].mxu0 %v1309
      %v2395 = vpop.f32.mrb[0].mxu0
      %v2396 = vadd.f32 %v2235, %v2395
      %v2397 = vpop.f32.mrb[0].mxu0
      %v2398 = vpop.f32.mrb[0].mxu0
      %v2399 = vadd.f32 %v2238, %v2398
      %v2400 = vpop.f32.mrb[0].mxu0
      %2401 = vdwg.mxu0
      %v2402 = vmax.f32 %v2276, 0.0
      %v2403 = vmax.f32 %v2279, 0.0
      %v2404 = vmax.f32 %v2284, 0.0
      %v2405 = vmax.f32 %v2287, 0.0
      %v2406 = vmax.f32 %v2292, 0.0
      %v2407 = vmax.f32 %v2295, 0.0
      %v2408 = vmax.f32 %v2300, 0.0
      %v2409 = vmax.f32 %v2303, 0.0
      %v2410 = vmax.f32 %v2308, 0.0
      %v2411 = vmax.f32 %v2311, 0.0
      %v2412 = vmax.f32 %v2316, 0.0
      %v2413 = vmax.f32 %v2319, 0.0
      %v2414 = vmax.f32 %v2324, 0.0
      %v2415 = vmax.f32 %v2327, 0.0
      %v2416 = vmax.f32 %v2332, 0.0
      %v2417 = vmax.f32 %v2335, 0.0
      %v2418 = vmax.f32 %v2340, 0.0
      %v2419 = vmax.f32 %v2343, 0.0
      %v2420 = vmax.f32 %v2348, 0.0
      %v2421 = vmax.f32 %v2351, 0.0
      %v2422 = vmax.f32 %v2356, 0.0
      %v2423 = vmax.f32 %v2359, 0.0
      %v2424 = vmax.f32 %v2364, 0.0
      %v2425 = vmax.f32 %v2367, 0.0
      %v2426 = vmax.f32 %v2372, 0.0
      %v2427 = vmax.f32 %v2375, 0.0
      %v2428 = vmax.f32 %v2380, 0.0
      %v2429 = vmax.f32 %v2383, 0.0
      %v2430 = vmax.f32 %v2388, 0.0
      %v2431 = vmax.f32 %v2391, 0.0
      %v2432 = vmax.f32 %v2396, 0.0
      %v2433 = vmax.f32 %v2399, 0.0
      %v2434 = vpack.c.bf16 %v2403, %v2402
      %v2435 = vpack.c.bf16 %v2405, %v2404
      %v2436 = vpack.c.bf16 %v2407, %v2406
      %v2437 = vpack.c.bf16 %v2409, %v2408
      %v2438 = vpack.c.bf16 %v2411, %v2410
      %v2439 = vpack.c.bf16 %v2413, %v2412
      %v2440 = vpack.c.bf16 %v2415, %v2414
      %v2441 = vpack.c.bf16 %v2417, %v2416
      %v2442 = vpack.c.bf16 %v2419, %v2418
      %v2443 = vpack.c.bf16 %v2421, %v2420
      %v2444 = vpack.c.bf16 %v2423, %v2422
      %v2445 = vpack.c.bf16 %v2425, %v2424
      %v2446 = vpack.c.bf16 %v2427, %v2426
      %v2447 = vpack.c.bf16 %v2429, %v2428
      %v2448 = vpack.c.bf16 %v2431, %v2430
      %v2449 = vpack.c.bf16 %v2433, %v2432
      %v2450 = vld [vmem:[%s3] sm:$0xf]
      %v2451 = vld [vmem:[%s3 + $0x4] sm:$0xf]
      %v2452 = vld [vmem:[%s3 + $0x8] sm:$0xf]
      %v2453 = vld [vmem:[%s3 + $0xc] sm:$0xf]
      %v2454 = vld [vmem:[%s3 + $0x10] sm:$0xf]
      %v2455 = vld [vmem:[%s3 + $0x14] sm:$0xf]
      %v2456 = vld [vmem:[%s3 + $0x18] sm:$0xf]
      %v2457 = vld [vmem:[%s3 + $0x1c] sm:$0xf]
      %v2458 = vld [vmem:[%s3 + $0x20] sm:$0xf]
      %v2459 = vld [vmem:[%s3 + $0x24] sm:$0xf]
      %v2460 = vld [vmem:[%s3 + $0x28] sm:$0xf]
      %v2461 = vld [vmem:[%s3 + $0x2c] sm:$0xf]
      %v2462 = vld [vmem:[%s3 + $0x30] sm:$0xf]
      %v2463 = vld [vmem:[%s3 + $0x34] sm:$0xf]
      %v2464 = vld [vmem:[%s3 + $0x38] sm:$0xf]
      %v2465 = vld [vmem:[%s3 + $0x3c] sm:$0xf]
      %v2466 = vld [vmem:[%s4] sm:$0x1]
      %v2468 = vlaneseq
      %v2469 = vshrl.u32 %v2468, 7
      %v2470 = vsub.s32 0, %v2469
      %v2471 = vrot.slane %v2466, %v2470
      %v2489 = vunpack.c.l.b16 %v2450
      %v2490 = vunpack.c.l.b16 %v2451
      %v2491 = vunpack.c.l.b16 %v2452
      %v2492 = vunpack.c.l.b16 %v2453
      %v2493 = vunpack.c.l.b16 %v2454
      %v2494 = vunpack.c.l.b16 %v2455
      %v2495 = vunpack.c.l.b16 %v2456
      %v2496 = vunpack.c.l.b16 %v2457
      %v2497 = vunpack.c.l.b16 %v2458
      %v2498 = vunpack.c.l.b16 %v2459
      %v2499 = vunpack.c.l.b16 %v2460
      %v2500 = vunpack.c.l.b16 %v2461
      %v2501 = vunpack.c.l.b16 %v2462
      %v2502 = vunpack.c.l.b16 %v2463
      %v2503 = vunpack.c.l.b16 %v2464
      %v2504 = vunpack.c.l.b16 %v2465
      %v2505 = vpack.c.b16 %v2490, %v2489
      %v2506 = vpack.c.b16 %v2492, %v2491
      %v2507 = vpack.c.b16 %v2494, %v2493
      %v2508 = vpack.c.b16 %v2496, %v2495
      %v2509 = vpack.c.b16 %v2498, %v2497
      %v2510 = vpack.c.b16 %v2500, %v2499
      %v2511 = vpack.c.b16 %v2502, %v2501
      %v2512 = vpack.c.b16 %v2504, %v2503
      %2521 = vmatprep.subr.bf16.mxu0 0
      %2522 = vmatpush1.bf16.msra.mxu0 %v2505
      %2523 = vmatprep.subr.bf16.mxu0 0
      %2524 = vmatpush1.bf16.msra.mxu0 %v2506
      %2525 = vmatprep.subr.bf16.mxu0 0
      %2526 = vmatpush1.bf16.msra.mxu0 %v2507
      %2527 = vmatprep.subr.bf16.mxu0 0
      %2528 = vmatpush1.bf16.msra.mxu0 %v2508
      %2529 = vmatprep.subr.bf16.mxu0 0
      %2530 = vmatpush1.bf16.msra.mxu0 %v2509
      %2531 = vmatprep.subr.bf16.mxu0 0
      %2532 = vmatpush1.bf16.msra.mxu0 %v2510
      %2533 = vmatprep.subr.bf16.mxu0 0
      %2534 = vmatpush1.bf16.msra.mxu0 %v2511
      %2535 = vmatprep.subr.bf16.mxu0 0
      %2536 = vmatpush1.bf16.msra.mxu0 %v2512
      %2537 = vmatprep.subr.bf16.mxu0 0
      %2538 = vmatpush1.bf16.msra.mxu0 0
      %2539 = vmatprep.subr.bf16.mxu0 0
      %2540 = vmatpush1.bf16.msra.mxu0 0
      %2541 = vmatprep.subr.bf16.mxu0 0
      %2542 = vmatpush1.bf16.msra.mxu0 0
      %2543 = vmatprep.subr.bf16.mxu0 0
      %2544 = vmatpush1.bf16.msra.mxu0 0
      %2545 = vmatprep.subr.bf16.mxu0 0
      %2546 = vmatpush1.bf16.msra.mxu0 0
      %2547 = vmatprep.subr.bf16.mxu0 0
      %2548 = vmatpush1.bf16.msra.mxu0 0
      %2549 = vmatprep.subr.bf16.mxu0 0
      %2550 = vmatpush1.bf16.msra.mxu0 0
      %2551 = vmatprep.subr.bf16.mxu0 0
      %2552 = vmatpush1.bf16.msra.mxu0 0
      %2553 = vmatprep.mubr.bf16.mxu0 0
      %2554 = vmatmul.mubr.bf16.gmra.mrb[0].mxu0 %v2434
      %v2555 = vpop.f32.mrb[0].mxu0
      %v2556 = vadd.f32 %v2471, %v2555
      %v2557 = vpop.f32.mrb[0].mxu0
      %v2558 = vpop.f32.mrb[0].mxu0
      %v2559 = vadd.f32 %v2471, %v2558
      %v2560 = vpop.f32.mrb[0].mxu0
      %2561 = vmatprep.mubr.bf16.mxu0 0
      %2562 = vmatmul.mubr.bf16.gmra.mrb[0].mxu0 %v2435
      %v2563 = vpop.f32.mrb[0].mxu0
      %v2564 = vadd.f32 %v2471, %v2563
      %v2565 = vpop.f32.mrb[0].mxu0
      %v2566 = vpop.f32.mrb[0].mxu0
      %v2567 = vadd.f32 %v2471, %v2566
      %v2568 = vpop.f32.mrb[0].mxu0
      %2569 = vmatprep.mubr.bf16.mxu0 0
      %2570 = vmatmul.mubr.bf16.gmra.mrb[0].mxu0 %v2436
      %v2571 = vpop.f32.mrb[0].mxu0
      %v2572 = vadd.f32 %v2471, %v2571
      %v2573 = vpop.f32.mrb[0].mxu0
      %v2574 = vpop.f32.mrb[0].mxu0
      %v2575 = vadd.f32 %v2471, %v2574
      %v2576 = vpop.f32.mrb[0].mxu0
      %2577 = vmatprep.mubr.bf16.mxu0 0
      %2578 = vmatmul.mubr.bf16.gmra.mrb[0].mxu0 %v2437
      %v2579 = vpop.f32.mrb[0].mxu0
      %v2580 = vadd.f32 %v2471, %v2579
      %v2581 = vpop.f32.mrb[0].mxu0
      %v2582 = vpop.f32.mrb[0].mxu0
      %v2583 = vadd.f32 %v2471, %v2582
      %v2584 = vpop.f32.mrb[0].mxu0
      %2585 = vmatprep.mubr.bf16.mxu0 0
      %2586 = vmatmul.mubr.bf16.gmra.mrb[0].mxu0 %v2438
      %v2587 = vpop.f32.mrb[0].mxu0
      %v2588 = vadd.f32 %v2471, %v2587
      %v2589 = vpop.f32.mrb[0].mxu0
      %v2590 = vpop.f32.mrb[0].mxu0
      %v2591 = vadd.f32 %v2471, %v2590
      %v2592 = vpop.f32.mrb[0].mxu0
      %2593 = vmatprep.mubr.bf16.mxu0 0
      %2594 = vmatmul.mubr.bf16.gmra.mrb[0].mxu0 %v2439
      %v2595 = vpop.f32.mrb[0].mxu0
      %v2596 = vadd.f32 %v2471, %v2595
      %v2597 = vpop.f32.mrb[0].mxu0
      %v2598 = vpop.f32.mrb[0].mxu0
      %v2599 = vadd.f32 %v2471, %v2598
      %v2600 = vpop.f32.mrb[0].mxu0
      %2601 = vmatprep.mubr.bf16.mxu0 0
      %2602 = vmatmul.mubr.bf16.gmra.mrb[0].mxu0 %v2440
      %v2603 = vpop.f32.mrb[0].mxu0
      %v2604 = vadd.f32 %v2471, %v2603
      %v2605 = vpop.f32.mrb[0].mxu0
      %v2606 = vpop.f32.mrb[0].mxu0
      %v2607 = vadd.f32 %v2471, %v2606
      %v2608 = vpop.f32.mrb[0].mxu0
      %2609 = vmatprep.mubr.bf16.mxu0 0
      %2610 = vmatmul.mubr.bf16.gmra.mrb[0].mxu0 %v2441
      %v2611 = vpop.f32.mrb[0].mxu0
      %v2612 = vadd.f32 %v2471, %v2611
      %v2613 = vpop.f32.mrb[0].mxu0
      %v2614 = vpop.f32.mrb[0].mxu0
      %v2615 = vadd.f32 %v2471, %v2614
      %v2616 = vpop.f32.mrb[0].mxu0
      %2617 = vmatprep.mubr.bf16.mxu0 0
      %2618 = vmatmul.mubr.bf16.gmra.mrb[0].mxu0 %v2442
      %v2619 = vpop.f32.mrb[0].mxu0
      %v2620 = vadd.f32 %v2471, %v2619
      %v2621 = vpop.f32.mrb[0].mxu0
      %v2622 = vpop.f32.mrb[0].mxu0
      %v2623 = vadd.f32 %v2471, %v2622
      %v2624 = vpop.f32.mrb[0].mxu0
      %2625 = vmatprep.mubr.bf16.mxu0 0
      %2626 = vmatmul.mubr.bf16.gmra.mrb[0].mxu0 %v2443
      %v2627 = vpop.f32.mrb[0].mxu0
      %v2628 = vadd.f32 %v2471, %v2627
      %v2629 = vpop.f32.mrb[0].mxu0
      %v2630 = vpop.f32.mrb[0].mxu0
      %v2631 = vadd.f32 %v2471, %v2630
      %v2632 = vpop.f32.mrb[0].mxu0
      %2633 = vmatprep.mubr.bf16.mxu0 0
      %2634 = vmatmul.mubr.bf16.gmra.mrb[0].mxu0 %v2444
      %v2635 = vpop.f32.mrb[0].mxu0
      %v2636 = vadd.f32 %v2471, %v2635
      %v2637 = vpop.f32.mrb[0].mxu0
      %v2638 = vpop.f32.mrb[0].mxu0
      %v2639 = vadd.f32 %v2471, %v2638
      %v2640 = vpop.f32.mrb[0].mxu0
      %2641 = vmatprep.mubr.bf16.mxu0 0
      %2642 = vmatmul.mubr.bf16.gmra.mrb[0].mxu0 %v2445
      %v2643 = vpop.f32.mrb[0].mxu0
      %v2644 = vadd.f32 %v2471, %v2643
      %v2645 = vpop.f32.mrb[0].mxu0
      %v2646 = vpop.f32.mrb[0].mxu0
      %v2647 = vadd.f32 %v2471, %v2646
      %v2648 = vpop.f32.mrb[0].mxu0
      %2649 = vmatprep.mubr.bf16.mxu0 0
      %2650 = vmatmul.mubr.bf16.gmra.mrb[0].mxu0 %v2446
      %v2651 = vpop.f32.mrb[0].mxu0
      %v2652 = vadd.f32 %v2471, %v2651
      %v2653 = vpop.f32.mrb[0].mxu0
      %v2654 = vpop.f32.mrb[0].mxu0
      %v2655 = vadd.f32 %v2471, %v2654
      %v2656 = vpop.f32.mrb[0].mxu0
      %2657 = vmatprep.mubr.bf16.mxu0 0
      %2658 = vmatmul.mubr.bf16.gmra.mrb[0].mxu0 %v2447
      %v2659 = vpop.f32.mrb[0].mxu0
      %v2660 = vadd.f32 %v2471, %v2659
      %v2661 = vpop.f32.mrb[0].mxu0
      %v2662 = vpop.f32.mrb[0].mxu0
      %v2663 = vadd.f32 %v2471, %v2662
      %v2664 = vpop.f32.mrb[0].mxu0
      %2665 = vmatprep.mubr.bf16.mxu0 0
      %2666 = vmatmul.mubr.bf16.gmra.mrb[0].mxu0 %v2448
      %v2667 = vpop.f32.mrb[0].mxu0
      %v2668 = vadd.f32 %v2471, %v2667
      %v2669 = vpop.f32.mrb[0].mxu0
      %v2670 = vpop.f32.mrb[0].mxu0
      %v2671 = vadd.f32 %v2471, %v2670
      %v2672 = vpop.f32.mrb[0].mxu0
      %2673 = vmatprep.mubr.bf16.mxu0 0
      %2674 = vmatmul.mubr.bf16.gmra.mrb[0].mxu0 %v2449
      %v2675 = vpop.f32.mrb[0].mxu0
      %v2676 = vadd.f32 %v2471, %v2675
      %v2677 = vpop.f32.mrb[0].mxu0
      %v2678 = vpop.f32.mrb[0].mxu0
      %v2679 = vadd.f32 %v2471, %v2678
      %v2680 = vpop.f32.mrb[0].mxu0
      %2681 = vdwg.mxu0
      %v2682 = vmax.f32 %v2556, 0.0
      %v2683 = vmax.f32 %v2559, 0.0
      %v2684 = vmax.f32 %v2564, 0.0
      %v2685 = vmax.f32 %v2567, 0.0
      %v2686 = vmax.f32 %v2572, 0.0
      %v2687 = vmax.f32 %v2575, 0.0
      %v2688 = vmax.f32 %v2580, 0.0
      %v2689 = vmax.f32 %v2583, 0.0
      %v2690 = vmax.f32 %v2588, 0.0
      %v2691 = vmax.f32 %v2591, 0.0
      %v2692 = vmax.f32 %v2596, 0.0
      %v2693 = vmax.f32 %v2599, 0.0
      %v2694 = vmax.f32 %v2604, 0.0
      %v2695 = vmax.f32 %v2607, 0.0
      %v2696 = vmax.f32 %v2612, 0.0
      %v2697 = vmax.f32 %v2615, 0.0
      %v2698 = vmax.f32 %v2620, 0.0
      %v2699 = vmax.f32 %v2623, 0.0
      %v2700 = vmax.f32 %v2628, 0.0
      %v2701 = vmax.f32 %v2631, 0.0
      %v2702 = vmax.f32 %v2636, 0.0
      %v2703 = vmax.f32 %v2639, 0.0
      %v2704 = vmax.f32 %v2644, 0.0
      %v2705 = vmax.f32 %v2647, 0.0
      %v2706 = vmax.f32 %v2652, 0.0
      %v2707 = vmax.f32 %v2655, 0.0
      %v2708 = vmax.f32 %v2660, 0.0
      %v2709 = vmax.f32 %v2663, 0.0
      %v2710 = vmax.f32 %v2668, 0.0
      %v2711 = vmax.f32 %v2671, 0.0
      %v2712 = vmax.f32 %v2676, 0.0
      %v2713 = vmax.f32 %v2679, 0.0
      %v2714 = vpack.c.bf16 %v2683, %v2682
      %v2715 = vpack.c.bf16 %v2685, %v2684
      %v2716 = vpack.c.bf16 %v2687, %v2686
      %v2717 = vpack.c.bf16 %v2689, %v2688
      %v2718 = vpack.c.bf16 %v2691, %v2690
      %v2719 = vpack.c.bf16 %v2693, %v2692
      %v2720 = vpack.c.bf16 %v2695, %v2694
      %v2721 = vpack.c.bf16 %v2697, %v2696
      %v2722 = vpack.c.bf16 %v2699, %v2698
      %v2723 = vpack.c.bf16 %v2701, %v2700
      %v2724 = vpack.c.bf16 %v2703, %v2702
      %v2725 = vpack.c.bf16 %v2705, %v2704
      %v2726 = vpack.c.bf16 %v2707, %v2706
      %v2727 = vpack.c.bf16 %v2709, %v2708
      %v2728 = vpack.c.bf16 %v2711, %v2710
      %v2729 = vpack.c.bf16 %v2713, %v2712
      %v2730 = vld [vmem:[%s5] sm:$0xf]
      %v2731 = vld [vmem:[%s5 + $0x4] sm:$0xf]
      %v2732 = vld [vmem:[%s5 + $0x8] sm:$0xf]
      %v2733 = vld [vmem:[%s5 + $0xc] sm:$0xf]
      %v2734 = vld [vmem:[%s5 + $0x10] sm:$0xf]
      %v2735 = vld [vmem:[%s5 + $0x14] sm:$0xf]
      %v2736 = vld [vmem:[%s5 + $0x18] sm:$0xf]
      %v2737 = vld [vmem:[%s5 + $0x1c] sm:$0xf]
      %v2738 = vld [vmem:[%s6] sm:$0x1]
      %v2740 = vlaneseq
      %v2741 = vshrl.u32 %v2740, 7
      %v2742 = vsub.s32 0, %v2741
      %v2743 = vrot.slane %v2738, %v2742
      %v2753 = vunpack.c.l.b16 %v2730
      %v2754 = vunpack.c.l.b16 %v2731
      %v2755 = vunpack.c.l.b16 %v2732
      %v2756 = vunpack.c.l.b16 %v2733
      %v2757 = vunpack.c.l.b16 %v2734
      %v2758 = vunpack.c.l.b16 %v2735
      %v2759 = vunpack.c.l.b16 %v2736
      %v2760 = vunpack.c.l.b16 %v2737
      %v2761 = vpack.c.b16 %v2754, %v2753
      %v2762 = vpack.c.b16 %v2756, %v2755
      %v2763 = vpack.c.b16 %v2758, %v2757
      %v2764 = vpack.c.b16 %v2760, %v2759
      %vm2769 = vcmask 523264
      %v2771 = vsel %vm2769, %v2714, 0
      %v2774 = vsel %vm2769, %v2715, 0
      %v2777 = vsel %vm2769, %v2716, 0
      %v2780 = vsel %vm2769, %v2717, 0
      %v2783 = vsel %vm2769, %v2718, 0
      %v2786 = vsel %vm2769, %v2719, 0
      %v2789 = vsel %vm2769, %v2720, 0
      %v2792 = vsel %vm2769, %v2721, 0
      %v2795 = vsel %vm2769, %v2722, 0
      %v2798 = vsel %vm2769, %v2723, 0
      %v2801 = vsel %vm2769, %v2724, 0
      %v2804 = vsel %vm2769, %v2725, 0
      %v2807 = vsel %vm2769, %v2726, 0
      %v2810 = vsel %vm2769, %v2727, 0
      %v2813 = vsel %vm2769, %v2728, 0
      %v2816 = vsel %vm2769, %v2729, 0
      %2818 = vmatprep.subr.bf16.mxu0 0
      %2819 = vmatpush1.bf16.msra.mxu0 %v2761
      %2820 = vmatprep.subr.bf16.mxu0 0
      %2821 = vmatpush1.bf16.msra.mxu0 %v2762
      %2822 = vmatprep.subr.bf16.mxu0 0
      %2823 = vmatpush1.bf16.msra.mxu0 %v2763
      %2824 = vmatprep.subr.bf16.mxu0 0
      %2825 = vmatpush1.bf16.msra.mxu0 %v2764
      %2826 = vmatprep.subr.bf16.mxu0 0
      %2827 = vmatpush1.bf16.msra.mxu0 0
      %2828 = vmatprep.subr.bf16.mxu0 0
      %2829 = vmatpush1.bf16.msra.mxu0 0
      %2830 = vmatprep.subr.bf16.mxu0 0
      %2831 = vmatpush1.bf16.msra.mxu0 0
      %2832 = vmatprep.subr.bf16.mxu0 0
      %2833 = vmatpush1.bf16.msra.mxu0 0
      %2834 = vmatprep.subr.bf16.mxu0 0
      %2835 = vmatpush1.bf16.msra.mxu0 0
      %2836 = vmatprep.subr.bf16.mxu0 0
      %2837 = vmatpush1.bf16.msra.mxu0 0
      %2838 = vmatprep.subr.bf16.mxu0 0
      %2839 = vmatpush1.bf16.msra.mxu0 0
      %2840 = vmatprep.subr.bf16.mxu0 0
      %2841 = vmatpush1.bf16.msra.mxu0 0
      %2842 = vmatprep.subr.bf16.mxu0 0
      %2843 = vmatpush1.bf16.msra.mxu0 0
      %2844 = vmatprep.subr.bf16.mxu0 0
      %2845 = vmatpush1.bf16.msra.mxu0 0
      %2846 = vmatprep.subr.bf16.mxu0 0
      %2847 = vmatpush1.bf16.msra.mxu0 0
      %2848 = vmatprep.subr.bf16.mxu0 0
      %2849 = vmatpush1.bf16.msra.mxu0 0
      %2850 = vmatprep.mubr.bf16.mxu0 0
      %2851 = vmatmul.mubr.bf16.gmra.mrb[0].mxu0 %v2771
      %v2852 = vpop.f32.mrb[0].mxu0
      %v2853 = vadd.f32 %v2743, %v2852
      %v2854 = vpop.f32.mrb[0].mxu0
      %v2855 = vpop.f32.mrb[0].mxu0
      %v2856 = vadd.f32 %v2743, %v2855
      %v2857 = vpop.f32.mrb[0].mxu0
      %2858 = vmatprep.mubr.bf16.mxu0 0
      %2859 = vmatmul.mubr.bf16.gmra.mrb[0].mxu0 %v2774
      %v2860 = vpop.f32.mrb[0].mxu0
      %v2861 = vadd.f32 %v2743, %v2860
      %v2862 = vpop.f32.mrb[0].mxu0
      %v2863 = vpop.f32.mrb[0].mxu0
      %v2864 = vadd.f32 %v2743, %v2863
      %v2865 = vpop.f32.mrb[0].mxu0
      %2866 = vmatprep.mubr.bf16.mxu0 0
      %2867 = vmatmul.mubr.bf16.gmra.mrb[0].mxu0 %v2777
      %v2868 = vpop.f32.mrb[0].mxu0
      %v2869 = vadd.f32 %v2743, %v2868
      %v2870 = vpop.f32.mrb[0].mxu0
      %v2871 = vpop.f32.mrb[0].mxu0
      %v2872 = vadd.f32 %v2743, %v2871
      %v2873 = vpop.f32.mrb[0].mxu0
      %2874 = vmatprep.mubr.bf16.mxu0 0
      %2875 = vmatmul.mubr.bf16.gmra.mrb[0].mxu0 %v2780
      %v2876 = vpop.f32.mrb[0].mxu0
      %v2877 = vadd.f32 %v2743, %v2876
      %v2878 = vpop.f32.mrb[0].mxu0
      %v2879 = vpop.f32.mrb[0].mxu0
      %v2880 = vadd.f32 %v2743, %v2879
      %v2881 = vpop.f32.mrb[0].mxu0
      %2882 = vmatprep.mubr.bf16.mxu0 0
      %2883 = vmatmul.mubr.bf16.gmra.mrb[0].mxu0 %v2783
      %v2884 = vpop.f32.mrb[0].mxu0
      %v2885 = vadd.f32 %v2743, %v2884
      %v2886 = vpop.f32.mrb[0].mxu0
      %v2887 = vpop.f32.mrb[0].mxu0
      %v2888 = vadd.f32 %v2743, %v2887
      %v2889 = vpop.f32.mrb[0].mxu0
      %2890 = vmatprep.mubr.bf16.mxu0 0
      %2891 = vmatmul.mubr.bf16.gmra.mrb[0].mxu0 %v2786
      %v2892 = vpop.f32.mrb[0].mxu0
      %v2893 = vadd.f32 %v2743, %v2892
      %v2894 = vpop.f32.mrb[0].mxu0
      %v2895 = vpop.f32.mrb[0].mxu0
      %v2896 = vadd.f32 %v2743, %v2895
      %v2897 = vpop.f32.mrb[0].mxu0
      %2898 = vmatprep.mubr.bf16.mxu0 0
      %2899 = vmatmul.mubr.bf16.gmra.mrb[0].mxu0 %v2789
      %v2900 = vpop.f32.mrb[0].mxu0
      %v2901 = vadd.f32 %v2743, %v2900
      %v2902 = vpop.f32.mrb[0].mxu0
      %v2903 = vpop.f32.mrb[0].mxu0
      %v2904 = vadd.f32 %v2743, %v2903
      %v2905 = vpop.f32.mrb[0].mxu0
      %2906 = vmatprep.mubr.bf16.mxu0 0
      %2907 = vmatmul.mubr.bf16.gmra.mrb[0].mxu0 %v2792
      %v2908 = vpop.f32.mrb[0].mxu0
      %v2909 = vadd.f32 %v2743, %v2908
      %v2910 = vpop.f32.mrb[0].mxu0
      %v2911 = vpop.f32.mrb[0].mxu0
      %v2912 = vadd.f32 %v2743, %v2911
      %v2913 = vpop.f32.mrb[0].mxu0
      %2914 = vmatprep.mubr.bf16.mxu0 0
      %2915 = vmatmul.mubr.bf16.gmra.mrb[0].mxu0 %v2795
      %v2916 = vpop.f32.mrb[0].mxu0
      %v2917 = vadd.f32 %v2743, %v2916
      %v2918 = vpop.f32.mrb[0].mxu0
      %v2919 = vpop.f32.mrb[0].mxu0
      %v2920 = vadd.f32 %v2743, %v2919
      %v2921 = vpop.f32.mrb[0].mxu0
      %2922 = vmatprep.mubr.bf16.mxu0 0
      %2923 = vmatmul.mubr.bf16.gmra.mrb[0].mxu0 %v2798
      %v2924 = vpop.f32.mrb[0].mxu0
      %v2925 = vadd.f32 %v2743, %v2924
      %v2926 = vpop.f32.mrb[0].mxu0
      %v2927 = vpop.f32.mrb[0].mxu0
      %v2928 = vadd.f32 %v2743, %v2927
      %v2929 = vpop.f32.mrb[0].mxu0
      %2930 = vmatprep.mubr.bf16.mxu0 0
      %2931 = vmatmul.mubr.bf16.gmra.mrb[0].mxu0 %v2801
      %v2932 = vpop.f32.mrb[0].mxu0
      %v2933 = vadd.f32 %v2743, %v2932
      %v2934 = vpop.f32.mrb[0].mxu0
      %v2935 = vpop.f32.mrb[0].mxu0
      %v2936 = vadd.f32 %v2743, %v2935
      %v2937 = vpop.f32.mrb[0].mxu0
      %2938 = vmatprep.mubr.bf16.mxu0 0
      %2939 = vmatmul.mubr.bf16.gmra.mrb[0].mxu0 %v2804
      %v2940 = vpop.f32.mrb[0].mxu0
      %v2941 = vadd.f32 %v2743, %v2940
      %v2942 = vpop.f32.mrb[0].mxu0
      %v2943 = vpop.f32.mrb[0].mxu0
      %v2944 = vadd.f32 %v2743, %v2943
      %v2945 = vpop.f32.mrb[0].mxu0
      %2946 = vmatprep.mubr.bf16.mxu0 0
      %2947 = vmatmul.mubr.bf16.gmra.mrb[0].mxu0 %v2807
      %v2948 = vpop.f32.mrb[0].mxu0
      %v2949 = vadd.f32 %v2743, %v2948
      %v2950 = vpop.f32.mrb[0].mxu0
      %v2951 = vpop.f32.mrb[0].mxu0
      %v2952 = vadd.f32 %v2743, %v2951
      %v2953 = vpop.f32.mrb[0].mxu0
      %2954 = vmatprep.mubr.bf16.mxu0 0
      %2955 = vmatmul.mubr.bf16.gmra.mrb[0].mxu0 %v2810
      %v2956 = vpop.f32.mrb[0].mxu0
      %v2957 = vadd.f32 %v2743, %v2956
      %v2958 = vpop.f32.mrb[0].mxu0
      %v2959 = vpop.f32.mrb[0].mxu0
      %v2960 = vadd.f32 %v2743, %v2959
      %v2961 = vpop.f32.mrb[0].mxu0
      %2962 = vmatprep.mubr.bf16.mxu0 0
      %2963 = vmatmul.mubr.bf16.gmra.mrb[0].mxu0 %v2813
      %v2964 = vpop.f32.mrb[0].mxu0
      %v2965 = vadd.f32 %v2743, %v2964
      %v2966 = vpop.f32.mrb[0].mxu0
      %v2967 = vpop.f32.mrb[0].mxu0
      %v2968 = vadd.f32 %v2743, %v2967
      %v2969 = vpop.f32.mrb[0].mxu0
      %2970 = vmatprep.mubr.bf16.mxu0 0
      %2971 = vmatmul.mubr.bf16.gmra.mrb[0].mxu0 %v2816
      %v2972 = vpop.f32.mrb[0].mxu0
      %v2973 = vadd.f32 %v2743, %v2972
      %v2974 = vpop.f32.mrb[0].mxu0
      %v2975 = vpop.f32.mrb[0].mxu0
      %v2976 = vadd.f32 %v2743, %v2975
      %v2977 = vpop.f32.mrb[0].mxu0
      %2978 = vdwg.mxu0
      %v2979 = vmax.f32 %v2853, 0.0
      %v2980 = vmax.f32 %v2856, 0.0
      %v2981 = vmax.f32 %v2861, 0.0
      %v2982 = vmax.f32 %v2864, 0.0
      %v2983 = vmax.f32 %v2869, 0.0
      %v2984 = vmax.f32 %v2872, 0.0
      %v2985 = vmax.f32 %v2877, 0.0
      %v2986 = vmax.f32 %v2880, 0.0
      %v2987 = vmax.f32 %v2885, 0.0
      %v2988 = vmax.f32 %v2888, 0.0
      %v2989 = vmax.f32 %v2893, 0.0
      %v2990 = vmax.f32 %v2896, 0.0
      %v2991 = vmax.f32 %v2901, 0.0
      %v2992 = vmax.f32 %v2904, 0.0
      %v2993 = vmax.f32 %v2909, 0.0
      %v2994 = vmax.f32 %v2912, 0.0
      %v2995 = vmax.f32 %v2917, 0.0
      %v2996 = vmax.f32 %v2920, 0.0
      %v2997 = vmax.f32 %v2925, 0.0
      %v2998 = vmax.f32 %v2928, 0.0
      %v2999 = vmax.f32 %v2933, 0.0
      %v3000 = vmax.f32 %v2936, 0.0
      %v3001 = vmax.f32 %v2941, 0.0
      %v3002 = vmax.f32 %v2944, 0.0
      %v3003 = vmax.f32 %v2949, 0.0
      %v3004 = vmax.f32 %v2952, 0.0
      %v3005 = vmax.f32 %v2957, 0.0
      %v3006 = vmax.f32 %v2960, 0.0
      %v3007 = vmax.f32 %v2965, 0.0
      %v3008 = vmax.f32 %v2968, 0.0
      %v3009 = vmax.f32 %v2973, 0.0
      %v3010 = vmax.f32 %v2976, 0.0
      %v3011 = vpack.c.bf16 %v2980, %v2979
      %v3012 = vpack.c.bf16 %v2982, %v2981
      %v3013 = vpack.c.bf16 %v2984, %v2983
      %v3014 = vpack.c.bf16 %v2986, %v2985
      %v3015 = vpack.c.bf16 %v2988, %v2987
      %v3016 = vpack.c.bf16 %v2990, %v2989
      %v3017 = vpack.c.bf16 %v2992, %v2991
      %v3018 = vpack.c.bf16 %v2994, %v2993
      %v3019 = vpack.c.bf16 %v2996, %v2995
      %v3020 = vpack.c.bf16 %v2998, %v2997
      %v3021 = vpack.c.bf16 %v3000, %v2999
      %v3022 = vpack.c.bf16 %v3002, %v3001
      %v3023 = vpack.c.bf16 %v3004, %v3003
      %v3024 = vpack.c.bf16 %v3006, %v3005
      %v3025 = vpack.c.bf16 %v3008, %v3007
      %v3026 = vpack.c.bf16 %v3010, %v3009
      %v3027 = vld [vmem:[%s7] sm:$0xf]
      %v3028 = vld [vmem:[%s7 + $0x4] sm:$0x3]
      %v3029 = vld [vmem:[%s8] sm:$0x1]
      %v3031 = vlaneseq
      %v3032 = vshrl.u32 %v3031, 7
      %v3033 = vsub.s32 0, %v3032
      %v3034 = vrot.slane %v3029, %v3033
      %v3038 = vunpack.c.l.b16 %v3027
      %v3039 = vunpack.c.l.b16 %v3028
      %v3040 = vpack.c.b16 %v3039, %v3038
      %vm3041 = vcmask 97280
      %v3043 = vsel %vm3041, %v3011, 0
      %v3046 = vsel %vm3041, %v3012, 0
      %v3049 = vsel %vm3041, %v3013, 0
      %v3052 = vsel %vm3041, %v3014, 0
      %v3055 = vsel %vm3041, %v3015, 0
      %v3058 = vsel %vm3041, %v3016, 0
      %v3061 = vsel %vm3041, %v3017, 0
      %v3064 = vsel %vm3041, %v3018, 0
      %v3067 = vsel %vm3041, %v3019, 0
      %v3070 = vsel %vm3041, %v3020, 0
      %v3073 = vsel %vm3041, %v3021, 0
      %v3076 = vsel %vm3041, %v3022, 0
      %v3079 = vsel %vm3041, %v3023, 0
      %v3082 = vsel %vm3041, %v3024, 0
      %v3085 = vsel %vm3041, %v3025, 0
      %v3088 = vsel %vm3041, %v3026, 0
      %vm3090 = vcmask 1045504
      %v3092 = vsel %vm3090, %v3040, 0
      %3094 = vmatprep.subr.bf16.mxu0 0
      %3095 = vmatpush1.bf16.msra.mxu0 %v3092
      %3096 = vmatprep.subr.bf16.mxu0 0
      %3097 = vmatpush1.bf16.msra.mxu0 0
      %3098 = vmatprep.subr.bf16.mxu0 0
      %3099 = vmatpush1.bf16.msra.mxu0 0
      %3100 = vmatprep.subr.bf16.mxu0 0
      %3101 = vmatpush1.bf16.msra.mxu0 0
      %3102 = vmatprep.subr.bf16.mxu0 0
      %3103 = vmatpush1.bf16.msra.mxu0 0
      %3104 = vmatprep.subr.bf16.mxu0 0
      %3105 = vmatpush1.bf16.msra.mxu0 0
      %3106 = vmatprep.subr.bf16.mxu0 0
      %3107 = vmatpush1.bf16.msra.mxu0 0
      %3108 = vmatprep.subr.bf16.mxu0 0
      %3109 = vmatpush1.bf16.msra.mxu0 0
      %3110 = vmatprep.subr.bf16.mxu0 0
      %3111 = vmatpush1.bf16.msra.mxu0 0
      %3112 = vmatprep.subr.bf16.mxu0 0
      %3113 = vmatpush1.bf16.msra.mxu0 0
      %3114 = vmatprep.subr.bf16.mxu0 0
      %3115 = vmatpush1.bf16.msra.mxu0 0
      %3116 = vmatprep.subr.bf16.mxu0 0
      %3117 = vmatpush1.bf16.msra.mxu0 0
      %3118 = vmatprep.subr.bf16.mxu0 0
      %3119 = vmatpush1.bf16.msra.mxu0 0
      %3120 = vmatprep.subr.bf16.mxu0 0
      %3121 = vmatpush1.bf16.msra.mxu0 0
      %3122 = vmatprep.subr.bf16.mxu0 0
      %3123 = vmatpush1.bf16.msra.mxu0 0
      %3124 = vmatprep.subr.bf16.mxu0 0
      %3125 = vmatpush1.bf16.msra.mxu0 0
      %3126 = vmatprep.mubr.bf16.mxu0 0
      %3127 = vmatmul.mubr.bf16.gmra.mrb[0].mxu0 %v3043
      %v3128 = vpop.f32.mrb[0].mxu0
      %v3129 = vadd.f32 %v3034, %v3128
      %v3130 = vpop.f32.mrb[0].mxu0
      %v3131 = vpop.f32.mrb[0].mxu0
      %v3132 = vadd.f32 %v3034, %v3131
      %v3133 = vpop.f32.mrb[0].mxu0
      %3134 = vmatprep.mubr.bf16.mxu0 0
      %3135 = vmatmul.mubr.bf16.gmra.mrb[0].mxu0 %v3046
      %v3136 = vpop.f32.mrb[0].mxu0
      %v3137 = vadd.f32 %v3034, %v3136
      %v3138 = vpop.f32.mrb[0].mxu0
      %v3139 = vpop.f32.mrb[0].mxu0
      %v3140 = vadd.f32 %v3034, %v3139
      %v3141 = vpop.f32.mrb[0].mxu0
      %3142 = vmatprep.mubr.bf16.mxu0 0
      %3143 = vmatmul.mubr.bf16.gmra.mrb[0].mxu0 %v3049
      %v3144 = vpop.f32.mrb[0].mxu0
      %v3145 = vadd.f32 %v3034, %v3144
      %v3146 = vpop.f32.mrb[0].mxu0
      %v3147 = vpop.f32.mrb[0].mxu0
      %v3148 = vadd.f32 %v3034, %v3147
      %v3149 = vpop.f32.mrb[0].mxu0
      %3150 = vmatprep.mubr.bf16.mxu0 0
      %3151 = vmatmul.mubr.bf16.gmra.mrb[0].mxu0 %v3052
      %v3152 = vpop.f32.mrb[0].mxu0
      %v3153 = vadd.f32 %v3034, %v3152
      %v3154 = vpop.f32.mrb[0].mxu0
      %v3155 = vpop.f32.mrb[0].mxu0
      %v3156 = vadd.f32 %v3034, %v3155
      %v3157 = vpop.f32.mrb[0].mxu0
      %3158 = vmatprep.mubr.bf16.mxu0 0
      %3159 = vmatmul.mubr.bf16.gmra.mrb[0].mxu0 %v3055
      %v3160 = vpop.f32.mrb[0].mxu0
      %v3161 = vadd.f32 %v3034, %v3160
      %v3162 = vpop.f32.mrb[0].mxu0
      %v3163 = vpop.f32.mrb[0].mxu0
      %v3164 = vadd.f32 %v3034, %v3163
      %v3165 = vpop.f32.mrb[0].mxu0
      %3166 = vmatprep.mubr.bf16.mxu0 0
      %3167 = vmatmul.mubr.bf16.gmra.mrb[0].mxu0 %v3058
      %v3168 = vpop.f32.mrb[0].mxu0
      %v3169 = vadd.f32 %v3034, %v3168
      %v3170 = vpop.f32.mrb[0].mxu0
      %v3171 = vpop.f32.mrb[0].mxu0
      %v3172 = vadd.f32 %v3034, %v3171
      %v3173 = vpop.f32.mrb[0].mxu0
      %3174 = vmatprep.mubr.bf16.mxu0 0
      %3175 = vmatmul.mubr.bf16.gmra.mrb[0].mxu0 %v3061
      %v3176 = vpop.f32.mrb[0].mxu0
      %v3177 = vadd.f32 %v3034, %v3176
      %v3178 = vpop.f32.mrb[0].mxu0
      %v3179 = vpop.f32.mrb[0].mxu0
      %v3180 = vadd.f32 %v3034, %v3179
      %v3181 = vpop.f32.mrb[0].mxu0
      %3182 = vmatprep.mubr.bf16.mxu0 0
      %3183 = vmatmul.mubr.bf16.gmra.mrb[0].mxu0 %v3064
      %v3184 = vpop.f32.mrb[0].mxu0
      %v3185 = vadd.f32 %v3034, %v3184
      %v3186 = vpop.f32.mrb[0].mxu0
      %v3187 = vpop.f32.mrb[0].mxu0
      %v3188 = vadd.f32 %v3034, %v3187
      %v3189 = vpop.f32.mrb[0].mxu0
      %3190 = vmatprep.mubr.bf16.mxu0 0
      %3191 = vmatmul.mubr.bf16.gmra.mrb[0].mxu0 %v3067
      %v3192 = vpop.f32.mrb[0].mxu0
      %v3193 = vadd.f32 %v3034, %v3192
      %v3194 = vpop.f32.mrb[0].mxu0
      %v3195 = vpop.f32.mrb[0].mxu0
      %v3196 = vadd.f32 %v3034, %v3195
      %v3197 = vpop.f32.mrb[0].mxu0
      %3198 = vmatprep.mubr.bf16.mxu0 0
      %3199 = vmatmul.mubr.bf16.gmra.mrb[0].mxu0 %v3070
      %v3200 = vpop.f32.mrb[0].mxu0
      %v3201 = vadd.f32 %v3034, %v3200
      %v3202 = vpop.f32.mrb[0].mxu0
      %v3203 = vpop.f32.mrb[0].mxu0
      %v3204 = vadd.f32 %v3034, %v3203
      %v3205 = vpop.f32.mrb[0].mxu0
      %3206 = vmatprep.mubr.bf16.mxu0 0
      %3207 = vmatmul.mubr.bf16.gmra.mrb[0].mxu0 %v3073
      %v3208 = vpop.f32.mrb[0].mxu0
      %v3209 = vadd.f32 %v3034, %v3208
      %v3210 = vpop.f32.mrb[0].mxu0
      %v3211 = vpop.f32.mrb[0].mxu0
      %v3212 = vadd.f32 %v3034, %v3211
      %v3213 = vpop.f32.mrb[0].mxu0
      %3214 = vmatprep.mubr.bf16.mxu0 0
      %3215 = vmatmul.mubr.bf16.gmra.mrb[0].mxu0 %v3076
      %v3216 = vpop.f32.mrb[0].mxu0
      %v3217 = vadd.f32 %v3034, %v3216
      %v3218 = vpop.f32.mrb[0].mxu0
      %v3219 = vpop.f32.mrb[0].mxu0
      %v3220 = vadd.f32 %v3034, %v3219
      %v3221 = vpop.f32.mrb[0].mxu0
      %3222 = vmatprep.mubr.bf16.mxu0 0
      %3223 = vmatmul.mubr.bf16.gmra.mrb[0].mxu0 %v3079
      %v3224 = vpop.f32.mrb[0].mxu0
      %v3225 = vadd.f32 %v3034, %v3224
      %v3226 = vpop.f32.mrb[0].mxu0
      %v3227 = vpop.f32.mrb[0].mxu0
      %v3228 = vadd.f32 %v3034, %v3227
      %v3229 = vpop.f32.mrb[0].mxu0
      %3230 = vmatprep.mubr.bf16.mxu0 0
      %3231 = vmatmul.mubr.bf16.gmra.mrb[0].mxu0 %v3082
      %v3232 = vpop.f32.mrb[0].mxu0
      %v3233 = vadd.f32 %v3034, %v3232
      %v3234 = vpop.f32.mrb[0].mxu0
      %v3235 = vpop.f32.mrb[0].mxu0
      %v3236 = vadd.f32 %v3034, %v3235
      %v3237 = vpop.f32.mrb[0].mxu0
      %3238 = vmatprep.mubr.bf16.mxu0 0
      %3239 = vmatmul.mubr.bf16.gmra.mrb[0].mxu0 %v3085
      %v3240 = vpop.f32.mrb[0].mxu0
      %v3241 = vadd.f32 %v3034, %v3240
      %v3242 = vpop.f32.mrb[0].mxu0
      %v3243 = vpop.f32.mrb[0].mxu0
      %v3244 = vadd.f32 %v3034, %v3243
      %v3245 = vpop.f32.mrb[0].mxu0
      %3246 = vmatprep.mubr.bf16.mxu0 0
      %3247 = vmatmul.mubr.bf16.gmra.mrb[0].mxu0 %v3088
      %v3248 = vpop.f32.mrb[0].mxu0
      %v3249 = vadd.f32 %v3034, %v3248
      %v3250 = vpop.f32.mrb[0].mxu0
      %v3251 = vpop.f32.mrb[0].mxu0
      %v3252 = vadd.f32 %v3034, %v3251
      %v3253 = vpop.f32.mrb[0].mxu0
      %3254 = vdwg.mxu0
      %3255 = vst [vmem:[%s589] sm:$0xff] %v3129
      %3256 = vst [vmem:[%s589 + $0x8] sm:$0xff] %v3132
      %3257 = vst [vmem:[%s589 + $0x10] sm:$0xff] %v3137
      %3258 = vst [vmem:[%s589 + $0x18] sm:$0xff] %v3140
      %3259 = vst [vmem:[%s589 + $0x20] sm:$0xff] %v3145
      %3260 = vst [vmem:[%s589 + $0x28] sm:$0xff] %v3148
      %3261 = vst [vmem:[%s589 + $0x30] sm:$0xff] %v3153
      %3262 = vst [vmem:[%s589 + $0x38] sm:$0xff] %v3156
      %3263 = vst [vmem:[%s589 + $0x40] sm:$0xff] %v3161
      %3264 = vst [vmem:[%s589 + $0x48] sm:$0xff] %v3164
      %3265 = vst [vmem:[%s589 + $0x50] sm:$0xff] %v3169
      %3266 = vst [vmem:[%s589 + $0x58] sm:$0xff] %v3172
      %3267 = vst [vmem:[%s589 + $0x60] sm:$0xff] %v3177
      %3268 = vst [vmem:[%s589 + $0x68] sm:$0xff] %v3180
      %3269 = vst [vmem:[%s589 + $0x70] sm:$0xff] %v3185
      %3270 = vst [vmem:[%s589 + $0x78] sm:$0xff] %v3188
      %3271 = vst [vmem:[%s589 + $0x80] sm:$0xff] %v3193
      %3272 = vst [vmem:[%s589 + $0x88] sm:$0xff] %v3196
      %3273 = vst [vmem:[%s589 + $0x90] sm:$0xff] %v3201
      %3274 = vst [vmem:[%s589 + $0x98] sm:$0xff] %v3204
      %3275 = vst [vmem:[%s589 + $0xa0] sm:$0xff] %v3209
      %3276 = vst [vmem:[%s589 + $0xa8] sm:$0xff] %v3212
      %3277 = vst [vmem:[%s589 + $0xb0] sm:$0xff] %v3217
      %3278 = vst [vmem:[%s589 + $0xb8] sm:$0xff] %v3220
      %3279 = vst [vmem:[%s589 + $0xc0] sm:$0xff] %v3225
      %3280 = vst [vmem:[%s589 + $0xc8] sm:$0xff] %v3228
      %3281 = vst [vmem:[%s589 + $0xd0] sm:$0xff] %v3233
      %3282 = vst [vmem:[%s589 + $0xd8] sm:$0xff] %v3236
      %3283 = vst [vmem:[%s589 + $0xe0] sm:$0xff] %v3241
      %3284 = vst [vmem:[%s589 + $0xe8] sm:$0xff] %v3244
      %3285 = vst [vmem:[%s589 + $0xf0] sm:$0xff] %v3249
      %3286 = vst [vmem:[%s589 + $0xf8] sm:$0xff] %v3252
      %v3287 = vpack.c.bf16 %v3132, %v3129
      %v3288 = vpack.c.bf16 %v3140, %v3137
      %v3289 = vpack.c.bf16 %v3148, %v3145
      %v3290 = vpack.c.bf16 %v3156, %v3153
      %v3291 = vpack.c.bf16 %v3164, %v3161
      %v3292 = vpack.c.bf16 %v3172, %v3169
      %v3293 = vpack.c.bf16 %v3180, %v3177
      %v3294 = vpack.c.bf16 %v3188, %v3185
      %v3295 = vpack.c.bf16 %v3196, %v3193
      %v3296 = vpack.c.bf16 %v3204, %v3201
      %v3297 = vpack.c.bf16 %v3212, %v3209
      %v3298 = vpack.c.bf16 %v3220, %v3217
      %v3299 = vpack.c.bf16 %v3228, %v3225
      %v3300 = vpack.c.bf16 %v3236, %v3233
      %v3301 = vpack.c.bf16 %v3244, %v3241
      %v3302 = vpack.c.bf16 %v3252, %v3249
      %v3303 = vld [vmem:[%s9] sm:$0xf]
      %v3304 = vld [vmem:[%s9 + $0x4] sm:$0xf]
      %v3305 = vld [vmem:[%s9 + $0x8] sm:$0xf]
      %v3306 = vld [vmem:[%s9 + $0xc] sm:$0xf]
      %v3307 = vld [vmem:[%s9 + $0x10] sm:$0xf]
      %v3308 = vld [vmem:[%s9 + $0x14] sm:$0xf]
      %v3309 = vld [vmem:[%s9 + $0x18] sm:$0xf]
      %v3310 = vld [vmem:[%s9 + $0x1c] sm:$0xf]
      %v3311 = vld [vmem:[%s9 + $0x20] sm:$0xf]
      %v3312 = vld [vmem:[%s9 + $0x24] sm:$0xf]
      %v3313 = vld [vmem:[%s9 + $0x28] sm:$0xf]
      %v3314 = vld [vmem:[%s9 + $0x2c] sm:$0xf]
      %v3315 = vld [vmem:[%s9 + $0x30] sm:$0xf]
      %v3316 = vld [vmem:[%s9 + $0x34] sm:$0xf]
      %v3317 = vld [vmem:[%s9 + $0x38] sm:$0xf]
      %v3318 = vld [vmem:[%s9 + $0x3c] sm:$0xf]
      %v3319 = vld [vmem:[%s10] sm:$0x1]
      %v3321 = vlaneseq
      %v3322 = vshrl.u32 %v3321, 7
      %v3323 = vsub.s32 0, %v3322
      %v3324 = vrot.slane %v3319, %v3323
      %v3342 = vunpack.c.l.b16 %v3303
      %v3343 = vunpack.c.l.b16 %v3304
      %v3344 = vunpack.c.l.b16 %v3305
      %v3345 = vunpack.c.l.b16 %v3306
      %v3346 = vunpack.c.l.b16 %v3307
      %v3347 = vunpack.c.l.b16 %v3308
      %v3348 = vunpack.c.l.b16 %v3309
      %v3349 = vunpack.c.l.b16 %v3310
      %v3350 = vunpack.c.l.b16 %v3311
      %v3351 = vunpack.c.l.b16 %v3312
      %v3352 = vunpack.c.l.b16 %v3313
      %v3353 = vunpack.c.l.b16 %v3314
      %v3354 = vunpack.c.l.b16 %v3315
      %v3355 = vunpack.c.l.b16 %v3316
      %v3356 = vunpack.c.l.b16 %v3317
      %v3357 = vunpack.c.l.b16 %v3318
      %v3358 = vpack.c.b16 %v3343, %v3342
      %v3359 = vpack.c.b16 %v3345, %v3344
      %v3360 = vpack.c.b16 %v3347, %v3346
      %v3361 = vpack.c.b16 %v3349, %v3348
      %v3362 = vpack.c.b16 %v3351, %v3350
      %v3363 = vpack.c.b16 %v3353, %v3352
      %v3364 = vpack.c.b16 %v3355, %v3354
      %v3365 = vpack.c.b16 %v3357, %v3356
      %3374 = vmatprep.subr.bf16.mxu0 0
      %3375 = vmatpush1.bf16.msra.mxu0 %v3358
      %3376 = vmatprep.subr.bf16.mxu0 0
      %3377 = vmatpush1.bf16.msra.mxu0 %v3359
      %3378 = vmatprep.subr.bf16.mxu0 0
      %3379 = vmatpush1.bf16.msra.mxu0 %v3360
      %3380 = vmatprep.subr.bf16.mxu0 0
      %3381 = vmatpush1.bf16.msra.mxu0 %v3361
      %3382 = vmatprep.subr.bf16.mxu0 0
      %3383 = vmatpush1.bf16.msra.mxu0 %v3362
      %3384 = vmatprep.subr.bf16.mxu0 0
      %3385 = vmatpush1.bf16.msra.mxu0 %v3363
      %3386 = vmatprep.subr.bf16.mxu0 0
      %3387 = vmatpush1.bf16.msra.mxu0 %v3364
      %3388 = vmatprep.subr.bf16.mxu0 0
      %3389 = vmatpush1.bf16.msra.mxu0 %v3365
      %3390 = vmatprep.subr.bf16.mxu0 0
      %3391 = vmatpush1.bf16.msra.mxu0 0
      %3392 = vmatprep.subr.bf16.mxu0 0
      %3393 = vmatpush1.bf16.msra.mxu0 0
      %3394 = vmatprep.subr.bf16.mxu0 0
      %3395 = vmatpush1.bf16.msra.mxu0 0
      %3396 = vmatprep.subr.bf16.mxu0 0
      %3397 = vmatpush1.bf16.msra.mxu0 0
      %3398 = vmatprep.subr.bf16.mxu0 0
      %3399 = vmatpush1.bf16.msra.mxu0 0
      %3400 = vmatprep.subr.bf16.mxu0 0
      %3401 = vmatpush1.bf16.msra.mxu0 0
      %3402 = vmatprep.subr.bf16.mxu0 0
      %3403 = vmatpush1.bf16.msra.mxu0 0
      %3404 = vmatprep.subr.bf16.mxu0 0
      %3405 = vmatpush1.bf16.msra.mxu0 0
      %3406 = vmatprep.mubr.bf16.mxu0 0
      %3407 = vmatmul.mubr.bf16.gmra.mrb[0].mxu0 %v3287
      %v3408 = vpop.f32.mrb[0].mxu0
      %v3409 = vadd.f32 %v3324, %v3408
      %v3410 = vpop.f32.mrb[0].mxu0
      %v3411 = vpop.f32.mrb[0].mxu0
      %v3412 = vadd.f32 %v3324, %v3411
      %v3413 = vpop.f32.mrb[0].mxu0
      %3414 = vmatprep.mubr.bf16.mxu0 0
      %3415 = vmatmul.mubr.bf16.gmra.mrb[0].mxu0 %v3288
      %v3416 = vpop.f32.mrb[0].mxu0
      %v3417 = vadd.f32 %v3324, %v3416
      %v3418 = vpop.f32.mrb[0].mxu0
      %v3419 = vpop.f32.mrb[0].mxu0
      %v3420 = vadd.f32 %v3324, %v3419
      %v3421 = vpop.f32.mrb[0].mxu0
      %3422 = vmatprep.mubr.bf16.mxu0 0
      %3423 = vmatmul.mubr.bf16.gmra.mrb[0].mxu0 %v3289
      %v3424 = vpop.f32.mrb[0].mxu0
      %v3425 = vadd.f32 %v3324, %v3424
      %v3426 = vpop.f32.mrb[0].mxu0
      %v3427 = vpop.f32.mrb[0].mxu0
      %v3428 = vadd.f32 %v3324, %v3427
      %v3429 = vpop.f32.mrb[0].mxu0
      %3430 = vmatprep.mubr.bf16.mxu0 0
      %3431 = vmatmul.mubr.bf16.gmra.mrb[0].mxu0 %v3290
      %v3432 = vpop.f32.mrb[0].mxu0
      %v3433 = vadd.f32 %v3324, %v3432
      %v3434 = vpop.f32.mrb[0].mxu0
      %v3435 = vpop.f32.mrb[0].mxu0
      %v3436 = vadd.f32 %v3324, %v3435
      %v3437 = vpop.f32.mrb[0].mxu0
      %3438 = vmatprep.mubr.bf16.mxu0 0
      %3439 = vmatmul.mubr.bf16.gmra.mrb[0].mxu0 %v3291
      %v3440 = vpop.f32.mrb[0].mxu0
      %v3441 = vadd.f32 %v3324, %v3440
      %v3442 = vpop.f32.mrb[0].mxu0
      %v3443 = vpop.f32.mrb[0].mxu0
      %v3444 = vadd.f32 %v3324, %v3443
      %v3445 = vpop.f32.mrb[0].mxu0
      %3446 = vmatprep.mubr.bf16.mxu0 0
      %3447 = vmatmul.mubr.bf16.gmra.mrb[0].mxu0 %v3292
      %v3448 = vpop.f32.mrb[0].mxu0
      %v3449 = vadd.f32 %v3324, %v3448
      %v3450 = vpop.f32.mrb[0].mxu0
      %v3451 = vpop.f32.mrb[0].mxu0
      %v3452 = vadd.f32 %v3324, %v3451
      %v3453 = vpop.f32.mrb[0].mxu0
      %3454 = vmatprep.mubr.bf16.mxu0 0
      %3455 = vmatmul.mubr.bf16.gmra.mrb[0].mxu0 %v3293
      %v3456 = vpop.f32.mrb[0].mxu0
      %v3457 = vadd.f32 %v3324, %v3456
      %v3458 = vpop.f32.mrb[0].mxu0
      %v3459 = vpop.f32.mrb[0].mxu0
      %v3460 = vadd.f32 %v3324, %v3459
      %v3461 = vpop.f32.mrb[0].mxu0
      %3462 = vmatprep.mubr.bf16.mxu0 0
      %3463 = vmatmul.mubr.bf16.gmra.mrb[0].mxu0 %v3294
      %v3464 = vpop.f32.mrb[0].mxu0
      %v3465 = vadd.f32 %v3324, %v3464
      %v3466 = vpop.f32.mrb[0].mxu0
      %v3467 = vpop.f32.mrb[0].mxu0
      %v3468 = vadd.f32 %v3324, %v3467
      %v3469 = vpop.f32.mrb[0].mxu0
      %3470 = vmatprep.mubr.bf16.mxu0 0
      %3471 = vmatmul.mubr.bf16.gmra.mrb[0].mxu0 %v3295
      %v3472 = vpop.f32.mrb[0].mxu0
      %v3473 = vadd.f32 %v3324, %v3472
      %v3474 = vpop.f32.mrb[0].mxu0
      %v3475 = vpop.f32.mrb[0].mxu0
      %v3476 = vadd.f32 %v3324, %v3475
      %v3477 = vpop.f32.mrb[0].mxu0
      %3478 = vmatprep.mubr.bf16.mxu0 0
      %3479 = vmatmul.mubr.bf16.gmra.mrb[0].mxu0 %v3296
      %v3480 = vpop.f32.mrb[0].mxu0
      %v3481 = vadd.f32 %v3324, %v3480
      %v3482 = vpop.f32.mrb[0].mxu0
      %v3483 = vpop.f32.mrb[0].mxu0
      %v3484 = vadd.f32 %v3324, %v3483
      %v3485 = vpop.f32.mrb[0].mxu0
      %3486 = vmatprep.mubr.bf16.mxu0 0
      %3487 = vmatmul.mubr.bf16.gmra.mrb[0].mxu0 %v3297
      %v3488 = vpop.f32.mrb[0].mxu0
      %v3489 = vadd.f32 %v3324, %v3488
      %v3490 = vpop.f32.mrb[0].mxu0
      %v3491 = vpop.f32.mrb[0].mxu0
      %v3492 = vadd.f32 %v3324, %v3491
      %v3493 = vpop.f32.mrb[0].mxu0
      %3494 = vmatprep.mubr.bf16.mxu0 0
      %3495 = vmatmul.mubr.bf16.gmra.mrb[0].mxu0 %v3298
      %v3496 = vpop.f32.mrb[0].mxu0
      %v3497 = vadd.f32 %v3324, %v3496
      %v3498 = vpop.f32.mrb[0].mxu0
      %v3499 = vpop.f32.mrb[0].mxu0
      %v3500 = vadd.f32 %v3324, %v3499
      %v3501 = vpop.f32.mrb[0].mxu0
      %3502 = vmatprep.mubr.bf16.mxu0 0
      %3503 = vmatmul.mubr.bf16.gmra.mrb[0].mxu0 %v3299
      %v3504 = vpop.f32.mrb[0].mxu0
      %v3505 = vadd.f32 %v3324, %v3504
      %v3506 = vpop.f32.mrb[0].mxu0
      %v3507 = vpop.f32.mrb[0].mxu0
      %v3508 = vadd.f32 %v3324, %v3507
      %v3509 = vpop.f32.mrb[0].mxu0
      %3510 = vmatprep.mubr.bf16.mxu0 0
      %3511 = vmatmul.mubr.bf16.gmra.mrb[0].mxu0 %v3300
      %v3512 = vpop.f32.mrb[0].mxu0
      %v3513 = vadd.f32 %v3324, %v3512
      %v3514 = vpop.f32.mrb[0].mxu0
      %v3515 = vpop.f32.mrb[0].mxu0
      %v3516 = vadd.f32 %v3324, %v3515
      %v3517 = vpop.f32.mrb[0].mxu0
      %3518 = vmatprep.mubr.bf16.mxu0 0
      %3519 = vmatmul.mubr.bf16.gmra.mrb[0].mxu0 %v3301
      %v3520 = vpop.f32.mrb[0].mxu0
      %v3521 = vadd.f32 %v3324, %v3520
      %v3522 = vpop.f32.mrb[0].mxu0
      %v3523 = vpop.f32.mrb[0].mxu0
      %v3524 = vadd.f32 %v3324, %v3523
      %v3525 = vpop.f32.mrb[0].mxu0
      %3526 = vmatprep.mubr.bf16.mxu0 0
      %3527 = vmatmul.mubr.bf16.gmra.mrb[0].mxu0 %v3302
      %v3528 = vpop.f32.mrb[0].mxu0
      %v3529 = vadd.f32 %v3324, %v3528
      %v3530 = vpop.f32.mrb[0].mxu0
      %v3531 = vpop.f32.mrb[0].mxu0
      %v3532 = vadd.f32 %v3324, %v3531
      %v3533 = vpop.f32.mrb[0].mxu0
      %3534 = vdwg.mxu0
      %v3535 = vmax.f32 %v3409, 0.0
      %v3536 = vmax.f32 %v3412, 0.0
      %v3537 = vmax.f32 %v3417, 0.0
      %v3538 = vmax.f32 %v3420, 0.0
      %v3539 = vmax.f32 %v3425, 0.0
      %v3540 = vmax.f32 %v3428, 0.0
      %v3541 = vmax.f32 %v3433, 0.0
      %v3542 = vmax.f32 %v3436, 0.0
      %v3543 = vmax.f32 %v3441, 0.0
      %v3544 = vmax.f32 %v3444, 0.0
      %v3545 = vmax.f32 %v3449, 0.0
      %v3546 = vmax.f32 %v3452, 0.0
      %v3547 = vmax.f32 %v3457, 0.0
      %v3548 = vmax.f32 %v3460, 0.0
      %v3549 = vmax.f32 %v3465, 0.0
      %v3550 = vmax.f32 %v3468, 0.0
      %v3551 = vmax.f32 %v3473, 0.0
      %v3552 = vmax.f32 %v3476, 0.0
      %v3553 = vmax.f32 %v3481, 0.0
      %v3554 = vmax.f32 %v3484, 0.0
      %v3555 = vmax.f32 %v3489, 0.0
      %v3556 = vmax.f32 %v3492, 0.0
      %v3557 = vmax.f32 %v3497, 0.0
      %v3558 = vmax.f32 %v3500, 0.0
      %v3559 = vmax.f32 %v3505, 0.0
      %v3560 = vmax.f32 %v3508, 0.0
      %v3561 = vmax.f32 %v3513, 0.0
      %v3562 = vmax.f32 %v3516, 0.0
      %v3563 = vmax.f32 %v3521, 0.0
      %v3564 = vmax.f32 %v3524, 0.0
      %v3565 = vmax.f32 %v3529, 0.0
      %v3566 = vmax.f32 %v3532, 0.0
      %v3567 = vpack.c.bf16 %v3536, %v3535
      %v3568 = vpack.c.bf16 %v3538, %v3537
      %v3569 = vpack.c.bf16 %v3540, %v3539
      %v3570 = vpack.c.bf16 %v3542, %v3541
      %v3571 = vpack.c.bf16 %v3544, %v3543
      %v3572 = vpack.c.bf16 %v3546, %v3545
      %v3573 = vpack.c.bf16 %v3548, %v3547
      %v3574 = vpack.c.bf16 %v3550, %v3549
      %v3575 = vpack.c.bf16 %v3552, %v3551
      %v3576 = vpack.c.bf16 %v3554, %v3553
      %v3577 = vpack.c.bf16 %v3556, %v3555
      %v3578 = vpack.c.bf16 %v3558, %v3557
      %v3579 = vpack.c.bf16 %v3560, %v3559
      %v3580 = vpack.c.bf16 %v3562, %v3561
      %v3581 = vpack.c.bf16 %v3564, %v3563
      %v3582 = vpack.c.bf16 %v3566, %v3565
      %v3583 = vld [vmem:[%s11] sm:$0xf]
      %v3584 = vld [vmem:[%s11 + $0x4] sm:$0x3]
      %v3585 = vld [vmem:[%s12] sm:$0x1]
      %v3587 = vlaneseq
      %v3588 = vshrl.u32 %v3587, 7
      %v3589 = vsub.s32 0, %v3588
      %v3590 = vrot.slane %v3585, %v3589
      %v3594 = vunpack.c.l.b16 %v3583
      %v3595 = vunpack.c.l.b16 %v3584
      %v3596 = vpack.c.b16 %v3595, %v3594
      %v3598 = vsel %vm3041, %v3567, 0
      %v3601 = vsel %vm3041, %v3568, 0
      %v3604 = vsel %vm3041, %v3569, 0
      %v3607 = vsel %vm3041, %v3570, 0
      %v3610 = vsel %vm3041, %v3571, 0
      %v3613 = vsel %vm3041, %v3572, 0
      %v3616 = vsel %vm3041, %v3573, 0
      %v3619 = vsel %vm3041, %v3574, 0
      %v3622 = vsel %vm3041, %v3575, 0
      %v3625 = vsel %vm3041, %v3576, 0
      %v3628 = vsel %vm3041, %v3577, 0
      %v3631 = vsel %vm3041, %v3578, 0
      %v3634 = vsel %vm3041, %v3579, 0
      %v3637 = vsel %vm3041, %v3580, 0
      %v3640 = vsel %vm3041, %v3581, 0
      %v3643 = vsel %vm3041, %v3582, 0
      %v3646 = vsel %vm3090, %v3596, 0
      %3648 = vmatprep.subr.bf16.mxu0 0
      %3649 = vmatpush1.bf16.msra.mxu0 %v3646
      %3650 = vmatprep.subr.bf16.mxu0 0
      %3651 = vmatpush1.bf16.msra.mxu0 0
      %3652 = vmatprep.subr.bf16.mxu0 0
      %3653 = vmatpush1.bf16.msra.mxu0 0
      %3654 = vmatprep.subr.bf16.mxu0 0
      %3655 = vmatpush1.bf16.msra.mxu0 0
      %3656 = vmatprep.subr.bf16.mxu0 0
      %3657 = vmatpush1.bf16.msra.mxu0 0
      %3658 = vmatprep.subr.bf16.mxu0 0
      %3659 = vmatpush1.bf16.msra.mxu0 0
      %3660 = vmatprep.subr.bf16.mxu0 0
      %3661 = vmatpush1.bf16.msra.mxu0 0
      %3662 = vmatprep.subr.bf16.mxu0 0
      %3663 = vmatpush1.bf16.msra.mxu0 0
      %3664 = vmatprep.subr.bf16.mxu0 0
      %3665 = vmatpush1.bf16.msra.mxu0 0
      %3666 = vmatprep.subr.bf16.mxu0 0
      %3667 = vmatpush1.bf16.msra.mxu0 0
      %3668 = vmatprep.subr.bf16.mxu0 0
      %3669 = vmatpush1.bf16.msra.mxu0 0
      %3670 = vmatprep.subr.bf16.mxu0 0
      %3671 = vmatpush1.bf16.msra.mxu0 0
      %3672 = vmatprep.subr.bf16.mxu0 0
      %3673 = vmatpush1.bf16.msra.mxu0 0
      %3674 = vmatprep.subr.bf16.mxu0 0
      %3675 = vmatpush1.bf16.msra.mxu0 0
      %3676 = vmatprep.subr.bf16.mxu0 0
      %3677 = vmatpush1.bf16.msra.mxu0 0
      %3678 = vmatprep.subr.bf16.mxu0 0
      %3679 = vmatpush1.bf16.msra.mxu0 0
      %3680 = vmatprep.mubr.bf16.mxu0 0
      %3681 = vmatmul.mubr.bf16.gmra.mrb[0].mxu0 %v3598
      %v3682 = vpop.f32.mrb[0].mxu0
      %v3683 = vadd.f32 %v3590, %v3682
      %v3684 = vpop.f32.mrb[0].mxu0
      %v3685 = vpop.f32.mrb[0].mxu0
      %v3686 = vadd.f32 %v3590, %v3685
      %v3687 = vpop.f32.mrb[0].mxu0
      %3688 = vmatprep.mubr.bf16.mxu0 0
      %3689 = vmatmul.mubr.bf16.gmra.mrb[0].mxu0 %v3601
      %v3690 = vpop.f32.mrb[0].mxu0
      %v3691 = vadd.f32 %v3590, %v3690
      %v3692 = vpop.f32.mrb[0].mxu0
      %v3693 = vpop.f32.mrb[0].mxu0
      %v3694 = vadd.f32 %v3590, %v3693
      %v3695 = vpop.f32.mrb[0].mxu0
      %3696 = vmatprep.mubr.bf16.mxu0 0
      %3697 = vmatmul.mubr.bf16.gmra.mrb[0].mxu0 %v3604
      %v3698 = vpop.f32.mrb[0].mxu0
      %v3699 = vadd.f32 %v3590, %v3698
      %v3700 = vpop.f32.mrb[0].mxu0
      %v3701 = vpop.f32.mrb[0].mxu0
      %v3702 = vadd.f32 %v3590, %v3701
      %v3703 = vpop.f32.mrb[0].mxu0
      %3704 = vmatprep.mubr.bf16.mxu0 0
      %3705 = vmatmul.mubr.bf16.gmra.mrb[0].mxu0 %v3607
      %v3706 = vpop.f32.mrb[0].mxu0
      %v3707 = vadd.f32 %v3590, %v3706
      %v3708 = vpop.f32.mrb[0].mxu0
      %v3709 = vpop.f32.mrb[0].mxu0
      %v3710 = vadd.f32 %v3590, %v3709
      %v3711 = vpop.f32.mrb[0].mxu0
      %3712 = vmatprep.mubr.bf16.mxu0 0
      %3713 = vmatmul.mubr.bf16.gmra.mrb[0].mxu0 %v3610
      %v3714 = vpop.f32.mrb[0].mxu0
      %v3715 = vadd.f32 %v3590, %v3714
      %v3716 = vpop.f32.mrb[0].mxu0
      %v3717 = vpop.f32.mrb[0].mxu0
      %v3718 = vadd.f32 %v3590, %v3717
      %v3719 = vpop.f32.mrb[0].mxu0
      %3720 = vmatprep.mubr.bf16.mxu0 0
      %3721 = vmatmul.mubr.bf16.gmra.mrb[0].mxu0 %v3613
      %v3722 = vpop.f32.mrb[0].mxu0
      %v3723 = vadd.f32 %v3590, %v3722
      %v3724 = vpop.f32.mrb[0].mxu0
      %v3725 = vpop.f32.mrb[0].mxu0
      %v3726 = vadd.f32 %v3590, %v3725
      %v3727 = vpop.f32.mrb[0].mxu0
      %3728 = vmatprep.mubr.bf16.mxu0 0
      %3729 = vmatmul.mubr.bf16.gmra.mrb[0].mxu0 %v3616
      %v3730 = vpop.f32.mrb[0].mxu0
      %v3731 = vadd.f32 %v3590, %v3730
      %v3732 = vpop.f32.mrb[0].mxu0
      %v3733 = vpop.f32.mrb[0].mxu0
      %v3734 = vadd.f32 %v3590, %v3733
      %v3735 = vpop.f32.mrb[0].mxu0
      %3736 = vmatprep.mubr.bf16.mxu0 0
      %3737 = vmatmul.mubr.bf16.gmra.mrb[0].mxu0 %v3619
      %v3738 = vpop.f32.mrb[0].mxu0
      %v3739 = vadd.f32 %v3590, %v3738
      %v3740 = vpop.f32.mrb[0].mxu0
      %v3741 = vpop.f32.mrb[0].mxu0
      %v3742 = vadd.f32 %v3590, %v3741
      %v3743 = vpop.f32.mrb[0].mxu0
      %3744 = vmatprep.mubr.bf16.mxu0 0
      %3745 = vmatmul.mubr.bf16.gmra.mrb[0].mxu0 %v3622
      %v3746 = vpop.f32.mrb[0].mxu0
      %v3747 = vadd.f32 %v3590, %v3746
      %v3748 = vpop.f32.mrb[0].mxu0
      %v3749 = vpop.f32.mrb[0].mxu0
      %v3750 = vadd.f32 %v3590, %v3749
      %v3751 = vpop.f32.mrb[0].mxu0
      %3752 = vmatprep.mubr.bf16.mxu0 0
      %3753 = vmatmul.mubr.bf16.gmra.mrb[0].mxu0 %v3625
      %v3754 = vpop.f32.mrb[0].mxu0
      %v3755 = vadd.f32 %v3590, %v3754
      %v3756 = vpop.f32.mrb[0].mxu0
      %v3757 = vpop.f32.mrb[0].mxu0
      %v3758 = vadd.f32 %v3590, %v3757
      %v3759 = vpop.f32.mrb[0].mxu0
      %3760 = vmatprep.mubr.bf16.mxu0 0
      %3761 = vmatmul.mubr.bf16.gmra.mrb[0].mxu0 %v3628
      %v3762 = vpop.f32.mrb[0].mxu0
      %v3763 = vadd.f32 %v3590, %v3762
      %v3764 = vpop.f32.mrb[0].mxu0
      %v3765 = vpop.f32.mrb[0].mxu0
      %v3766 = vadd.f32 %v3590, %v3765
      %v3767 = vpop.f32.mrb[0].mxu0
      %3768 = vmatprep.mubr.bf16.mxu0 0
      %3769 = vmatmul.mubr.bf16.gmra.mrb[0].mxu0 %v3631
      %v3770 = vpop.f32.mrb[0].mxu0
      %v3771 = vadd.f32 %v3590, %v3770
      %v3772 = vpop.f32.mrb[0].mxu0
      %v3773 = vpop.f32.mrb[0].mxu0
      %v3774 = vadd.f32 %v3590, %v3773
      %v3775 = vpop.f32.mrb[0].mxu0
      %3776 = vmatprep.mubr.bf16.mxu0 0
      %3777 = vmatmul.mubr.bf16.gmra.mrb[0].mxu0 %v3634
      %v3778 = vpop.f32.mrb[0].mxu0
      %v3779 = vadd.f32 %v3590, %v3778
      %v3780 = vpop.f32.mrb[0].mxu0
      %v3781 = vpop.f32.mrb[0].mxu0
      %v3782 = vadd.f32 %v3590, %v3781
      %v3783 = vpop.f32.mrb[0].mxu0
      %3784 = vmatprep.mubr.bf16.mxu0 0
      %3785 = vmatmul.mubr.bf16.gmra.mrb[0].mxu0 %v3637
      %v3786 = vpop.f32.mrb[0].mxu0
      %v3787 = vadd.f32 %v3590, %v3786
      %v3788 = vpop.f32.mrb[0].mxu0
      %v3789 = vpop.f32.mrb[0].mxu0
      %v3790 = vadd.f32 %v3590, %v3789
      %v3791 = vpop.f32.mrb[0].mxu0
      %3792 = vmatprep.mubr.bf16.mxu0 0
      %3793 = vmatmul.mubr.bf16.gmra.mrb[0].mxu0 %v3640
      %v3794 = vpop.f32.mrb[0].mxu0
      %v3795 = vadd.f32 %v3590, %v3794
      %v3796 = vpop.f32.mrb[0].mxu0
      %v3797 = vpop.f32.mrb[0].mxu0
      %v3798 = vadd.f32 %v3590, %v3797
      %v3799 = vpop.f32.mrb[0].mxu0
      %3800 = vmatprep.mubr.bf16.mxu0 0
      %3801 = vmatmul.mubr.bf16.gmra.mrb[0].mxu0 %v3643
      %v3802 = vpop.f32.mrb[0].mxu0
      %v3803 = vadd.f32 %v3590, %v3802
      %v3804 = vpop.f32.mrb[0].mxu0
      %v3805 = vpop.f32.mrb[0].mxu0
      %v3806 = vadd.f32 %v3590, %v3805
      %v3807 = vpop.f32.mrb[0].mxu0
      %3808 = vdwg.mxu0
      %v3809 = vmax.f32 %v3683, 0.0
      %v3810 = vmax.f32 %v3686, 0.0
      %v3811 = vmax.f32 %v3691, 0.0
      %v3812 = vmax.f32 %v3694, 0.0
      %v3813 = vmax.f32 %v3699, 0.0
      %v3814 = vmax.f32 %v3702, 0.0
      %v3815 = vmax.f32 %v3707, 0.0
      %v3816 = vmax.f32 %v3710, 0.0
      %v3817 = vmax.f32 %v3715, 0.0
      %v3818 = vmax.f32 %v3718, 0.0
      %v3819 = vmax.f32 %v3723, 0.0
      %v3820 = vmax.f32 %v3726, 0.0
      %v3821 = vmax.f32 %v3731, 0.0
      %v3822 = vmax.f32 %v3734, 0.0
      %v3823 = vmax.f32 %v3739, 0.0
      %v3824 = vmax.f32 %v3742, 0.0
      %v3825 = vmax.f32 %v3747, 0.0
      %v3826 = vmax.f32 %v3750, 0.0
      %v3827 = vmax.f32 %v3755, 0.0
      %v3828 = vmax.f32 %v3758, 0.0
      %v3829 = vmax.f32 %v3763, 0.0
      %v3830 = vmax.f32 %v3766, 0.0
      %v3831 = vmax.f32 %v3771, 0.0
      %v3832 = vmax.f32 %v3774, 0.0
      %v3833 = vmax.f32 %v3779, 0.0
      %v3834 = vmax.f32 %v3782, 0.0
      %v3835 = vmax.f32 %v3787, 0.0
      %v3836 = vmax.f32 %v3790, 0.0
      %v3837 = vmax.f32 %v3795, 0.0
      %v3838 = vmax.f32 %v3798, 0.0
      %v3839 = vmax.f32 %v3803, 0.0
      %v3840 = vmax.f32 %v3806, 0.0
      %v3841 = vpack.c.bf16 %v3810, %v3809
      %v3842 = vpack.c.bf16 %v3812, %v3811
      %v3843 = vpack.c.bf16 %v3814, %v3813
      %v3844 = vpack.c.bf16 %v3816, %v3815
      %v3845 = vpack.c.bf16 %v3818, %v3817
      %v3846 = vpack.c.bf16 %v3820, %v3819
      %v3847 = vpack.c.bf16 %v3822, %v3821
      %v3848 = vpack.c.bf16 %v3824, %v3823
      %v3849 = vpack.c.bf16 %v3826, %v3825
      %v3850 = vpack.c.bf16 %v3828, %v3827
      %v3851 = vpack.c.bf16 %v3830, %v3829
      %v3852 = vpack.c.bf16 %v3832, %v3831
      %v3853 = vpack.c.bf16 %v3834, %v3833
      %v3854 = vpack.c.bf16 %v3836, %v3835
      %v3855 = vpack.c.bf16 %v3838, %v3837
      %v3856 = vpack.c.bf16 %v3840, %v3839
      %v3857 = vld [vmem:[%s13] sm:$0xf]
      %v3858 = vld [vmem:[%s13 + $0x4] sm:$0xf]
      %v3859 = vld [vmem:[%s13 + $0x8] sm:$0xf]
      %v3860 = vld [vmem:[%s13 + $0xc] sm:$0xf]
      %v3861 = vld [vmem:[%s13 + $0x10] sm:$0xf]
      %v3862 = vld [vmem:[%s13 + $0x14] sm:$0xf]
      %v3863 = vld [vmem:[%s13 + $0x18] sm:$0xf]
      %v3864 = vld [vmem:[%s13 + $0x1c] sm:$0xf]
      %v3865 = vld [vmem:[%s14] sm:$0x1]
      %v3867 = vlaneseq
      %v3868 = vshrl.u32 %v3867, 7
      %v3869 = vsub.s32 0, %v3868
      %v3870 = vrot.slane %v3865, %v3869
      %v3880 = vunpack.c.l.b16 %v3857
      %v3881 = vunpack.c.l.b16 %v3858
      %v3882 = vunpack.c.l.b16 %v3859
      %v3883 = vunpack.c.l.b16 %v3860
      %v3884 = vunpack.c.l.b16 %v3861
      %v3885 = vunpack.c.l.b16 %v3862
      %v3886 = vunpack.c.l.b16 %v3863
      %v3887 = vunpack.c.l.b16 %v3864
      %v3888 = vpack.c.b16 %v3881, %v3880
      %v3889 = vpack.c.b16 %v3883, %v3882
      %v3890 = vpack.c.b16 %v3885, %v3884
      %v3891 = vpack.c.b16 %v3887, %v3886
      %v3897 = vsel %vm2769, %v3841, 0
      %v3900 = vsel %vm2769, %v3842, 0
      %v3903 = vsel %vm2769, %v3843, 0
      %v3906 = vsel %vm2769, %v3844, 0
      %v3909 = vsel %vm2769, %v3845, 0
      %v3912 = vsel %vm2769, %v3846, 0
      %v3915 = vsel %vm2769, %v3847, 0
      %v3918 = vsel %vm2769, %v3848, 0
      %v3921 = vsel %vm2769, %v3849, 0
      %v3924 = vsel %vm2769, %v3850, 0
      %v3927 = vsel %vm2769, %v3851, 0
      %v3930 = vsel %vm2769, %v3852, 0
      %v3933 = vsel %vm2769, %v3853, 0
      %v3936 = vsel %vm2769, %v3854, 0
      %v3939 = vsel %vm2769, %v3855, 0
      %v3942 = vsel %vm2769, %v3856, 0
      %3944 = vmatprep.subr.bf16.mxu0 0
      %3945 = vmatpush1.bf16.msra.mxu0 %v3888
      %3946 = vmatprep.subr.bf16.mxu0 0
      %3947 = vmatpush1.bf16.msra.mxu0 %v3889
      %3948 = vmatprep.subr.bf16.mxu0 0
      %3949 = vmatpush1.bf16.msra.mxu0 %v3890
      %3950 = vmatprep.subr.bf16.mxu0 0
      %3951 = vmatpush1.bf16.msra.mxu0 %v3891
      %3952 = vmatprep.subr.bf16.mxu0 0
      %3953 = vmatpush1.bf16.msra.mxu0 0
      %3954 = vmatprep.subr.bf16.mxu0 0
      %3955 = vmatpush1.bf16.msra.mxu0 0
      %3956 = vmatprep.subr.bf16.mxu0 0
      %3957 = vmatpush1.bf16.msra.mxu0 0
      %3958 = vmatprep.subr.bf16.mxu0 0
      %3959 = vmatpush1.bf16.msra.mxu0 0
      %3960 = vmatprep.subr.bf16.mxu0 0
      %3961 = vmatpush1.bf16.msra.mxu0 0
      %3962 = vmatprep.subr.bf16.mxu0 0
      %3963 = vmatpush1.bf16.msra.mxu0 0
      %3964 = vmatprep.subr.bf16.mxu0 0
      %3965 = vmatpush1.bf16.msra.mxu0 0
      %3966 = vmatprep.subr.bf16.mxu0 0
      %3967 = vmatpush1.bf16.msra.mxu0 0
      %3968 = vmatprep.subr.bf16.mxu0 0
      %3969 = vmatpush1.bf16.msra.mxu0 0
      %3970 = vmatprep.subr.bf16.mxu0 0
      %3971 = vmatpush1.bf16.msra.mxu0 0
      %3972 = vmatprep.subr.bf16.mxu0 0
      %3973 = vmatpush1.bf16.msra.mxu0 0
      %3974 = vmatprep.subr.bf16.mxu0 0
      %3975 = vmatpush1.bf16.msra.mxu0 0
      %3976 = vmatprep.mubr.bf16.mxu0 0
      %3977 = vmatmul.mubr.bf16.gmra.mrb[0].mxu0 %v3897
      %v3978 = vpop.f32.mrb[0].mxu0
      %v3979 = vadd.f32 %v3870, %v3978
      %v3980 = vpop.f32.mrb[0].mxu0
      %v3981 = vpop.f32.mrb[0].mxu0
      %v3982 = vadd.f32 %v3870, %v3981
      %v3983 = vpop.f32.mrb[0].mxu0
      %3984 = vmatprep.mubr.bf16.mxu0 0
      %3985 = vmatmul.mubr.bf16.gmra.mrb[0].mxu0 %v3900
      %v3986 = vpop.f32.mrb[0].mxu0
      %v3987 = vadd.f32 %v3870, %v3986
      %v3988 = vpop.f32.mrb[0].mxu0
      %v3989 = vpop.f32.mrb[0].mxu0
      %v3990 = vadd.f32 %v3870, %v3989
      %v3991 = vpop.f32.mrb[0].mxu0
      %3992 = vmatprep.mubr.bf16.mxu0 0
      %3993 = vmatmul.mubr.bf16.gmra.mrb[0].mxu0 %v3903
      %v3994 = vpop.f32.mrb[0].mxu0
      %v3995 = vadd.f32 %v3870, %v3994
      %v3996 = vpop.f32.mrb[0].mxu0
      %v3997 = vpop.f32.mrb[0].mxu0
      %v3998 = vadd.f32 %v3870, %v3997
      %v3999 = vpop.f32.mrb[0].mxu0
      %4000 = vmatprep.mubr.bf16.mxu0 0
      %4001 = vmatmul.mubr.bf16.gmra.mrb[0].mxu0 %v3906
      %v4002 = vpop.f32.mrb[0].mxu0
      %v4003 = vadd.f32 %v3870, %v4002
      %v4004 = vpop.f32.mrb[0].mxu0
      %v4005 = vpop.f32.mrb[0].mxu0
      %v4006 = vadd.f32 %v3870, %v4005
      %v4007 = vpop.f32.mrb[0].mxu0
      %4008 = vmatprep.mubr.bf16.mxu0 0
      %4009 = vmatmul.mubr.bf16.gmra.mrb[0].mxu0 %v3909
      %v4010 = vpop.f32.mrb[0].mxu0
      %v4011 = vadd.f32 %v3870, %v4010
      %v4012 = vpop.f32.mrb[0].mxu0
      %v4013 = vpop.f32.mrb[0].mxu0
      %v4014 = vadd.f32 %v3870, %v4013
      %v4015 = vpop.f32.mrb[0].mxu0
      %4016 = vmatprep.mubr.bf16.mxu0 0
      %4017 = vmatmul.mubr.bf16.gmra.mrb[0].mxu0 %v3912
      %v4018 = vpop.f32.mrb[0].mxu0
      %v4019 = vadd.f32 %v3870, %v4018
      %v4020 = vpop.f32.mrb[0].mxu0
      %v4021 = vpop.f32.mrb[0].mxu0
      %v4022 = vadd.f32 %v3870, %v4021
      %v4023 = vpop.f32.mrb[0].mxu0
      %4024 = vmatprep.mubr.bf16.mxu0 0
      %4025 = vmatmul.mubr.bf16.gmra.mrb[0].mxu0 %v3915
      %v4026 = vpop.f32.mrb[0].mxu0
      %v4027 = vadd.f32 %v3870, %v4026
      %v4028 = vpop.f32.mrb[0].mxu0
      %v4029 = vpop.f32.mrb[0].mxu0
      %v4030 = vadd.f32 %v3870, %v4029
      %v4031 = vpop.f32.mrb[0].mxu0
      %4032 = vmatprep.mubr.bf16.mxu0 0
      %4033 = vmatmul.mubr.bf16.gmra.mrb[0].mxu0 %v3918
      %v4034 = vpop.f32.mrb[0].mxu0
      %v4035 = vadd.f32 %v3870, %v4034
      %v4036 = vpop.f32.mrb[0].mxu0
      %v4037 = vpop.f32.mrb[0].mxu0
      %v4038 = vadd.f32 %v3870, %v4037
      %v4039 = vpop.f32.mrb[0].mxu0
      %4040 = vmatprep.mubr.bf16.mxu0 0
      %4041 = vmatmul.mubr.bf16.gmra.mrb[0].mxu0 %v3921
      %v4042 = vpop.f32.mrb[0].mxu0
      %v4043 = vadd.f32 %v3870, %v4042
      %v4044 = vpop.f32.mrb[0].mxu0
      %v4045 = vpop.f32.mrb[0].mxu0
      %v4046 = vadd.f32 %v3870, %v4045
      %v4047 = vpop.f32.mrb[0].mxu0
      %4048 = vmatprep.mubr.bf16.mxu0 0
      %4049 = vmatmul.mubr.bf16.gmra.mrb[0].mxu0 %v3924
      %v4050 = vpop.f32.mrb[0].mxu0
      %v4051 = vadd.f32 %v3870, %v4050
      %v4052 = vpop.f32.mrb[0].mxu0
      %v4053 = vpop.f32.mrb[0].mxu0
      %v4054 = vadd.f32 %v3870, %v4053
      %v4055 = vpop.f32.mrb[0].mxu0
      %4056 = vmatprep.mubr.bf16.mxu0 0
      %4057 = vmatmul.mubr.bf16.gmra.mrb[0].mxu0 %v3927
      %v4058 = vpop.f32.mrb[0].mxu0
      %v4059 = vadd.f32 %v3870, %v4058
      %v4060 = vpop.f32.mrb[0].mxu0
      %v4061 = vpop.f32.mrb[0].mxu0
      %v4062 = vadd.f32 %v3870, %v4061
      %v4063 = vpop.f32.mrb[0].mxu0
      %4064 = vmatprep.mubr.bf16.mxu0 0
      %4065 = vmatmul.mubr.bf16.gmra.mrb[0].mxu0 %v3930
      %v4066 = vpop.f32.mrb[0].mxu0
      %v4067 = vadd.f32 %v3870, %v4066
      %v4068 = vpop.f32.mrb[0].mxu0
      %v4069 = vpop.f32.mrb[0].mxu0
      %v4070 = vadd.f32 %v3870, %v4069
      %v4071 = vpop.f32.mrb[0].mxu0
      %4072 = vmatprep.mubr.bf16.mxu0 0
      %4073 = vmatmul.mubr.bf16.gmra.mrb[0].mxu0 %v3933
      %v4074 = vpop.f32.mrb[0].mxu0
      %v4075 = vadd.f32 %v3870, %v4074
      %v4076 = vpop.f32.mrb[0].mxu0
      %v4077 = vpop.f32.mrb[0].mxu0
      %v4078 = vadd.f32 %v3870, %v4077
      %v4079 = vpop.f32.mrb[0].mxu0
      %4080 = vmatprep.mubr.bf16.mxu0 0
      %4081 = vmatmul.mubr.bf16.gmra.mrb[0].mxu0 %v3936
      %v4082 = vpop.f32.mrb[0].mxu0
      %v4083 = vadd.f32 %v3870, %v4082
      %v4084 = vpop.f32.mrb[0].mxu0
      %v4085 = vpop.f32.mrb[0].mxu0
      %v4086 = vadd.f32 %v3870, %v4085
      %v4087 = vpop.f32.mrb[0].mxu0
      %4088 = vmatprep.mubr.bf16.mxu0 0
      %4089 = vmatmul.mubr.bf16.gmra.mrb[0].mxu0 %v3939
      %v4090 = vpop.f32.mrb[0].mxu0
      %v4091 = vadd.f32 %v3870, %v4090
      %v4092 = vpop.f32.mrb[0].mxu0
      %v4093 = vpop.f32.mrb[0].mxu0
      %v4094 = vadd.f32 %v3870, %v4093
      %v4095 = vpop.f32.mrb[0].mxu0
      %4096 = vmatprep.mubr.bf16.mxu0 0
      %4097 = vmatmul.mubr.bf16.gmra.mrb[0].mxu0 %v3942
      %v4098 = vpop.f32.mrb[0].mxu0
      %v4099 = vadd.f32 %v3870, %v4098
      %v4100 = vpop.f32.mrb[0].mxu0
      %v4101 = vpop.f32.mrb[0].mxu0
      %v4102 = vadd.f32 %v3870, %v4101
      %v4103 = vpop.f32.mrb[0].mxu0
      %4104 = vdwg.mxu0
      %v4105 = vmax.f32 %v3979, 0.0
      %v4106 = vmax.f32 %v3982, 0.0
      %v4107 = vmax.f32 %v3987, 0.0
      %v4108 = vmax.f32 %v3990, 0.0
      %v4109 = vmax.f32 %v3995, 0.0
      %v4110 = vmax.f32 %v3998, 0.0
      %v4111 = vmax.f32 %v4003, 0.0
      %v4112 = vmax.f32 %v4006, 0.0
      %v4113 = vmax.f32 %v4011, 0.0
      %v4114 = vmax.f32 %v4014, 0.0
      %v4115 = vmax.f32 %v4019, 0.0
      %v4116 = vmax.f32 %v4022, 0.0
      %v4117 = vmax.f32 %v4027, 0.0
      %v4118 = vmax.f32 %v4030, 0.0
      %v4119 = vmax.f32 %v4035, 0.0
      %v4120 = vmax.f32 %v4038, 0.0
      %v4121 = vmax.f32 %v4043, 0.0
      %v4122 = vmax.f32 %v4046, 0.0
      %v4123 = vmax.f32 %v4051, 0.0
      %v4124 = vmax.f32 %v4054, 0.0
      %v4125 = vmax.f32 %v4059, 0.0
      %v4126 = vmax.f32 %v4062, 0.0
      %v4127 = vmax.f32 %v4067, 0.0
      %v4128 = vmax.f32 %v4070, 0.0
      %v4129 = vmax.f32 %v4075, 0.0
      %v4130 = vmax.f32 %v4078, 0.0
      %v4131 = vmax.f32 %v4083, 0.0
      %v4132 = vmax.f32 %v4086, 0.0
      %v4133 = vmax.f32 %v4091, 0.0
      %v4134 = vmax.f32 %v4094, 0.0
      %v4135 = vmax.f32 %v4099, 0.0
      %v4136 = vmax.f32 %v4102, 0.0
      %v4137 = vpack.c.bf16 %v4106, %v4105
      %v4138 = vpack.c.bf16 %v4108, %v4107
      %v4139 = vpack.c.bf16 %v4110, %v4109
      %v4140 = vpack.c.bf16 %v4112, %v4111
      %v4141 = vpack.c.bf16 %v4114, %v4113
      %v4142 = vpack.c.bf16 %v4116, %v4115
      %v4143 = vpack.c.bf16 %v4118, %v4117
      %v4144 = vpack.c.bf16 %v4120, %v4119
      %v4145 = vpack.c.bf16 %v4122, %v4121
      %v4146 = vpack.c.bf16 %v4124, %v4123
      %v4147 = vpack.c.bf16 %v4126, %v4125
      %v4148 = vpack.c.bf16 %v4128, %v4127
      %v4149 = vpack.c.bf16 %v4130, %v4129
      %v4150 = vpack.c.bf16 %v4132, %v4131
      %v4151 = vpack.c.bf16 %v4134, %v4133
      %v4152 = vpack.c.bf16 %v4136, %v4135
      %v4153 = vld [vmem:[%s15] sm:$0xff]
      %v4154 = vld [vmem:[%s15 + $0x8] sm:$0xff]
      %v4155 = vld [vmem:[%s15 + $0x10] sm:$0xff]
      %v4156 = vld [vmem:[%s15 + $0x18] sm:$0xf]
      %v4157 = vld [vmem:[%s15 + $0x1c] sm:$0xff]
      %v4158 = vld [vmem:[%s15 + $0x24] sm:$0xff]
      %v4159 = vld [vmem:[%s15 + $0x2c] sm:$0xff]
      %v4160 = vld [vmem:[%s15 + $0x34] sm:$0xf]
      %v4161 = vld [vmem:[%s15 + $0x38] sm:$0xff]
      %v4162 = vld [vmem:[%s15 + $0x40] sm:$0xff]
      %v4163 = vld [vmem:[%s15 + $0x48] sm:$0xff]
      %v4164 = vld [vmem:[%s15 + $0x50] sm:$0xf]
      %v4165 = vld [vmem:[%s15 + $0x54] sm:$0xff]
      %v4166 = vld [vmem:[%s15 + $0x5c] sm:$0xff]
      %v4167 = vld [vmem:[%s15 + $0x64] sm:$0xff]
      %v4168 = vld [vmem:[%s15 + $0x6c] sm:$0xf]
      %v4169 = vld [vmem:[%s15 + $0x70] sm:$0xff]
      %v4170 = vld [vmem:[%s15 + $0x78] sm:$0xff]
      %v4171 = vld [vmem:[%s15 + $0x80] sm:$0xff]
      %v4172 = vld [vmem:[%s15 + $0x88] sm:$0xf]
      %v4173 = vld [vmem:[%s15 + $0x8c] sm:$0xff]
      %v4174 = vld [vmem:[%s15 + $0x94] sm:$0xff]
      %v4175 = vld [vmem:[%s15 + $0x9c] sm:$0xff]
      %v4176 = vld [vmem:[%s15 + $0xa4] sm:$0xf]
      %v4177 = vld [vmem:[%s15 + $0xa8] sm:$0xff]
      %v4178 = vld [vmem:[%s15 + $0xb0] sm:$0xff]
      %v4179 = vld [vmem:[%s15 + $0xb8] sm:$0xff]
      %v4180 = vld [vmem:[%s15 + $0xc0] sm:$0xf]
      %v4181 = vld [vmem:[%s15 + $0xc4] sm:$0xff]
      %v4182 = vld [vmem:[%s15 + $0xcc] sm:$0xff]
      %v4183 = vld [vmem:[%s15 + $0xd4] sm:$0xff]
      %v4184 = vld [vmem:[%s15 + $0xdc] sm:$0xf]
      %v4185 = vld [vmem:[%s15 + $0xe0] sm:$0xff]
      %v4186 = vld [vmem:[%s15 + $0xe8] sm:$0xff]
      %v4187 = vld [vmem:[%s15 + $0xf0] sm:$0xff]
      %v4188 = vld [vmem:[%s15 + $0xf8] sm:$0xf]
      %v4189 = vld [vmem:[%s15 + $0xfc] sm:$0xff]
      %v4190 = vld [vmem:[%s15 + $0x104] sm:$0xff]
      %v4191 = vld [vmem:[%s15 + $0x10c] sm:$0xff]
      %v4192 = vld [vmem:[%s15 + $0x114] sm:$0xf]
      %v4193 = vld [vmem:[%s15 + $0x118] sm:$0xff]
      %v4194 = vld [vmem:[%s15 + $0x120] sm:$0xff]
      %v4195 = vld [vmem:[%s15 + $0x128] sm:$0xff]
      %v4196 = vld [vmem:[%s15 + $0x130] sm:$0xf]
      %v4197 = vld [vmem:[%s15 + $0x134] sm:$0xff]
      %v4198 = vld [vmem:[%s15 + $0x13c] sm:$0xff]
      %v4199 = vld [vmem:[%s15 + $0x144] sm:$0xff]
      %v4200 = vld [vmem:[%s15 + $0x14c] sm:$0xf]
      %v4201 = vld [vmem:[%s15 + $0x150] sm:$0xff]
      %v4202 = vld [vmem:[%s15 + $0x158] sm:$0xff]
      %v4203 = vld [vmem:[%s15 + $0x160] sm:$0xff]
      %v4204 = vld [vmem:[%s15 + $0x168] sm:$0xf]
      %v4205 = vld [vmem:[%s15 + $0x16c] sm:$0xff]
      %v4206 = vld [vmem:[%s15 + $0x174] sm:$0xff]
      %v4207 = vld [vmem:[%s15 + $0x17c] sm:$0xff]
      %v4208 = vld [vmem:[%s15 + $0x184] sm:$0xf]
      %v4209 = vld [vmem:[%s15 + $0x188] sm:$0xff]
      %v4210 = vld [vmem:[%s15 + $0x190] sm:$0xff]
      %v4211 = vld [vmem:[%s15 + $0x198] sm:$0xff]
      %v4212 = vld [vmem:[%s15 + $0x1a0] sm:$0xf]
      %v4213 = vld [vmem:[%s15 + $0x1a4] sm:$0xff]
      %v4214 = vld [vmem:[%s15 + $0x1ac] sm:$0xff]
      %v4215 = vld [vmem:[%s15 + $0x1b4] sm:$0xff]
      %v4216 = vld [vmem:[%s15 + $0x1bc] sm:$0xf]
      %v4217 = vld [vmem:[%s16] sm:$0xff]
      %v4219 = vlaneseq
      %v4220 = vshrl.u32 %v4219, 7
      %v4221 = vsub.s32 0, %v4220
      %v4222 = vrot.slane %v4217, %v4221
      %v4223 = vlaneseq
      %v4224 = vshrl.u32 %v4223, 7
      %v4225 = vsub.s32 1, %v4224
      %v4226 = vrot.slane %v4217, %v4225
      %v4227 = vlaneseq
      %v4228 = vshrl.u32 %v4227, 7
      %v4229 = vsub.s32 2, %v4228
      %v4230 = vrot.slane %v4217, %v4229
      %v4231 = vlaneseq
      %v4232 = vshrl.u32 %v4231, 7
      %v4233 = vsub.s32 3, %v4232
      %v4234 = vrot.slane %v4217, %v4233
      %v4235 = vlaneseq
      %v4236 = vshrl.u32 %v4235, 7
      %v4237 = vsub.s32 4, %v4236
      %v4238 = vrot.slane %v4217, %v4237
      %v4239 = vlaneseq
      %v4240 = vshrl.u32 %v4239, 7
      %v4241 = vsub.s32 5, %v4240
      %v4242 = vrot.slane %v4217, %v4241
      %v4243 = vlaneseq
      %v4244 = vshrl.u32 %v4243, 7
      %v4245 = vsub.s32 6, %v4244
      %v4246 = vrot.slane %v4217, %v4245
      %v4318 = vunpack.c.l.b16 %v4153
      %v4319 = vunpack.c.h.b16 %v4153
      %v4320 = vunpack.c.l.b16 %v4154
      %v4321 = vunpack.c.h.b16 %v4154
      %v4322 = vunpack.c.l.b16 %v4155
      %v4323 = vunpack.c.h.b16 %v4155
      %v4324 = vunpack.c.l.b16 %v4156
      %v4325 = vunpack.c.l.b16 %v4157
      %v4326 = vunpack.c.h.b16 %v4157
      %v4327 = vunpack.c.l.b16 %v4158
      %v4328 = vunpack.c.h.b16 %v4158
      %v4329 = vunpack.c.l.b16 %v4159
      %v4330 = vunpack.c.h.b16 %v4159
      %v4331 = vunpack.c.l.b16 %v4160
      %v4332 = vunpack.c.l.b16 %v4161
      %v4333 = vunpack.c.h.b16 %v4161
      %v4334 = vunpack.c.l.b16 %v4162
      %v4335 = vunpack.c.h.b16 %v4162
      %v4336 = vunpack.c.l.b16 %v4163
      %v4337 = vunpack.c.h.b16 %v4163
      %v4338 = vunpack.c.l.b16 %v4164
      %v4339 = vunpack.c.l.b16 %v4165
      %v4340 = vunpack.c.h.b16 %v4165
      %v4341 = vunpack.c.l.b16 %v4166
      %v4342 = vunpack.c.h.b16 %v4166
      %v4343 = vunpack.c.l.b16 %v4167
      %v4344 = vunpack.c.h.b16 %v4167
      %v4345 = vunpack.c.l.b16 %v4168
      %v4346 = vunpack.c.l.b16 %v4169
      %v4347 = vunpack.c.h.b16 %v4169
      %v4348 = vunpack.c.l.b16 %v4170
      %v4349 = vunpack.c.h.b16 %v4170
      %v4350 = vunpack.c.l.b16 %v4171
      %v4351 = vunpack.c.h.b16 %v4171
      %v4352 = vunpack.c.l.b16 %v4172
      %v4353 = vunpack.c.l.b16 %v4173
      %v4354 = vunpack.c.h.b16 %v4173
      %v4355 = vunpack.c.l.b16 %v4174
      %v4356 = vunpack.c.h.b16 %v4174
      %v4357 = vunpack.c.l.b16 %v4175
      %v4358 = vunpack.c.h.b16 %v4175
      %v4359 = vunpack.c.l.b16 %v4176
      %v4360 = vunpack.c.l.b16 %v4177
      %v4361 = vunpack.c.h.b16 %v4177
      %v4362 = vunpack.c.l.b16 %v4178
      %v4363 = vunpack.c.h.b16 %v4178
      %v4364 = vunpack.c.l.b16 %v4179
      %v4365 = vunpack.c.h.b16 %v4179
      %v4366 = vunpack.c.l.b16 %v4180
      %v4367 = vunpack.c.l.b16 %v4181
      %v4368 = vunpack.c.h.b16 %v4181
      %v4369 = vunpack.c.l.b16 %v4182
      %v4370 = vunpack.c.h.b16 %v4182
      %v4371 = vunpack.c.l.b16 %v4183
      %v4372 = vunpack.c.h.b16 %v4183
      %v4373 = vunpack.c.l.b16 %v4184
      %v4374 = vunpack.c.l.b16 %v4185
      %v4375 = vunpack.c.h.b16 %v4185
      %v4376 = vunpack.c.l.b16 %v4186
      %v4377 = vunpack.c.h.b16 %v4186
      %v4378 = vunpack.c.l.b16 %v4187
      %v4379 = vunpack.c.h.b16 %v4187
      %v4380 = vunpack.c.l.b16 %v4188
      %v4381 = vunpack.c.l.b16 %v4189
      %v4382 = vunpack.c.h.b16 %v4189
      %v4383 = vunpack.c.l.b16 %v4190
      %v4384 = vunpack.c.h.b16 %v4190
      %v4385 = vunpack.c.l.b16 %v4191
      %v4386 = vunpack.c.h.b16 %v4191
      %v4387 = vunpack.c.l.b16 %v4192
      %v4388 = vunpack.c.l.b16 %v4193
      %v4389 = vunpack.c.h.b16 %v4193
      %v4390 = vunpack.c.l.b16 %v4194
      %v4391 = vunpack.c.h.b16 %v4194
      %v4392 = vunpack.c.l.b16 %v4195
      %v4393 = vunpack.c.h.b16 %v4195
      %v4394 = vunpack.c.l.b16 %v4196
      %v4395 = vunpack.c.l.b16 %v4197
      %v4396 = vunpack.c.h.b16 %v4197
      %v4397 = vunpack.c.l.b16 %v4198
      %v4398 = vunpack.c.h.b16 %v4198
      %v4399 = vunpack.c.l.b16 %v4199
      %v4400 = vunpack.c.h.b16 %v4199
      %v4401 = vunpack.c.l.b16 %v4200
      %v4402 = vunpack.c.l.b16 %v4201
      %v4403 = vunpack.c.h.b16 %v4201
      %v4404 = vunpack.c.l.b16 %v4202
      %v4405 = vunpack.c.h.b16 %v4202
      %v4406 = vunpack.c.l.b16 %v4203
      %v4407 = vunpack.c.h.b16 %v4203
      %v4408 = vunpack.c.l.b16 %v4204
      %v4409 = vunpack.c.l.b16 %v4205
      %v4410 = vunpack.c.h.b16 %v4205
      %v4411 = vunpack.c.l.b16 %v4206
      %v4412 = vunpack.c.h.b16 %v4206
      %v4413 = vunpack.c.l.b16 %v4207
      %v4414 = vunpack.c.h.b16 %v4207
      %v4415 = vunpack.c.l.b16 %v4208
      %v4416 = vunpack.c.l.b16 %v4209
      %v4417 = vunpack.c.h.b16 %v4209
      %v4418 = vunpack.c.l.b16 %v4210
      %v4419 = vunpack.c.h.b16 %v4210
      %v4420 = vunpack.c.l.b16 %v4211
      %v4421 = vunpack.c.h.b16 %v4211
      %v4422 = vunpack.c.l.b16 %v4212
      %v4423 = vunpack.c.l.b16 %v4213
      %v4424 = vunpack.c.h.b16 %v4213
      %v4425 = vunpack.c.l.b16 %v4214
      %v4426 = vunpack.c.h.b16 %v4214
      %v4427 = vunpack.c.l.b16 %v4215
      %v4428 = vunpack.c.h.b16 %v4215
      %v4429 = vunpack.c.l.b16 %v4216
      %v4430 = vpack.c.b16 %v4325, %v4318
      %v4431 = vpack.c.b16 %v4326, %v4319
      %v4432 = vpack.c.b16 %v4327, %v4320
      %v4433 = vpack.c.b16 %v4328, %v4321
      %v4434 = vpack.c.b16 %v4329, %v4322
      %v4435 = vpack.c.b16 %v4330, %v4323
      %v4436 = vpack.c.b16 %v4331, %v4324
      %v4437 = vpack.c.b16 %v4339, %v4332
      %v4438 = vpack.c.b16 %v4340, %v4333
      %v4439 = vpack.c.b16 %v4341, %v4334
      %v4440 = vpack.c.b16 %v4342, %v4335
      %v4441 = vpack.c.b16 %v4343, %v4336
      %v4442 = vpack.c.b16 %v4344, %v4337
      %v4443 = vpack.c.b16 %v4345, %v4338
      %v4444 = vpack.c.b16 %v4353, %v4346
      %v4445 = vpack.c.b16 %v4354, %v4347
      %v4446 = vpack.c.b16 %v4355, %v4348
      %v4447 = vpack.c.b16 %v4356, %v4349
      %v4448 = vpack.c.b16 %v4357, %v4350
      %v4449 = vpack.c.b16 %v4358, %v4351
      %v4450 = vpack.c.b16 %v4359, %v4352
      %v4451 = vpack.c.b16 %v4367, %v4360
      %v4452 = vpack.c.b16 %v4368, %v4361
      %v4453 = vpack.c.b16 %v4369, %v4362
      %v4454 = vpack.c.b16 %v4370, %v4363
      %v4455 = vpack.c.b16 %v4371, %v4364
      %v4456 = vpack.c.b16 %v4372, %v4365
      %v4457 = vpack.c.b16 %v4373, %v4366
      %v4458 = vpack.c.b16 %v4381, %v4374
      %v4459 = vpack.c.b16 %v4382, %v4375
      %v4460 = vpack.c.b16 %v4383, %v4376
      %v4461 = vpack.c.b16 %v4384, %v4377
      %v4462 = vpack.c.b16 %v4385, %v4378
      %v4463 = vpack.c.b16 %v4386, %v4379
      %v4464 = vpack.c.b16 %v4387, %v4380
      %v4465 = vpack.c.b16 %v4395, %v4388
      %v4466 = vpack.c.b16 %v4396, %v4389
      %v4467 = vpack.c.b16 %v4397, %v4390
      %v4468 = vpack.c.b16 %v4398, %v4391
      %v4469 = vpack.c.b16 %v4399, %v4392
      %v4470 = vpack.c.b16 %v4400, %v4393
      %v4471 = vpack.c.b16 %v4401, %v4394
      %v4472 = vpack.c.b16 %v4409, %v4402
      %v4473 = vpack.c.b16 %v4410, %v4403
      %v4474 = vpack.c.b16 %v4411, %v4404
      %v4475 = vpack.c.b16 %v4412, %v4405
      %v4476 = vpack.c.b16 %v4413, %v4406
      %v4477 = vpack.c.b16 %v4414, %v4407
      %v4478 = vpack.c.b16 %v4415, %v4408
      %v4479 = vpack.c.b16 %v4423, %v4416
      %v4480 = vpack.c.b16 %v4424, %v4417
      %v4481 = vpack.c.b16 %v4425, %v4418
      %v4482 = vpack.c.b16 %v4426, %v4419
      %v4483 = vpack.c.b16 %v4427, %v4420
      %v4484 = vpack.c.b16 %v4428, %v4421
      %v4485 = vpack.c.b16 %v4429, %v4422
      %4542 = vmatprep.subr.bf16.mxu0 %v4431
      %4543 = vmatpush1.bf16.msra.mxu0 %v4430
      %4544 = vmatprep.subr.bf16.mxu0 %v4438
      %4545 = vmatpush1.bf16.msra.mxu0 %v4437
      %4546 = vmatprep.subr.bf16.mxu0 %v4445
      %4547 = vmatpush1.bf16.msra.mxu0 %v4444
      %4548 = vmatprep.subr.bf16.mxu0 %v4452
      %4549 = vmatpush1.bf16.msra.mxu0 %v4451
      %4550 = vmatprep.subr.bf16.mxu0 %v4459
      %4551 = vmatpush1.bf16.msra.mxu0 %v4458
      %4552 = vmatprep.subr.bf16.mxu0 %v4466
      %4553 = vmatpush1.bf16.msra.mxu0 %v4465
      %4554 = vmatprep.subr.bf16.mxu0 %v4473
      %4555 = vmatpush1.bf16.msra.mxu0 %v4472
      %4556 = vmatprep.subr.bf16.mxu0 %v4480
      %4557 = vmatpush1.bf16.msra.mxu0 %v4479
      %4558 = vmatprep.subr.bf16.mxu0 0
      %4559 = vmatpush1.bf16.msra.mxu0 0
      %4560 = vmatprep.subr.bf16.mxu0 0
      %4561 = vmatpush1.bf16.msra.mxu0 0
      %4562 = vmatprep.subr.bf16.mxu0 0
      %4563 = vmatpush1.bf16.msra.mxu0 0
      %4564 = vmatprep.subr.bf16.mxu0 0
      %4565 = vmatpush1.bf16.msra.mxu0 0
      %4566 = vmatprep.subr.bf16.mxu0 0
      %4567 = vmatpush1.bf16.msra.mxu0 0
      %4568 = vmatprep.subr.bf16.mxu0 0
      %4569 = vmatpush1.bf16.msra.mxu0 0
      %4570 = vmatprep.subr.bf16.mxu0 0
      %4571 = vmatpush1.bf16.msra.mxu0 0
      %4572 = vmatprep.subr.bf16.mxu0 0
      %4573 = vmatpush1.bf16.msra.mxu0 0
      %4574 = vmatprep.mubr.bf16.mxu0 0
      %4575 = vmatmul.mubr.bf16.gmra.mrb[0].mxu0 %v4137
      %v4576 = vpop.f32.mrb[0].mxu0
      %v4577 = vadd.f32 %v4222, %v4576
      %v4578 = vpop.f32.mrb[0].mxu0
      %v4579 = vadd.f32 %v4226, %v4578
      %v4580 = vpop.f32.mrb[0].mxu0
      %v4581 = vadd.f32 %v4222, %v4580
      %v4582 = vpop.f32.mrb[0].mxu0
      %v4583 = vadd.f32 %v4226, %v4582
      %4584 = vmatprep.mubr.bf16.mxu0 0
      %4585 = vmatmul.mubr.bf16.gmra.mrb[0].mxu0 %v4138
      %v4586 = vpop.f32.mrb[0].mxu0
      %v4587 = vadd.f32 %v4222, %v4586
      %v4588 = vpop.f32.mrb[0].mxu0
      %v4589 = vadd.f32 %v4226, %v4588
      %v4590 = vpop.f32.mrb[0].mxu0
      %v4591 = vadd.f32 %v4222, %v4590
      %v4592 = vpop.f32.mrb[0].mxu0
      %v4593 = vadd.f32 %v4226, %v4592
      %4594 = vmatprep.mubr.bf16.mxu0 0
      %4595 = vmatmul.mubr.bf16.gmra.mrb[0].mxu0 %v4139
      %v4596 = vpop.f32.mrb[0].mxu0
      %v4597 = vadd.f32 %v4222, %v4596
      %v4598 = vpop.f32.mrb[0].mxu0
      %v4599 = vadd.f32 %v4226, %v4598
      %v4600 = vpop.f32.mrb[0].mxu0
      %v4601 = vadd.f32 %v4222, %v4600
      %v4602 = vpop.f32.mrb[0].mxu0
      %v4603 = vadd.f32 %v4226, %v4602
      %4604 = vmatprep.mubr.bf16.mxu0 0
      %4605 = vmatmul.mubr.bf16.gmra.mrb[0].mxu0 %v4140
      %v4606 = vpop.f32.mrb[0].mxu0
      %v4607 = vadd.f32 %v4222, %v4606
      %v4608 = vpop.f32.mrb[0].mxu0
      %v4609 = vadd.f32 %v4226, %v4608
      %v4610 = vpop.f32.mrb[0].mxu0
      %v4611 = vadd.f32 %v4222, %v4610
      %v4612 = vpop.f32.mrb[0].mxu0
      %v4613 = vadd.f32 %v4226, %v4612
      %4614 = vmatprep.mubr.bf16.mxu0 0
      %4615 = vmatmul.mubr.bf16.gmra.mrb[0].mxu0 %v4141
      %v4616 = vpop.f32.mrb[0].mxu0
      %v4617 = vadd.f32 %v4222, %v4616
      %v4618 = vpop.f32.mrb[0].mxu0
      %v4619 = vadd.f32 %v4226, %v4618
      %v4620 = vpop.f32.mrb[0].mxu0
      %v4621 = vadd.f32 %v4222, %v4620
      %v4622 = vpop.f32.mrb[0].mxu0
      %v4623 = vadd.f32 %v4226, %v4622
      %4624 = vmatprep.mubr.bf16.mxu0 0
      %4625 = vmatmul.mubr.bf16.gmra.mrb[0].mxu0 %v4142
      %v4626 = vpop.f32.mrb[0].mxu0
      %v4627 = vadd.f32 %v4222, %v4626
      %v4628 = vpop.f32.mrb[0].mxu0
      %v4629 = vadd.f32 %v4226, %v4628
      %v4630 = vpop.f32.mrb[0].mxu0
      %v4631 = vadd.f32 %v4222, %v4630
      %v4632 = vpop.f32.mrb[0].mxu0
      %v4633 = vadd.f32 %v4226, %v4632
      %4634 = vmatprep.mubr.bf16.mxu0 0
      %4635 = vmatmul.mubr.bf16.gmra.mrb[0].mxu0 %v4143
      %v4636 = vpop.f32.mrb[0].mxu0
      %v4637 = vadd.f32 %v4222, %v4636
      %v4638 = vpop.f32.mrb[0].mxu0
      %v4639 = vadd.f32 %v4226, %v4638
      %v4640 = vpop.f32.mrb[0].mxu0
      %v4641 = vadd.f32 %v4222, %v4640
      %v4642 = vpop.f32.mrb[0].mxu0
      %v4643 = vadd.f32 %v4226, %v4642
      %4644 = vmatprep.mubr.bf16.mxu0 0
      %4645 = vmatmul.mubr.bf16.gmra.mrb[0].mxu0 %v4144
      %v4646 = vpop.f32.mrb[0].mxu0
      %v4647 = vadd.f32 %v4222, %v4646
      %v4648 = vpop.f32.mrb[0].mxu0
      %v4649 = vadd.f32 %v4226, %v4648
      %v4650 = vpop.f32.mrb[0].mxu0
      %v4651 = vadd.f32 %v4222, %v4650
      %v4652 = vpop.f32.mrb[0].mxu0
      %v4653 = vadd.f32 %v4226, %v4652
      %4654 = vmatprep.mubr.bf16.mxu0 0
      %4655 = vmatmul.mubr.bf16.gmra.mrb[0].mxu0 %v4145
      %v4656 = vpop.f32.mrb[0].mxu0
      %v4657 = vadd.f32 %v4222, %v4656
      %v4658 = vpop.f32.mrb[0].mxu0
      %v4659 = vadd.f32 %v4226, %v4658
      %v4660 = vpop.f32.mrb[0].mxu0
      %v4661 = vadd.f32 %v4222, %v4660
      %v4662 = vpop.f32.mrb[0].mxu0
      %v4663 = vadd.f32 %v4226, %v4662
      %4664 = vmatprep.mubr.bf16.mxu0 0
      %4665 = vmatmul.mubr.bf16.gmra.mrb[0].mxu0 %v4146
      %v4666 = vpop.f32.mrb[0].mxu0
      %v4667 = vadd.f32 %v4222, %v4666
      %v4668 = vpop.f32.mrb[0].mxu0
      %v4669 = vadd.f32 %v4226, %v4668
      %v4670 = vpop.f32.mrb[0].mxu0
      %v4671 = vadd.f32 %v4222, %v4670
      %v4672 = vpop.f32.mrb[0].mxu0
      %v4673 = vadd.f32 %v4226, %v4672
      %4674 = vmatprep.mubr.bf16.mxu0 0
      %4675 = vmatmul.mubr.bf16.gmra.mrb[0].mxu0 %v4147
      %v4676 = vpop.f32.mrb[0].mxu0
      %v4677 = vadd.f32 %v4222, %v4676
      %v4678 = vpop.f32.mrb[0].mxu0
      %v4679 = vadd.f32 %v4226, %v4678
      %v4680 = vpop.f32.mrb[0].mxu0
      %v4681 = vadd.f32 %v4222, %v4680
      %v4682 = vpop.f32.mrb[0].mxu0
      %v4683 = vadd.f32 %v4226, %v4682
      %4684 = vmatprep.mubr.bf16.mxu0 0
      %4685 = vmatmul.mubr.bf16.gmra.mrb[0].mxu0 %v4148
      %v4686 = vpop.f32.mrb[0].mxu0
      %v4687 = vadd.f32 %v4222, %v4686
      %v4688 = vpop.f32.mrb[0].mxu0
      %v4689 = vadd.f32 %v4226, %v4688
      %v4690 = vpop.f32.mrb[0].mxu0
      %v4691 = vadd.f32 %v4222, %v4690
      %v4692 = vpop.f32.mrb[0].mxu0
      %v4693 = vadd.f32 %v4226, %v4692
      %4694 = vmatprep.mubr.bf16.mxu0 0
      %4695 = vmatmul.mubr.bf16.gmra.mrb[0].mxu0 %v4149
      %v4696 = vpop.f32.mrb[0].mxu0
      %v4697 = vadd.f32 %v4222, %v4696
      %v4698 = vpop.f32.mrb[0].mxu0
      %v4699 = vadd.f32 %v4226, %v4698
      %v4700 = vpop.f32.mrb[0].mxu0
      %v4701 = vadd.f32 %v4222, %v4700
      %v4702 = vpop.f32.mrb[0].mxu0
      %v4703 = vadd.f32 %v4226, %v4702
      %4704 = vmatprep.mubr.bf16.mxu0 0
      %4705 = vmatmul.mubr.bf16.gmra.mrb[0].mxu0 %v4150
      %v4706 = vpop.f32.mrb[0].mxu0
      %v4707 = vadd.f32 %v4222, %v4706
      %v4708 = vpop.f32.mrb[0].mxu0
      %v4709 = vadd.f32 %v4226, %v4708
      %v4710 = vpop.f32.mrb[0].mxu0
      %v4711 = vadd.f32 %v4222, %v4710
      %v4712 = vpop.f32.mrb[0].mxu0
      %v4713 = vadd.f32 %v4226, %v4712
      %4714 = vmatprep.mubr.bf16.mxu0 0
      %4715 = vmatmul.mubr.bf16.gmra.mrb[0].mxu0 %v4151
      %v4716 = vpop.f32.mrb[0].mxu0
      %v4717 = vadd.f32 %v4222, %v4716
      %v4718 = vpop.f32.mrb[0].mxu0
      %v4719 = vadd.f32 %v4226, %v4718
      %v4720 = vpop.f32.mrb[0].mxu0
      %v4721 = vadd.f32 %v4222, %v4720
      %v4722 = vpop.f32.mrb[0].mxu0
      %v4723 = vadd.f32 %v4226, %v4722
      %4724 = vmatprep.mubr.bf16.mxu0 0
      %4725 = vmatmul.mubr.bf16.gmra.mrb[0].mxu0 %v4152
      %v4726 = vpop.f32.mrb[0].mxu0
      %v4727 = vadd.f32 %v4222, %v4726
      %v4728 = vpop.f32.mrb[0].mxu0
      %v4729 = vadd.f32 %v4226, %v4728
      %v4730 = vpop.f32.mrb[0].mxu0
      %v4731 = vadd.f32 %v4222, %v4730
      %v4732 = vpop.f32.mrb[0].mxu0
      %v4733 = vadd.f32 %v4226, %v4732
      %4734 = vdwg.mxu0
      %4735 = vmatprep.subr.bf16.mxu0 %v4433
      %4736 = vmatpush1.bf16.msra.mxu0 %v4432
      %4737 = vmatprep.subr.bf16.mxu0 %v4440
      %4738 = vmatpush1.bf16.msra.mxu0 %v4439
      %4739 = vmatprep.subr.bf16.mxu0 %v4447
      %4740 = vmatpush1.bf16.msra.mxu0 %v4446
      %4741 = vmatprep.subr.bf16.mxu0 %v4454
      %4742 = vmatpush1.bf16.msra.mxu0 %v4453
      %4743 = vmatprep.subr.bf16.mxu0 %v4461
      %4744 = vmatpush1.bf16.msra.mxu0 %v4460
      %4745 = vmatprep.subr.bf16.mxu0 %v4468
      %4746 = vmatpush1.bf16.msra.mxu0 %v4467
      %4747 = vmatprep.subr.bf16.mxu0 %v4475
      %4748 = vmatpush1.bf16.msra.mxu0 %v4474
      %4749 = vmatprep.subr.bf16.mxu0 %v4482
      %4750 = vmatpush1.bf16.msra.mxu0 %v4481
      %4751 = vmatprep.subr.bf16.mxu0 0
      %4752 = vmatpush1.bf16.msra.mxu0 0
      %4753 = vmatprep.subr.bf16.mxu0 0
      %4754 = vmatpush1.bf16.msra.mxu0 0
      %4755 = vmatprep.subr.bf16.mxu0 0
      %4756 = vmatpush1.bf16.msra.mxu0 0
      %4757 = vmatprep.subr.bf16.mxu0 0
      %4758 = vmatpush1.bf16.msra.mxu0 0
      %4759 = vmatprep.subr.bf16.mxu0 0
      %4760 = vmatpush1.bf16.msra.mxu0 0
      %4761 = vmatprep.subr.bf16.mxu0 0
      %4762 = vmatpush1.bf16.msra.mxu0 0
      %4763 = vmatprep.subr.bf16.mxu0 0
      %4764 = vmatpush1.bf16.msra.mxu0 0
      %4765 = vmatprep.subr.bf16.mxu0 0
      %4766 = vmatpush1.bf16.msra.mxu0 0
      %4767 = vmatprep.mubr.bf16.mxu0 0
      %4768 = vmatmul.mubr.bf16.gmra.mrb[0].mxu0 %v4137
      %v4769 = vpop.f32.mrb[0].mxu0
      %v4770 = vadd.f32 %v4230, %v4769
      %v4771 = vpop.f32.mrb[0].mxu0
      %v4772 = vadd.f32 %v4234, %v4771
      %v4773 = vpop.f32.mrb[0].mxu0
      %v4774 = vadd.f32 %v4230, %v4773
      %v4775 = vpop.f32.mrb[0].mxu0
      %v4776 = vadd.f32 %v4234, %v4775
      %4777 = vmatprep.mubr.bf16.mxu0 0
      %4778 = vmatmul.mubr.bf16.gmra.mrb[0].mxu0 %v4138
      %v4779 = vpop.f32.mrb[0].mxu0
      %v4780 = vadd.f32 %v4230, %v4779
      %v4781 = vpop.f32.mrb[0].mxu0
      %v4782 = vadd.f32 %v4234, %v4781
      %v4783 = vpop.f32.mrb[0].mxu0
      %v4784 = vadd.f32 %v4230, %v4783
      %v4785 = vpop.f32.mrb[0].mxu0
      %v4786 = vadd.f32 %v4234, %v4785
      %4787 = vmatprep.mubr.bf16.mxu0 0
      %4788 = vmatmul.mubr.bf16.gmra.mrb[0].mxu0 %v4139
      %v4789 = vpop.f32.mrb[0].mxu0
      %v4790 = vadd.f32 %v4230, %v4789
      %v4791 = vpop.f32.mrb[0].mxu0
      %v4792 = vadd.f32 %v4234, %v4791
      %v4793 = vpop.f32.mrb[0].mxu0
      %v4794 = vadd.f32 %v4230, %v4793
      %v4795 = vpop.f32.mrb[0].mxu0
      %v4796 = vadd.f32 %v4234, %v4795
      %4797 = vmatprep.mubr.bf16.mxu0 0
      %4798 = vmatmul.mubr.bf16.gmra.mrb[0].mxu0 %v4140
      %v4799 = vpop.f32.mrb[0].mxu0
      %v4800 = vadd.f32 %v4230, %v4799
      %v4801 = vpop.f32.mrb[0].mxu0
      %v4802 = vadd.f32 %v4234, %v4801
      %v4803 = vpop.f32.mrb[0].mxu0
      %v4804 = vadd.f32 %v4230, %v4803
      %v4805 = vpop.f32.mrb[0].mxu0
      %v4806 = vadd.f32 %v4234, %v4805
      %4807 = vmatprep.mubr.bf16.mxu0 0
      %4808 = vmatmul.mubr.bf16.gmra.mrb[0].mxu0 %v4141
      %v4809 = vpop.f32.mrb[0].mxu0
      %v4810 = vadd.f32 %v4230, %v4809
      %v4811 = vpop.f32.mrb[0].mxu0
      %v4812 = vadd.f32 %v4234, %v4811
      %v4813 = vpop.f32.mrb[0].mxu0
      %v4814 = vadd.f32 %v4230, %v4813
      %v4815 = vpop.f32.mrb[0].mxu0
      %v4816 = vadd.f32 %v4234, %v4815
      %4817 = vmatprep.mubr.bf16.mxu0 0
      %4818 = vmatmul.mubr.bf16.gmra.mrb[0].mxu0 %v4142
      %v4819 = vpop.f32.mrb[0].mxu0
      %v4820 = vadd.f32 %v4230, %v4819
      %v4821 = vpop.f32.mrb[0].mxu0
      %v4822 = vadd.f32 %v4234, %v4821
      %v4823 = vpop.f32.mrb[0].mxu0
      %v4824 = vadd.f32 %v4230, %v4823
      %v4825 = vpop.f32.mrb[0].mxu0
      %v4826 = vadd.f32 %v4234, %v4825
      %4827 = vmatprep.mubr.bf16.mxu0 0
      %4828 = vmatmul.mubr.bf16.gmra.mrb[0].mxu0 %v4143
      %v4829 = vpop.f32.mrb[0].mxu0
      %v4830 = vadd.f32 %v4230, %v4829
      %v4831 = vpop.f32.mrb[0].mxu0
      %v4832 = vadd.f32 %v4234, %v4831
      %v4833 = vpop.f32.mrb[0].mxu0
      %v4834 = vadd.f32 %v4230, %v4833
      %v4835 = vpop.f32.mrb[0].mxu0
      %v4836 = vadd.f32 %v4234, %v4835
      %4837 = vmatprep.mubr.bf16.mxu0 0
      %4838 = vmatmul.mubr.bf16.gmra.mrb[0].mxu0 %v4144
      %v4839 = vpop.f32.mrb[0].mxu0
      %v4840 = vadd.f32 %v4230, %v4839
      %v4841 = vpop.f32.mrb[0].mxu0
      %v4842 = vadd.f32 %v4234, %v4841
      %v4843 = vpop.f32.mrb[0].mxu0
      %v4844 = vadd.f32 %v4230, %v4843
      %v4845 = vpop.f32.mrb[0].mxu0
      %v4846 = vadd.f32 %v4234, %v4845
      %4847 = vmatprep.mubr.bf16.mxu0 0
      %4848 = vmatmul.mubr.bf16.gmra.mrb[0].mxu0 %v4145
      %v4849 = vpop.f32.mrb[0].mxu0
      %v4850 = vadd.f32 %v4230, %v4849
      %v4851 = vpop.f32.mrb[0].mxu0
      %v4852 = vadd.f32 %v4234, %v4851
      %v4853 = vpop.f32.mrb[0].mxu0
      %v4854 = vadd.f32 %v4230, %v4853
      %v4855 = vpop.f32.mrb[0].mxu0
      %v4856 = vadd.f32 %v4234, %v4855
      %4857 = vmatprep.mubr.bf16.mxu0 0
      %4858 = vmatmul.mubr.bf16.gmra.mrb[0].mxu0 %v4146
      %v4859 = vpop.f32.mrb[0].mxu0
      %v4860 = vadd.f32 %v4230, %v4859
      %v4861 = vpop.f32.mrb[0].mxu0
      %v4862 = vadd.f32 %v4234, %v4861
      %v4863 = vpop.f32.mrb[0].mxu0
      %v4864 = vadd.f32 %v4230, %v4863
      %v4865 = vpop.f32.mrb[0].mxu0
      %v4866 = vadd.f32 %v4234, %v4865
      %4867 = vmatprep.mubr.bf16.mxu0 0
      %4868 = vmatmul.mubr.bf16.gmra.mrb[0].mxu0 %v4147
      %v4869 = vpop.f32.mrb[0].mxu0
      %v4870 = vadd.f32 %v4230, %v4869
      %v4871 = vpop.f32.mrb[0].mxu0
      %v4872 = vadd.f32 %v4234, %v4871
      %v4873 = vpop.f32.mrb[0].mxu0
      %v4874 = vadd.f32 %v4230, %v4873
      %v4875 = vpop.f32.mrb[0].mxu0
      %v4876 = vadd.f32 %v4234, %v4875
      %4877 = vmatprep.mubr.bf16.mxu0 0
      %4878 = vmatmul.mubr.bf16.gmra.mrb[0].mxu0 %v4148
      %v4879 = vpop.f32.mrb[0].mxu0
      %v4880 = vadd.f32 %v4230, %v4879
      %v4881 = vpop.f32.mrb[0].mxu0
      %v4882 = vadd.f32 %v4234, %v4881
      %v4883 = vpop.f32.mrb[0].mxu0
      %v4884 = vadd.f32 %v4230, %v4883
      %v4885 = vpop.f32.mrb[0].mxu0
      %v4886 = vadd.f32 %v4234, %v4885
      %4887 = vmatprep.mubr.bf16.mxu0 0
      %4888 = vmatmul.mubr.bf16.gmra.mrb[0].mxu0 %v4149
      %v4889 = vpop.f32.mrb[0].mxu0
      %v4890 = vadd.f32 %v4230, %v4889
      %v4891 = vpop.f32.mrb[0].mxu0
      %v4892 = vadd.f32 %v4234, %v4891
      %v4893 = vpop.f32.mrb[0].mxu0
      %v4894 = vadd.f32 %v4230, %v4893
      %v4895 = vpop.f32.mrb[0].mxu0
      %v4896 = vadd.f32 %v4234, %v4895
      %4897 = vmatprep.mubr.bf16.mxu0 0
      %4898 = vmatmul.mubr.bf16.gmra.mrb[0].mxu0 %v4150
      %v4899 = vpop.f32.mrb[0].mxu0
      %v4900 = vadd.f32 %v4230, %v4899
      %v4901 = vpop.f32.mrb[0].mxu0
      %v4902 = vadd.f32 %v4234, %v4901
      %v4903 = vpop.f32.mrb[0].mxu0
      %v4904 = vadd.f32 %v4230, %v4903
      %v4905 = vpop.f32.mrb[0].mxu0
      %v4906 = vadd.f32 %v4234, %v4905
      %4907 = vmatprep.mubr.bf16.mxu0 0
      %4908 = vmatmul.mubr.bf16.gmra.mrb[0].mxu0 %v4151
      %v4909 = vpop.f32.mrb[0].mxu0
      %v4910 = vadd.f32 %v4230, %v4909
      %v4911 = vpop.f32.mrb[0].mxu0
      %v4912 = vadd.f32 %v4234, %v4911
      %v4913 = vpop.f32.mrb[0].mxu0
      %v4914 = vadd.f32 %v4230, %v4913
      %v4915 = vpop.f32.mrb[0].mxu0
      %v4916 = vadd.f32 %v4234, %v4915
      %4917 = vmatprep.mubr.bf16.mxu0 0
      %4918 = vmatmul.mubr.bf16.gmra.mrb[0].mxu0 %v4152
      %v4919 = vpop.f32.mrb[0].mxu0
      %v4920 = vadd.f32 %v4230, %v4919
      %v4921 = vpop.f32.mrb[0].mxu0
      %v4922 = vadd.f32 %v4234, %v4921
      %v4923 = vpop.f32.mrb[0].mxu0
      %v4924 = vadd.f32 %v4230, %v4923
      %v4925 = vpop.f32.mrb[0].mxu0
      %v4926 = vadd.f32 %v4234, %v4925
      %4927 = vdwg.mxu0
      %4928 = vmatprep.subr.bf16.mxu0 %v4435
      %4929 = vmatpush1.bf16.msra.mxu0 %v4434
      %4930 = vmatprep.subr.bf16.mxu0 %v4442
      %4931 = vmatpush1.bf16.msra.mxu0 %v4441
      %4932 = vmatprep.subr.bf16.mxu0 %v4449
      %4933 = vmatpush1.bf16.msra.mxu0 %v4448
      %4934 = vmatprep.subr.bf16.mxu0 %v4456
      %4935 = vmatpush1.bf16.msra.mxu0 %v4455
      %4936 = vmatprep.subr.bf16.mxu0 %v4463
      %4937 = vmatpush1.bf16.msra.mxu0 %v4462
      %4938 = vmatprep.subr.bf16.mxu0 %v4470
      %4939 = vmatpush1.bf16.msra.mxu0 %v4469
      %4940 = vmatprep.subr.bf16.mxu0 %v4477
      %4941 = vmatpush1.bf16.msra.mxu0 %v4476
      %4942 = vmatprep.subr.bf16.mxu0 %v4484
      %4943 = vmatpush1.bf16.msra.mxu0 %v4483
      %4944 = vmatprep.subr.bf16.mxu0 0
      %4945 = vmatpush1.bf16.msra.mxu0 0
      %4946 = vmatprep.subr.bf16.mxu0 0
      %4947 = vmatpush1.bf16.msra.mxu0 0
      %4948 = vmatprep.subr.bf16.mxu0 0
      %4949 = vmatpush1.bf16.msra.mxu0 0
      %4950 = vmatprep.subr.bf16.mxu0 0
      %4951 = vmatpush1.bf16.msra.mxu0 0
      %4952 = vmatprep.subr.bf16.mxu0 0
      %4953 = vmatpush1.bf16.msra.mxu0 0
      %4954 = vmatprep.subr.bf16.mxu0 0
      %4955 = vmatpush1.bf16.msra.mxu0 0
      %4956 = vmatprep.subr.bf16.mxu0 0
      %4957 = vmatpush1.bf16.msra.mxu0 0
      %4958 = vmatprep.subr.bf16.mxu0 0
      %4959 = vmatpush1.bf16.msra.mxu0 0
      %4960 = vmatprep.mubr.bf16.mxu0 0
      %4961 = vmatmul.mubr.bf16.gmra.mrb[0].mxu0 %v4137
      %v4962 = vpop.f32.mrb[0].mxu0
      %v4963 = vadd.f32 %v4238, %v4962
      %v4964 = vpop.f32.mrb[0].mxu0
      %v4965 = vadd.f32 %v4242, %v4964
      %v4966 = vpop.f32.mrb[0].mxu0
      %v4967 = vadd.f32 %v4238, %v4966
      %v4968 = vpop.f32.mrb[0].mxu0
      %v4969 = vadd.f32 %v4242, %v4968
      %4970 = vmatprep.mubr.bf16.mxu0 0
      %4971 = vmatmul.mubr.bf16.gmra.mrb[0].mxu0 %v4138
      %v4972 = vpop.f32.mrb[0].mxu0
      %v4973 = vadd.f32 %v4238, %v4972
      %v4974 = vpop.f32.mrb[0].mxu0
      %v4975 = vadd.f32 %v4242, %v4974
      %v4976 = vpop.f32.mrb[0].mxu0
      %v4977 = vadd.f32 %v4238, %v4976
      %v4978 = vpop.f32.mrb[0].mxu0
      %v4979 = vadd.f32 %v4242, %v4978
      %4980 = vmatprep.mubr.bf16.mxu0 0
      %4981 = vmatmul.mubr.bf16.gmra.mrb[0].mxu0 %v4139
      %v4982 = vpop.f32.mrb[0].mxu0
      %v4983 = vadd.f32 %v4238, %v4982
      %v4984 = vpop.f32.mrb[0].mxu0
      %v4985 = vadd.f32 %v4242, %v4984
      %v4986 = vpop.f32.mrb[0].mxu0
      %v4987 = vadd.f32 %v4238, %v4986
      %v4988 = vpop.f32.mrb[0].mxu0
      %v4989 = vadd.f32 %v4242, %v4988
      %4990 = vmatprep.mubr.bf16.mxu0 0
      %4991 = vmatmul.mubr.bf16.gmra.mrb[0].mxu0 %v4140
      %v4992 = vpop.f32.mrb[0].mxu0
      %v4993 = vadd.f32 %v4238, %v4992
      %v4994 = vpop.f32.mrb[0].mxu0
      %v4995 = vadd.f32 %v4242, %v4994
      %v4996 = vpop.f32.mrb[0].mxu0
      %v4997 = vadd.f32 %v4238, %v4996
      %v4998 = vpop.f32.mrb[0].mxu0
      %v4999 = vadd.f32 %v4242, %v4998
      %5000 = vmatprep.mubr.bf16.mxu0 0
      %5001 = vmatmul.mubr.bf16.gmra.mrb[0].mxu0 %v4141
      %v5002 = vpop.f32.mrb[0].mxu0
      %v5003 = vadd.f32 %v4238, %v5002
      %v5004 = vpop.f32.mrb[0].mxu0
      %v5005 = vadd.f32 %v4242, %v5004
      %v5006 = vpop.f32.mrb[0].mxu0
      %v5007 = vadd.f32 %v4238, %v5006
      %v5008 = vpop.f32.mrb[0].mxu0
      %v5009 = vadd.f32 %v4242, %v5008
      %5010 = vmatprep.mubr.bf16.mxu0 0
      %5011 = vmatmul.mubr.bf16.gmra.mrb[0].mxu0 %v4142
      %v5012 = vpop.f32.mrb[0].mxu0
      %v5013 = vadd.f32 %v4238, %v5012
      %v5014 = vpop.f32.mrb[0].mxu0
      %v5015 = vadd.f32 %v4242, %v5014
      %v5016 = vpop.f32.mrb[0].mxu0
      %v5017 = vadd.f32 %v4238, %v5016
      %v5018 = vpop.f32.mrb[0].mxu0
      %v5019 = vadd.f32 %v4242, %v5018
      %5020 = vmatprep.mubr.bf16.mxu0 0
      %5021 = vmatmul.mubr.bf16.gmra.mrb[0].mxu0 %v4143
      %v5022 = vpop.f32.mrb[0].mxu0
      %v5023 = vadd.f32 %v4238, %v5022
      %v5024 = vpop.f32.mrb[0].mxu0
      %v5025 = vadd.f32 %v4242, %v5024
      %v5026 = vpop.f32.mrb[0].mxu0
      %v5027 = vadd.f32 %v4238, %v5026
      %v5028 = vpop.f32.mrb[0].mxu0
      %v5029 = vadd.f32 %v4242, %v5028
      %5030 = vmatprep.mubr.bf16.mxu0 0
      %5031 = vmatmul.mubr.bf16.gmra.mrb[0].mxu0 %v4144
      %v5032 = vpop.f32.mrb[0].mxu0
      %v5033 = vadd.f32 %v4238, %v5032
      %v5034 = vpop.f32.mrb[0].mxu0
      %v5035 = vadd.f32 %v4242, %v5034
      %v5036 = vpop.f32.mrb[0].mxu0
      %v5037 = vadd.f32 %v4238, %v5036
      %v5038 = vpop.f32.mrb[0].mxu0
      %v5039 = vadd.f32 %v4242, %v5038
      %5040 = vmatprep.mubr.bf16.mxu0 0
      %5041 = vmatmul.mubr.bf16.gmra.mrb[0].mxu0 %v4145
      %v5042 = vpop.f32.mrb[0].mxu0
      %v5043 = vadd.f32 %v4238, %v5042
      %v5044 = vpop.f32.mrb[0].mxu0
      %v5045 = vadd.f32 %v4242, %v5044
      %v5046 = vpop.f32.mrb[0].mxu0
      %v5047 = vadd.f32 %v4238, %v5046
      %v5048 = vpop.f32.mrb[0].mxu0
      %v5049 = vadd.f32 %v4242, %v5048
      %5050 = vmatprep.mubr.bf16.mxu0 0
      %5051 = vmatmul.mubr.bf16.gmra.mrb[0].mxu0 %v4146
      %v5052 = vpop.f32.mrb[0].mxu0
      %v5053 = vadd.f32 %v4238, %v5052
      %v5054 = vpop.f32.mrb[0].mxu0
      %v5055 = vadd.f32 %v4242, %v5054
      %v5056 = vpop.f32.mrb[0].mxu0
      %v5057 = vadd.f32 %v4238, %v5056
      %v5058 = vpop.f32.mrb[0].mxu0
      %v5059 = vadd.f32 %v4242, %v5058
      %5060 = vmatprep.mubr.bf16.mxu0 0
      %5061 = vmatmul.mubr.bf16.gmra.mrb[0].mxu0 %v4147
      %v5062 = vpop.f32.mrb[0].mxu0
      %v5063 = vadd.f32 %v4238, %v5062
      %v5064 = vpop.f32.mrb[0].mxu0
      %v5065 = vadd.f32 %v4242, %v5064
      %v5066 = vpop.f32.mrb[0].mxu0
      %v5067 = vadd.f32 %v4238, %v5066
      %v5068 = vpop.f32.mrb[0].mxu0
      %v5069 = vadd.f32 %v4242, %v5068
      %5070 = vmatprep.mubr.bf16.mxu0 0
      %5071 = vmatmul.mubr.bf16.gmra.mrb[0].mxu0 %v4148
      %v5072 = vpop.f32.mrb[0].mxu0
      %v5073 = vadd.f32 %v4238, %v5072
      %v5074 = vpop.f32.mrb[0].mxu0
      %v5075 = vadd.f32 %v4242, %v5074
      %v5076 = vpop.f32.mrb[0].mxu0
      %v5077 = vadd.f32 %v4238, %v5076
      %v5078 = vpop.f32.mrb[0].mxu0
      %v5079 = vadd.f32 %v4242, %v5078
      %5080 = vmatprep.mubr.bf16.mxu0 0
      %5081 = vmatmul.mubr.bf16.gmra.mrb[0].mxu0 %v4149
      %v5082 = vpop.f32.mrb[0].mxu0
      %v5083 = vadd.f32 %v4238, %v5082
      %v5084 = vpop.f32.mrb[0].mxu0
      %v5085 = vadd.f32 %v4242, %v5084
      %v5086 = vpop.f32.mrb[0].mxu0
      %v5087 = vadd.f32 %v4238, %v5086
      %v5088 = vpop.f32.mrb[0].mxu0
      %v5089 = vadd.f32 %v4242, %v5088
      %5090 = vmatprep.mubr.bf16.mxu0 0
      %5091 = vmatmul.mubr.bf16.gmra.mrb[0].mxu0 %v4150
      %v5092 = vpop.f32.mrb[0].mxu0
      %v5093 = vadd.f32 %v4238, %v5092
      %v5094 = vpop.f32.mrb[0].mxu0
      %v5095 = vadd.f32 %v4242, %v5094
      %v5096 = vpop.f32.mrb[0].mxu0
      %v5097 = vadd.f32 %v4238, %v5096
      %v5098 = vpop.f32.mrb[0].mxu0
      %v5099 = vadd.f32 %v4242, %v5098
      %5100 = vmatprep.mubr.bf16.mxu0 0
      %5101 = vmatmul.mubr.bf16.gmra.mrb[0].mxu0 %v4151
      %v5102 = vpop.f32.mrb[0].mxu0
      %v5103 = vadd.f32 %v4238, %v5102
      %v5104 = vpop.f32.mrb[0].mxu0
      %v5105 = vadd.f32 %v4242, %v5104
      %v5106 = vpop.f32.mrb[0].mxu0
      %v5107 = vadd.f32 %v4238, %v5106
      %v5108 = vpop.f32.mrb[0].mxu0
      %v5109 = vadd.f32 %v4242, %v5108
      %5110 = vmatprep.mubr.bf16.mxu0 0
      %5111 = vmatmul.mubr.bf16.gmra.mrb[0].mxu0 %v4152
      %v5112 = vpop.f32.mrb[0].mxu0
      %v5113 = vadd.f32 %v4238, %v5112
      %v5114 = vpop.f32.mrb[0].mxu0
      %v5115 = vadd.f32 %v4242, %v5114
      %v5116 = vpop.f32.mrb[0].mxu0
      %v5117 = vadd.f32 %v4238, %v5116
      %v5118 = vpop.f32.mrb[0].mxu0
      %v5119 = vadd.f32 %v4242, %v5118
      %5120 = vdwg.mxu0
      %5121 = vmatprep.subr.bf16.mxu0 0
      %5122 = vmatpush1.bf16.msra.mxu0 %v4436
      %5123 = vmatprep.subr.bf16.mxu0 0
      %5124 = vmatpush1.bf16.msra.mxu0 %v4443
      %5125 = vmatprep.subr.bf16.mxu0 0
      %5126 = vmatpush1.bf16.msra.mxu0 %v4450
      %5127 = vmatprep.subr.bf16.mxu0 0
      %5128 = vmatpush1.bf16.msra.mxu0 %v4457
      %5129 = vmatprep.subr.bf16.mxu0 0
      %5130 = vmatpush1.bf16.msra.mxu0 %v4464
      %5131 = vmatprep.subr.bf16.mxu0 0
      %5132 = vmatpush1.bf16.msra.mxu0 %v4471
      %5133 = vmatprep.subr.bf16.mxu0 0
      %5134 = vmatpush1.bf16.msra.mxu0 %v4478
      %5135 = vmatprep.subr.bf16.mxu0 0
      %5136 = vmatpush1.bf16.msra.mxu0 %v4485
      %5137 = vmatprep.subr.bf16.mxu0 0
      %5138 = vmatpush1.bf16.msra.mxu0 0
      %5139 = vmatprep.subr.bf16.mxu0 0
      %5140 = vmatpush1.bf16.msra.mxu0 0
      %5141 = vmatprep.subr.bf16.mxu0 0
      %5142 = vmatpush1.bf16.msra.mxu0 0
      %5143 = vmatprep.subr.bf16.mxu0 0
      %5144 = vmatpush1.bf16.msra.mxu0 0
      %5145 = vmatprep.subr.bf16.mxu0 0
      %5146 = vmatpush1.bf16.msra.mxu0 0
      %5147 = vmatprep.subr.bf16.mxu0 0
      %5148 = vmatpush1.bf16.msra.mxu0 0
      %5149 = vmatprep.subr.bf16.mxu0 0
      %5150 = vmatpush1.bf16.msra.mxu0 0
      %5151 = vmatprep.subr.bf16.mxu0 0
      %5152 = vmatpush1.bf16.msra.mxu0 0
      %5153 = vmatprep.mubr.bf16.mxu0 0
      %5154 = vmatmul.mubr.bf16.gmra.mrb[0].mxu0 %v4137
      %v5155 = vpop.f32.mrb[0].mxu0
      %v5156 = vadd.f32 %v4246, %v5155
      %v5157 = vpop.f32.mrb[0].mxu0
      %v5158 = vpop.f32.mrb[0].mxu0
      %v5159 = vadd.f32 %v4246, %v5158
      %v5160 = vpop.f32.mrb[0].mxu0
      %5161 = vmatprep.mubr.bf16.mxu0 0
      %5162 = vmatmul.mubr.bf16.gmra.mrb[0].mxu0 %v4138
      %v5163 = vpop.f32.mrb[0].mxu0
      %v5164 = vadd.f32 %v4246, %v5163
      %v5165 = vpop.f32.mrb[0].mxu0
      %v5166 = vpop.f32.mrb[0].mxu0
      %v5167 = vadd.f32 %v4246, %v5166
      %v5168 = vpop.f32.mrb[0].mxu0
      %5169 = vmatprep.mubr.bf16.mxu0 0
      %5170 = vmatmul.mubr.bf16.gmra.mrb[0].mxu0 %v4139
      %v5171 = vpop.f32.mrb[0].mxu0
      %v5172 = vadd.f32 %v4246, %v5171
      %v5173 = vpop.f32.mrb[0].mxu0
      %v5174 = vpop.f32.mrb[0].mxu0
      %v5175 = vadd.f32 %v4246, %v5174
      %v5176 = vpop.f32.mrb[0].mxu0
      %5177 = vmatprep.mubr.bf16.mxu0 0
      %5178 = vmatmul.mubr.bf16.gmra.mrb[0].mxu0 %v4140
      %v5179 = vpop.f32.mrb[0].mxu0
      %v5180 = vadd.f32 %v4246, %v5179
      %v5181 = vpop.f32.mrb[0].mxu0
      %v5182 = vpop.f32.mrb[0].mxu0
      %v5183 = vadd.f32 %v4246, %v5182
      %v5184 = vpop.f32.mrb[0].mxu0
      %5185 = vmatprep.mubr.bf16.mxu0 0
      %5186 = vmatmul.mubr.bf16.gmra.mrb[0].mxu0 %v4141
      %v5187 = vpop.f32.mrb[0].mxu0
      %v5188 = vadd.f32 %v4246, %v5187
      %v5189 = vpop.f32.mrb[0].mxu0
      %v5190 = vpop.f32.mrb[0].mxu0
      %v5191 = vadd.f32 %v4246, %v5190
      %v5192 = vpop.f32.mrb[0].mxu0
      %5193 = vmatprep.mubr.bf16.mxu0 0
      %5194 = vmatmul.mubr.bf16.gmra.mrb[0].mxu0 %v4142
      %v5195 = vpop.f32.mrb[0].mxu0
      %v5196 = vadd.f32 %v4246, %v5195
      %v5197 = vpop.f32.mrb[0].mxu0
      %v5198 = vpop.f32.mrb[0].mxu0
      %v5199 = vadd.f32 %v4246, %v5198
      %v5200 = vpop.f32.mrb[0].mxu0
      %5201 = vmatprep.mubr.bf16.mxu0 0
      %5202 = vmatmul.mubr.bf16.gmra.mrb[0].mxu0 %v4143
      %v5203 = vpop.f32.mrb[0].mxu0
      %v5204 = vadd.f32 %v4246, %v5203
      %v5205 = vpop.f32.mrb[0].mxu0
      %v5206 = vpop.f32.mrb[0].mxu0
      %v5207 = vadd.f32 %v4246, %v5206
      %v5208 = vpop.f32.mrb[0].mxu0
      %5209 = vmatprep.mubr.bf16.mxu0 0
      %5210 = vmatmul.mubr.bf16.gmra.mrb[0].mxu0 %v4144
      %v5211 = vpop.f32.mrb[0].mxu0
      %v5212 = vadd.f32 %v4246, %v5211
      %v5213 = vpop.f32.mrb[0].mxu0
      %v5214 = vpop.f32.mrb[0].mxu0
      %v5215 = vadd.f32 %v4246, %v5214
      %v5216 = vpop.f32.mrb[0].mxu0
      %5217 = vmatprep.mubr.bf16.mxu0 0
      %5218 = vmatmul.mubr.bf16.gmra.mrb[0].mxu0 %v4145
      %v5219 = vpop.f32.mrb[0].mxu0
      %v5220 = vadd.f32 %v4246, %v5219
      %v5221 = vpop.f32.mrb[0].mxu0
      %v5222 = vpop.f32.mrb[0].mxu0
      %v5223 = vadd.f32 %v4246, %v5222
      %v5224 = vpop.f32.mrb[0].mxu0
      %5225 = vmatprep.mubr.bf16.mxu0 0
      %5226 = vmatmul.mubr.bf16.gmra.mrb[0].mxu0 %v4146
      %v5227 = vpop.f32.mrb[0].mxu0
      %v5228 = vadd.f32 %v4246, %v5227
      %v5229 = vpop.f32.mrb[0].mxu0
      %v5230 = vpop.f32.mrb[0].mxu0
      %v5231 = vadd.f32 %v4246, %v5230
      %v5232 = vpop.f32.mrb[0].mxu0
      %5233 = vmatprep.mubr.bf16.mxu0 0
      %5234 = vmatmul.mubr.bf16.gmra.mrb[0].mxu0 %v4147
      %v5235 = vpop.f32.mrb[0].mxu0
      %v5236 = vadd.f32 %v4246, %v5235
      %v5237 = vpop.f32.mrb[0].mxu0
      %v5238 = vpop.f32.mrb[0].mxu0
      %v5239 = vadd.f32 %v4246, %v5238
      %v5240 = vpop.f32.mrb[0].mxu0
      %5241 = vmatprep.mubr.bf16.mxu0 0
      %5242 = vmatmul.mubr.bf16.gmra.mrb[0].mxu0 %v4148
      %v5243 = vpop.f32.mrb[0].mxu0
      %v5244 = vadd.f32 %v4246, %v5243
      %v5245 = vpop.f32.mrb[0].mxu0
      %v5246 = vpop.f32.mrb[0].mxu0
      %v5247 = vadd.f32 %v4246, %v5246
      %v5248 = vpop.f32.mrb[0].mxu0
      %5249 = vmatprep.mubr.bf16.mxu0 0
      %5250 = vmatmul.mubr.bf16.gmra.mrb[0].mxu0 %v4149
      %v5251 = vpop.f32.mrb[0].mxu0
      %v5252 = vadd.f32 %v4246, %v5251
      %v5253 = vpop.f32.mrb[0].mxu0
      %v5254 = vpop.f32.mrb[0].mxu0
      %v5255 = vadd.f32 %v4246, %v5254
      %v5256 = vpop.f32.mrb[0].mxu0
      %5257 = vmatprep.mubr.bf16.mxu0 0
      %5258 = vmatmul.mubr.bf16.gmra.mrb[0].mxu0 %v4150
      %v5259 = vpop.f32.mrb[0].mxu0
      %v5260 = vadd.f32 %v4246, %v5259
      %v5261 = vpop.f32.mrb[0].mxu0
      %v5262 = vpop.f32.mrb[0].mxu0
      %v5263 = vadd.f32 %v4246, %v5262
      %v5264 = vpop.f32.mrb[0].mxu0
      %5265 = vmatprep.mubr.bf16.mxu0 0
      %5266 = vmatmul.mubr.bf16.gmra.mrb[0].mxu0 %v4151
      %v5267 = vpop.f32.mrb[0].mxu0
      %v5268 = vadd.f32 %v4246, %v5267
      %v5269 = vpop.f32.mrb[0].mxu0
      %v5270 = vpop.f32.mrb[0].mxu0
      %v5271 = vadd.f32 %v4246, %v5270
      %v5272 = vpop.f32.mrb[0].mxu0
      %5273 = vmatprep.mubr.bf16.mxu0 0
      %5274 = vmatmul.mubr.bf16.gmra.mrb[0].mxu0 %v4152
      %v5275 = vpop.f32.mrb[0].mxu0
      %v5276 = vadd.f32 %v4246, %v5275
      %v5277 = vpop.f32.mrb[0].mxu0
      %v5278 = vpop.f32.mrb[0].mxu0
      %v5279 = vadd.f32 %v4246, %v5278
      %v5280 = vpop.f32.mrb[0].mxu0
      %5281 = vdwg.mxu0
      %v5282 = vxor.u32 %v4577, 2147483648
      %v5283 = vxor.u32 %v4579, 2147483648
      %v5284 = vxor.u32 %v4770, 2147483648
      %v5285 = vxor.u32 %v4772, 2147483648
      %v5286 = vxor.u32 %v4963, 2147483648
      %v5287 = vxor.u32 %v4965, 2147483648
      %v5288 = vxor.u32 %v5156, 2147483648
      %v5289 = vxor.u32 %v4581, 2147483648
      %v5290 = vxor.u32 %v4583, 2147483648
      %v5291 = vxor.u32 %v4774, 2147483648
      %v5292 = vxor.u32 %v4776, 2147483648
      %v5293 = vxor.u32 %v4967, 2147483648
      %v5294 = vxor.u32 %v4969, 2147483648
      %v5295 = vxor.u32 %v5159, 2147483648
      %v5296 = vxor.u32 %v4587, 2147483648
      %v5297 = vxor.u32 %v4589, 2147483648
      %v5298 = vxor.u32 %v4780, 2147483648
      %v5299 = vxor.u32 %v4782, 2147483648
      %v5300 = vxor.u32 %v4973, 2147483648
      %v5301 = vxor.u32 %v4975, 2147483648
      %v5302 = vxor.u32 %v5164, 2147483648
      %v5303 = vxor.u32 %v4591, 2147483648
      %v5304 = vxor.u32 %v4593, 2147483648
      %v5305 = vxor.u32 %v4784, 2147483648
      %v5306 = vxor.u32 %v4786, 2147483648
      %v5307 = vxor.u32 %v4977, 2147483648
      %v5308 = vxor.u32 %v4979, 2147483648
      %v5309 = vxor.u32 %v5167, 2147483648
      %v5310 = vxor.u32 %v4597, 2147483648
      %v5311 = vxor.u32 %v4599, 2147483648
      %v5312 = vxor.u32 %v4790, 2147483648
      %v5313 = vxor.u32 %v4792, 2147483648
      %v5314 = vxor.u32 %v4983, 2147483648
      %v5315 = vxor.u32 %v4985, 2147483648
      %v5316 = vxor.u32 %v5172, 2147483648
      %v5317 = vxor.u32 %v4601, 2147483648
      %v5318 = vxor.u32 %v4603, 2147483648
      %v5319 = vxor.u32 %v4794, 2147483648
      %v5320 = vxor.u32 %v4796, 2147483648
      %v5321 = vxor.u32 %v4987, 2147483648
      %v5322 = vxor.u32 %v4989, 2147483648
      %v5323 = vxor.u32 %v5175, 2147483648
      %v5324 = vxor.u32 %v4607, 2147483648
      %v5325 = vxor.u32 %v4609, 2147483648
      %v5326 = vxor.u32 %v4800, 2147483648
      %v5327 = vxor.u32 %v4802, 2147483648
      %v5328 = vxor.u32 %v4993, 2147483648
      %v5329 = vxor.u32 %v4995, 2147483648
      %v5330 = vxor.u32 %v5180, 2147483648
      %v5331 = vxor.u32 %v4611, 2147483648
      %v5332 = vxor.u32 %v4613, 2147483648
      %v5333 = vxor.u32 %v4804, 2147483648
      %v5334 = vxor.u32 %v4806, 2147483648
      %v5335 = vxor.u32 %v4997, 2147483648
      %v5336 = vxor.u32 %v4999, 2147483648
      %v5337 = vxor.u32 %v5183, 2147483648
      %v5338 = vxor.u32 %v4617, 2147483648
      %v5339 = vxor.u32 %v4619, 2147483648
      %v5340 = vxor.u32 %v4810, 2147483648
      %v5341 = vxor.u32 %v4812, 2147483648
      %v5342 = vxor.u32 %v5003, 2147483648
      %v5343 = vxor.u32 %v5005, 2147483648
      %v5344 = vxor.u32 %v5188, 2147483648
      %v5345 = vxor.u32 %v4621, 2147483648
      %v5346 = vxor.u32 %v4623, 2147483648
      %v5347 = vxor.u32 %v4814, 2147483648
      %v5348 = vxor.u32 %v4816, 2147483648
      %v5349 = vxor.u32 %v5007, 2147483648
      %v5350 = vxor.u32 %v5009, 2147483648
      %v5351 = vxor.u32 %v5191, 2147483648
      %v5352 = vxor.u32 %v4627, 2147483648
      %v5353 = vxor.u32 %v4629, 2147483648
      %v5354 = vxor.u32 %v4820, 2147483648
      %v5355 = vxor.u32 %v4822, 2147483648
      %v5356 = vxor.u32 %v5013, 2147483648
      %v5357 = vxor.u32 %v5015, 2147483648
      %v5358 = vxor.u32 %v5196, 2147483648
      %v5359 = vxor.u32 %v4631, 2147483648
      %v5360 = vxor.u32 %v4633, 2147483648
      %v5361 = vxor.u32 %v4824, 2147483648
      %v5362 = vxor.u32 %v4826, 2147483648
      %v5363 = vxor.u32 %v5017, 2147483648
      %v5364 = vxor.u32 %v5019, 2147483648
      %v5365 = vxor.u32 %v5199, 2147483648
      %v5366 = vxor.u32 %v4637, 2147483648
      %v5367 = vxor.u32 %v4639, 2147483648
      %v5368 = vxor.u32 %v4830, 2147483648
      %v5369 = vxor.u32 %v4832, 2147483648
      %v5370 = vxor.u32 %v5023, 2147483648
      %v5371 = vxor.u32 %v5025, 2147483648
      %v5372 = vxor.u32 %v5204, 2147483648
      %v5373 = vxor.u32 %v4641, 2147483648
      %v5374 = vxor.u32 %v4643, 2147483648
      %v5375 = vxor.u32 %v4834, 2147483648
      %v5376 = vxor.u32 %v4836, 2147483648
      %v5377 = vxor.u32 %v5027, 2147483648
      %v5378 = vxor.u32 %v5029, 2147483648
      %v5379 = vxor.u32 %v5207, 2147483648
      %v5380 = vxor.u32 %v4647, 2147483648
      %v5381 = vxor.u32 %v4649, 2147483648
      %v5382 = vxor.u32 %v4840, 2147483648
      %v5383 = vxor.u32 %v4842, 2147483648
      %v5384 = vxor.u32 %v5033, 2147483648
      %v5385 = vxor.u32 %v5035, 2147483648
      %v5386 = vxor.u32 %v5212, 2147483648
      %v5387 = vxor.u32 %v4651, 2147483648
      %v5388 = vxor.u32 %v4653, 2147483648
      %v5389 = vxor.u32 %v4844, 2147483648
      %v5390 = vxor.u32 %v4846, 2147483648
      %v5391 = vxor.u32 %v5037, 2147483648
      %v5392 = vxor.u32 %v5039, 2147483648
      %v5393 = vxor.u32 %v5215, 2147483648
      %v5394 = vxor.u32 %v4657, 2147483648
      %v5395 = vxor.u32 %v4659, 2147483648
      %v5396 = vxor.u32 %v4850, 2147483648
      %v5397 = vxor.u32 %v4852, 2147483648
      %v5398 = vxor.u32 %v5043, 2147483648
      %v5399 = vxor.u32 %v5045, 2147483648
      %v5400 = vxor.u32 %v5220, 2147483648
      %v5401 = vxor.u32 %v4661, 2147483648
      %v5402 = vxor.u32 %v4663, 2147483648
      %v5403 = vxor.u32 %v4854, 2147483648
      %v5404 = vxor.u32 %v4856, 2147483648
      %v5405 = vxor.u32 %v5047, 2147483648
      %v5406 = vxor.u32 %v5049, 2147483648
      %v5407 = vxor.u32 %v5223, 2147483648
      %v5408 = vxor.u32 %v4667, 2147483648
      %v5409 = vxor.u32 %v4669, 2147483648
      %v5410 = vxor.u32 %v4860, 2147483648
      %v5411 = vxor.u32 %v4862, 2147483648
      %v5412 = vxor.u32 %v5053, 2147483648
      %v5413 = vxor.u32 %v5055, 2147483648
      %v5414 = vxor.u32 %v5228, 2147483648
      %v5415 = vxor.u32 %v4671, 2147483648
      %v5416 = vxor.u32 %v4673, 2147483648
      %v5417 = vxor.u32 %v4864, 2147483648
      %v5418 = vxor.u32 %v4866, 2147483648
      %v5419 = vxor.u32 %v5057, 2147483648
      %v5420 = vxor.u32 %v5059, 2147483648
      %v5421 = vxor.u32 %v5231, 2147483648
      %v5422 = vxor.u32 %v4677, 2147483648
      %v5423 = vxor.u32 %v4679, 2147483648
      %v5424 = vxor.u32 %v4870, 2147483648
      %v5425 = vxor.u32 %v4872, 2147483648
      %v5426 = vxor.u32 %v5063, 2147483648
      %v5427 = vxor.u32 %v5065, 2147483648
      %v5428 = vxor.u32 %v5236, 2147483648
      %v5429 = vxor.u32 %v4681, 2147483648
      %v5430 = vxor.u32 %v4683, 2147483648
      %v5431 = vxor.u32 %v4874, 2147483648
      %v5432 = vxor.u32 %v4876, 2147483648
      %v5433 = vxor.u32 %v5067, 2147483648
      %v5434 = vxor.u32 %v5069, 2147483648
      %v5435 = vxor.u32 %v5239, 2147483648
      %v5436 = vxor.u32 %v4687, 2147483648
      %v5437 = vxor.u32 %v4689, 2147483648
      %v5438 = vxor.u32 %v4880, 2147483648
      %v5439 = vxor.u32 %v4882, 2147483648
      %v5440 = vxor.u32 %v5073, 2147483648
      %v5441 = vxor.u32 %v5075, 2147483648
      %v5442 = vxor.u32 %v5244, 2147483648
      %v5443 = vxor.u32 %v4691, 2147483648
      %v5444 = vxor.u32 %v4693, 2147483648
      %v5445 = vxor.u32 %v4884, 2147483648
      %v5446 = vxor.u32 %v4886, 2147483648
      %v5447 = vxor.u32 %v5077, 2147483648
      %v5448 = vxor.u32 %v5079, 2147483648
      %v5449 = vxor.u32 %v5247, 2147483648
      %v5450 = vxor.u32 %v4697, 2147483648
      %v5451 = vxor.u32 %v4699, 2147483648
      %v5452 = vxor.u32 %v4890, 2147483648
      %v5453 = vxor.u32 %v4892, 2147483648
      %v5454 = vxor.u32 %v5083, 2147483648
      %v5455 = vxor.u32 %v5085, 2147483648
      %v5456 = vxor.u32 %v5252, 2147483648
      %v5457 = vxor.u32 %v4701, 2147483648
      %v5458 = vxor.u32 %v4703, 2147483648
      %v5459 = vxor.u32 %v4894, 2147483648
      %v5460 = vxor.u32 %v4896, 2147483648
      %v5461 = vxor.u32 %v5087, 2147483648
      %v5462 = vxor.u32 %v5089, 2147483648
      %v5463 = vxor.u32 %v5255, 2147483648
      %v5464 = vxor.u32 %v4707, 2147483648
      %v5465 = vxor.u32 %v4709, 2147483648
      %v5466 = vxor.u32 %v4900, 2147483648
      %v5467 = vxor.u32 %v4902, 2147483648
      %v5468 = vxor.u32 %v5093, 2147483648
      %v5469 = vxor.u32 %v5095, 2147483648
      %v5470 = vxor.u32 %v5260, 2147483648
      %v5471 = vxor.u32 %v4711, 2147483648
      %v5472 = vxor.u32 %v4713, 2147483648
      %v5473 = vxor.u32 %v4904, 2147483648
      %v5474 = vxor.u32 %v4906, 2147483648
      %v5475 = vxor.u32 %v5097, 2147483648
      %v5476 = vxor.u32 %v5099, 2147483648
      %v5477 = vxor.u32 %v5263, 2147483648
      %v5478 = vxor.u32 %v4717, 2147483648
      %v5479 = vxor.u32 %v4719, 2147483648
      %v5480 = vxor.u32 %v4910, 2147483648
      %v5481 = vxor.u32 %v4912, 2147483648
      %v5482 = vxor.u32 %v5103, 2147483648
      %v5483 = vxor.u32 %v5105, 2147483648
      %v5484 = vxor.u32 %v5268, 2147483648
      %v5485 = vxor.u32 %v4721, 2147483648
      %v5486 = vxor.u32 %v4723, 2147483648
      %v5487 = vxor.u32 %v4914, 2147483648
      %v5488 = vxor.u32 %v4916, 2147483648
      %v5489 = vxor.u32 %v5107, 2147483648
      %v5490 = vxor.u32 %v5109, 2147483648
      %v5491 = vxor.u32 %v5271, 2147483648
      %v5492 = vxor.u32 %v4727, 2147483648
      %v5493 = vxor.u32 %v4729, 2147483648
      %v5494 = vxor.u32 %v4920, 2147483648
      %v5495 = vxor.u32 %v4922, 2147483648
      %v5496 = vxor.u32 %v5113, 2147483648
      %v5497 = vxor.u32 %v5115, 2147483648
      %v5498 = vxor.u32 %v5276, 2147483648
      %v5499 = vxor.u32 %v4731, 2147483648
      %v5500 = vxor.u32 %v4733, 2147483648
      %v5501 = vxor.u32 %v4924, 2147483648
      %v5502 = vxor.u32 %v4926, 2147483648
      %v5503 = vxor.u32 %v5117, 2147483648
      %v5504 = vxor.u32 %v5119, 2147483648
      %v5505 = vxor.u32 %v5279, 2147483648
      %v5506 = vmul.f32 %v5282, 1.442695
      %v5507 = vpow.pop %v5506
      %v5508 = vmul.f32 %v5283, 1.442695
      %v5509 = vpow.pop %v5508
      %v5510 = vmul.f32 %v5284, 1.442695
      %v5511 = vpow.pop %v5510
      %v5512 = vmul.f32 %v5285, 1.442695
      %v5513 = vpow.pop %v5512
      %v5514 = vmul.f32 %v5286, 1.442695
      %v5515 = vpow.pop %v5514
      %v5516 = vmul.f32 %v5287, 1.442695
      %v5517 = vpow.pop %v5516
      %v5518 = vmul.f32 %v5288, 1.442695
      %v5519 = vpow.pop %v5518
      %v5520 = vmul.f32 %v5289, 1.442695
      %v5521 = vpow.pop %v5520
      %v5522 = vmul.f32 %v5290, 1.442695
      %v5523 = vpow.pop %v5522
      %v5524 = vmul.f32 %v5291, 1.442695
      %v5525 = vpow.pop %v5524
      %v5526 = vmul.f32 %v5292, 1.442695
      %v5527 = vpow.pop %v5526
      %v5528 = vmul.f32 %v5293, 1.442695
      %v5529 = vpow.pop %v5528
      %v5530 = vmul.f32 %v5294, 1.442695
      %v5531 = vpow.pop %v5530
      %v5532 = vmul.f32 %v5295, 1.442695
      %v5533 = vpow.pop %v5532
      %v5534 = vmul.f32 %v5296, 1.442695
      %v5535 = vpow.pop %v5534
      %v5536 = vmul.f32 %v5297, 1.442695
      %v5537 = vpow.pop %v5536
      %v5538 = vmul.f32 %v5298, 1.442695
      %v5539 = vpow.pop %v5538
      %v5540 = vmul.f32 %v5299, 1.442695
      %v5541 = vpow.pop %v5540
      %v5542 = vmul.f32 %v5300, 1.442695
      %v5543 = vpow.pop %v5542
      %v5544 = vmul.f32 %v5301, 1.442695
      %v5545 = vpow.pop %v5544
      %v5546 = vmul.f32 %v5302, 1.442695
      %v5547 = vpow.pop %v5546
      %v5548 = vmul.f32 %v5303, 1.442695
      %v5549 = vpow.pop %v5548
      %v5550 = vmul.f32 %v5304, 1.442695
      %v5551 = vpow.pop %v5550
      %v5552 = vmul.f32 %v5305, 1.442695
      %v5553 = vpow.pop %v5552
      %v5554 = vmul.f32 %v5306, 1.442695
      %v5555 = vpow.pop %v5554
      %v5556 = vmul.f32 %v5307, 1.442695
      %v5557 = vpow.pop %v5556
      %v5558 = vmul.f32 %v5308, 1.442695
      %v5559 = vpow.pop %v5558
      %v5560 = vmul.f32 %v5309, 1.442695
      %v5561 = vpow.pop %v5560
      %v5562 = vmul.f32 %v5310, 1.442695
      %v5563 = vpow.pop %v5562
      %v5564 = vmul.f32 %v5311, 1.442695
      %v5565 = vpow.pop %v5564
      %v5566 = vmul.f32 %v5312, 1.442695
      %v5567 = vpow.pop %v5566
      %v5568 = vmul.f32 %v5313, 1.442695
      %v5569 = vpow.pop %v5568
      %v5570 = vmul.f32 %v5314, 1.442695
      %v5571 = vpow.pop %v5570
      %v5572 = vmul.f32 %v5315, 1.442695
      %v5573 = vpow.pop %v5572
      %v5574 = vmul.f32 %v5316, 1.442695
      %v5575 = vpow.pop %v5574
      %v5576 = vmul.f32 %v5317, 1.442695
      %v5577 = vpow.pop %v5576
      %v5578 = vmul.f32 %v5318, 1.442695
      %v5579 = vpow.pop %v5578
      %v5580 = vmul.f32 %v5319, 1.442695
      %v5581 = vpow.pop %v5580
      %v5582 = vmul.f32 %v5320, 1.442695
      %v5583 = vpow.pop %v5582
      %v5584 = vmul.f32 %v5321, 1.442695
      %v5585 = vpow.pop %v5584
      %v5586 = vmul.f32 %v5322, 1.442695
      %v5587 = vpow.pop %v5586
      %v5588 = vmul.f32 %v5323, 1.442695
      %v5589 = vpow.pop %v5588
      %v5590 = vmul.f32 %v5324, 1.442695
      %v5591 = vpow.pop %v5590
      %v5592 = vmul.f32 %v5325, 1.442695
      %v5593 = vpow.pop %v5592
      %v5594 = vmul.f32 %v5326, 1.442695
      %v5595 = vpow.pop %v5594
      %v5596 = vmul.f32 %v5327, 1.442695
      %v5597 = vpow.pop %v5596
      %v5598 = vmul.f32 %v5328, 1.442695
      %v5599 = vpow.pop %v5598
      %v5600 = vmul.f32 %v5329, 1.442695
      %v5601 = vpow.pop %v5600
      %v5602 = vmul.f32 %v5330, 1.442695
      %v5603 = vpow.pop %v5602
      %v5604 = vmul.f32 %v5331, 1.442695
      %v5605 = vpow.pop %v5604
      %v5606 = vmul.f32 %v5332, 1.442695
      %v5607 = vpow.pop %v5606
      %v5608 = vmul.f32 %v5333, 1.442695
      %v5609 = vpow.pop %v5608
      %v5610 = vmul.f32 %v5334, 1.442695
      %v5611 = vpow.pop %v5610
      %v5612 = vmul.f32 %v5335, 1.442695
      %v5613 = vpow.pop %v5612
      %v5614 = vmul.f32 %v5336, 1.442695
      %v5615 = vpow.pop %v5614
      %v5616 = vmul.f32 %v5337, 1.442695
      %v5617 = vpow.pop %v5616
      %v5618 = vmul.f32 %v5338, 1.442695
      %v5619 = vpow.pop %v5618
      %v5620 = vmul.f32 %v5339, 1.442695
      %v5621 = vpow.pop %v5620
      %v5622 = vmul.f32 %v5340, 1.442695
      %v5623 = vpow.pop %v5622
      %v5624 = vmul.f32 %v5341, 1.442695
      %v5625 = vpow.pop %v5624
      %v5626 = vmul.f32 %v5342, 1.442695
      %v5627 = vpow.pop %v5626
      %v5628 = vmul.f32 %v5343, 1.442695
      %v5629 = vpow.pop %v5628
      %v5630 = vmul.f32 %v5344, 1.442695
      %v5631 = vpow.pop %v5630
      %v5632 = vmul.f32 %v5345, 1.442695
      %v5633 = vpow.pop %v5632
      %v5634 = vmul.f32 %v5346, 1.442695
      %v5635 = vpow.pop %v5634
      %v5636 = vmul.f32 %v5347, 1.442695
      %v5637 = vpow.pop %v5636
      %v5638 = vmul.f32 %v5348, 1.442695
      %v5639 = vpow.pop %v5638
      %v5640 = vmul.f32 %v5349, 1.442695
      %v5641 = vpow.pop %v5640
      %v5642 = vmul.f32 %v5350, 1.442695
      %v5643 = vpow.pop %v5642
      %v5644 = vmul.f32 %v5351, 1.442695
      %v5645 = vpow.pop %v5644
      %v5646 = vmul.f32 %v5352, 1.442695
      %v5647 = vpow.pop %v5646
      %v5648 = vmul.f32 %v5353, 1.442695
      %v5649 = vpow.pop %v5648
      %v5650 = vmul.f32 %v5354, 1.442695
      %v5651 = vpow.pop %v5650
      %v5652 = vmul.f32 %v5355, 1.442695
      %v5653 = vpow.pop %v5652
      %v5654 = vmul.f32 %v5356, 1.442695
      %v5655 = vpow.pop %v5654
      %v5656 = vmul.f32 %v5357, 1.442695
      %v5657 = vpow.pop %v5656
      %v5658 = vmul.f32 %v5358, 1.442695
      %v5659 = vpow.pop %v5658
      %v5660 = vmul.f32 %v5359, 1.442695
      %v5661 = vpow.pop %v5660
      %v5662 = vmul.f32 %v5360, 1.442695
      %v5663 = vpow.pop %v5662
      %v5664 = vmul.f32 %v5361, 1.442695
      %v5665 = vpow.pop %v5664
      %v5666 = vmul.f32 %v5362, 1.442695
      %v5667 = vpow.pop %v5666
      %v5668 = vmul.f32 %v5363, 1.442695
      %v5669 = vpow.pop %v5668
      %v5670 = vmul.f32 %v5364, 1.442695
      %v5671 = vpow.pop %v5670
      %v5672 = vmul.f32 %v5365, 1.442695
      %v5673 = vpow.pop %v5672
      %v5674 = vmul.f32 %v5366, 1.442695
      %v5675 = vpow.pop %v5674
      %v5676 = vmul.f32 %v5367, 1.442695
      %v5677 = vpow.pop %v5676
      %v5678 = vmul.f32 %v5368, 1.442695
      %v5679 = vpow.pop %v5678
      %v5680 = vmul.f32 %v5369, 1.442695
      %v5681 = vpow.pop %v5680
      %v5682 = vmul.f32 %v5370, 1.442695
      %v5683 = vpow.pop %v5682
      %v5684 = vmul.f32 %v5371, 1.442695
      %v5685 = vpow.pop %v5684
      %v5686 = vmul.f32 %v5372, 1.442695
      %v5687 = vpow.pop %v5686
      %v5688 = vmul.f32 %v5373, 1.442695
      %v5689 = vpow.pop %v5688
      %v5690 = vmul.f32 %v5374, 1.442695
      %v5691 = vpow.pop %v5690
      %v5692 = vmul.f32 %v5375, 1.442695
      %v5693 = vpow.pop %v5692
      %v5694 = vmul.f32 %v5376, 1.442695
      %v5695 = vpow.pop %v5694
      %v5696 = vmul.f32 %v5377, 1.442695
      %v5697 = vpow.pop %v5696
      %v5698 = vmul.f32 %v5378, 1.442695
      %v5699 = vpow.pop %v5698
      %v5700 = vmul.f32 %v5379, 1.442695
      %v5701 = vpow.pop %v5700
      %v5702 = vmul.f32 %v5380, 1.442695
      %v5703 = vpow.pop %v5702
      %v5704 = vmul.f32 %v5381, 1.442695
      %v5705 = vpow.pop %v5704
      %v5706 = vmul.f32 %v5382, 1.442695
      %v5707 = vpow.pop %v5706
      %v5708 = vmul.f32 %v5383, 1.442695
      %v5709 = vpow.pop %v5708
      %v5710 = vmul.f32 %v5384, 1.442695
      %v5711 = vpow.pop %v5710
      %v5712 = vmul.f32 %v5385, 1.442695
      %v5713 = vpow.pop %v5712
      %v5714 = vmul.f32 %v5386, 1.442695
      %v5715 = vpow.pop %v5714
      %v5716 = vmul.f32 %v5387, 1.442695
      %v5717 = vpow.pop %v5716
      %v5718 = vmul.f32 %v5388, 1.442695
      %v5719 = vpow.pop %v5718
      %v5720 = vmul.f32 %v5389, 1.442695
      %v5721 = vpow.pop %v5720
      %v5722 = vmul.f32 %v5390, 1.442695
      %v5723 = vpow.pop %v5722
      %v5724 = vmul.f32 %v5391, 1.442695
      %v5725 = vpow.pop %v5724
      %v5726 = vmul.f32 %v5392, 1.442695
      %v5727 = vpow.pop %v5726
      %v5728 = vmul.f32 %v5393, 1.442695
      %v5729 = vpow.pop %v5728
      %v5730 = vmul.f32 %v5394, 1.442695
      %v5731 = vpow.pop %v5730
      %v5732 = vmul.f32 %v5395, 1.442695
      %v5733 = vpow.pop %v5732
      %v5734 = vmul.f32 %v5396, 1.442695
      %v5735 = vpow.pop %v5734
      %v5736 = vmul.f32 %v5397, 1.442695
      %v5737 = vpow.pop %v5736
      %v5738 = vmul.f32 %v5398, 1.442695
      %v5739 = vpow.pop %v5738
      %v5740 = vmul.f32 %v5399, 1.442695
      %v5741 = vpow.pop %v5740
      %v5742 = vmul.f32 %v5400, 1.442695
      %v5743 = vpow.pop %v5742
      %v5744 = vmul.f32 %v5401, 1.442695
      %v5745 = vpow.pop %v5744
      %v5746 = vmul.f32 %v5402, 1.442695
      %v5747 = vpow.pop %v5746
      %v5748 = vmul.f32 %v5403, 1.442695
      %v5749 = vpow.pop %v5748
      %v5750 = vmul.f32 %v5404, 1.442695
      %v5751 = vpow.pop %v5750
      %v5752 = vmul.f32 %v5405, 1.442695
      %v5753 = vpow.pop %v5752
      %v5754 = vmul.f32 %v5406, 1.442695
      %v5755 = vpow.pop %v5754
      %v5756 = vmul.f32 %v5407, 1.442695
      %v5757 = vpow.pop %v5756
      %v5758 = vmul.f32 %v5408, 1.442695
      %v5759 = vpow.pop %v5758
      %v5760 = vmul.f32 %v5409, 1.442695
      %v5761 = vpow.pop %v5760
      %v5762 = vmul.f32 %v5410, 1.442695
      %v5763 = vpow.pop %v5762
      %v5764 = vmul.f32 %v5411, 1.442695
      %v5765 = vpow.pop %v5764
      %v5766 = vmul.f32 %v5412, 1.442695
      %v5767 = vpow.pop %v5766
      %v5768 = vmul.f32 %v5413, 1.442695
      %v5769 = vpow.pop %v5768
      %v5770 = vmul.f32 %v5414, 1.442695
      %v5771 = vpow.pop %v5770
      %v5772 = vmul.f32 %v5415, 1.442695
      %v5773 = vpow.pop %v5772
      %v5774 = vmul.f32 %v5416, 1.442695
      %v5775 = vpow.pop %v5774
      %v5776 = vmul.f32 %v5417, 1.442695
      %v5777 = vpow.pop %v5776
      %v5778 = vmul.f32 %v5418, 1.442695
      %v5779 = vpow.pop %v5778
      %v5780 = vmul.f32 %v5419, 1.442695
      %v5781 = vpow.pop %v5780
      %v5782 = vmul.f32 %v5420, 1.442695
      %v5783 = vpow.pop %v5782
      %v5784 = vmul.f32 %v5421, 1.442695
      %v5785 = vpow.pop %v5784
      %v5786 = vmul.f32 %v5422, 1.442695
      %v5787 = vpow.pop %v5786
      %v5788 = vmul.f32 %v5423, 1.442695
      %v5789 = vpow.pop %v5788
      %v5790 = vmul.f32 %v5424, 1.442695
      %v5791 = vpow.pop %v5790
      %v5792 = vmul.f32 %v5425, 1.442695
      %v5793 = vpow.pop %v5792
      %v5794 = vmul.f32 %v5426, 1.442695
      %v5795 = vpow.pop %v5794
      %v5796 = vmul.f32 %v5427, 1.442695
      %v5797 = vpow.pop %v5796
      %v5798 = vmul.f32 %v5428, 1.442695
      %v5799 = vpow.pop %v5798
      %v5800 = vmul.f32 %v5429, 1.442695
      %v5801 = vpow.pop %v5800
      %v5802 = vmul.f32 %v5430, 1.442695
      %v5803 = vpow.pop %v5802
      %v5804 = vmul.f32 %v5431, 1.442695
      %v5805 = vpow.pop %v5804
      %v5806 = vmul.f32 %v5432, 1.442695
      %v5807 = vpow.pop %v5806
      %v5808 = vmul.f32 %v5433, 1.442695
      %v5809 = vpow.pop %v5808
      %v5810 = vmul.f32 %v5434, 1.442695
      %v5811 = vpow.pop %v5810
      %v5812 = vmul.f32 %v5435, 1.442695
      %v5813 = vpow.pop %v5812
      %v5814 = vmul.f32 %v5436, 1.442695
      %v5815 = vpow.pop %v5814
      %v5816 = vmul.f32 %v5437, 1.442695
      %v5817 = vpow.pop %v5816
      %v5818 = vmul.f32 %v5438, 1.442695
      %v5819 = vpow.pop %v5818
      %v5820 = vmul.f32 %v5439, 1.442695
      %v5821 = vpow.pop %v5820
      %v5822 = vmul.f32 %v5440, 1.442695
      %v5823 = vpow.pop %v5822
      %v5824 = vmul.f32 %v5441, 1.442695
      %v5825 = vpow.pop %v5824
      %v5826 = vmul.f32 %v5442, 1.442695
      %v5827 = vpow.pop %v5826
      %v5828 = vmul.f32 %v5443, 1.442695
      %v5829 = vpow.pop %v5828
      %v5830 = vmul.f32 %v5444, 1.442695
      %v5831 = vpow.pop %v5830
      %v5832 = vmul.f32 %v5445, 1.442695
      %v5833 = vpow.pop %v5832
      %v5834 = vmul.f32 %v5446, 1.442695
      %v5835 = vpow.pop %v5834
      %v5836 = vmul.f32 %v5447, 1.442695
      %v5837 = vpow.pop %v5836
      %v5838 = vmul.f32 %v5448, 1.442695
      %v5839 = vpow.pop %v5838
      %v5840 = vmul.f32 %v5449, 1.442695
      %v5841 = vpow.pop %v5840
      %v5842 = vmul.f32 %v5450, 1.442695
      %v5843 = vpow.pop %v5842
      %v5844 = vmul.f32 %v5451, 1.442695
      %v5845 = vpow.pop %v5844
      %v5846 = vmul.f32 %v5452, 1.442695
      %v5847 = vpow.pop %v5846
      %v5848 = vmul.f32 %v5453, 1.442695
      %v5849 = vpow.pop %v5848
      %v5850 = vmul.f32 %v5454, 1.442695
      %v5851 = vpow.pop %v5850
      %v5852 = vmul.f32 %v5455, 1.442695
      %v5853 = vpow.pop %v5852
      %v5854 = vmul.f32 %v5456, 1.442695
      %v5855 = vpow.pop %v5854
      %v5856 = vmul.f32 %v5457, 1.442695
      %v5857 = vpow.pop %v5856
      %v5858 = vmul.f32 %v5458, 1.442695
      %v5859 = vpow.pop %v5858
      %v5860 = vmul.f32 %v5459, 1.442695
      %v5861 = vpow.pop %v5860
      %v5862 = vmul.f32 %v5460, 1.442695
      %v5863 = vpow.pop %v5862
      %v5864 = vmul.f32 %v5461, 1.442695
      %v5865 = vpow.pop %v5864
      %v5866 = vmul.f32 %v5462, 1.442695
      %v5867 = vpow.pop %v5866
      %v5868 = vmul.f32 %v5463, 1.442695
      %v5869 = vpow.pop %v5868
      %v5870 = vmul.f32 %v5464, 1.442695
      %v5871 = vpow.pop %v5870
      %v5872 = vmul.f32 %v5465, 1.442695
      %v5873 = vpow.pop %v5872
      %v5874 = vmul.f32 %v5466, 1.442695
      %v5875 = vpow.pop %v5874
      %v5876 = vmul.f32 %v5467, 1.442695
      %v5877 = vpow.pop %v5876
      %v5878 = vmul.f32 %v5468, 1.442695
      %v5879 = vpow.pop %v5878
      %v5880 = vmul.f32 %v5469, 1.442695
      %v5881 = vpow.pop %v5880
      %v5882 = vmul.f32 %v5470, 1.442695
      %v5883 = vpow.pop %v5882
      %v5884 = vmul.f32 %v5471, 1.442695
      %v5885 = vpow.pop %v5884
      %v5886 = vmul.f32 %v5472, 1.442695
      %v5887 = vpow.pop %v5886
      %v5888 = vmul.f32 %v5473, 1.442695
      %v5889 = vpow.pop %v5888
      %v5890 = vmul.f32 %v5474, 1.442695
      %v5891 = vpow.pop %v5890
      %v5892 = vmul.f32 %v5475, 1.442695
      %v5893 = vpow.pop %v5892
      %v5894 = vmul.f32 %v5476, 1.442695
      %v5895 = vpow.pop %v5894
      %v5896 = vmul.f32 %v5477, 1.442695
      %v5897 = vpow.pop %v5896
      %v5898 = vmul.f32 %v5478, 1.442695
      %v5899 = vpow.pop %v5898
      %v5900 = vmul.f32 %v5479, 1.442695
      %v5901 = vpow.pop %v5900
      %v5902 = vmul.f32 %v5480, 1.442695
      %v5903 = vpow.pop %v5902
      %v5904 = vmul.f32 %v5481, 1.442695
      %v5905 = vpow.pop %v5904
      %v5906 = vmul.f32 %v5482, 1.442695
      %v5907 = vpow.pop %v5906
      %v5908 = vmul.f32 %v5483, 1.442695
      %v5909 = vpow.pop %v5908
      %v5910 = vmul.f32 %v5484, 1.442695
      %v5911 = vpow.pop %v5910
      %v5912 = vmul.f32 %v5485, 1.442695
      %v5913 = vpow.pop %v5912
      %v5914 = vmul.f32 %v5486, 1.442695
      %v5915 = vpow.pop %v5914
      %v5916 = vmul.f32 %v5487, 1.442695
      %v5917 = vpow.pop %v5916
      %v5918 = vmul.f32 %v5488, 1.442695
      %v5919 = vpow.pop %v5918
      %v5920 = vmul.f32 %v5489, 1.442695
      %v5921 = vpow.pop %v5920
      %v5922 = vmul.f32 %v5490, 1.442695
      %v5923 = vpow.pop %v5922
      %v5924 = vmul.f32 %v5491, 1.442695
      %v5925 = vpow.pop %v5924
      %v5926 = vmul.f32 %v5492, 1.442695
      %v5927 = vpow.pop %v5926
      %v5928 = vmul.f32 %v5493, 1.442695
      %v5929 = vpow.pop %v5928
      %v5930 = vmul.f32 %v5494, 1.442695
      %v5931 = vpow.pop %v5930
      %v5932 = vmul.f32 %v5495, 1.442695
      %v5933 = vpow.pop %v5932
      %v5934 = vmul.f32 %v5496, 1.442695
      %v5935 = vpow.pop %v5934
      %v5936 = vmul.f32 %v5497, 1.442695
      %v5937 = vpow.pop %v5936
      %v5938 = vmul.f32 %v5498, 1.442695
      %v5939 = vpow.pop %v5938
      %v5940 = vmul.f32 %v5499, 1.442695
      %v5941 = vpow.pop %v5940
      %v5942 = vmul.f32 %v5500, 1.442695
      %v5943 = vpow.pop %v5942
      %v5944 = vmul.f32 %v5501, 1.442695
      %v5945 = vpow.pop %v5944
      %v5946 = vmul.f32 %v5502, 1.442695
      %v5947 = vpow.pop %v5946
      %v5948 = vmul.f32 %v5503, 1.442695
      %v5949 = vpow.pop %v5948
      %v5950 = vmul.f32 %v5504, 1.442695
      %v5951 = vpow.pop %v5950
      %v5952 = vmul.f32 %v5505, 1.442695
      %v5953 = vpow.pop %v5952
      %v5954 = vadd.f32 %v5507, 1.0
      %v5955 = vadd.f32 %v5509, 1.0
      %v5956 = vadd.f32 %v5511, 1.0
      %v5957 = vadd.f32 %v5513, 1.0
      %v5958 = vadd.f32 %v5515, 1.0
      %v5959 = vadd.f32 %v5517, 1.0
      %v5960 = vadd.f32 %v5519, 1.0
      %v5961 = vadd.f32 %v5521, 1.0
      %v5962 = vadd.f32 %v5523, 1.0
      %v5963 = vadd.f32 %v5525, 1.0
      %v5964 = vadd.f32 %v5527, 1.0
      %v5965 = vadd.f32 %v5529, 1.0
      %v5966 = vadd.f32 %v5531, 1.0
      %v5967 = vadd.f32 %v5533, 1.0
      %v5968 = vadd.f32 %v5535, 1.0
      %v5969 = vadd.f32 %v5537, 1.0
      %v5970 = vadd.f32 %v5539, 1.0
      %v5971 = vadd.f32 %v5541, 1.0
      %v5972 = vadd.f32 %v5543, 1.0
      %v5973 = vadd.f32 %v5545, 1.0
      %v5974 = vadd.f32 %v5547, 1.0
      %v5975 = vadd.f32 %v5549, 1.0
      %v5976 = vadd.f32 %v5551, 1.0
      %v5977 = vadd.f32 %v5553, 1.0
      %v5978 = vadd.f32 %v5555, 1.0
      %v5979 = vadd.f32 %v5557, 1.0
      %v5980 = vadd.f32 %v5559, 1.0
      %v5981 = vadd.f32 %v5561, 1.0
      %v5982 = vadd.f32 %v5563, 1.0
      %v5983 = vadd.f32 %v5565, 1.0
      %v5984 = vadd.f32 %v5567, 1.0
      %v5985 = vadd.f32 %v5569, 1.0
      %v5986 = vadd.f32 %v5571, 1.0
      %v5987 = vadd.f32 %v5573, 1.0
      %v5988 = vadd.f32 %v5575, 1.0
      %v5989 = vadd.f32 %v5577, 1.0
      %v5990 = vadd.f32 %v5579, 1.0
      %v5991 = vadd.f32 %v5581, 1.0
      %v5992 = vadd.f32 %v5583, 1.0
      %v5993 = vadd.f32 %v5585, 1.0
      %v5994 = vadd.f32 %v5587, 1.0
      %v5995 = vadd.f32 %v5589, 1.0
      %v5996 = vadd.f32 %v5591, 1.0
      %v5997 = vadd.f32 %v5593, 1.0
      %v5998 = vadd.f32 %v5595, 1.0
      %v5999 = vadd.f32 %v5597, 1.0
      %v6000 = vadd.f32 %v5599, 1.0
      %v6001 = vadd.f32 %v5601, 1.0
      %v6002 = vadd.f32 %v5603, 1.0
      %v6003 = vadd.f32 %v5605, 1.0
      %v6004 = vadd.f32 %v5607, 1.0
      %v6005 = vadd.f32 %v5609, 1.0
      %v6006 = vadd.f32 %v5611, 1.0
      %v6007 = vadd.f32 %v5613, 1.0
      %v6008 = vadd.f32 %v5615, 1.0
      %v6009 = vadd.f32 %v5617, 1.0
      %v6010 = vadd.f32 %v5619, 1.0
      %v6011 = vadd.f32 %v5621, 1.0
      %v6012 = vadd.f32 %v5623, 1.0
      %v6013 = vadd.f32 %v5625, 1.0
      %v6014 = vadd.f32 %v5627, 1.0
      %v6015 = vadd.f32 %v5629, 1.0
      %v6016 = vadd.f32 %v5631, 1.0
      %v6017 = vadd.f32 %v5633, 1.0
      %v6018 = vadd.f32 %v5635, 1.0
      %v6019 = vadd.f32 %v5637, 1.0
      %v6020 = vadd.f32 %v5639, 1.0
      %v6021 = vadd.f32 %v5641, 1.0
      %v6022 = vadd.f32 %v5643, 1.0
      %v6023 = vadd.f32 %v5645, 1.0
      %v6024 = vadd.f32 %v5647, 1.0
      %v6025 = vadd.f32 %v5649, 1.0
      %v6026 = vadd.f32 %v5651, 1.0
      %v6027 = vadd.f32 %v5653, 1.0
      %v6028 = vadd.f32 %v5655, 1.0
      %v6029 = vadd.f32 %v5657, 1.0
      %v6030 = vadd.f32 %v5659, 1.0
      %v6031 = vadd.f32 %v5661, 1.0
      %v6032 = vadd.f32 %v5663, 1.0
      %v6033 = vadd.f32 %v5665, 1.0
      %v6034 = vadd.f32 %v5667, 1.0
      %v6035 = vadd.f32 %v5669, 1.0
      %v6036 = vadd.f32 %v5671, 1.0
      %v6037 = vadd.f32 %v5673, 1.0
      %v6038 = vadd.f32 %v5675, 1.0
      %v6039 = vadd.f32 %v5677, 1.0
      %v6040 = vadd.f32 %v5679, 1.0
      %v6041 = vadd.f32 %v5681, 1.0
      %v6042 = vadd.f32 %v5683, 1.0
      %v6043 = vadd.f32 %v5685, 1.0
      %v6044 = vadd.f32 %v5687, 1.0
      %v6045 = vadd.f32 %v5689, 1.0
      %v6046 = vadd.f32 %v5691, 1.0
      %v6047 = vadd.f32 %v5693, 1.0
      %v6048 = vadd.f32 %v5695, 1.0
      %v6049 = vadd.f32 %v5697, 1.0
      %v6050 = vadd.f32 %v5699, 1.0
      %v6051 = vadd.f32 %v5701, 1.0
      %v6052 = vadd.f32 %v5703, 1.0
      %v6053 = vadd.f32 %v5705, 1.0
      %v6054 = vadd.f32 %v5707, 1.0
      %v6055 = vadd.f32 %v5709, 1.0
      %v6056 = vadd.f32 %v5711, 1.0
      %v6057 = vadd.f32 %v5713, 1.0
      %v6058 = vadd.f32 %v5715, 1.0
      %v6059 = vadd.f32 %v5717, 1.0
      %v6060 = vadd.f32 %v5719, 1.0
      %v6061 = vadd.f32 %v5721, 1.0
      %v6062 = vadd.f32 %v5723, 1.0
      %v6063 = vadd.f32 %v5725, 1.0
      %v6064 = vadd.f32 %v5727, 1.0
      %v6065 = vadd.f32 %v5729, 1.0
      %v6066 = vadd.f32 %v5731, 1.0
      %v6067 = vadd.f32 %v5733, 1.0
      %v6068 = vadd.f32 %v5735, 1.0
      %v6069 = vadd.f32 %v5737, 1.0
      %v6070 = vadd.f32 %v5739, 1.0
      %v6071 = vadd.f32 %v5741, 1.0
      %v6072 = vadd.f32 %v5743, 1.0
      %v6073 = vadd.f32 %v5745, 1.0
      %v6074 = vadd.f32 %v5747, 1.0
      %v6075 = vadd.f32 %v5749, 1.0
      %v6076 = vadd.f32 %v5751, 1.0
      %v6077 = vadd.f32 %v5753, 1.0
      %v6078 = vadd.f32 %v5755, 1.0
      %v6079 = vadd.f32 %v5757, 1.0
      %v6080 = vadd.f32 %v5759, 1.0
      %v6081 = vadd.f32 %v5761, 1.0
      %v6082 = vadd.f32 %v5763, 1.0
      %v6083 = vadd.f32 %v5765, 1.0
      %v6084 = vadd.f32 %v5767, 1.0
      %v6085 = vadd.f32 %v5769, 1.0
      %v6086 = vadd.f32 %v5771, 1.0
      %v6087 = vadd.f32 %v5773, 1.0
      %v6088 = vadd.f32 %v5775, 1.0
      %v6089 = vadd.f32 %v5777, 1.0
      %v6090 = vadd.f32 %v5779, 1.0
      %v6091 = vadd.f32 %v5781, 1.0
      %v6092 = vadd.f32 %v5783, 1.0
      %v6093 = vadd.f32 %v5785, 1.0
      %v6094 = vadd.f32 %v5787, 1.0
      %v6095 = vadd.f32 %v5789, 1.0
      %v6096 = vadd.f32 %v5791, 1.0
      %v6097 = vadd.f32 %v5793, 1.0
      %v6098 = vadd.f32 %v5795, 1.0
      %v6099 = vadd.f32 %v5797, 1.0
      %v6100 = vadd.f32 %v5799, 1.0
      %v6101 = vadd.f32 %v5801, 1.0
      %v6102 = vadd.f32 %v5803, 1.0
      %v6103 = vadd.f32 %v5805, 1.0
      %v6104 = vadd.f32 %v5807, 1.0
      %v6105 = vadd.f32 %v5809, 1.0
      %v6106 = vadd.f32 %v5811, 1.0
      %v6107 = vadd.f32 %v5813, 1.0
      %v6108 = vadd.f32 %v5815, 1.0
      %v6109 = vadd.f32 %v5817, 1.0
      %v6110 = vadd.f32 %v5819, 1.0
      %v6111 = vadd.f32 %v5821, 1.0
      %v6112 = vadd.f32 %v5823, 1.0
      %v6113 = vadd.f32 %v5825, 1.0
      %v6114 = vadd.f32 %v5827, 1.0
      %v6115 = vadd.f32 %v5829, 1.0
      %v6116 = vadd.f32 %v5831, 1.0
      %v6117 = vadd.f32 %v5833, 1.0
      %v6118 = vadd.f32 %v5835, 1.0
      %v6119 = vadd.f32 %v5837, 1.0
      %v6120 = vadd.f32 %v5839, 1.0
      %v6121 = vadd.f32 %v5841, 1.0
      %v6122 = vadd.f32 %v5843, 1.0
      %v6123 = vadd.f32 %v5845, 1.0
      %v6124 = vadd.f32 %v5847, 1.0
      %v6125 = vadd.f32 %v5849, 1.0
      %v6126 = vadd.f32 %v5851, 1.0
      %v6127 = vadd.f32 %v5853, 1.0
      %v6128 = vadd.f32 %v5855, 1.0
      %v6129 = vadd.f32 %v5857, 1.0
      %v6130 = vadd.f32 %v5859, 1.0
      %v6131 = vadd.f32 %v5861, 1.0
      %v6132 = vadd.f32 %v5863, 1.0
      %v6133 = vadd.f32 %v5865, 1.0
      %v6134 = vadd.f32 %v5867, 1.0
      %v6135 = vadd.f32 %v5869, 1.0
      %v6136 = vadd.f32 %v5871, 1.0
      %v6137 = vadd.f32 %v5873, 1.0
      %v6138 = vadd.f32 %v5875, 1.0
      %v6139 = vadd.f32 %v5877, 1.0
      %v6140 = vadd.f32 %v5879, 1.0
      %v6141 = vadd.f32 %v5881, 1.0
      %v6142 = vadd.f32 %v5883, 1.0
      %v6143 = vadd.f32 %v5885, 1.0
      %v6144 = vadd.f32 %v5887, 1.0
      %v6145 = vadd.f32 %v5889, 1.0
      %v6146 = vadd.f32 %v5891, 1.0
      %v6147 = vadd.f32 %v5893, 1.0
      %v6148 = vadd.f32 %v5895, 1.0
      %v6149 = vadd.f32 %v5897, 1.0
      %v6150 = vadd.f32 %v5899, 1.0
      %v6151 = vadd.f32 %v5901, 1.0
      %v6152 = vadd.f32 %v5903, 1.0
      %v6153 = vadd.f32 %v5905, 1.0
      %v6154 = vadd.f32 %v5907, 1.0
      %v6155 = vadd.f32 %v5909, 1.0
      %v6156 = vadd.f32 %v5911, 1.0
      %v6157 = vadd.f32 %v5913, 1.0
      %v6158 = vadd.f32 %v5915, 1.0
      %v6159 = vadd.f32 %v5917, 1.0
      %v6160 = vadd.f32 %v5919, 1.0
      %v6161 = vadd.f32 %v5921, 1.0
      %v6162 = vadd.f32 %v5923, 1.0
      %v6163 = vadd.f32 %v5925, 1.0
      %v6164 = vadd.f32 %v5927, 1.0
      %v6165 = vadd.f32 %v5929, 1.0
      %v6166 = vadd.f32 %v5931, 1.0
      %v6167 = vadd.f32 %v5933, 1.0
      %v6168 = vadd.f32 %v5935, 1.0
      %v6169 = vadd.f32 %v5937, 1.0
      %v6170 = vadd.f32 %v5939, 1.0
      %v6171 = vadd.f32 %v5941, 1.0
      %v6172 = vadd.f32 %v5943, 1.0
      %v6173 = vadd.f32 %v5945, 1.0
      %v6174 = vadd.f32 %v5947, 1.0
      %v6175 = vadd.f32 %v5949, 1.0
      %v6176 = vadd.f32 %v5951, 1.0
      %v6177 = vadd.f32 %v5953, 1.0
      %v6178 = vrcp.pop %v5954
      %v6179 = vmul.f32 1.0, %v6178
      %v6180 = vrcp.pop %v5955
      %v6181 = vmul.f32 1.0, %v6180
      %v6182 = vrcp.pop %v5956
      %v6183 = vmul.f32 1.0, %v6182
      %v6184 = vrcp.pop %v5957
      %v6185 = vmul.f32 1.0, %v6184
      %v6186 = vrcp.pop %v5958
      %v6187 = vmul.f32 1.0, %v6186
      %v6188 = vrcp.pop %v5959
      %v6189 = vmul.f32 1.0, %v6188
      %v6190 = vrcp.pop %v5960
      %v6191 = vmul.f32 1.0, %v6190
      %v6192 = vrcp.pop %v5961
      %v6193 = vmul.f32 1.0, %v6192
      %v6194 = vrcp.pop %v5962
      %v6195 = vmul.f32 1.0, %v6194
      %v6196 = vrcp.pop %v5963
      %v6197 = vmul.f32 1.0, %v6196
      %v6198 = vrcp.pop %v5964
      %v6199 = vmul.f32 1.0, %v6198
      %v6200 = vrcp.pop %v5965
      %v6201 = vmul.f32 1.0, %v6200
      %v6202 = vrcp.pop %v5966
      %v6203 = vmul.f32 1.0, %v6202
      %v6204 = vrcp.pop %v5967
      %v6205 = vmul.f32 1.0, %v6204
      %v6206 = vrcp.pop %v5968
      %v6207 = vmul.f32 1.0, %v6206
      %v6208 = vrcp.pop %v5969
      %v6209 = vmul.f32 1.0, %v6208
      %v6210 = vrcp.pop %v5970
      %v6211 = vmul.f32 1.0, %v6210
      %v6212 = vrcp.pop %v5971
      %v6213 = vmul.f32 1.0, %v6212
      %v6214 = vrcp.pop %v5972
      %v6215 = vmul.f32 1.0, %v6214
      %v6216 = vrcp.pop %v5973
      %v6217 = vmul.f32 1.0, %v6216
      %v6218 = vrcp.pop %v5974
      %v6219 = vmul.f32 1.0, %v6218
      %v6220 = vrcp.pop %v5975
      %v6221 = vmul.f32 1.0, %v6220
      %v6222 = vrcp.pop %v5976
      %v6223 = vmul.f32 1.0, %v6222
      %v6224 = vrcp.pop %v5977
      %v6225 = vmul.f32 1.0, %v6224
      %v6226 = vrcp.pop %v5978
      %v6227 = vmul.f32 1.0, %v6226
      %v6228 = vrcp.pop %v5979
      %v6229 = vmul.f32 1.0, %v6228
      %v6230 = vrcp.pop %v5980
      %v6231 = vmul.f32 1.0, %v6230
      %v6232 = vrcp.pop %v5981
      %v6233 = vmul.f32 1.0, %v6232
      %v6234 = vrcp.pop %v5982
      %v6235 = vmul.f32 1.0, %v6234
      %v6236 = vrcp.pop %v5983
      %v6237 = vmul.f32 1.0, %v6236
      %v6238 = vrcp.pop %v5984
      %v6239 = vmul.f32 1.0, %v6238
      %v6240 = vrcp.pop %v5985
      %v6241 = vmul.f32 1.0, %v6240
      %v6242 = vrcp.pop %v5986
      %v6243 = vmul.f32 1.0, %v6242
      %v6244 = vrcp.pop %v5987
      %v6245 = vmul.f32 1.0, %v6244
      %v6246 = vrcp.pop %v5988
      %v6247 = vmul.f32 1.0, %v6246
      %v6248 = vrcp.pop %v5989
      %v6249 = vmul.f32 1.0, %v6248
      %v6250 = vrcp.pop %v5990
      %v6251 = vmul.f32 1.0, %v6250
      %v6252 = vrcp.pop %v5991
      %v6253 = vmul.f32 1.0, %v6252
      %v6254 = vrcp.pop %v5992
      %v6255 = vmul.f32 1.0, %v6254
      %v6256 = vrcp.pop %v5993
      %v6257 = vmul.f32 1.0, %v6256
      %v6258 = vrcp.pop %v5994
      %v6259 = vmul.f32 1.0, %v6258
      %v6260 = vrcp.pop %v5995
      %v6261 = vmul.f32 1.0, %v6260
      %v6262 = vrcp.pop %v5996
      %v6263 = vmul.f32 1.0, %v6262
      %v6264 = vrcp.pop %v5997
      %v6265 = vmul.f32 1.0, %v6264
      %v6266 = vrcp.pop %v5998
      %v6267 = vmul.f32 1.0, %v6266
      %v6268 = vrcp.pop %v5999
      %v6269 = vmul.f32 1.0, %v6268
      %v6270 = vrcp.pop %v6000
      %v6271 = vmul.f32 1.0, %v6270
      %v6272 = vrcp.pop %v6001
      %v6273 = vmul.f32 1.0, %v6272
      %v6274 = vrcp.pop %v6002
      %v6275 = vmul.f32 1.0, %v6274
      %v6276 = vrcp.pop %v6003
      %v6277 = vmul.f32 1.0, %v6276
      %v6278 = vrcp.pop %v6004
      %v6279 = vmul.f32 1.0, %v6278
      %v6280 = vrcp.pop %v6005
      %v6281 = vmul.f32 1.0, %v6280
      %v6282 = vrcp.pop %v6006
      %v6283 = vmul.f32 1.0, %v6282
      %v6284 = vrcp.pop %v6007
      %v6285 = vmul.f32 1.0, %v6284
      %v6286 = vrcp.pop %v6008
      %v6287 = vmul.f32 1.0, %v6286
      %v6288 = vrcp.pop %v6009
      %v6289 = vmul.f32 1.0, %v6288
      %v6290 = vrcp.pop %v6010
      %v6291 = vmul.f32 1.0, %v6290
      %v6292 = vrcp.pop %v6011
      %v6293 = vmul.f32 1.0, %v6292
      %v6294 = vrcp.pop %v6012
      %v6295 = vmul.f32 1.0, %v6294
      %v6296 = vrcp.pop %v6013
      %v6297 = vmul.f32 1.0, %v6296
      %v6298 = vrcp.pop %v6014
      %v6299 = vmul.f32 1.0, %v6298
      %v6300 = vrcp.pop %v6015
      %v6301 = vmul.f32 1.0, %v6300
      %v6302 = vrcp.pop %v6016
      %v6303 = vmul.f32 1.0, %v6302
      %v6304 = vrcp.pop %v6017
      %v6305 = vmul.f32 1.0, %v6304
      %v6306 = vrcp.pop %v6018
      %v6307 = vmul.f32 1.0, %v6306
      %v6308 = vrcp.pop %v6019
      %v6309 = vmul.f32 1.0, %v6308
      %v6310 = vrcp.pop %v6020
      %v6311 = vmul.f32 1.0, %v6310
      %v6312 = vrcp.pop %v6021
      %v6313 = vmul.f32 1.0, %v6312
      %v6314 = vrcp.pop %v6022
      %v6315 = vmul.f32 1.0, %v6314
      %v6316 = vrcp.pop %v6023
      %v6317 = vmul.f32 1.0, %v6316
      %v6318 = vrcp.pop %v6024
      %v6319 = vmul.f32 1.0, %v6318
      %v6320 = vrcp.pop %v6025
      %v6321 = vmul.f32 1.0, %v6320
      %v6322 = vrcp.pop %v6026
      %v6323 = vmul.f32 1.0, %v6322
      %v6324 = vrcp.pop %v6027
      %v6325 = vmul.f32 1.0, %v6324
      %v6326 = vrcp.pop %v6028
      %v6327 = vmul.f32 1.0, %v6326
      %v6328 = vrcp.pop %v6029
      %v6329 = vmul.f32 1.0, %v6328
      %v6330 = vrcp.pop %v6030
      %v6331 = vmul.f32 1.0, %v6330
      %v6332 = vrcp.pop %v6031
      %v6333 = vmul.f32 1.0, %v6332
      %v6334 = vrcp.pop %v6032
      %v6335 = vmul.f32 1.0, %v6334
      %v6336 = vrcp.pop %v6033
      %v6337 = vmul.f32 1.0, %v6336
      %v6338 = vrcp.pop %v6034
      %v6339 = vmul.f32 1.0, %v6338
      %v6340 = vrcp.pop %v6035
      %v6341 = vmul.f32 1.0, %v6340
      %v6342 = vrcp.pop %v6036
      %v6343 = vmul.f32 1.0, %v6342
      %v6344 = vrcp.pop %v6037
      %v6345 = vmul.f32 1.0, %v6344
      %v6346 = vrcp.pop %v6038
      %v6347 = vmul.f32 1.0, %v6346
      %v6348 = vrcp.pop %v6039
      %v6349 = vmul.f32 1.0, %v6348
      %v6350 = vrcp.pop %v6040
      %v6351 = vmul.f32 1.0, %v6350
      %v6352 = vrcp.pop %v6041
      %v6353 = vmul.f32 1.0, %v6352
      %v6354 = vrcp.pop %v6042
      %v6355 = vmul.f32 1.0, %v6354
      %v6356 = vrcp.pop %v6043
      %v6357 = vmul.f32 1.0, %v6356
      %v6358 = vrcp.pop %v6044
      %v6359 = vmul.f32 1.0, %v6358
      %v6360 = vrcp.pop %v6045
      %v6361 = vmul.f32 1.0, %v6360
      %v6362 = vrcp.pop %v6046
      %v6363 = vmul.f32 1.0, %v6362
      %v6364 = vrcp.pop %v6047
      %v6365 = vmul.f32 1.0, %v6364
      %v6366 = vrcp.pop %v6048
      %v6367 = vmul.f32 1.0, %v6366
      %v6368 = vrcp.pop %v6049
      %v6369 = vmul.f32 1.0, %v6368
      %v6370 = vrcp.pop %v6050
      %v6371 = vmul.f32 1.0, %v6370
      %v6372 = vrcp.pop %v6051
      %v6373 = vmul.f32 1.0, %v6372
      %v6374 = vrcp.pop %v6052
      %v6375 = vmul.f32 1.0, %v6374
      %v6376 = vrcp.pop %v6053
      %v6377 = vmul.f32 1.0, %v6376
      %v6378 = vrcp.pop %v6054
      %v6379 = vmul.f32 1.0, %v6378
      %v6380 = vrcp.pop %v6055
      %v6381 = vmul.f32 1.0, %v6380
      %v6382 = vrcp.pop %v6056
      %v6383 = vmul.f32 1.0, %v6382
      %v6384 = vrcp.pop %v6057
      %v6385 = vmul.f32 1.0, %v6384
      %v6386 = vrcp.pop %v6058
      %v6387 = vmul.f32 1.0, %v6386
      %v6388 = vrcp.pop %v6059
      %v6389 = vmul.f32 1.0, %v6388
      %v6390 = vrcp.pop %v6060
      %v6391 = vmul.f32 1.0, %v6390
      %v6392 = vrcp.pop %v6061
      %v6393 = vmul.f32 1.0, %v6392
      %v6394 = vrcp.pop %v6062
      %v6395 = vmul.f32 1.0, %v6394
      %v6396 = vrcp.pop %v6063
      %v6397 = vmul.f32 1.0, %v6396
      %v6398 = vrcp.pop %v6064
      %v6399 = vmul.f32 1.0, %v6398
      %v6400 = vrcp.pop %v6065
      %v6401 = vmul.f32 1.0, %v6400
      %v6402 = vrcp.pop %v6066
      %v6403 = vmul.f32 1.0, %v6402
      %v6404 = vrcp.pop %v6067
      %v6405 = vmul.f32 1.0, %v6404
      %v6406 = vrcp.pop %v6068
      %v6407 = vmul.f32 1.0, %v6406
      %v6408 = vrcp.pop %v6069
      %v6409 = vmul.f32 1.0, %v6408
      %v6410 = vrcp.pop %v6070
      %v6411 = vmul.f32 1.0, %v6410
      %v6412 = vrcp.pop %v6071
      %v6413 = vmul.f32 1.0, %v6412
      %v6414 = vrcp.pop %v6072
      %v6415 = vmul.f32 1.0, %v6414
      %v6416 = vrcp.pop %v6073
      %v6417 = vmul.f32 1.0, %v6416
      %v6418 = vrcp.pop %v6074
      %v6419 = vmul.f32 1.0, %v6418
      %v6420 = vrcp.pop %v6075
      %v6421 = vmul.f32 1.0, %v6420
      %v6422 = vrcp.pop %v6076
      %v6423 = vmul.f32 1.0, %v6422
      %v6424 = vrcp.pop %v6077
      %v6425 = vmul.f32 1.0, %v6424
      %v6426 = vrcp.pop %v6078
      %v6427 = vmul.f32 1.0, %v6426
      %v6428 = vrcp.pop %v6079
      %v6429 = vmul.f32 1.0, %v6428
      %v6430 = vrcp.pop %v6080
      %v6431 = vmul.f32 1.0, %v6430
      %v6432 = vrcp.pop %v6081
      %v6433 = vmul.f32 1.0, %v6432
      %v6434 = vrcp.pop %v6082
      %v6435 = vmul.f32 1.0, %v6434
      %v6436 = vrcp.pop %v6083
      %v6437 = vmul.f32 1.0, %v6436
      %v6438 = vrcp.pop %v6084
      %v6439 = vmul.f32 1.0, %v6438
      %v6440 = vrcp.pop %v6085
      %v6441 = vmul.f32 1.0, %v6440
      %v6442 = vrcp.pop %v6086
      %v6443 = vmul.f32 1.0, %v6442
      %v6444 = vrcp.pop %v6087
      %v6445 = vmul.f32 1.0, %v6444
      %v6446 = vrcp.pop %v6088
      %v6447 = vmul.f32 1.0, %v6446
      %v6448 = vrcp.pop %v6089
      %v6449 = vmul.f32 1.0, %v6448
      %v6450 = vrcp.pop %v6090
      %v6451 = vmul.f32 1.0, %v6450
      %v6452 = vrcp.pop %v6091
      %v6453 = vmul.f32 1.0, %v6452
      %v6454 = vrcp.pop %v6092
      %v6455 = vmul.f32 1.0, %v6454
      %v6456 = vrcp.pop %v6093
      %v6457 = vmul.f32 1.0, %v6456
      %v6458 = vrcp.pop %v6094
      %v6459 = vmul.f32 1.0, %v6458
      %v6460 = vrcp.pop %v6095
      %v6461 = vmul.f32 1.0, %v6460
      %v6462 = vrcp.pop %v6096
      %v6463 = vmul.f32 1.0, %v6462
      %v6464 = vrcp.pop %v6097
      %v6465 = vmul.f32 1.0, %v6464
      %v6466 = vrcp.pop %v6098
      %v6467 = vmul.f32 1.0, %v6466
      %v6468 = vrcp.pop %v6099
      %v6469 = vmul.f32 1.0, %v6468
      %v6470 = vrcp.pop %v6100
      %v6471 = vmul.f32 1.0, %v6470
      %v6472 = vrcp.pop %v6101
      %v6473 = vmul.f32 1.0, %v6472
      %v6474 = vrcp.pop %v6102
      %v6475 = vmul.f32 1.0, %v6474
      %v6476 = vrcp.pop %v6103
      %v6477 = vmul.f32 1.0, %v6476
      %v6478 = vrcp.pop %v6104
      %v6479 = vmul.f32 1.0, %v6478
      %v6480 = vrcp.pop %v6105
      %v6481 = vmul.f32 1.0, %v6480
      %v6482 = vrcp.pop %v6106
      %v6483 = vmul.f32 1.0, %v6482
      %v6484 = vrcp.pop %v6107
      %v6485 = vmul.f32 1.0, %v6484
      %v6486 = vrcp.pop %v6108
      %v6487 = vmul.f32 1.0, %v6486
      %v6488 = vrcp.pop %v6109
      %v6489 = vmul.f32 1.0, %v6488
      %v6490 = vrcp.pop %v6110
      %v6491 = vmul.f32 1.0, %v6490
      %v6492 = vrcp.pop %v6111
      %v6493 = vmul.f32 1.0, %v6492
      %v6494 = vrcp.pop %v6112
      %v6495 = vmul.f32 1.0, %v6494
      %v6496 = vrcp.pop %v6113
      %v6497 = vmul.f32 1.0, %v6496
      %v6498 = vrcp.pop %v6114
      %v6499 = vmul.f32 1.0, %v6498
      %v6500 = vrcp.pop %v6115
      %v6501 = vmul.f32 1.0, %v6500
      %v6502 = vrcp.pop %v6116
      %v6503 = vmul.f32 1.0, %v6502
      %v6504 = vrcp.pop %v6117
      %v6505 = vmul.f32 1.0, %v6504
      %v6506 = vrcp.pop %v6118
      %v6507 = vmul.f32 1.0, %v6506
      %v6508 = vrcp.pop %v6119
      %v6509 = vmul.f32 1.0, %v6508
      %v6510 = vrcp.pop %v6120
      %v6511 = vmul.f32 1.0, %v6510
      %v6512 = vrcp.pop %v6121
      %v6513 = vmul.f32 1.0, %v6512
      %v6514 = vrcp.pop %v6122
      %v6515 = vmul.f32 1.0, %v6514
      %v6516 = vrcp.pop %v6123
      %v6517 = vmul.f32 1.0, %v6516
      %v6518 = vrcp.pop %v6124
      %v6519 = vmul.f32 1.0, %v6518
      %v6520 = vrcp.pop %v6125
      %v6521 = vmul.f32 1.0, %v6520
      %v6522 = vrcp.pop %v6126
      %v6523 = vmul.f32 1.0, %v6522
      %v6524 = vrcp.pop %v6127
      %v6525 = vmul.f32 1.0, %v6524
      %v6526 = vrcp.pop %v6128
      %v6527 = vmul.f32 1.0, %v6526
      %v6528 = vrcp.pop %v6129
      %v6529 = vmul.f32 1.0, %v6528
      %v6530 = vrcp.pop %v6130
      %v6531 = vmul.f32 1.0, %v6530
      %v6532 = vrcp.pop %v6131
      %v6533 = vmul.f32 1.0, %v6532
      %v6534 = vrcp.pop %v6132
      %v6535 = vmul.f32 1.0, %v6534
      %v6536 = vrcp.pop %v6133
      %v6537 = vmul.f32 1.0, %v6536
      %v6538 = vrcp.pop %v6134
      %v6539 = vmul.f32 1.0, %v6538
      %v6540 = vrcp.pop %v6135
      %v6541 = vmul.f32 1.0, %v6540
      %v6542 = vrcp.pop %v6136
      %v6543 = vmul.f32 1.0, %v6542
      %v6544 = vrcp.pop %v6137
      %v6545 = vmul.f32 1.0, %v6544
      %v6546 = vrcp.pop %v6138
      %v6547 = vmul.f32 1.0, %v6546
      %v6548 = vrcp.pop %v6139
      %v6549 = vmul.f32 1.0, %v6548
      %v6550 = vrcp.pop %v6140
      %v6551 = vmul.f32 1.0, %v6550
      %v6552 = vrcp.pop %v6141
      %v6553 = vmul.f32 1.0, %v6552
      %v6554 = vrcp.pop %v6142
      %v6555 = vmul.f32 1.0, %v6554
      %v6556 = vrcp.pop %v6143
      %v6557 = vmul.f32 1.0, %v6556
      %v6558 = vrcp.pop %v6144
      %v6559 = vmul.f32 1.0, %v6558
      %v6560 = vrcp.pop %v6145
      %v6561 = vmul.f32 1.0, %v6560
      %v6562 = vrcp.pop %v6146
      %v6563 = vmul.f32 1.0, %v6562
      %v6564 = vrcp.pop %v6147
      %v6565 = vmul.f32 1.0, %v6564
      %v6566 = vrcp.pop %v6148
      %v6567 = vmul.f32 1.0, %v6566
      %v6568 = vrcp.pop %v6149
      %v6569 = vmul.f32 1.0, %v6568
      %v6570 = vrcp.pop %v6150
      %v6571 = vmul.f32 1.0, %v6570
      %v6572 = vrcp.pop %v6151
      %v6573 = vmul.f32 1.0, %v6572
      %v6574 = vrcp.pop %v6152
      %v6575 = vmul.f32 1.0, %v6574
      %v6576 = vrcp.pop %v6153
      %v6577 = vmul.f32 1.0, %v6576
      %v6578 = vrcp.pop %v6154
      %v6579 = vmul.f32 1.0, %v6578
      %v6580 = vrcp.pop %v6155
      %v6581 = vmul.f32 1.0, %v6580
      %v6582 = vrcp.pop %v6156
      %v6583 = vmul.f32 1.0, %v6582
      %v6584 = vrcp.pop %v6157
      %v6585 = vmul.f32 1.0, %v6584
      %v6586 = vrcp.pop %v6158
      %v6587 = vmul.f32 1.0, %v6586
      %v6588 = vrcp.pop %v6159
      %v6589 = vmul.f32 1.0, %v6588
      %v6590 = vrcp.pop %v6160
      %v6591 = vmul.f32 1.0, %v6590
      %v6592 = vrcp.pop %v6161
      %v6593 = vmul.f32 1.0, %v6592
      %v6594 = vrcp.pop %v6162
      %v6595 = vmul.f32 1.0, %v6594
      %v6596 = vrcp.pop %v6163
      %v6597 = vmul.f32 1.0, %v6596
      %v6598 = vrcp.pop %v6164
      %v6599 = vmul.f32 1.0, %v6598
      %v6600 = vrcp.pop %v6165
      %v6601 = vmul.f32 1.0, %v6600
      %v6602 = vrcp.pop %v6166
      %v6603 = vmul.f32 1.0, %v6602
      %v6604 = vrcp.pop %v6167
      %v6605 = vmul.f32 1.0, %v6604
      %v6606 = vrcp.pop %v6168
      %v6607 = vmul.f32 1.0, %v6606
      %v6608 = vrcp.pop %v6169
      %v6609 = vmul.f32 1.0, %v6608
      %v6610 = vrcp.pop %v6170
      %v6611 = vmul.f32 1.0, %v6610
      %v6612 = vrcp.pop %v6171
      %v6613 = vmul.f32 1.0, %v6612
      %v6614 = vrcp.pop %v6172
      %v6615 = vmul.f32 1.0, %v6614
      %v6616 = vrcp.pop %v6173
      %v6617 = vmul.f32 1.0, %v6616
      %v6618 = vrcp.pop %v6174
      %v6619 = vmul.f32 1.0, %v6618
      %v6620 = vrcp.pop %v6175
      %v6621 = vmul.f32 1.0, %v6620
      %v6622 = vrcp.pop %v6176
      %v6623 = vmul.f32 1.0, %v6622
      %v6624 = vrcp.pop %v6177
      %v6625 = vmul.f32 1.0, %v6624
      %6626 = vst [vmem:[%s596] sm:$0xff] %v6179
      %6627 = vst [vmem:[%s596 + $0x8] sm:$0xff] %v6181
      %6628 = vst [vmem:[%s596 + $0x10] sm:$0xff] %v6183
      %6629 = vst [vmem:[%s596 + $0x18] sm:$0xff] %v6185
      %6630 = vst [vmem:[%s596 + $0x20] sm:$0xff] %v6187
      %6631 = vst [vmem:[%s596 + $0x28] sm:$0xff] %v6189
      %6632 = vst [vmem:[%s596 + $0x30] sm:$0xff] %v6191
      %6633 = vst [vmem:[%s596 + $0x38] sm:$0xff] %v6193
      %6634 = vst [vmem:[%s596 + $0x40] sm:$0xff] %v6195
      %6635 = vst [vmem:[%s596 + $0x48] sm:$0xff] %v6197
      %6636 = vst [vmem:[%s596 + $0x50] sm:$0xff] %v6199
      %6637 = vst [vmem:[%s596 + $0x58] sm:$0xff] %v6201
      %6638 = vst [vmem:[%s596 + $0x60] sm:$0xff] %v6203
      %6639 = vst [vmem:[%s596 + $0x68] sm:$0xff] %v6205
      %6640 = vst [vmem:[%s596 + $0x70] sm:$0xff] %v6207
      %6641 = vst [vmem:[%s596 + $0x78] sm:$0xff] %v6209
      %6642 = vst [vmem:[%s596 + $0x80] sm:$0xff] %v6211
      %6643 = vst [vmem:[%s596 + $0x88] sm:$0xff] %v6213
      %6644 = vst [vmem:[%s596 + $0x90] sm:$0xff] %v6215
      %6645 = vst [vmem:[%s596 + $0x98] sm:$0xff] %v6217
      %6646 = vst [vmem:[%s596 + $0xa0] sm:$0xff] %v6219
      %6647 = vst [vmem:[%s596 + $0xa8] sm:$0xff] %v6221
      %6648 = vst [vmem:[%s596 + $0xb0] sm:$0xff] %v6223
      %6649 = vst [vmem:[%s596 + $0xb8] sm:$0xff] %v6225
      %6650 = vst [vmem:[%s596 + $0xc0] sm:$0xff] %v6227
      %6651 = vst [vmem:[%s596 + $0xc8] sm:$0xff] %v6229
      %6652 = vst [vmem:[%s596 + $0xd0] sm:$0xff] %v6231
      %6653 = vst [vmem:[%s596 + $0xd8] sm:$0xff] %v6233
      %6654 = vst [vmem:[%s596 + $0xe0] sm:$0xff] %v6235
      %6655 = vst [vmem:[%s596 + $0xe8] sm:$0xff] %v6237
      %6656 = vst [vmem:[%s596 + $0xf0] sm:$0xff] %v6239
      %6657 = vst [vmem:[%s596 + $0xf8] sm:$0xff] %v6241
      %6658 = vst [vmem:[%s596 + $0x100] sm:$0xff] %v6243
      %6659 = vst [vmem:[%s596 + $0x108] sm:$0xff] %v6245
      %6660 = vst [vmem:[%s596 + $0x110] sm:$0xff] %v6247
      %6661 = vst [vmem:[%s596 + $0x118] sm:$0xff] %v6249
      %6662 = vst [vmem:[%s596 + $0x120] sm:$0xff] %v6251
      %6663 = vst [vmem:[%s596 + $0x128] sm:$0xff] %v6253
      %6664 = vst [vmem:[%s596 + $0x130] sm:$0xff] %v6255
      %6665 = vst [vmem:[%s596 + $0x138] sm:$0xff] %v6257
      %6666 = vst [vmem:[%s596 + $0x140] sm:$0xff] %v6259
      %6667 = vst [vmem:[%s596 + $0x148] sm:$0xff] %v6261
      %6668 = vst [vmem:[%s596 + $0x150] sm:$0xff] %v6263
      %6669 = vst [vmem:[%s596 + $0x158] sm:$0xff] %v6265
      %6670 = vst [vmem:[%s596 + $0x160] sm:$0xff] %v6267
      %6671 = vst [vmem:[%s596 + $0x168] sm:$0xff] %v6269
      %6672 = vst [vmem:[%s596 + $0x170] sm:$0xff] %v6271
      %6673 = vst [vmem:[%s596 + $0x178] sm:$0xff] %v6273
      %6674 = vst [vmem:[%s596 + $0x180] sm:$0xff] %v6275
      %6675 = vst [vmem:[%s596 + $0x188] sm:$0xff] %v6277
      %6676 = vst [vmem:[%s596 + $0x190] sm:$0xff] %v6279
      %6677 = vst [vmem:[%s596 + $0x198] sm:$0xff] %v6281
      %6678 = vst [vmem:[%s596 + $0x1a0] sm:$0xff] %v6283
      %6679 = vst [vmem:[%s596 + $0x1a8] sm:$0xff] %v6285
      %6680 = vst [vmem:[%s596 + $0x1b0] sm:$0xff] %v6287
      %6681 = vst [vmem:[%s596 + $0x1b8] sm:$0xff] %v6289
      %6682 = vst [vmem:[%s596 + $0x1c0] sm:$0xff] %v6291
      %6683 = vst [vmem:[%s596 + $0x1c8] sm:$0xff] %v6293
      %6684 = vst [vmem:[%s596 + $0x1d0] sm:$0xff] %v6295
      %6685 = vst [vmem:[%s596 + $0x1d8] sm:$0xff] %v6297
      %6686 = vst [vmem:[%s596 + $0x1e0] sm:$0xff] %v6299
      %6687 = vst [vmem:[%s596 + $0x1e8] sm:$0xff] %v6301
      %6688 = vst [vmem:[%s596 + $0x1f0] sm:$0xff] %v6303
      %6689 = vst [vmem:[%s596 + $0x1f8] sm:$0xff] %v6305
      %6690 = vst [vmem:[%s596 + $0x200] sm:$0xff] %v6307
      %6691 = vst [vmem:[%s596 + $0x208] sm:$0xff] %v6309
      %6692 = vst [vmem:[%s596 + $0x210] sm:$0xff] %v6311
      %6693 = vst [vmem:[%s596 + $0x218] sm:$0xff] %v6313
      %6694 = vst [vmem:[%s596 + $0x220] sm:$0xff] %v6315
      %6695 = vst [vmem:[%s596 + $0x228] sm:$0xff] %v6317
      %6696 = vst [vmem:[%s596 + $0x230] sm:$0xff] %v6319
      %6697 = vst [vmem:[%s596 + $0x238] sm:$0xff] %v6321
      %6698 = vst [vmem:[%s596 + $0x240] sm:$0xff] %v6323
      %6699 = vst [vmem:[%s596 + $0x248] sm:$0xff] %v6325
      %6700 = vst [vmem:[%s596 + $0x250] sm:$0xff] %v6327
      %6701 = vst [vmem:[%s596 + $0x258] sm:$0xff] %v6329
      %6702 = vst [vmem:[%s596 + $0x260] sm:$0xff] %v6331
      %6703 = vst [vmem:[%s596 + $0x268] sm:$0xff] %v6333
      %6704 = vst [vmem:[%s596 + $0x270] sm:$0xff] %v6335
      %6705 = vst [vmem:[%s596 + $0x278] sm:$0xff] %v6337
      %6706 = vst [vmem:[%s596 + $0x280] sm:$0xff] %v6339
      %6707 = vst [vmem:[%s596 + $0x288] sm:$0xff] %v6341
      %6708 = vst [vmem:[%s596 + $0x290] sm:$0xff] %v6343
      %6709 = vst [vmem:[%s596 + $0x298] sm:$0xff] %v6345
      %6710 = vst [vmem:[%s596 + $0x2a0] sm:$0xff] %v6347
      %6711 = vst [vmem:[%s596 + $0x2a8] sm:$0xff] %v6349
      %6712 = vst [vmem:[%s596 + $0x2b0] sm:$0xff] %v6351
      %6713 = vst [vmem:[%s596 + $0x2b8] sm:$0xff] %v6353
      %6714 = vst [vmem:[%s596 + $0x2c0] sm:$0xff] %v6355
      %6715 = vst [vmem:[%s596 + $0x2c8] sm:$0xff] %v6357
      %6716 = vst [vmem:[%s596 + $0x2d0] sm:$0xff] %v6359
      %6717 = vst [vmem:[%s596 + $0x2d8] sm:$0xff] %v6361
      %6718 = vst [vmem:[%s596 + $0x2e0] sm:$0xff] %v6363
      %6719 = vst [vmem:[%s596 + $0x2e8] sm:$0xff] %v6365
      %6720 = vst [vmem:[%s596 + $0x2f0] sm:$0xff] %v6367
      %6721 = vst [vmem:[%s596 + $0x2f8] sm:$0xff] %v6369
      %6722 = vst [vmem:[%s596 + $0x300] sm:$0xff] %v6371
      %6723 = vst [vmem:[%s596 + $0x308] sm:$0xff] %v6373
      %6724 = vst [vmem:[%s596 + $0x310] sm:$0xff] %v6375
      %6725 = vst [vmem:[%s596 + $0x318] sm:$0xff] %v6377
      %6726 = vst [vmem:[%s596 + $0x320] sm:$0xff] %v6379
      %6727 = vst [vmem:[%s596 + $0x328] sm:$0xff] %v6381
      %6728 = vst [vmem:[%s596 + $0x330] sm:$0xff] %v6383
      %6729 = vst [vmem:[%s596 + $0x338] sm:$0xff] %v6385
      %6730 = vst [vmem:[%s596 + $0x340] sm:$0xff] %v6387
      %6731 = vst [vmem:[%s596 + $0x348] sm:$0xff] %v6389
      %6732 = vst [vmem:[%s596 + $0x350] sm:$0xff] %v6391
      %6733 = vst [vmem:[%s596 + $0x358] sm:$0xff] %v6393
      %6734 = vst [vmem:[%s596 + $0x360] sm:$0xff] %v6395
      %6735 = vst [vmem:[%s596 + $0x368] sm:$0xff] %v6397
      %6736 = vst [vmem:[%s596 + $0x370] sm:$0xff] %v6399
      %6737 = vst [vmem:[%s596 + $0x378] sm:$0xff] %v6401
      %6738 = vst [vmem:[%s596 + $0x380] sm:$0xff] %v6403
      %6739 = vst [vmem:[%s596 + $0x388] sm:$0xff] %v6405
      %6740 = vst [vmem:[%s596 + $0x390] sm:$0xff] %v6407
      %6741 = vst [vmem:[%s596 + $0x398] sm:$0xff] %v6409
      %6742 = vst [vmem:[%s596 + $0x3a0] sm:$0xff] %v6411
      %6743 = vst [vmem:[%s596 + $0x3a8] sm:$0xff] %v6413
      %6744 = vst [vmem:[%s596 + $0x3b0] sm:$0xff] %v6415
      %6745 = vst [vmem:[%s596 + $0x3b8] sm:$0xff] %v6417
      %6746 = vst [vmem:[%s596 + $0x3c0] sm:$0xff] %v6419
      %6747 = vst [vmem:[%s596 + $0x3c8] sm:$0xff] %v6421
      %6748 = vst [vmem:[%s596 + $0x3d0] sm:$0xff] %v6423
      %6749 = vst [vmem:[%s596 + $0x3d8] sm:$0xff] %v6425
      %6750 = vst [vmem:[%s596 + $0x3e0] sm:$0xff] %v6427
      %6751 = vst [vmem:[%s596 + $0x3e8] sm:$0xff] %v6429
      %6752 = vst [vmem:[%s596 + $0x3f0] sm:$0xff] %v6431
      %6753 = vst [vmem:[%s596 + $0x3f8] sm:$0xff] %v6433
      %6754 = vst [vmem:[%s596 + $0x400] sm:$0xff] %v6435
      %6755 = vst [vmem:[%s596 + $0x408] sm:$0xff] %v6437
      %6756 = vst [vmem:[%s596 + $0x410] sm:$0xff] %v6439
      %6757 = vst [vmem:[%s596 + $0x418] sm:$0xff] %v6441
      %6758 = vst [vmem:[%s596 + $0x420] sm:$0xff] %v6443
      %6759 = vst [vmem:[%s596 + $0x428] sm:$0xff] %v6445
      %6760 = vst [vmem:[%s596 + $0x430] sm:$0xff] %v6447
      %6761 = vst [vmem:[%s596 + $0x438] sm:$0xff] %v6449
      %6762 = vst [vmem:[%s596 + $0x440] sm:$0xff] %v6451
      %6763 = vst [vmem:[%s596 + $0x448] sm:$0xff] %v6453
      %6764 = vst [vmem:[%s596 + $0x450] sm:$0xff] %v6455
      %6765 = vst [vmem:[%s596 + $0x458] sm:$0xff] %v6457
      %6766 = vst [vmem:[%s596 + $0x460] sm:$0xff] %v6459
      %6767 = vst [vmem:[%s596 + $0x468] sm:$0xff] %v6461
      %6768 = vst [vmem:[%s596 + $0x470] sm:$0xff] %v6463
      %6769 = vst [vmem:[%s596 + $0x478] sm:$0xff] %v6465
      %6770 = vst [vmem:[%s596 + $0x480] sm:$0xff] %v6467
      %6771 = vst [vmem:[%s596 + $0x488] sm:$0xff] %v6469
      %6772 = vst [vmem:[%s596 + $0x490] sm:$0xff] %v6471
      %6773 = vst [vmem:[%s596 + $0x498] sm:$0xff] %v6473
      %6774 = vst [vmem:[%s596 + $0x4a0] sm:$0xff] %v6475
      %6775 = vst [vmem:[%s596 + $0x4a8] sm:$0xff] %v6477
      %6776 = vst [vmem:[%s596 + $0x4b0] sm:$0xff] %v6479
      %6777 = vst [vmem:[%s596 + $0x4b8] sm:$0xff] %v6481
      %6778 = vst [vmem:[%s596 + $0x4c0] sm:$0xff] %v6483
      %6779 = vst [vmem:[%s596 + $0x4c8] sm:$0xff] %v6485
      %6780 = vst [vmem:[%s596 + $0x4d0] sm:$0xff] %v6487
      %6781 = vst [vmem:[%s596 + $0x4d8] sm:$0xff] %v6489
      %6782 = vst [vmem:[%s596 + $0x4e0] sm:$0xff] %v6491
      %6783 = vst [vmem:[%s596 + $0x4e8] sm:$0xff] %v6493
      %6784 = vst [vmem:[%s596 + $0x4f0] sm:$0xff] %v6495
      %6785 = vst [vmem:[%s596 + $0x4f8] sm:$0xff] %v6497
      %6786 = vst [vmem:[%s596 + $0x500] sm:$0xff] %v6499
      %6787 = vst [vmem:[%s596 + $0x508] sm:$0xff] %v6501
      %6788 = vst [vmem:[%s596 + $0x510] sm:$0xff] %v6503
      %6789 = vst [vmem:[%s596 + $0x518] sm:$0xff] %v6505
      %6790 = vst [vmem:[%s596 + $0x520] sm:$0xff] %v6507
      %6791 = vst [vmem:[%s596 + $0x528] sm:$0xff] %v6509
      %6792 = vst [vmem:[%s596 + $0x530] sm:$0xff] %v6511
      %6793 = vst [vmem:[%s596 + $0x538] sm:$0xff] %v6513
      %6794 = vst [vmem:[%s596 + $0x540] sm:$0xff] %v6515
      %6795 = vst [vmem:[%s596 + $0x548] sm:$0xff] %v6517
      %6796 = vst [vmem:[%s596 + $0x550] sm:$0xff] %v6519
      %6797 = vst [vmem:[%s596 + $0x558] sm:$0xff] %v6521
      %6798 = vst [vmem:[%s596 + $0x560] sm:$0xff] %v6523
      %6799 = vst [vmem:[%s596 + $0x568] sm:$0xff] %v6525
      %6800 = vst [vmem:[%s596 + $0x570] sm:$0xff] %v6527
      %6801 = vst [vmem:[%s596 + $0x578] sm:$0xff] %v6529
      %6802 = vst [vmem:[%s596 + $0x580] sm:$0xff] %v6531
      %6803 = vst [vmem:[%s596 + $0x588] sm:$0xff] %v6533
      %6804 = vst [vmem:[%s596 + $0x590] sm:$0xff] %v6535
      %6805 = vst [vmem:[%s596 + $0x598] sm:$0xff] %v6537
      %6806 = vst [vmem:[%s596 + $0x5a0] sm:$0xff] %v6539
      %6807 = vst [vmem:[%s596 + $0x5a8] sm:$0xff] %v6541
      %6808 = vst [vmem:[%s596 + $0x5b0] sm:$0xff] %v6543
      %6809 = vst [vmem:[%s596 + $0x5b8] sm:$0xff] %v6545
      %6810 = vst [vmem:[%s596 + $0x5c0] sm:$0xff] %v6547
      %6811 = vst [vmem:[%s596 + $0x5c8] sm:$0xff] %v6549
      %6812 = vst [vmem:[%s596 + $0x5d0] sm:$0xff] %v6551
      %6813 = vst [vmem:[%s596 + $0x5d8] sm:$0xff] %v6553
      %6814 = vst [vmem:[%s596 + $0x5e0] sm:$0xff] %v6555
      %6815 = vst [vmem:[%s596 + $0x5e8] sm:$0xff] %v6557
      %6816 = vst [vmem:[%s596 + $0x5f0] sm:$0xff] %v6559
      %6817 = vst [vmem:[%s596 + $0x5f8] sm:$0xff] %v6561
      %6818 = vst [vmem:[%s596 + $0x600] sm:$0xff] %v6563
      %6819 = vst [vmem:[%s596 + $0x608] sm:$0xff] %v6565
      %6820 = vst [vmem:[%s596 + $0x610] sm:$0xff] %v6567
      %6821 = vst [vmem:[%s596 + $0x618] sm:$0xff] %v6569
      %6822 = vst [vmem:[%s596 + $0x620] sm:$0xff] %v6571
      %6823 = vst [vmem:[%s596 + $0x628] sm:$0xff] %v6573
      %6824 = vst [vmem:[%s596 + $0x630] sm:$0xff] %v6575
      %6825 = vst [vmem:[%s596 + $0x638] sm:$0xff] %v6577
      %6826 = vst [vmem:[%s596 + $0x640] sm:$0xff] %v6579
      %6827 = vst [vmem:[%s596 + $0x648] sm:$0xff] %v6581
      %6828 = vst [vmem:[%s596 + $0x650] sm:$0xff] %v6583
      %6829 = vst [vmem:[%s596 + $0x658] sm:$0xff] %v6585
      %6830 = vst [vmem:[%s596 + $0x660] sm:$0xff] %v6587
      %6831 = vst [vmem:[%s596 + $0x668] sm:$0xff] %v6589
      %6832 = vst [vmem:[%s596 + $0x670] sm:$0xff] %v6591
      %6833 = vst [vmem:[%s596 + $0x678] sm:$0xff] %v6593
      %6834 = vst [vmem:[%s596 + $0x680] sm:$0xff] %v6595
      %6835 = vst [vmem:[%s596 + $0x688] sm:$0xff] %v6597
      %6836 = vst [vmem:[%s596 + $0x690] sm:$0xff] %v6599
      %6837 = vst [vmem:[%s596 + $0x698] sm:$0xff] %v6601
      %6838 = vst [vmem:[%s596 + $0x6a0] sm:$0xff] %v6603
      %6839 = vst [vmem:[%s596 + $0x6a8] sm:$0xff] %v6605
      %6840 = vst [vmem:[%s596 + $0x6b0] sm:$0xff] %v6607
      %6841 = vst [vmem:[%s596 + $0x6b8] sm:$0xff] %v6609
      %6842 = vst [vmem:[%s596 + $0x6c0] sm:$0xff] %v6611
      %6843 = vst [vmem:[%s596 + $0x6c8] sm:$0xff] %v6613
      %6844 = vst [vmem:[%s596 + $0x6d0] sm:$0xff] %v6615
      %6845 = vst [vmem:[%s596 + $0x6d8] sm:$0xff] %v6617
      %6846 = vst [vmem:[%s596 + $0x6e0] sm:$0xff] %v6619
      %6847 = vst [vmem:[%s596 + $0x6e8] sm:$0xff] %v6621
      %6848 = vst [vmem:[%s596 + $0x6f0] sm:$0xff] %v6623
      %6849 = vst [vmem:[%s596 + $0x6f8] sm:$0xff] %v6625
      %s6850 = smul.u32 32, %s30
      %p6851 = scmp.lt.s32.totalorder %s6850, 63
      %s6852 = scalar_select %p6851, %s6850, 63
      %s6853 = smul.addr %s6852, 8
      %s6854 = scalar_lea.vmem %s17, %s6853
      %s6855 = smul.u32 32, %s30
      %p6856 = scmp.lt.s32.totalorder %s6855, 63
      %s6857 = scalar_select %p6856, %s6855, 63
      %s6858 = smul.addr %s6857, 7
      %s6859 = smul.addr %s6858, 8
      %s6860 = scalar_lea.vmem %s18, %s6859
      // Predicated region
      $region89: #{autoencoder_forward.1} parent=87 // pred_check
        %p6861 = pneg %p410
      $region90: #{autoencoder_forward.1} parent=87 // pred_check_branch
        %6863 = sbr.rel (%p6861) target = $region92
      $region91: #{autoencoder_forward.1} parent=87 // pred_region
        %s6864 = smul.u32 32, %s30
      $region92: #{autoencoder_forward.1} parent=87 // pred_fallthru
        _
      // Predicated region
      $region93: #{autoencoder_forward.1} parent=87 // pred_check
        %p6865 = pneg %p436
      $region94: #{autoencoder_forward.1} parent=87 // pred_check_branch
        %6867 = sbr.rel (%p6865) target = $region96
      $region95: #{autoencoder_forward.1} parent=87 // pred_region
        %s6868 = smul.u32 32, %s30
      $region96: #{autoencoder_forward.1} parent=87 // pred_fallthru
        _
    $region88: #{autoencoder_forward.1} parent=5 // pred_fallthru
      _
    %p6869 = scmp.le.s32.totalorder 2, %s25
    // Predicated region
    $region97: #{autoencoder_forward.1} parent=5 // pred_check
      %p6870 = pneg %p6869
    $region98: #{autoencoder_forward.1} parent=5 // pred_check_branch
      %6872 = sbr.rel (%p6870) target = $region100
    $region99: #{autoencoder_forward.1} parent=5 // pred_region
      %s6873 = ssub.s32 %s25, 2
      // Predicated region
      $region101: #{autoencoder_forward.1} parent=99 // pred_check
        %p6874 = pneg %p416
      $region102: #{autoencoder_forward.1} parent=99 // pred_check_branch
        %6876 = sbr.rel (%p6874) target = $region104
      $region103: #{autoencoder_forward.1} parent=99 // pred_region
        %s6877 = smul.u32 32, %s31
        %p6878 = scmp.lt.s32.totalorder %s6877, 63
        %s6879 = scalar_select %p6878, %s6877, 63
        %s6880 = smul.addr %s6879, 8
        %s6881 = scalar_lea.vmem %s17, %s6880
      $region104: #{autoencoder_forward.1} parent=99 // pred_fallthru
        _
      // Predicated region
      $region105: #{autoencoder_forward.1} parent=99 // pred_check
        %p6882 = pneg %p442
      $region106: #{autoencoder_forward.1} parent=99 // pred_check_branch
        %6884 = sbr.rel (%p6882) target = $region108
      $region107: #{autoencoder_forward.1} parent=99 // pred_region
        %s6885 = smul.u32 32, %s31
        %p6886 = scmp.lt.s32.totalorder %s6885, 63
        %s6887 = scalar_select %p6886, %s6885, 63
        %s6888 = smul.addr %s6887, 7
        %s6889 = smul.addr %s6888, 8
        %s6890 = scalar_lea.vmem %s18, %s6889
      $region108: #{autoencoder_forward.1} parent=99 // pred_fallthru
        _
    $region100: #{autoencoder_forward.1} parent=5 // pred_fallthru
      _
  $region6: #{autoencoder_forward.1} parent=0 // loop_footer
    %s29 = sadd.s32 1, %s25
  $region7: #{autoencoder_forward.1} parent=0 // loop_footer_branch
    %24 = sbr.rel target = $region3
  $region8: #{autoencoder_forward.1} parent=0 // loop_exit
    _

</llo_original>
